<compile_context>
chip_gen: v7x
topology: tpu7x:2x2x1
jax: 0.10.0
libtpu: 0.0.40
codegen_flags: <defaults>
</compile_context>

<pallas_src>
import math
import functools

import jax
import jax.numpy as jnp
from jax.experimental import pallas as pl
from jax.experimental.pallas import tpu as pltpu


# ----------------------------------------------------------------------------
# Fused encoder-layer kernel
# ----------------------------------------------------------------------------

def _layer_norm_f32(x, g, b, eps):
    mu = jnp.mean(x, axis=-1, keepdims=True)
    xc = x - mu
    var = jnp.mean(xc * xc, axis=-1, keepdims=True)
    return xc * jax.lax.rsqrt(var + eps) * g + b


def _encoder_layer_kernel(src_ref, pos_ref, bias_ref,
                          wqk_ref, bqk_ref, wv_ref, bv_ref,
                          wo_ref, bo_ref, g1_ref, beta1_ref,
                          wf1_ref, bf1_ref, wf2_ref, bf2_ref,
                          g2_ref, beta2_ref,
                          *refs, num_heads, eps, need_weights):
    if need_weights:
        out_ref, attw_ref, q_sc, k_sc, v_sc, attn_sc = refs
    else:
        out_ref, q_sc, k_sc, v_sc, attn_sc = refs
        attw_ref = None

    NB, S, D = src_ref.shape
    H = num_heads
    Dh = D // H
    M = NB * S

    # ---- merged q|k projection + v projection (bf16 MXU, f32 accumulate) ----
    x_bf = src_ref[...].reshape(M, D)                       # (M, D) bf16
    qk_in = x_bf + pos_ref[...].reshape(M, D)               # q = k = src + pos

    qk = jnp.dot(qk_in, wqk_ref[...],
                 preferred_element_type=jnp.float32) + bqk_ref[...]   # (M, 2D) f32
    # 1/sqrt(Dh) scale is pre-folded into the q half of wqk / bqk.
    q_sc[...] = qk[:, :D].astype(jnp.bfloat16)
    k_sc[...] = qk[:, D:].astype(jnp.bfloat16)
    v_sc[...] = (jnp.dot(x_bf, wv_ref[...],
                         preferred_element_type=jnp.float32)
                 + bv_ref[...]).astype(jnp.bfloat16)

    # ---- attention: per (batch, head); only one (S,S) tile chain live ----
    dn = (((1,), (1,)), ((), ()))       # q (S,Dh) . k (S,Dh) contracting Dh
    for b in range(NB):
        r0 = b * S
        bias_b = jnp.broadcast_to(bias_ref[b], (S, S))      # hoisted out of head loop
        for h in range(H):
            c0 = h * Dh
            s = jax.lax.dot_general(
                q_sc[r0:r0 + S, c0:c0 + Dh],
                k_sc[r0:r0 + S, c0:c0 + Dh],
                dn, preferred_element_type=jnp.float32) + bias_b
            e = jnp.exp(s - jnp.max(s, axis=-1, keepdims=True))
            p = e * pl.reciprocal(jnp.sum(e, axis=-1, keepdims=True), approx=True)
            if need_weights:
                if h == 0:
                    attw_ref[b] = p
                else:
                    attw_ref[b] += p
            attn_sc[r0:r0 + S, c0:c0 + Dh] = jnp.dot(
                p.astype(jnp.bfloat16), v_sc[r0:r0 + S, c0:c0 + Dh],
                preferred_element_type=jnp.float32).astype(jnp.bfloat16)
        if need_weights:
            attw_ref[b] = attw_ref[b] * (1.0 / H)           # head average

    # ---- out-proj + residual + LayerNorm1 ----
    x_f32 = src_ref[...].reshape(M, D).astype(jnp.float32)  # re-read (cheap VMEM load)
    src2 = jnp.dot(attn_sc[...], wo_ref[...],
                   preferred_element_type=jnp.float32) + bo_ref[...]
    x1 = _layer_norm_f32(x_f32 + src2, g1_ref[...], beta1_ref[...], eps)

    # ---- FFN (linear1 -> relu -> linear2) + residual + LayerNorm2 ----
    h1 = jnp.maximum(
        jnp.dot(x1.astype(jnp.bfloat16), wf1_ref[...],
                preferred_element_type=jnp.float32) + bf1_ref[...], 0.0)
    src2b = jnp.dot(h1.astype(jnp.bfloat16), wf2_ref[...],
                    preferred_element_type=jnp.float32) + bf2_ref[...]
    y = _layer_norm_f32(x1 + src2b, g2_ref[...], beta2_ref[...], eps)

    out_ref[...] = y.reshape(NB, S, D).astype(out_ref.dtype)


# ----------------------------------------------------------------------------
# Parameter prep (one-time): fold scale into q weights, cast, reshape biases.
# ----------------------------------------------------------------------------

def prepare_params(params, nhead):
    d = params["w_qk"].shape[0]
    scale = 1.0 / math.sqrt(d // nhead)
    w_qk = params["w_qk"].astype(jnp.float32).at[:, :d].multiply(scale)
    b_qk = params["b_qk"].astype(jnp.float32).at[:d].multiply(scale)

    bf = lambda w: w.astype(jnp.bfloat16)
    row = lambda v: v.reshape(1, -1).astype(jnp.float32)
    return {
        "w_qk": bf(w_qk),                "b_qk": row(b_qk),
        "w_v": bf(params["w_v"]),        "b_v": row(params["b_v"]),
        "w_out": bf(params["w_out"]),    "b_out": row(params["b_out"]),
        "ln1_g": row(params["ln1_g"]),   "ln1_b": row(params["ln1_b"]),
        "w_ff1": bf(params["w_ff1"]),    "b_ff1": row(params["b_ff1"]),
        "w_ff2": bf(params["w_ff2"]),    "b_ff2": row(params["b_ff2"]),
        "ln2_g": row(params["ln2_g"]),   "ln2_b": row(params["ln2_b"]),
    }


# ----------------------------------------------------------------------------
# Wrapper
# ----------------------------------------------------------------------------

def encoder_layer_forward(prepared, src, pos, src_key_padding_mask, *,
                          nhead, eps=1e-5, need_weights=True, batch_block=None):
    """src / pos: (S, B, D) sequence-first; mask: (B, S) bool (True = pad).

    Returns (out (S, B, D) f32, attn_weights (B, S, S) f32 or None).
    """
    S0, B, D = src.shape
    dff = prepared["w_ff1"].shape[1]
    assert D % nhead == 0 and D % 128 == 0 and dff % 128 == 0

    # pad sequence length to a lane multiple (128); padded keys masked out.
    pad = (-S0) % 128
    if pad:
        src = jnp.pad(src, ((0, pad), (0, 0), (0, 0)))
        pos = jnp.pad(pos, ((0, pad), (0, 0), (0, 0)))
        src_key_padding_mask = jnp.pad(src_key_padding_mask, ((0, 0), (0, pad)),
                                       constant_values=True)
    S = S0 + pad

    if batch_block is None:
        # largest divisor of B that still leaves >= 2 parallel grid steps
        # (feeds both v7x TCs) while maximizing matmul rows on v5e/v6e.
        target = max(1, B // 2)
        batch_block = max(d for d in range(1, target + 1) if B % d == 0)
    NB = batch_block
    assert B % NB == 0
    n_steps = B // NB

    src_b = jnp.transpose(src, (1, 0, 2)).astype(jnp.bfloat16)   # (B, S, D)
    pos_b = jnp.transpose(pos, (1, 0, 2)).astype(jnp.bfloat16)
    key_bias = jnp.where(src_key_padding_mask, jnp.float32(-1e30),
                         jnp.float32(0.0))[:, None, :]           # (B, 1, S)

    kernel = functools.partial(_encoder_layer_kernel, num_heads=nhead,
                               eps=eps, need_weights=need_weights)
    batch3 = lambda i: (i, 0, 0)
    const2 = lambda i: (0, 0)

    out_shapes = [jax.ShapeDtypeStruct((B, S, D), jnp.float32)]
    out_specs = [pl.BlockSpec((NB, S, D), batch3)]
    if need_weights:
        out_shapes.append(jax.ShapeDtypeStruct((B, S, S), jnp.float32))
        out_specs.append(pl.BlockSpec((NB, S, S), batch3))

    results = pl.pallas_call(
        kernel,
        out_shape=tuple(out_shapes),
        grid=(n_steps,),
        in_specs=[
            pl.BlockSpec((NB, S, D), batch3),         # src (bf16)
            pl.BlockSpec((NB, S, D), batch3),         # pos (bf16)
            pl.BlockSpec((NB, 1, S), batch3),         # key-padding bias
            pl.BlockSpec((D, 2 * D), const2),         # merged q|k weight (bf16)
            pl.BlockSpec((1, 2 * D), const2),         # merged q|k bias
            pl.BlockSpec((D, D), const2),             # v weight
            pl.BlockSpec((1, D), const2),             # v bias
            pl.BlockSpec((D, D), const2),             # out-proj weight
            pl.BlockSpec((1, D), const2),             # out-proj bias
            pl.BlockSpec((1, D), const2),             # ln1 gamma
            pl.BlockSpec((1, D), const2),             # ln1 beta
            pl.BlockSpec((D, dff), const2),           # linear1 weight
            pl.BlockSpec((1, dff), const2),           # linear1 bias
            pl.BlockSpec((dff, D), const2),           # linear2 weight
            pl.BlockSpec((1, D), const2),             # linear2 bias
            pl.BlockSpec((1, D), const2),             # ln2 gamma
            pl.BlockSpec((1, D), const2),             # ln2 beta
        ],
        out_specs=tuple(out_specs),
        scratch_shapes=[
            pltpu.VMEM((NB * S, D), jnp.bfloat16),    # q
            pltpu.VMEM((NB * S, D), jnp.bfloat16),    # k
            pltpu.VMEM((NB * S, D), jnp.bfloat16),    # v
            pltpu.VMEM((NB * S, D), jnp.bfloat16),    # attn output slab
        ],
        compiler_params=pltpu.CompilerParams(
            dimension_semantics=("parallel",),
            vmem_limit_bytes=32 * 1024 * 1024),
    )(src_b, pos_b, key_bias,
      prepared["w_qk"], prepared["b_qk"],
      prepared["w_v"], prepared["b_v"],
      prepared["w_out"], prepared["b_out"],
      prepared["ln1_g"], prepared["ln1_b"],
      prepared["w_ff1"], prepared["b_ff1"],
      prepared["w_ff2"], prepared["b_ff2"],
      prepared["ln2_g"], prepared["ln2_b"])

    if need_weights:
        out, attw = results
        attw = attw[:, :S0, :S0]                      # (B, S0, S0)
    else:
        (out,) = results
        attw = None

    out = jnp.transpose(out, (1, 0, 2))[:S0]          # (S0, B, D)
    return out, attw


# ----------------------------------------------------------------------------
# Deterministic parameter init (shapes follow nn.MultiheadAttention / Linear)
# ----------------------------------------------------------------------------

def init_params(seed, d_model, nhead, dim_ff):
    ks = jax.random.split(jax.random.PRNGKey(seed), 8)

    def xavier(key, din, dout):
        lim = math.sqrt(6.0 / (din + dout))
        return jax.random.uniform(key, (din, dout), jnp.float32, -lim, lim)

    d, f = d_model, dim_ff
    return {
        # in_proj: q and k rows merged along the output dim (both consume src+pos)
        "w_qk": xavier(ks[0], d, 2 * d), "b_qk": jnp.zeros((2 * d,), jnp.float32),
        "w_v": xavier(ks[1], d, d),      "b_v": jnp.zeros((d,), jnp.float32),
        "w_out": xavier(ks[2], d, d),    "b_out": jnp.zeros((d,), jnp.float32),
        "ln1_g": jnp.ones((d,), jnp.float32), "ln1_b": jnp.zeros((d,), jnp.float32),
        "w_ff1": xavier(ks[3], d, f),
        "b_ff1": jax.random.uniform(ks[4], (f,), jnp.float32, -0.05, 0.05),
        "w_ff2": xavier(ks[5], f, d),
        "b_ff2": jax.random.uniform(ks[6], (d,), jnp.float32, -0.05, 0.05),
        "ln2_g": jnp.ones((d,), jnp.float32), "ln2_b": jnp.zeros((d,), jnp.float32),
    }


# ----------------------------------------------------------------------------
# Main
# ----------------------------------------------------------------------------

if __name__ == "__main__":
    d_model, nhead, dim_ff = 256, 8, 512
    bs, h, w = 2, 8, 8
    S = h * w                                          # flattened HW sequence

    key = jax.random.PRNGKey(0)
    k1, k2 = jax.random.split(key, 2)
    src = jax.random.normal(k1, (S, bs, d_model), jnp.float32)
    pos = jax.random.normal(k2, (S, bs, d_model), jnp.float32)
    # key-padding mask: pad out the last two columns of batch element 1
    mask = jnp.zeros((bs, h, w), jnp.bool_).at[1, :, -2:].set(True).reshape(bs, S)

    params = init_params(1, d_model, nhead, dim_ff)
    prepared = prepare_params(params, nhead)           # one-time weight prep

    fwd = jax.jit(functools.partial(encoder_layer_forward, nhead=nhead))
    out, K_weights = fwd(prepared, src, pos, mask)
    jax.block_until_ready((out, K_weights))

    assert out.shape == (S, bs, d_model)
    assert K_weights.shape == (bs, S, S)
    assert bool(jnp.all(jnp.isfinite(out)))
    assert bool(jnp.all(jnp.isfinite(K_weights)))
    # attention rows are (approximately) stochastic for the unmasked batch elem
    assert bool(jnp.allclose(jnp.sum(K_weights[0], axis=-1), 1.0, atol=1e-2))
    print("KERNEL_OK")
</pallas_src>

<mosaic_0001>
module attributes {stable_mosaic.version = 11 : i64} {
  func.func @_encoder_layer_kernel(%arg0: i32, %arg1: memref<1x128x256xbf16, #tpu.memory_space<vmem>>, %arg2: memref<1x128x256xbf16, #tpu.memory_space<vmem>>, %arg3: memref<1x1x128xf32, #tpu.memory_space<vmem>>, %arg4: memref<256x512xbf16, #tpu.memory_space<vmem>>, %arg5: memref<1x512xf32, #tpu.memory_space<vmem>>, %arg6: memref<256x256xbf16, #tpu.memory_space<vmem>>, %arg7: memref<1x256xf32, #tpu.memory_space<vmem>>, %arg8: memref<256x256xbf16, #tpu.memory_space<vmem>>, %arg9: memref<1x256xf32, #tpu.memory_space<vmem>>, %arg10: memref<1x256xf32, #tpu.memory_space<vmem>>, %arg11: memref<1x256xf32, #tpu.memory_space<vmem>>, %arg12: memref<256x512xbf16, #tpu.memory_space<vmem>>, %arg13: memref<1x512xf32, #tpu.memory_space<vmem>>, %arg14: memref<512x256xbf16, #tpu.memory_space<vmem>>, %arg15: memref<1x256xf32, #tpu.memory_space<vmem>>, %arg16: memref<1x256xf32, #tpu.memory_space<vmem>>, %arg17: memref<1x256xf32, #tpu.memory_space<vmem>>, %arg18: memref<1x128x256xf32, #tpu.memory_space<vmem>>, %arg19: memref<1x128x128xf32, #tpu.memory_space<vmem>>, %arg20: memref<128x256xbf16, #tpu.memory_space<vmem>>, %arg21: memref<128x256xbf16, #tpu.memory_space<vmem>>, %arg22: memref<128x256xbf16, #tpu.memory_space<vmem>>, %arg23: memref<128x256xbf16, #tpu.memory_space<vmem>>) attributes {dimension_semantics = [#tpu.dimension_semantics<parallel>], iteration_bounds = array<i64: 2>, scalar_prefetch = 0 : i64, scratch_operands = 4 : i64, tpu.core_type = #tpu.core_type<tc>, window_params = [{transform_indices = @transform_0, window_bounds = array<i64: 1, 128, 256>}, {transform_indices = @transform_1, window_bounds = array<i64: 1, 128, 256>}, {transform_indices = @transform_2, window_bounds = array<i64: 1, 1, 128>}, {pipeline_mode = #tpu.pipeline_mode<synchronous>, transform_indices = @transform_3, window_bounds = array<i64: 256, 512>}, {pipeline_mode = #tpu.pipeline_mode<synchronous>, transform_indices = @transform_4, window_bounds = array<i64: 1, 512>}, {pipeline_mode = #tpu.pipeline_mode<synchronous>, transform_indices = @transform_5, window_bounds = array<i64: 256, 256>}, {pipeline_mode = #tpu.pipeline_mode<synchronous>, transform_indices = @transform_6, window_bounds = array<i64: 1, 256>}, {pipeline_mode = #tpu.pipeline_mode<synchronous>, transform_indices = @transform_7, window_bounds = array<i64: 256, 256>}, {pipeline_mode = #tpu.pipeline_mode<synchronous>, transform_indices = @transform_8, window_bounds = array<i64: 1, 256>}, {pipeline_mode = #tpu.pipeline_mode<synchronous>, transform_indices = @transform_9, window_bounds = array<i64: 1, 256>}, {pipeline_mode = #tpu.pipeline_mode<synchronous>, transform_indices = @transform_10, window_bounds = array<i64: 1, 256>}, {pipeline_mode = #tpu.pipeline_mode<synchronous>, transform_indices = @transform_11, window_bounds = array<i64: 256, 512>}, {pipeline_mode = #tpu.pipeline_mode<synchronous>, transform_indices = @transform_12, window_bounds = array<i64: 1, 512>}, {pipeline_mode = #tpu.pipeline_mode<synchronous>, transform_indices = @transform_13, window_bounds = array<i64: 512, 256>}, {pipeline_mode = #tpu.pipeline_mode<synchronous>, transform_indices = @transform_14, window_bounds = array<i64: 1, 256>}, {pipeline_mode = #tpu.pipeline_mode<synchronous>, transform_indices = @transform_15, window_bounds = array<i64: 1, 256>}, {pipeline_mode = #tpu.pipeline_mode<synchronous>, transform_indices = @transform_16, window_bounds = array<i64: 1, 256>}, {transform_indices = @transform_17, window_bounds = array<i64: 1, 128, 256>}, {transform_indices = @transform_18, window_bounds = array<i64: 1, 128, 128>}]} {
    %c0 = arith.constant 0 : index
    %c0_0 = arith.constant 0 : index
    %c0_1 = arith.constant 0 : index
    %0 = vector.load %arg1[%c0, %c0_0, %c0_1] : memref<1x128x256xbf16, #tpu.memory_space<vmem>>, vector<1x128x256xbf16>
    %1 = vector.shape_cast %0 : vector<1x128x256xbf16> to vector<128x256xbf16>
    %c0_2 = arith.constant 0 : index
    %c0_3 = arith.constant 0 : index
    %c0_4 = arith.constant 0 : index
    %2 = vector.load %arg2[%c0_2, %c0_3, %c0_4] : memref<1x128x256xbf16, #tpu.memory_space<vmem>>, vector<1x128x256xbf16>
    %3 = vector.shape_cast %2 : vector<1x128x256xbf16> to vector<128x256xbf16>
    %4 = arith.addf %1, %3 : vector<128x256xbf16>
    %c0_5 = arith.constant 0 : index
    %c0_6 = arith.constant 0 : index
    %5 = vector.load %arg4[%c0_5, %c0_6] : memref<256x512xbf16, #tpu.memory_space<vmem>>, vector<256x512xbf16>
    %cst = arith.constant dense<0.000000e+00> : vector<128x512xf32>
    %6 = tpu.matmul %4, %5, %cst {dimension_numbers = #tpu.dot_dimension_numbers<[1], [0], [0], [1], [0, 0, 1, 1], [], []>} : vector<128x256xbf16>, vector<256x512xbf16>, vector<128x512xf32> -> vector<128x512xf32>
    %c0_7 = arith.constant 0 : index
    %c0_8 = arith.constant 0 : index
    %7 = vector.load %arg5[%c0_7, %c0_8] : memref<1x512xf32, #tpu.memory_space<vmem>>, vector<1x512xf32>
    %8 = vector.broadcast %7 : vector<1x512xf32> to vector<128x512xf32>
    %9 = arith.addf %6, %8 : vector<128x512xf32>
    %10 = vector.extract_strided_slice %9 {offsets = [0, 0], sizes = [128, 256], strides = [1, 1]} : vector<128x512xf32> to vector<128x256xf32>
    %11 = arith.truncf %10 : vector<128x256xf32> to vector<128x256xbf16>
    %c0_9 = arith.constant 0 : index
    %c0_10 = arith.constant 0 : index
    %12 = vector.load %arg20[%c0_9, %c0_10] : memref<128x256xbf16, #tpu.memory_space<vmem>>, vector<128x256xbf16>
    tpu.vector_store %arg20[%c0_9, %c0_10], %11 {strides = array<i32>} : memref<128x256xbf16, #tpu.memory_space<vmem>>, vector<128x256xbf16>,
    %13 = vector.extract_strided_slice %9 {offsets = [0, 256], sizes = [128, 256], strides = [1, 1]} : vector<128x512xf32> to vector<128x256xf32>
    %14 = arith.truncf %13 : vector<128x256xf32> to vector<128x256xbf16>
    %c0_11 = arith.constant 0 : index
    %c0_12 = arith.constant 0 : index
    %15 = vector.load %arg21[%c0_11, %c0_12] : memref<128x256xbf16, #tpu.memory_space<vmem>>, vector<128x256xbf16>
    tpu.vector_store %arg21[%c0_11, %c0_12], %14 {strides = array<i32>} : memref<128x256xbf16, #tpu.memory_space<vmem>>, vector<128x256xbf16>,
    %c0_13 = arith.constant 0 : index
    %c0_14 = arith.constant 0 : index
    %16 = vector.load %arg6[%c0_13, %c0_14] : memref<256x256xbf16, #tpu.memory_space<vmem>>, vector<256x256xbf16>
    %cst_15 = arith.constant dense<0.000000e+00> : vector<128x256xf32>
    %17 = tpu.matmul %1, %16, %cst_15 {dimension_numbers = #tpu.dot_dimension_numbers<[1], [0], [0], [1], [0, 0, 1, 1], [], []>} : vector<128x256xbf16>, vector<256x256xbf16>, vector<128x256xf32> -> vector<128x256xf32>
    %c0_16 = arith.constant 0 : index
    %c0_17 = arith.constant 0 : index
    %18 = vector.load %arg7[%c0_16, %c0_17] : memref<1x256xf32, #tpu.memory_space<vmem>>, vector<1x256xf32>
    %19 = vector.broadcast %18 : vector<1x256xf32> to vector<128x256xf32>
    %20 = arith.addf %17, %19 : vector<128x256xf32>
    %21 = arith.truncf %20 : vector<128x256xf32> to vector<128x256xbf16>
    %c0_18 = arith.constant 0 : index
    %c0_19 = arith.constant 0 : index
    %22 = vector.load %arg22[%c0_18, %c0_19] : memref<128x256xbf16, #tpu.memory_space<vmem>>, vector<128x256xbf16>
    tpu.vector_store %arg22[%c0_18, %c0_19], %21 {strides = array<i32>} : memref<128x256xbf16, #tpu.memory_space<vmem>>, vector<128x256xbf16>,
    %c0_20 = arith.constant 0 : index
    %c0_21 = arith.constant 0 : index
    %c0_22 = arith.constant 0 : index
    %23 = vector.load %arg3[%c0_20, %c0_21, %c0_22] : memref<1x1x128xf32, #tpu.memory_space<vmem>>, vector<1x1x128xf32>
    %24 = vector.shape_cast %23 : vector<1x1x128xf32> to vector<1x128xf32>
    %25 = vector.shape_cast %24 : vector<1x128xf32> to vector<1x128xf32>
    %26 = vector.broadcast %25 : vector<1x128xf32> to vector<128x128xf32>
    %c0_23 = arith.constant 0 : index
    %c0_24 = arith.constant 0 : index
    %27 = vector.load %arg20[%c0_23, %c0_24] : memref<128x256xbf16, #tpu.memory_space<vmem>>, vector<128x32xbf16>
    %c0_25 = arith.constant 0 : index
    %c0_26 = arith.constant 0 : index
    %28 = vector.load %arg21[%c0_25, %c0_26] : memref<128x256xbf16, #tpu.memory_space<vmem>>, vector<128x32xbf16>
    %cst_27 = arith.constant dense<0.000000e+00> : vector<128x128xf32>
    %29 = tpu.matmul %27, %28, %cst_27 {dimension_numbers = #tpu.dot_dimension_numbers<[1], [1], [0], [0], [0, 0, 1, 0], [], []>} : vector<128x32xbf16>, vector<128x32xbf16>, vector<128x128xf32> -> vector<128x128xf32>
    %30 = arith.addf %29, %26 : vector<128x128xf32>
    %cst_28 = arith.constant dense<0xFF800000> : vector<128xf32>
    %31 = vector.multi_reduction <maximumf>, %30, %cst_28 [1] : vector<128x128xf32> to vector<128xf32>
    %32 = vector.shape_cast %31 : vector<128xf32> to vector<128x1xf32>
    %33 = vector.broadcast %32 : vector<128x1xf32> to vector<128x128xf32>
    %34 = arith.subf %30, %33 : vector<128x128xf32>
    %35 = math.exp %34 : vector<128x128xf32>
    %cst_29 = arith.constant dense<0.000000e+00> : vector<128xf32>
    %36 = vector.multi_reduction <add>, %35, %cst_29 [1] : vector<128x128xf32> to vector<128xf32>
    %37 = vector.shape_cast %36 : vector<128xf32> to vector<128x1xf32>
    %38 = tpu.reciprocal %37 {approx = true} : vector<128x1xf32> -> vector<128x1xf32>
    %39 = vector.broadcast %38 : vector<128x1xf32> to vector<128x128xf32>
    %40 = arith.mulf %35, %39 : vector<128x128xf32>
    %c0_30 = arith.constant 0 : index
    %c0_31 = arith.constant 0 : index
    %c0_32 = arith.constant 0 : index
    %41 = vector.load %arg19[%c0_30, %c0_31, %c0_32] : memref<1x128x128xf32, #tpu.memory_space<vmem>>, vector<1x128x128xf32>
    %42 = vector.shape_cast %41 : vector<1x128x128xf32> to vector<128x128xf32>
    %43 = vector.shape_cast %40 : vector<128x128xf32> to vector<1x128x128xf32>
    tpu.vector_store %arg19[%c0_30, %c0_31, %c0_32], %43 {strides = array<i32>} : memref<1x128x128xf32, #tpu.memory_space<vmem>>, vector<1x128x128xf32>,
    %44 = arith.truncf %40 : vector<128x128xf32> to vector<128x128xbf16>
    %c0_33 = arith.constant 0 : index
    %c0_34 = arith.constant 0 : index
    %45 = vector.load %arg22[%c0_33, %c0_34] : memref<128x256xbf16, #tpu.memory_space<vmem>>, vector<128x32xbf16>
    %cst_35 = arith.constant dense<0.000000e+00> : vector<128x32xf32>
    %46 = tpu.matmul %44, %45, %cst_35 {dimension_numbers = #tpu.dot_dimension_numbers<[1], [0], [0], [1], [0, 0, 1, 1], [], []>} : vector<128x128xbf16>, vector<128x32xbf16>, vector<128x32xf32> -> vector<128x32xf32>
    %47 = arith.truncf %46 : vector<128x32xf32> to vector<128x32xbf16>
    %c0_36 = arith.constant 0 : index
    %c0_37 = arith.constant 0 : index
    %48 = vector.load %arg23[%c0_36, %c0_37] : memref<128x256xbf16, #tpu.memory_space<vmem>>, vector<128x32xbf16>
    tpu.vector_store %arg23[%c0_36, %c0_37], %47 {strides = array<i32>} : memref<128x256xbf16, #tpu.memory_space<vmem>>, vector<128x32xbf16>,
    %c0_38 = arith.constant 0 : index
    %c32 = arith.constant 32 : index
    %49 = vector.load %arg20[%c0_38, %c32] : memref<128x256xbf16, #tpu.memory_space<vmem>>, vector<128x32xbf16>
    %c0_39 = arith.constant 0 : index
    %c32_40 = arith.constant 32 : index
    %50 = vector.load %arg21[%c0_39, %c32_40] : memref<128x256xbf16, #tpu.memory_space<vmem>>, vector<128x32xbf16>
    %cst_41 = arith.constant dense<0.000000e+00> : vector<128x128xf32>
    %51 = tpu.matmul %49, %50, %cst_41 {dimension_numbers = #tpu.dot_dimension_numbers<[1], [1], [0], [0], [0, 0, 1, 0], [], []>} : vector<128x32xbf16>, vector<128x32xbf16>, vector<128x128xf32> -> vector<128x128xf32>
    %52 = arith.addf %51, %26 : vector<128x128xf32>
    %cst_42 = arith.constant dense<0xFF800000> : vector<128xf32>
    %53 = vector.multi_reduction <maximumf>, %52, %cst_42 [1] : vector<128x128xf32> to vector<128xf32>
    %54 = vector.shape_cast %53 : vector<128xf32> to vector<128x1xf32>
    %55 = vector.broadcast %54 : vector<128x1xf32> to vector<128x128xf32>
    %56 = arith.subf %52, %55 : vector<128x128xf32>
    %57 = math.exp %56 : vector<128x128xf32>
    %cst_43 = arith.constant dense<0.000000e+00> : vector<128xf32>
    %58 = vector.multi_reduction <add>, %57, %cst_43 [1] : vector<128x128xf32> to vector<128xf32>
    %59 = vector.shape_cast %58 : vector<128xf32> to vector<128x1xf32>
    %60 = tpu.reciprocal %59 {approx = true} : vector<128x1xf32> -> vector<128x1xf32>
    %61 = vector.broadcast %60 : vector<128x1xf32> to vector<128x128xf32>
    %62 = arith.mulf %57, %61 : vector<128x128xf32>
    %c0_44 = arith.constant 0 : index
    %c0_45 = arith.constant 0 : index
    %c0_46 = arith.constant 0 : index
    %63 = vector.load %arg19[%c0_44, %c0_45, %c0_46] : memref<1x128x128xf32, #tpu.memory_space<vmem>>, vector<1x128x128xf32>
    %64 = vector.shape_cast %63 : vector<1x128x128xf32> to vector<128x128xf32>
    %65 = arith.addf %64, %62 : vector<128x128xf32>
    %c0_47 = arith.constant 0 : index
    %c0_48 = arith.constant 0 : index
    %c0_49 = arith.constant 0 : index
    %66 = vector.load %arg19[%c0_47, %c0_48, %c0_49] : memref<1x128x128xf32, #tpu.memory_space<vmem>>, vector<1x128x128xf32>
    %67 = vector.shape_cast %66 : vector<1x128x128xf32> to vector<128x128xf32>
    %68 = vector.shape_cast %65 : vector<128x128xf32> to vector<1x128x128xf32>
    tpu.vector_store %arg19[%c0_47, %c0_48, %c0_49], %68 {strides = array<i32>} : memref<1x128x128xf32, #tpu.memory_space<vmem>>, vector<1x128x128xf32>,
    %69 = arith.truncf %62 : vector<128x128xf32> to vector<128x128xbf16>
    %c0_50 = arith.constant 0 : index
    %c32_51 = arith.constant 32 : index
    %70 = vector.load %arg22[%c0_50, %c32_51] : memref<128x256xbf16, #tpu.memory_space<vmem>>, vector<128x32xbf16>
    %cst_52 = arith.constant dense<0.000000e+00> : vector<128x32xf32>
    %71 = tpu.matmul %69, %70, %cst_52 {dimension_numbers = #tpu.dot_dimension_numbers<[1], [0], [0], [1], [0, 0, 1, 1], [], []>} : vector<128x128xbf16>, vector<128x32xbf16>, vector<128x32xf32> -> vector<128x32xf32>
    %72 = arith.truncf %71 : vector<128x32xf32> to vector<128x32xbf16>
    %c0_53 = arith.constant 0 : index
    %c32_54 = arith.constant 32 : index
    %73 = vector.load %arg23[%c0_53, %c32_54] : memref<128x256xbf16, #tpu.memory_space<vmem>>, vector<128x32xbf16>
    tpu.vector_store %arg23[%c0_53, %c32_54], %72 {strides = array<i32>} : memref<128x256xbf16, #tpu.memory_space<vmem>>, vector<128x32xbf16>,
    %c0_55 = arith.constant 0 : index
    %c64 = arith.constant 64 : index
    %74 = vector.load %arg20[%c0_55, %c64] : memref<128x256xbf16, #tpu.memory_space<vmem>>, vector<128x32xbf16>
    %c0_56 = arith.constant 0 : index
    %c64_57 = arith.constant 64 : index
    %75 = vector.load %arg21[%c0_56, %c64_57] : memref<128x256xbf16, #tpu.memory_space<vmem>>, vector<128x32xbf16>
    %cst_58 = arith.constant dense<0.000000e+00> : vector<128x128xf32>
    %76 = tpu.matmul %74, %75, %cst_58 {dimension_numbers = #tpu.dot_dimension_numbers<[1], [1], [0], [0], [0, 0, 1, 0], [], []>} : vector<128x32xbf16>, vector<128x32xbf16>, vector<128x128xf32> -> vector<128x128xf32>
    %77 = arith.addf %76, %26 : vector<128x128xf32>
    %cst_59 = arith.constant dense<0xFF800000> : vector<128xf32>
    %78 = vector.multi_reduction <maximumf>, %77, %cst_59 [1] : vector<128x128xf32> to vector<128xf32>
    %79 = vector.shape_cast %78 : vector<128xf32> to vector<128x1xf32>
    %80 = vector.broadcast %79 : vector<128x1xf32> to vector<128x128xf32>
    %81 = arith.subf %77, %80 : vector<128x128xf32>
    %82 = math.exp %81 : vector<128x128xf32>
    %cst_60 = arith.constant dense<0.000000e+00> : vector<128xf32>
    %83 = vector.multi_reduction <add>, %82, %cst_60 [1] : vector<128x128xf32> to vector<128xf32>
    %84 = vector.shape_cast %83 : vector<128xf32> to vector<128x1xf32>
    %85 = tpu.reciprocal %84 {approx = true} : vector<128x1xf32> -> vector<128x1xf32>
    %86 = vector.broadcast %85 : vector<128x1xf32> to vector<128x128xf32>
    %87 = arith.mulf %82, %86 : vector<128x128xf32>
    %c0_61 = arith.constant 0 : index
    %c0_62 = arith.constant 0 : index
    %c0_63 = arith.constant 0 : index
    %88 = vector.load %arg19[%c0_61, %c0_62, %c0_63] : memref<1x128x128xf32, #tpu.memory_space<vmem>>, vector<1x128x128xf32>
    %89 = vector.shape_cast %88 : vector<1x128x128xf32> to vector<128x128xf32>
    %90 = arith.addf %89, %87 : vector<128x128xf32>
    %c0_64 = arith.constant 0 : index
    %c0_65 = arith.constant 0 : index
    %c0_66 = arith.constant 0 : index
    %91 = vector.load %arg19[%c0_64, %c0_65, %c0_66] : memref<1x128x128xf32, #tpu.memory_space<vmem>>, vector<1x128x128xf32>
    %92 = vector.shape_cast %91 : vector<1x128x128xf32> to vector<128x128xf32>
    %93 = vector.shape_cast %90 : vector<128x128xf32> to vector<1x128x128xf32>
    tpu.vector_store %arg19[%c0_64, %c0_65, %c0_66], %93 {strides = array<i32>} : memref<1x128x128xf32, #tpu.memory_space<vmem>>, vector<1x128x128xf32>,
    %94 = arith.truncf %87 : vector<128x128xf32> to vector<128x128xbf16>
    %c0_67 = arith.constant 0 : index
    %c64_68 = arith.constant 64 : index
    %95 = vector.load %arg22[%c0_67, %c64_68] : memref<128x256xbf16, #tpu.memory_space<vmem>>, vector<128x32xbf16>
    %cst_69 = arith.constant dense<0.000000e+00> : vector<128x32xf32>
    %96 = tpu.matmul %94, %95, %cst_69 {dimension_numbers = #tpu.dot_dimension_numbers<[1], [0], [0], [1], [0, 0, 1, 1], [], []>} : vector<128x128xbf16>, vector<128x32xbf16>, vector<128x32xf32> -> vector<128x32xf32>
    %97 = arith.truncf %96 : vector<128x32xf32> to vector<128x32xbf16>
    %c0_70 = arith.constant 0 : index
    %c64_71 = arith.constant 64 : index
    %98 = vector.load %arg23[%c0_70, %c64_71] : memref<128x256xbf16, #tpu.memory_space<vmem>>, vector<128x32xbf16>
    tpu.vector_store %arg23[%c0_70, %c64_71], %97 {strides = array<i32>} : memref<128x256xbf16, #tpu.memory_space<vmem>>, vector<128x32xbf16>,
    %c0_72 = arith.constant 0 : index
    %c96 = arith.constant 96 : index
    %99 = vector.load %arg20[%c0_72, %c96] : memref<128x256xbf16, #tpu.memory_space<vmem>>, vector<128x32xbf16>
    %c0_73 = arith.constant 0 : index
    %c96_74 = arith.constant 96 : index
    %100 = vector.load %arg21[%c0_73, %c96_74] : memref<128x256xbf16, #tpu.memory_space<vmem>>, vector<128x32xbf16>
    %cst_75 = arith.constant dense<0.000000e+00> : vector<128x128xf32>
    %101 = tpu.matmul %99, %100, %cst_75 {dimension_numbers = #tpu.dot_dimension_numbers<[1], [1], [0], [0], [0, 0, 1, 0], [], []>} : vector<128x32xbf16>, vector<128x32xbf16>, vector<128x128xf32> -> vector<128x128xf32>
    %102 = arith.addf %101, %26 : vector<128x128xf32>
    %cst_76 = arith.constant dense<0xFF800000> : vector<128xf32>
    %103 = vector.multi_reduction <maximumf>, %102, %cst_76 [1] : vector<128x128xf32> to vector<128xf32>
    %104 = vector.shape_cast %103 : vector<128xf32> to vector<128x1xf32>
    %105 = vector.broadcast %104 : vector<128x1xf32> to vector<128x128xf32>
    %106 = arith.subf %102, %105 : vector<128x128xf32>
    %107 = math.exp %106 : vector<128x128xf32>
    %cst_77 = arith.constant dense<0.000000e+00> : vector<128xf32>
    %108 = vector.multi_reduction <add>, %107, %cst_77 [1] : vector<128x128xf32> to vector<128xf32>
    %109 = vector.shape_cast %108 : vector<128xf32> to vector<128x1xf32>
    %110 = tpu.reciprocal %109 {approx = true} : vector<128x1xf32> -> vector<128x1xf32>
    %111 = vector.broadcast %110 : vector<128x1xf32> to vector<128x128xf32>
    %112 = arith.mulf %107, %111 : vector<128x128xf32>
    %c0_78 = arith.constant 0 : index
    %c0_79 = arith.constant 0 : index
    %c0_80 = arith.constant 0 : index
    %113 = vector.load %arg19[%c0_78, %c0_79, %c0_80] : memref<1x128x128xf32, #tpu.memory_space<vmem>>, vector<1x128x128xf32>
    %114 = vector.shape_cast %113 : vector<1x128x128xf32> to vector<128x128xf32>
    %115 = arith.addf %114, %112 : vector<128x128xf32>
    %c0_81 = arith.constant 0 : index
    %c0_82 = arith.constant 0 : index
    %c0_83 = arith.constant 0 : index
    %116 = vector.load %arg19[%c0_81, %c0_82, %c0_83] : memref<1x128x128xf32, #tpu.memory_space<vmem>>, vector<1x128x128xf32>
    %117 = vector.shape_cast %116 : vector<1x128x128xf32> to vector<128x128xf32>
    %118 = vector.shape_cast %115 : vector<128x128xf32> to vector<1x128x128xf32>
    tpu.vector_store %arg19[%c0_81, %c0_82, %c0_83], %118 {strides = array<i32>} : memref<1x128x128xf32, #tpu.memory_space<vmem>>, vector<1x128x128xf32>,
    %119 = arith.truncf %112 : vector<128x128xf32> to vector<128x128xbf16>
    %c0_84 = arith.constant 0 : index
    %c96_85 = arith.constant 96 : index
    %120 = vector.load %arg22[%c0_84, %c96_85] : memref<128x256xbf16, #tpu.memory_space<vmem>>, vector<128x32xbf16>
    %cst_86 = arith.constant dense<0.000000e+00> : vector<128x32xf32>
    %121 = tpu.matmul %119, %120, %cst_86 {dimension_numbers = #tpu.dot_dimension_numbers<[1], [0], [0], [1], [0, 0, 1, 1], [], []>} : vector<128x128xbf16>, vector<128x32xbf16>, vector<128x32xf32> -> vector<128x32xf32>
    %122 = arith.truncf %121 : vector<128x32xf32> to vector<128x32xbf16>
    %c0_87 = arith.constant 0 : index
    %c96_88 = arith.constant 96 : index
    %123 = vector.load %arg23[%c0_87, %c96_88] : memref<128x256xbf16, #tpu.memory_space<vmem>>, vector<128x32xbf16>
    tpu.vector_store %arg23[%c0_87, %c96_88], %122 {strides = array<i32>} : memref<128x256xbf16, #tpu.memory_space<vmem>>, vector<128x32xbf16>,
    %c0_89 = arith.constant 0 : index
    %c128 = arith.constant 128 : index
    %124 = vector.load %arg20[%c0_89, %c128] : memref<128x256xbf16, #tpu.memory_space<vmem>>, vector<128x32xbf16>
    %c0_90 = arith.constant 0 : index
    %c128_91 = arith.constant 128 : index
    %125 = vector.load %arg21[%c0_90, %c128_91] : memref<128x256xbf16, #tpu.memory_space<vmem>>, vector<128x32xbf16>
    %cst_92 = arith.constant dense<0.000000e+00> : vector<128x128xf32>
    %126 = tpu.matmul %124, %125, %cst_92 {dimension_numbers = #tpu.dot_dimension_numbers<[1], [1], [0], [0], [0, 0, 1, 0], [], []>} : vector<128x32xbf16>, vector<128x32xbf16>, vector<128x128xf32> -> vector<128x128xf32>
    %127 = arith.addf %126, %26 : vector<128x128xf32>
    %cst_93 = arith.constant dense<0xFF800000> : vector<128xf32>
    %128 = vector.multi_reduction <maximumf>, %127, %cst_93 [1] : vector<128x128xf32> to vector<128xf32>
    %129 = vector.shape_cast %128 : vector<128xf32> to vector<128x1xf32>
    %130 = vector.broadcast %129 : vector<128x1xf32> to vector<128x128xf32>
    %131 = arith.subf %127, %130 : vector<128x128xf32>
    %132 = math.exp %131 : vector<128x128xf32>
    %cst_94 = arith.constant dense<0.000000e+00> : vector<128xf32>
    %133 = vector.multi_reduction <add>, %132, %cst_94 [1] : vector<128x128xf32> to vector<128xf32>
    %134 = vector.shape_cast %133 : vector<128xf32> to vector<128x1xf32>
    %135 = tpu.reciprocal %134 {approx = true} : vector<128x1xf32> -> vector<128x1xf32>
    %136 = vector.broadcast %135 : vector<128x1xf32> to vector<128x128xf32>
    %137 = arith.mulf %132, %136 : vector<128x128xf32>
    %c0_95 = arith.constant 0 : index
    %c0_96 = arith.constant 0 : index
    %c0_97 = arith.constant 0 : index
    %138 = vector.load %arg19[%c0_95, %c0_96, %c0_97] : memref<1x128x128xf32, #tpu.memory_space<vmem>>, vector<1x128x128xf32>
    %139 = vector.shape_cast %138 : vector<1x128x128xf32> to vector<128x128xf32>
    %140 = arith.addf %139, %137 : vector<128x128xf32>
    %c0_98 = arith.constant 0 : index
    %c0_99 = arith.constant 0 : index
    %c0_100 = arith.constant 0 : index
    %141 = vector.load %arg19[%c0_98, %c0_99, %c0_100] : memref<1x128x128xf32, #tpu.memory_space<vmem>>, vector<1x128x128xf32>
    %142 = vector.shape_cast %141 : vector<1x128x128xf32> to vector<128x128xf32>
    %143 = vector.shape_cast %140 : vector<128x128xf32> to vector<1x128x128xf32>
    tpu.vector_store %arg19[%c0_98, %c0_99, %c0_100], %143 {strides = array<i32>} : memref<1x128x128xf32, #tpu.memory_space<vmem>>, vector<1x128x128xf32>,
    %144 = arith.truncf %137 : vector<128x128xf32> to vector<128x128xbf16>
    %c0_101 = arith.constant 0 : index
    %c128_102 = arith.constant 128 : index
    %145 = vector.load %arg22[%c0_101, %c128_102] : memref<128x256xbf16, #tpu.memory_space<vmem>>, vector<128x32xbf16>
    %cst_103 = arith.constant dense<0.000000e+00> : vector<128x32xf32>
    %146 = tpu.matmul %144, %145, %cst_103 {dimension_numbers = #tpu.dot_dimension_numbers<[1], [0], [0], [1], [0, 0, 1, 1], [], []>} : vector<128x128xbf16>, vector<128x32xbf16>, vector<128x32xf32> -> vector<128x32xf32>
    %147 = arith.truncf %146 : vector<128x32xf32> to vector<128x32xbf16>
    %c0_104 = arith.constant 0 : index
    %c128_105 = arith.constant 128 : index
    %148 = vector.load %arg23[%c0_104, %c128_105] : memref<128x256xbf16, #tpu.memory_space<vmem>>, vector<128x32xbf16>
    tpu.vector_store %arg23[%c0_104, %c128_105], %147 {strides = array<i32>} : memref<128x256xbf16, #tpu.memory_space<vmem>>, vector<128x32xbf16>,
    %c0_106 = arith.constant 0 : index
    %c160 = arith.constant 160 : index
    %149 = vector.load %arg20[%c0_106, %c160] : memref<128x256xbf16, #tpu.memory_space<vmem>>, vector<128x32xbf16>
    %c0_107 = arith.constant 0 : index
    %c160_108 = arith.constant 160 : index
    %150 = vector.load %arg21[%c0_107, %c160_108] : memref<128x256xbf16, #tpu.memory_space<vmem>>, vector<128x32xbf16>
    %cst_109 = arith.constant dense<0.000000e+00> : vector<128x128xf32>
    %151 = tpu.matmul %149, %150, %cst_109 {dimension_numbers = #tpu.dot_dimension_numbers<[1], [1], [0], [0], [0, 0, 1, 0], [], []>} : vector<128x32xbf16>, vector<128x32xbf16>, vector<128x128xf32> -> vector<128x128xf32>
    %152 = arith.addf %151, %26 : vector<128x128xf32>
    %cst_110 = arith.constant dense<0xFF800000> : vector<128xf32>
    %153 = vector.multi_reduction <maximumf>, %152, %cst_110 [1] : vector<128x128xf32> to vector<128xf32>
    %154 = vector.shape_cast %153 : vector<128xf32> to vector<128x1xf32>
    %155 = vector.broadcast %154 : vector<128x1xf32> to vector<128x128xf32>
    %156 = arith.subf %152, %155 : vector<128x128xf32>
    %157 = math.exp %156 : vector<128x128xf32>
    %cst_111 = arith.constant dense<0.000000e+00> : vector<128xf32>
    %158 = vector.multi_reduction <add>, %157, %cst_111 [1] : vector<128x128xf32> to vector<128xf32>
    %159 = vector.shape_cast %158 : vector<128xf32> to vector<128x1xf32>
    %160 = tpu.reciprocal %159 {approx = true} : vector<128x1xf32> -> vector<128x1xf32>
    %161 = vector.broadcast %160 : vector<128x1xf32> to vector<128x128xf32>
    %162 = arith.mulf %157, %161 : vector<128x128xf32>
    %c0_112 = arith.constant 0 : index
    %c0_113 = arith.constant 0 : index
    %c0_114 = arith.constant 0 : index
    %163 = vector.load %arg19[%c0_112, %c0_113, %c0_114] : memref<1x128x128xf32, #tpu.memory_space<vmem>>, vector<1x128x128xf32>
    %164 = vector.shape_cast %163 : vector<1x128x128xf32> to vector<128x128xf32>
    %165 = arith.addf %164, %162 : vector<128x128xf32>
    %c0_115 = arith.constant 0 : index
    %c0_116 = arith.constant 0 : index
    %c0_117 = arith.constant 0 : index
    %166 = vector.load %arg19[%c0_115, %c0_116, %c0_117] : memref<1x128x128xf32, #tpu.memory_space<vmem>>, vector<1x128x128xf32>
    %167 = vector.shape_cast %166 : vector<1x128x128xf32> to vector<128x128xf32>
    %168 = vector.shape_cast %165 : vector<128x128xf32> to vector<1x128x128xf32>
    tpu.vector_store %arg19[%c0_115, %c0_116, %c0_117], %168 {strides = array<i32>} : memref<1x128x128xf32, #tpu.memory_space<vmem>>, vector<1x128x128xf32>,
    %169 = arith.truncf %162 : vector<128x128xf32> to vector<128x128xbf16>
    %c0_118 = arith.constant 0 : index
    %c160_119 = arith.constant 160 : index
    %170 = vector.load %arg22[%c0_118, %c160_119] : memref<128x256xbf16, #tpu.memory_space<vmem>>, vector<128x32xbf16>
    %cst_120 = arith.constant dense<0.000000e+00> : vector<128x32xf32>
    %171 = tpu.matmul %169, %170, %cst_120 {dimension_numbers = #tpu.dot_dimension_numbers<[1], [0], [0], [1], [0, 0, 1, 1], [], []>} : vector<128x128xbf16>, vector<128x32xbf16>, vector<128x32xf32> -> vector<128x32xf32>
    %172 = arith.truncf %171 : vector<128x32xf32> to vector<128x32xbf16>
    %c0_121 = arith.constant 0 : index
    %c160_122 = arith.constant 160 : index
    %173 = vector.load %arg23[%c0_121, %c160_122] : memref<128x256xbf16, #tpu.memory_space<vmem>>, vector<128x32xbf16>
    tpu.vector_store %arg23[%c0_121, %c160_122], %172 {strides = array<i32>} : memref<128x256xbf16, #tpu.memory_space<vmem>>, vector<128x32xbf16>,
    %c0_123 = arith.constant 0 : index
    %c192 = arith.constant 192 : index
    %174 = vector.load %arg20[%c0_123, %c192] : memref<128x256xbf16, #tpu.memory_space<vmem>>, vector<128x32xbf16>
    %c0_124 = arith.constant 0 : index
    %c192_125 = arith.constant 192 : index
    %175 = vector.load %arg21[%c0_124, %c192_125] : memref<128x256xbf16, #tpu.memory_space<vmem>>, vector<128x32xbf16>
    %cst_126 = arith.constant dense<0.000000e+00> : vector<128x128xf32>
    %176 = tpu.matmul %174, %175, %cst_126 {dimension_numbers = #tpu.dot_dimension_numbers<[1], [1], [0], [0], [0, 0, 1, 0], [], []>} : vector<128x32xbf16>, vector<128x32xbf16>, vector<128x128xf32> -> vector<128x128xf32>
    %177 = arith.addf %176, %26 : vector<128x128xf32>
    %cst_127 = arith.constant dense<0xFF800000> : vector<128xf32>
    %178 = vector.multi_reduction <maximumf>, %177, %cst_127 [1] : vector<128x128xf32> to vector<128xf32>
    %179 = vector.shape_cast %178 : vector<128xf32> to vector<128x1xf32>
    %180 = vector.broadcast %179 : vector<128x1xf32> to vector<128x128xf32>
    %181 = arith.subf %177, %180 : vector<128x128xf32>
    %182 = math.exp %181 : vector<128x128xf32>
    %cst_128 = arith.constant dense<0.000000e+00> : vector<128xf32>
    %183 = vector.multi_reduction <add>, %182, %cst_128 [1] : vector<128x128xf32> to vector<128xf32>
    %184 = vector.shape_cast %183 : vector<128xf32> to vector<128x1xf32>
    %185 = tpu.reciprocal %184 {approx = true} : vector<128x1xf32> -> vector<128x1xf32>
    %186 = vector.broadcast %185 : vector<128x1xf32> to vector<128x128xf32>
    %187 = arith.mulf %182, %186 : vector<128x128xf32>
    %c0_129 = arith.constant 0 : index
    %c0_130 = arith.constant 0 : index
    %c0_131 = arith.constant 0 : index
    %188 = vector.load %arg19[%c0_129, %c0_130, %c0_131] : memref<1x128x128xf32, #tpu.memory_space<vmem>>, vector<1x128x128xf32>
    %189 = vector.shape_cast %188 : vector<1x128x128xf32> to vector<128x128xf32>
    %190 = arith.addf %189, %187 : vector<128x128xf32>
    %c0_132 = arith.constant 0 : index
    %c0_133 = arith.constant 0 : index
    %c0_134 = arith.constant 0 : index
    %191 = vector.load %arg19[%c0_132, %c0_133, %c0_134] : memref<1x128x128xf32, #tpu.memory_space<vmem>>, vector<1x128x128xf32>
    %192 = vector.shape_cast %191 : vector<1x128x128xf32> to vector<128x128xf32>
    %193 = vector.shape_cast %190 : vector<128x128xf32> to vector<1x128x128xf32>
    tpu.vector_store %arg19[%c0_132, %c0_133, %c0_134], %193 {strides = array<i32>} : memref<1x128x128xf32, #tpu.memory_space<vmem>>, vector<1x128x128xf32>,
    %194 = arith.truncf %187 : vector<128x128xf32> to vector<128x128xbf16>
    %c0_135 = arith.constant 0 : index
    %c192_136 = arith.constant 192 : index
    %195 = vector.load %arg22[%c0_135, %c192_136] : memref<128x256xbf16, #tpu.memory_space<vmem>>, vector<128x32xbf16>
    %cst_137 = arith.constant dense<0.000000e+00> : vector<128x32xf32>
    %196 = tpu.matmul %194, %195, %cst_137 {dimension_numbers = #tpu.dot_dimension_numbers<[1], [0], [0], [1], [0, 0, 1, 1], [], []>} : vector<128x128xbf16>, vector<128x32xbf16>, vector<128x32xf32> -> vector<128x32xf32>
    %197 = arith.truncf %196 : vector<128x32xf32> to vector<128x32xbf16>
    %c0_138 = arith.constant 0 : index
    %c192_139 = arith.constant 192 : index
    %198 = vector.load %arg23[%c0_138, %c192_139] : memref<128x256xbf16, #tpu.memory_space<vmem>>, vector<128x32xbf16>
    tpu.vector_store %arg23[%c0_138, %c192_139], %197 {strides = array<i32>} : memref<128x256xbf16, #tpu.memory_space<vmem>>, vector<128x32xbf16>,
    %c0_140 = arith.constant 0 : index
    %c224 = arith.constant 224 : index
    %199 = vector.load %arg20[%c0_140, %c224] : memref<128x256xbf16, #tpu.memory_space<vmem>>, vector<128x32xbf16>
    %c0_141 = arith.constant 0 : index
    %c224_142 = arith.constant 224 : index
    %200 = vector.load %arg21[%c0_141, %c224_142] : memref<128x256xbf16, #tpu.memory_space<vmem>>, vector<128x32xbf16>
    %cst_143 = arith.constant dense<0.000000e+00> : vector<128x128xf32>
    %201 = tpu.matmul %199, %200, %cst_143 {dimension_numbers = #tpu.dot_dimension_numbers<[1], [1], [0], [0], [0, 0, 1, 0], [], []>} : vector<128x32xbf16>, vector<128x32xbf16>, vector<128x128xf32> -> vector<128x128xf32>
    %202 = arith.addf %201, %26 : vector<128x128xf32>
    %cst_144 = arith.constant dense<0xFF800000> : vector<128xf32>
    %203 = vector.multi_reduction <maximumf>, %202, %cst_144 [1] : vector<128x128xf32> to vector<128xf32>
    %204 = vector.shape_cast %203 : vector<128xf32> to vector<128x1xf32>
    %205 = vector.broadcast %204 : vector<128x1xf32> to vector<128x128xf32>
    %206 = arith.subf %202, %205 : vector<128x128xf32>
    %207 = math.exp %206 : vector<128x128xf32>
    %cst_145 = arith.constant dense<0.000000e+00> : vector<128xf32>
    %208 = vector.multi_reduction <add>, %207, %cst_145 [1] : vector<128x128xf32> to vector<128xf32>
    %209 = vector.shape_cast %208 : vector<128xf32> to vector<128x1xf32>
    %210 = tpu.reciprocal %209 {approx = true} : vector<128x1xf32> -> vector<128x1xf32>
    %211 = vector.broadcast %210 : vector<128x1xf32> to vector<128x128xf32>
    %212 = arith.mulf %207, %211 : vector<128x128xf32>
    %c0_146 = arith.constant 0 : index
    %c0_147 = arith.constant 0 : index
    %c0_148 = arith.constant 0 : index
    %213 = vector.load %arg19[%c0_146, %c0_147, %c0_148] : memref<1x128x128xf32, #tpu.memory_space<vmem>>, vector<1x128x128xf32>
    %214 = vector.shape_cast %213 : vector<1x128x128xf32> to vector<128x128xf32>
    %215 = arith.addf %214, %212 : vector<128x128xf32>
    %c0_149 = arith.constant 0 : index
    %c0_150 = arith.constant 0 : index
    %c0_151 = arith.constant 0 : index
    %216 = vector.load %arg19[%c0_149, %c0_150, %c0_151] : memref<1x128x128xf32, #tpu.memory_space<vmem>>, vector<1x128x128xf32>
    %217 = vector.shape_cast %216 : vector<1x128x128xf32> to vector<128x128xf32>
    %218 = vector.shape_cast %215 : vector<128x128xf32> to vector<1x128x128xf32>
    tpu.vector_store %arg19[%c0_149, %c0_150, %c0_151], %218 {strides = array<i32>} : memref<1x128x128xf32, #tpu.memory_space<vmem>>, vector<1x128x128xf32>,
    %219 = arith.truncf %212 : vector<128x128xf32> to vector<128x128xbf16>
    %c0_152 = arith.constant 0 : index
    %c224_153 = arith.constant 224 : index
    %220 = vector.load %arg22[%c0_152, %c224_153] : memref<128x256xbf16, #tpu.memory_space<vmem>>, vector<128x32xbf16>
    %cst_154 = arith.constant dense<0.000000e+00> : vector<128x32xf32>
    %221 = tpu.matmul %219, %220, %cst_154 {dimension_numbers = #tpu.dot_dimension_numbers<[1], [0], [0], [1], [0, 0, 1, 1], [], []>} : vector<128x128xbf16>, vector<128x32xbf16>, vector<128x32xf32> -> vector<128x32xf32>
    %222 = arith.truncf %221 : vector<128x32xf32> to vector<128x32xbf16>
    %c0_155 = arith.constant 0 : index
    %c224_156 = arith.constant 224 : index
    %223 = vector.load %arg23[%c0_155, %c224_156] : memref<128x256xbf16, #tpu.memory_space<vmem>>, vector<128x32xbf16>
    tpu.vector_store %arg23[%c0_155, %c224_156], %222 {strides = array<i32>} : memref<128x256xbf16, #tpu.memory_space<vmem>>, vector<128x32xbf16>,
    %c0_157 = arith.constant 0 : index
    %c0_158 = arith.constant 0 : index
    %c0_159 = arith.constant 0 : index
    %224 = vector.load %arg19[%c0_157, %c0_158, %c0_159] : memref<1x128x128xf32, #tpu.memory_space<vmem>>, vector<1x128x128xf32>
    %225 = vector.shape_cast %224 : vector<1x128x128xf32> to vector<128x128xf32>
    %cst_160 = arith.constant 1.250000e-01 : f32
    %226 = vector.broadcast %cst_160 : f32 to vector<128x128xf32>
    %227 = arith.mulf %225, %226 : vector<128x128xf32>
    %c0_161 = arith.constant 0 : index
    %c0_162 = arith.constant 0 : index
    %c0_163 = arith.constant 0 : index
    %228 = vector.load %arg19[%c0_161, %c0_162, %c0_163] : memref<1x128x128xf32, #tpu.memory_space<vmem>>, vector<1x128x128xf32>
    %229 = vector.shape_cast %228 : vector<1x128x128xf32> to vector<128x128xf32>
    %230 = vector.shape_cast %227 : vector<128x128xf32> to vector<1x128x128xf32>
    tpu.vector_store %arg19[%c0_161, %c0_162, %c0_163], %230 {strides = array<i32>} : memref<1x128x128xf32, #tpu.memory_space<vmem>>, vector<1x128x128xf32>,
    %c0_164 = arith.constant 0 : index
    %c0_165 = arith.constant 0 : index
    %c0_166 = arith.constant 0 : index
    %231 = vector.load %arg1[%c0_164, %c0_165, %c0_166] : memref<1x128x256xbf16, #tpu.memory_space<vmem>>, vector<1x128x256xbf16>
    %232 = vector.shape_cast %231 : vector<1x128x256xbf16> to vector<128x256xbf16>
    %233 = arith.extf %232 : vector<128x256xbf16> to vector<128x256xf32>
    %c0_167 = arith.constant 0 : index
    %c0_168 = arith.constant 0 : index
    %234 = vector.load %arg23[%c0_167, %c0_168] : memref<128x256xbf16, #tpu.memory_space<vmem>>, vector<128x256xbf16>
    %c0_169 = arith.constant 0 : index
    %c0_170 = arith.constant 0 : index
    %235 = vector.load %arg8[%c0_169, %c0_170] : memref<256x256xbf16, #tpu.memory_space<vmem>>, vector<256x256xbf16>
    %cst_171 = arith.constant dense<0.000000e+00> : vector<128x256xf32>
    %236 = tpu.matmul %234, %235, %cst_171 {dimension_numbers = #tpu.dot_dimension_numbers<[1], [0], [0], [1], [0, 0, 1, 1], [], []>} : vector<128x256xbf16>, vector<256x256xbf16>, vector<128x256xf32> -> vector<128x256xf32>
    %c0_172 = arith.constant 0 : index
    %c0_173 = arith.constant 0 : index
    %237 = vector.load %arg9[%c0_172, %c0_173] : memref<1x256xf32, #tpu.memory_space<vmem>>, vector<1x256xf32>
    %238 = vector.broadcast %237 : vector<1x256xf32> to vector<128x256xf32>
    %239 = arith.addf %236, %238 : vector<128x256xf32>
    %240 = arith.addf %233, %239 : vector<128x256xf32>
    %c0_174 = arith.constant 0 : index
    %c0_175 = arith.constant 0 : index
    %241 = vector.load %arg10[%c0_174, %c0_175] : memref<1x256xf32, #tpu.memory_space<vmem>>, vector<1x256xf32>
    %c0_176 = arith.constant 0 : index
    %c0_177 = arith.constant 0 : index
    %242 = vector.load %arg11[%c0_176, %c0_177] : memref<1x256xf32, #tpu.memory_space<vmem>>, vector<1x256xf32>
    %cst_178 = arith.constant dense<0.000000e+00> : vector<128xf32>
    %243 = vector.multi_reduction <add>, %240, %cst_178 [1] : vector<128x256xf32> to vector<128xf32>
    %244 = vector.shape_cast %243 : vector<128xf32> to vector<128x1xf32>
    %cst_179 = arith.constant 2.560000e+02 : f32
    %245 = vector.broadcast %cst_179 : f32 to vector<128x1xf32>
    %246 = arith.divf %244, %245 : vector<128x1xf32>
    %247 = vector.broadcast %246 : vector<128x1xf32> to vector<128x256xf32>
    %248 = arith.subf %240, %247 : vector<128x256xf32>
    %249 = arith.mulf %248, %248 : vector<128x256xf32>
    %cst_180 = arith.constant dense<0.000000e+00> : vector<128xf32>
    %250 = vector.multi_reduction <add>, %249, %cst_180 [1] : vector<128x256xf32> to vector<128xf32>
    %251 = vector.shape_cast %250 : vector<128xf32> to vector<128x1xf32>
    %cst_181 = arith.constant 2.560000e+02 : f32
    %252 = vector.broadcast %cst_181 : f32 to vector<128x1xf32>
    %253 = arith.divf %251, %252 : vector<128x1xf32>
    %cst_182 = arith.constant 9.99999974E-6 : f32
    %254 = vector.broadcast %cst_182 : f32 to vector<128x1xf32>
    %255 = arith.addf %253, %254 : vector<128x1xf32>
    %256 = math.rsqrt %255 : vector<128x1xf32>
    %257 = vector.broadcast %256 : vector<128x1xf32> to vector<128x256xf32>
    %258 = arith.mulf %248, %257 : vector<128x256xf32>
    %259 = vector.broadcast %241 : vector<1x256xf32> to vector<128x256xf32>
    %260 = arith.mulf %258, %259 : vector<128x256xf32>
    %261 = vector.broadcast %242 : vector<1x256xf32> to vector<128x256xf32>
    %262 = arith.addf %260, %261 : vector<128x256xf32>
    %263 = arith.truncf %262 : vector<128x256xf32> to vector<128x256xbf16>
    %c0_183 = arith.constant 0 : index
    %c0_184 = arith.constant 0 : index
    %264 = vector.load %arg12[%c0_183, %c0_184] : memref<256x512xbf16, #tpu.memory_space<vmem>>, vector<256x512xbf16>
    %cst_185 = arith.constant dense<0.000000e+00> : vector<128x512xf32>
    %265 = tpu.matmul %263, %264, %cst_185 {dimension_numbers = #tpu.dot_dimension_numbers<[1], [0], [0], [1], [0, 0, 1, 1], [], []>} : vector<128x256xbf16>, vector<256x512xbf16>, vector<128x512xf32> -> vector<128x512xf32>
    %c0_186 = arith.constant 0 : index
    %c0_187 = arith.constant 0 : index
    %266 = vector.load %arg13[%c0_186, %c0_187] : memref<1x512xf32, #tpu.memory_space<vmem>>, vector<1x512xf32>
    %267 = vector.broadcast %266 : vector<1x512xf32> to vector<128x512xf32>
    %268 = arith.addf %265, %267 : vector<128x512xf32>
    %cst_188 = arith.constant 0.000000e+00 : f32
    %269 = vector.broadcast %cst_188 : f32 to vector<128x512xf32>
    %270 = arith.maximumf %268, %269 : vector<128x512xf32>
    %271 = arith.truncf %270 : vector<128x512xf32> to vector<128x512xbf16>
    %c0_189 = arith.constant 0 : index
    %c0_190 = arith.constant 0 : index
    %272 = vector.load %arg14[%c0_189, %c0_190] : memref<512x256xbf16, #tpu.memory_space<vmem>>, vector<512x256xbf16>
    %cst_191 = arith.constant dense<0.000000e+00> : vector<128x256xf32>
    %273 = tpu.matmul %271, %272, %cst_191 {dimension_numbers = #tpu.dot_dimension_numbers<[1], [0], [0], [1], [0, 0, 1, 1], [], []>} : vector<128x512xbf16>, vector<512x256xbf16>, vector<128x256xf32> -> vector<128x256xf32>
    %c0_192 = arith.constant 0 : index
    %c0_193 = arith.constant 0 : index
    %274 = vector.load %arg15[%c0_192, %c0_193] : memref<1x256xf32, #tpu.memory_space<vmem>>, vector<1x256xf32>
    %275 = vector.broadcast %274 : vector<1x256xf32> to vector<128x256xf32>
    %276 = arith.addf %273, %275 : vector<128x256xf32>
    %277 = arith.addf %262, %276 : vector<128x256xf32>
    %c0_194 = arith.constant 0 : index
    %c0_195 = arith.constant 0 : index
    %278 = vector.load %arg16[%c0_194, %c0_195] : memref<1x256xf32, #tpu.memory_space<vmem>>, vector<1x256xf32>
    %c0_196 = arith.constant 0 : index
    %c0_197 = arith.constant 0 : index
    %279 = vector.load %arg17[%c0_196, %c0_197] : memref<1x256xf32, #tpu.memory_space<vmem>>, vector<1x256xf32>
    %cst_198 = arith.constant dense<0.000000e+00> : vector<128xf32>
    %280 = vector.multi_reduction <add>, %277, %cst_198 [1] : vector<128x256xf32> to vector<128xf32>
    %281 = vector.shape_cast %280 : vector<128xf32> to vector<128x1xf32>
    %cst_199 = arith.constant 2.560000e+02 : f32
    %282 = vector.broadcast %cst_199 : f32 to vector<128x1xf32>
    %283 = arith.divf %281, %282 : vector<128x1xf32>
    %284 = vector.broadcast %283 : vector<128x1xf32> to vector<128x256xf32>
    %285 = arith.subf %277, %284 : vector<128x256xf32>
    %286 = arith.mulf %285, %285 : vector<128x256xf32>
    %cst_200 = arith.constant dense<0.000000e+00> : vector<128xf32>
    %287 = vector.multi_reduction <add>, %286, %cst_200 [1] : vector<128x256xf32> to vector<128xf32>
    %288 = vector.shape_cast %287 : vector<128xf32> to vector<128x1xf32>
    %cst_201 = arith.constant 2.560000e+02 : f32
    %289 = vector.broadcast %cst_201 : f32 to vector<128x1xf32>
    %290 = arith.divf %288, %289 : vector<128x1xf32>
    %cst_202 = arith.constant 9.99999974E-6 : f32
    %291 = vector.broadcast %cst_202 : f32 to vector<128x1xf32>
    %292 = arith.addf %290, %291 : vector<128x1xf32>
    %293 = math.rsqrt %292 : vector<128x1xf32>
    %294 = vector.broadcast %293 : vector<128x1xf32> to vector<128x256xf32>
    %295 = arith.mulf %285, %294 : vector<128x256xf32>
    %296 = vector.broadcast %278 : vector<1x256xf32> to vector<128x256xf32>
    %297 = arith.mulf %295, %296 : vector<128x256xf32>
    %298 = vector.broadcast %279 : vector<1x256xf32> to vector<128x256xf32>
    %299 = arith.addf %297, %298 : vector<128x256xf32>
    %300 = vector.shape_cast %299 : vector<128x256xf32> to vector<1x128x256xf32>
    %c0_203 = arith.constant 0 : index
    %c0_204 = arith.constant 0 : index
    %c0_205 = arith.constant 0 : index
    %301 = vector.load %arg18[%c0_203, %c0_204, %c0_205] : memref<1x128x256xf32, #tpu.memory_space<vmem>>, vector<1x128x256xf32>
    tpu.vector_store %arg18[%c0_203, %c0_204, %c0_205], %300 {strides = array<i32>} : memref<1x128x256xf32, #tpu.memory_space<vmem>>, vector<1x128x256xf32>,
    return
  }
  func.func @transform_0(%arg0: i32) -> (i32, i32, i32) {
    %c0_i32 = arith.constant 0 : i32
    %c0_i32_0 = arith.constant 0 : i32
    %c0_i32_1 = arith.constant 0 : i32
    return %arg0, %c0_i32, %c0_i32_0 : i32, i32, i32
  }
  func.func @transform_1(%arg0: i32) -> (i32, i32, i32) {
    %c0_i32 = arith.constant 0 : i32
    %c0_i32_0 = arith.constant 0 : i32
    %c0_i32_1 = arith.constant 0 : i32
    return %arg0, %c0_i32, %c0_i32_0 : i32, i32, i32
  }
  func.func @transform_2(%arg0: i32) -> (i32, i32, i32) {
    %c0_i32 = arith.constant 0 : i32
    %c0_i32_0 = arith.constant 0 : i32
    %c0_i32_1 = arith.constant 0 : i32
    return %arg0, %c0_i32, %c0_i32_0 : i32, i32, i32
  }
  func.func @transform_3(%arg0: i32) -> (i32, i32) {
    %c0_i32 = arith.constant 0 : i32
    %c0_i32_0 = arith.constant 0 : i32
    %c0_i32_1 = arith.constant 0 : i32
    return %c0_i32, %c0_i32_0 : i32, i32
  }
  func.func @transform_4(%arg0: i32) -> (i32, i32) {
    %c0_i32 = arith.constant 0 : i32
    %c0_i32_0 = arith.constant 0 : i32
    %c0_i32_1 = arith.constant 0 : i32
    return %c0_i32, %c0_i32_0 : i32, i32
  }
  func.func @transform_5(%arg0: i32) -> (i32, i32) {
    %c0_i32 = arith.constant 0 : i32
    %c0_i32_0 = arith.constant 0 : i32
    %c0_i32_1 = arith.constant 0 : i32
    return %c0_i32, %c0_i32_0 : i32, i32
  }
  func.func @transform_6(%arg0: i32) -> (i32, i32) {
    %c0_i32 = arith.constant 0 : i32
    %c0_i32_0 = arith.constant 0 : i32
    %c0_i32_1 = arith.constant 0 : i32
    return %c0_i32, %c0_i32_0 : i32, i32
  }
  func.func @transform_7(%arg0: i32) -> (i32, i32) {
    %c0_i32 = arith.constant 0 : i32
    %c0_i32_0 = arith.constant 0 : i32
    %c0_i32_1 = arith.constant 0 : i32
    return %c0_i32, %c0_i32_0 : i32, i32
  }
  func.func @transform_8(%arg0: i32) -> (i32, i32) {
    %c0_i32 = arith.constant 0 : i32
    %c0_i32_0 = arith.constant 0 : i32
    %c0_i32_1 = arith.constant 0 : i32
    return %c0_i32, %c0_i32_0 : i32, i32
  }
  func.func @transform_9(%arg0: i32) -> (i32, i32) {
    %c0_i32 = arith.constant 0 : i32
    %c0_i32_0 = arith.constant 0 : i32
    %c0_i32_1 = arith.constant 0 : i32
    return %c0_i32, %c0_i32_0 : i32, i32
  }
  func.func @transform_10(%arg0: i32) -> (i32, i32) {
    %c0_i32 = arith.constant 0 : i32
    %c0_i32_0 = arith.constant 0 : i32
    %c0_i32_1 = arith.constant 0 : i32
    return %c0_i32, %c0_i32_0 : i32, i32
  }
  func.func @transform_11(%arg0: i32) -> (i32, i32) {
    %c0_i32 = arith.constant 0 : i32
    %c0_i32_0 = arith.constant 0 : i32
    %c0_i32_1 = arith.constant 0 : i32
    return %c0_i32, %c0_i32_0 : i32, i32
  }
  func.func @transform_12(%arg0: i32) -> (i32, i32) {
    %c0_i32 = arith.constant 0 : i32
    %c0_i32_0 = arith.constant 0 : i32
    %c0_i32_1 = arith.constant 0 : i32
    return %c0_i32, %c0_i32_0 : i32, i32
  }
  func.func @transform_13(%arg0: i32) -> (i32, i32) {
    %c0_i32 = arith.constant 0 : i32
    %c0_i32_0 = arith.constant 0 : i32
    %c0_i32_1 = arith.constant 0 : i32
    return %c0_i32, %c0_i32_0 : i32, i32
  }
  func.func @transform_14(%arg0: i32) -> (i32, i32) {
    %c0_i32 = arith.constant 0 : i32
    %c0_i32_0 = arith.constant 0 : i32
    %c0_i32_1 = arith.constant 0 : i32
    return %c0_i32, %c0_i32_0 : i32, i32
  }
  func.func @transform_15(%arg0: i32) -> (i32, i32) {
    %c0_i32 = arith.constant 0 : i32
    %c0_i32_0 = arith.constant 0 : i32
    %c0_i32_1 = arith.constant 0 : i32
    return %c0_i32, %c0_i32_0 : i32, i32
  }
  func.func @transform_16(%arg0: i32) -> (i32, i32) {
    %c0_i32 = arith.constant 0 : i32
    %c0_i32_0 = arith.constant 0 : i32
    %c0_i32_1 = arith.constant 0 : i32
    return %c0_i32, %c0_i32_0 : i32, i32
  }
  func.func @transform_17(%arg0: i32) -> (i32, i32, i32) {
    %c0_i32 = arith.constant 0 : i32
    %c0_i32_0 = arith.constant 0 : i32
    %c0_i32_1 = arith.constant 0 : i32
    return %arg0, %c0_i32, %c0_i32_0 : i32, i32, i32
  }
  func.func @transform_18(%arg0: i32) -> (i32, i32, i32) {
    %c0_i32 = arith.constant 0 : i32
    %c0_i32_0 = arith.constant 0 : i32
    %c0_i32_1 = arith.constant 0 : i32
    return %arg0, %c0_i32, %c0_i32_0 : i32, i32, i32
  }
}

</mosaic_0001>

<llo_original>
// kernel: encoder_layer_forward.1
$region0: #{encoder_layer_forward.1}
  #allocation0 [shape = 'u32[]', space=smem, size = 0x4, offset = 0x4, fixed_abs, tag = 'smem constant byte address 0x4 - core index']
  #allocation1 [shape = 'u32[144,128]{1,0:T(1,128)}', space=vmem, size = 0x12000, scoped, tag = 'internal scratch']
  #allocation2 [shape = 'bf16[128,256]{1,0:T(16,128)(2,1)}', space=vmem, size = 0x10000, scoped, tag = 'scratch operand']
  #allocation3 [shape = 'bf16[128,256]{1,0:T(16,128)(2,1)}', space=vmem, size = 0x10000, scoped, tag = 'scratch operand']
  #allocation4 [shape = 'bf16[128,256]{1,0:T(16,128)(2,1)}', space=vmem, size = 0x10000, scoped, tag = 'scratch operand']
  #allocation5 [shape = 'bf16[128,256]{1,0:T(16,128)(2,1)}', space=vmem, size = 0x10000, scoped, tag = 'scratch operand']
  %s0 = inlined_call_operand.vmem [shape: bf16[2,128,256], index: 0, kind: input, shape index: {}]
  %s1 = inlined_call_operand.vmem [shape: bf16[2,128,256], index: 1, kind: input, shape index: {}]
  %s2 = inlined_call_operand.vmem [shape: f32[2,1,128], index: 2, kind: input, shape index: {}]
  %s3 = inlined_call_operand.vmem [shape: bf16[256,512], index: 3, kind: input, shape index: {}]
  %s4 = inlined_call_operand.vmem [shape: f32[1,512], index: 4, kind: input, shape index: {}]
  %s5 = inlined_call_operand.hbm [shape: bf16[256,256], index: 5, kind: input, shape index: {}]
  %s6 = inlined_call_operand.vmem [shape: f32[1,256], index: 6, kind: input, shape index: {}]
  %s7 = inlined_call_operand.hbm [shape: bf16[256,256], index: 7, kind: input, shape index: {}]
  %s8 = inlined_call_operand.hbm [shape: f32[1,256], index: 8, kind: input, shape index: {}]
  %s9 = inlined_call_operand.vmem [shape: f32[1,256], index: 9, kind: input, shape index: {}]
  %s10 = inlined_call_operand.vmem [shape: f32[1,256], index: 10, kind: input, shape index: {}]
  %s11 = inlined_call_operand.vmem [shape: bf16[256,512], index: 11, kind: input, shape index: {}]
  %s12 = inlined_call_operand.hbm [shape: f32[1,512], index: 12, kind: input, shape index: {}]
  %s13 = inlined_call_operand.vmem [shape: bf16[512,256], index: 13, kind: input, shape index: {}]
  %s14 = inlined_call_operand.hbm [shape: f32[1,256], index: 14, kind: input, shape index: {}]
  %s15 = inlined_call_operand.vmem [shape: f32[1,256], index: 15, kind: input, shape index: {}]
  %s16 = inlined_call_operand.vmem [shape: f32[1,256], index: 16, kind: input, shape index: {}]
  %s17 = inlined_call_operand.vmem [shape: f32[2,128,256], index: 17, kind: output, shape index: {0}]
  %s18 = inlined_call_operand.vmem [shape: f32[2,128,128], index: 18, kind: output, shape index: {1}]
  %19 = xla_tuple %s17, %s18
  %s20 = sld [smem:[#allocation0]]
  $region129: #{encoder_layer_forward.1} parent=0
    _
  %s22 = ssub.s32 1, %s20
  %s23 = scalar_select 0, %s22, %s20
  $region1: #{encoder_layer_forward.1} parent=0
    #allocation6 [shape = 'u8[131072]{0}', space=vmem, size = 0x20000, scoped, tag = 'input window, operand 5, single buffered']
    #allocation7 [shape = 's32[2]{0}', space=sflag, size = 0x8, scoped, tag = 'scoped memory for encoder_layer_forward.1']
    #allocation8 [shape = 'u8[131072]{0}', space=vmem, size = 0x20000, scoped, tag = 'input window, operand 7, single buffered']
    #allocation9 [shape = 's32[1]{0}', space=sflag, size = 0x4, scoped, tag = 'scoped memory for encoder_layer_forward.1']
    #allocation10 [shape = 'u8[1024]{0}', space=vmem, size = 0x400, scoped, tag = 'input window, operand 8, single buffered']
    #allocation11 [shape = 'u8[2048]{0}', space=vmem, size = 0x800, scoped, tag = 'input window, operand 12, single buffered']
    #allocation12 [shape = 's32[1]{0}', space=sflag, size = 0x4, scoped, tag = 'scoped memory for encoder_layer_forward.1']
    #allocation13 [shape = 'u8[1024]{0}', space=vmem, size = 0x400, scoped, tag = 'input window, operand 14, single buffered']
    %24 = vsyncpa [#allocation7], 0
    %25 = vsyncpa [#allocation9], 0
    %26 = vsyncpa [#allocation12], 0
    loop: start=0, step=1, limit=4
    $region2: #{encoder_layer_forward.1} parent=1 // loop_pre_header
      _
    $region3: #{encoder_layer_forward.1} parent=1 // loop_header
      %s28 = sphi 0, %s32
      %p29 = scmp.ge.s32.totalorder %s28, 4
      %s38 = sphi 0, %s40
      %s41 = sphi 0, %s38
      %s42 = sphi 0, %s41
      %s58 = sphi 0, %s42
      %s64 = sphi 0, %s66
      %s67 = sphi 0, %s64
      %s68 = sphi 0, %s67
      %s84 = sphi 0, %s68
      %s90 = sphi 0, %s92
      %s93 = sphi 0, %s90
      %s94 = sphi 0, %s93
      %s110 = sphi 0, %s94
      %s114 = sphi 0, %s114
      %s116 = sphi 0, %s114
      %s117 = sphi 0, %s116
      %s131 = sphi 0, %s117
      %s135 = sphi 0, %s135
      %s137 = sphi 0, %s135
      %s138 = sphi 0, %s137
      %s152 = sphi 0, %s138
      %s156 = sphi 0, %s156
      %s158 = sphi 0, %s156
      %s159 = sphi 0, %s158
      %s173 = sphi 0, %s159
      %s177 = sphi 0, %s177
      %s179 = sphi 0, %s177
      %s180 = sphi 0, %s179
      %s194 = sphi 0, %s180
      %s198 = sphi 0, %s198
      %s200 = sphi 0, %s198
      %s201 = sphi 0, %s200
      %s215 = sphi 0, %s201
      %s219 = sphi 0, %s219
      %s221 = sphi 0, %s219
      %s222 = sphi 0, %s221
      %s236 = sphi 0, %s222
      %s240 = sphi 0, %s240
      %s242 = sphi 0, %s240
      %s243 = sphi 0, %s242
      %s257 = sphi 0, %s243
      %s261 = sphi 0, %s261
      %s263 = sphi 0, %s261
      %s264 = sphi 0, %s263
      %s278 = sphi 0, %s264
      %s282 = sphi 0, %s282
      %s284 = sphi 0, %s282
      %s285 = sphi 0, %s284
      %s299 = sphi 0, %s285
      %s303 = sphi 0, %s303
      %s305 = sphi 0, %s303
      %s306 = sphi 0, %s305
      %s320 = sphi 0, %s306
      %s324 = sphi 0, %s324
      %s326 = sphi 0, %s324
      %s327 = sphi 0, %s326
      %s341 = sphi 0, %s327
      %s345 = sphi 0, %s345
      %s347 = sphi 0, %s345
      %s348 = sphi 0, %s347
      %s362 = sphi 0, %s348
      %s366 = sphi 0, %s366
      %s368 = sphi 0, %s366
      %s369 = sphi 0, %s368
      %s383 = sphi 0, %s369
      %s387 = sphi 0, %s387
      %s389 = sphi 0, %s387
      %s390 = sphi 0, %s389
      %s404 = sphi 0, %s390
      %s410 = sphi 0, %s412
      %s413 = sphi 0, %s410
      %s414 = sphi 0, %s413
      %s430 = sphi 0, %s414
      %s436 = sphi 0, %s438
      %s439 = sphi 0, %s436
      %s440 = sphi 0, %s439
      %s456 = sphi 0, %s440
    $region4: #{encoder_layer_forward.1} parent=1 // loop_header_branch
      %31 = sbr.rel (%p29) target = $region8
    $region5: #{encoder_layer_forward.1} parent=1 // loop_body
      %s33 = ssub.s32 %s28, 1
      %s34 = ssub.s32 %s28, 2
      %s35 = sadd.s32 %s28, 1
      %s36 = ssub.s32 %s28, %s35
      %p37 = scmp.eq.s32.totalorder %s36, 0
      %s39 = sadd.s32 %s38, 1
      %s40 = scalar_select %p37, %s38, %s39
      %p43 = pneg %p37
      %p44 = scmp.eq.s32.totalorder %s28, 1
      %p45 = por %p43, %p44
      %p46 = scmp.ne.s32.totalorder %s38, %s41
      %p47 = scmp.eq.s32.totalorder %s28, 0
      %p48 = por %p46, %p47
      %p49 = scmp.ne.s32.totalorder %s38, %s41
      %p50 = scmp.eq.s32.totalorder %s33, 1
      %p51 = por %p49, %p50
      %p52 = scmp.ne.s32.totalorder %s41, %s42
      %p53 = scmp.eq.s32.totalorder %s33, 0
      %p54 = por %p52, %p53
      %p55 = scmp.ne.s32.totalorder %s41, %s42
      %p56 = scmp.eq.s32.totalorder %s34, 1
      %p57 = por %p55, %p56
      %p59 = scmp.ne.s32.totalorder %s42, %s58
      %p60 = scmp.eq.s32.totalorder %s34, 0
      %p61 = por %p59, %p60
      %s62 = ssub.s32 %s28, %s35
      %p63 = scmp.eq.s32.totalorder %s62, 0
      %s65 = sadd.s32 %s64, 1
      %s66 = scalar_select %p63, %s64, %s65
      %p69 = pneg %p63
      %p70 = scmp.eq.s32.totalorder %s28, 1
      %p71 = por %p69, %p70
      %p72 = scmp.ne.s32.totalorder %s64, %s67
      %p73 = scmp.eq.s32.totalorder %s28, 0
      %p74 = por %p72, %p73
      %p75 = scmp.ne.s32.totalorder %s64, %s67
      %p76 = scmp.eq.s32.totalorder %s33, 1
      %p77 = por %p75, %p76
      %p78 = scmp.ne.s32.totalorder %s67, %s68
      %p79 = scmp.eq.s32.totalorder %s33, 0
      %p80 = por %p78, %p79
      %p81 = scmp.ne.s32.totalorder %s67, %s68
      %p82 = scmp.eq.s32.totalorder %s34, 1
      %p83 = por %p81, %p82
      %p85 = scmp.ne.s32.totalorder %s68, %s84
      %p86 = scmp.eq.s32.totalorder %s34, 0
      %p87 = por %p85, %p86
      %s88 = ssub.s32 %s28, %s35
      %p89 = scmp.eq.s32.totalorder %s88, 0
      %s91 = sadd.s32 %s90, 1
      %s92 = scalar_select %p89, %s90, %s91
      %p95 = pneg %p89
      %p96 = scmp.eq.s32.totalorder %s28, 1
      %p97 = por %p95, %p96
      %p98 = scmp.ne.s32.totalorder %s90, %s93
      %p99 = scmp.eq.s32.totalorder %s28, 0
      %p100 = por %p98, %p99
      %p101 = scmp.ne.s32.totalorder %s90, %s93
      %p102 = scmp.eq.s32.totalorder %s33, 1
      %p103 = por %p101, %p102
      %p104 = scmp.ne.s32.totalorder %s93, %s94
      %p105 = scmp.eq.s32.totalorder %s33, 0
      %p106 = por %p104, %p105
      %p107 = scmp.ne.s32.totalorder %s93, %s94
      %p108 = scmp.eq.s32.totalorder %s34, 1
      %p109 = por %p107, %p108
      %p111 = scmp.ne.s32.totalorder %s94, %s110
      %p112 = scmp.eq.s32.totalorder %s34, 0
      %p113 = por %p111, %p112
      %s115 = sadd.s32 %s114, 1
      %p118 = scmp.eq.s32.totalorder %s28, 1
      %p119 = scmp.ne.s32.totalorder %s114, %s116
      %p120 = scmp.eq.s32.totalorder %s28, 0
      %p121 = por %p119, %p120
      %p122 = scmp.ne.s32.totalorder %s114, %s116
      %p123 = scmp.eq.s32.totalorder %s33, 1
      %p124 = por %p122, %p123
      %p125 = scmp.ne.s32.totalorder %s116, %s117
      %p126 = scmp.eq.s32.totalorder %s33, 0
      %p127 = por %p125, %p126
      %p128 = scmp.ne.s32.totalorder %s116, %s117
      %p129 = scmp.eq.s32.totalorder %s34, 1
      %p130 = por %p128, %p129
      %p132 = scmp.ne.s32.totalorder %s117, %s131
      %p133 = scmp.eq.s32.totalorder %s34, 0
      %p134 = por %p132, %p133
      %s136 = sadd.s32 %s135, 1
      %p139 = scmp.eq.s32.totalorder %s28, 1
      %p140 = scmp.ne.s32.totalorder %s135, %s137
      %p141 = scmp.eq.s32.totalorder %s28, 0
      %p142 = por %p140, %p141
      %p143 = scmp.ne.s32.totalorder %s135, %s137
      %p144 = scmp.eq.s32.totalorder %s33, 1
      %p145 = por %p143, %p144
      %p146 = scmp.ne.s32.totalorder %s137, %s138
      %p147 = scmp.eq.s32.totalorder %s33, 0
      %p148 = por %p146, %p147
      %p149 = scmp.ne.s32.totalorder %s137, %s138
      %p150 = scmp.eq.s32.totalorder %s34, 1
      %p151 = por %p149, %p150
      %p153 = scmp.ne.s32.totalorder %s138, %s152
      %p154 = scmp.eq.s32.totalorder %s34, 0
      %p155 = por %p153, %p154
      %s157 = sadd.s32 %s156, 1
      %p160 = scmp.eq.s32.totalorder %s28, 1
      %p161 = scmp.ne.s32.totalorder %s156, %s158
      %p162 = scmp.eq.s32.totalorder %s28, 0
      %p163 = por %p161, %p162
      %p164 = scmp.ne.s32.totalorder %s156, %s158
      %p165 = scmp.eq.s32.totalorder %s33, 1
      %p166 = por %p164, %p165
      %p167 = scmp.ne.s32.totalorder %s158, %s159
      %p168 = scmp.eq.s32.totalorder %s33, 0
      %p169 = por %p167, %p168
      %p170 = scmp.ne.s32.totalorder %s158, %s159
      %p171 = scmp.eq.s32.totalorder %s34, 1
      %p172 = por %p170, %p171
      %p174 = scmp.ne.s32.totalorder %s159, %s173
      %p175 = scmp.eq.s32.totalorder %s34, 0
      %p176 = por %p174, %p175
      %s178 = sadd.s32 %s177, 1
      %p181 = scmp.eq.s32.totalorder %s28, 1
      %p182 = scmp.ne.s32.totalorder %s177, %s179
      %p183 = scmp.eq.s32.totalorder %s28, 0
      %p184 = por %p182, %p183
      %p185 = scmp.ne.s32.totalorder %s177, %s179
      %p186 = scmp.eq.s32.totalorder %s33, 1
      %p187 = por %p185, %p186
      %p188 = scmp.ne.s32.totalorder %s179, %s180
      %p189 = scmp.eq.s32.totalorder %s33, 0
      %p190 = por %p188, %p189
      %p191 = scmp.ne.s32.totalorder %s179, %s180
      %p192 = scmp.eq.s32.totalorder %s34, 1
      %p193 = por %p191, %p192
      %p195 = scmp.ne.s32.totalorder %s180, %s194
      %p196 = scmp.eq.s32.totalorder %s34, 0
      %p197 = por %p195, %p196
      %s199 = sadd.s32 %s198, 1
      %p202 = scmp.eq.s32.totalorder %s28, 1
      %p203 = scmp.ne.s32.totalorder %s198, %s200
      %p204 = scmp.eq.s32.totalorder %s28, 0
      %p205 = por %p203, %p204
      %p206 = scmp.ne.s32.totalorder %s198, %s200
      %p207 = scmp.eq.s32.totalorder %s33, 1
      %p208 = por %p206, %p207
      %p209 = scmp.ne.s32.totalorder %s200, %s201
      %p210 = scmp.eq.s32.totalorder %s33, 0
      %p211 = por %p209, %p210
      %p212 = scmp.ne.s32.totalorder %s200, %s201
      %p213 = scmp.eq.s32.totalorder %s34, 1
      %p214 = por %p212, %p213
      %p216 = scmp.ne.s32.totalorder %s201, %s215
      %p217 = scmp.eq.s32.totalorder %s34, 0
      %p218 = por %p216, %p217
      %s220 = sadd.s32 %s219, 1
      %p223 = scmp.eq.s32.totalorder %s28, 1
      %p224 = scmp.ne.s32.totalorder %s219, %s221
      %p225 = scmp.eq.s32.totalorder %s28, 0
      %p226 = por %p224, %p225
      %p227 = scmp.ne.s32.totalorder %s219, %s221
      %p228 = scmp.eq.s32.totalorder %s33, 1
      %p229 = por %p227, %p228
      %p230 = scmp.ne.s32.totalorder %s221, %s222
      %p231 = scmp.eq.s32.totalorder %s33, 0
      %p232 = por %p230, %p231
      %p233 = scmp.ne.s32.totalorder %s221, %s222
      %p234 = scmp.eq.s32.totalorder %s34, 1
      %p235 = por %p233, %p234
      %p237 = scmp.ne.s32.totalorder %s222, %s236
      %p238 = scmp.eq.s32.totalorder %s34, 0
      %p239 = por %p237, %p238
      %s241 = sadd.s32 %s240, 1
      %p244 = scmp.eq.s32.totalorder %s28, 1
      %p245 = scmp.ne.s32.totalorder %s240, %s242
      %p246 = scmp.eq.s32.totalorder %s28, 0
      %p247 = por %p245, %p246
      %p248 = scmp.ne.s32.totalorder %s240, %s242
      %p249 = scmp.eq.s32.totalorder %s33, 1
      %p250 = por %p248, %p249
      %p251 = scmp.ne.s32.totalorder %s242, %s243
      %p252 = scmp.eq.s32.totalorder %s33, 0
      %p253 = por %p251, %p252
      %p254 = scmp.ne.s32.totalorder %s242, %s243
      %p255 = scmp.eq.s32.totalorder %s34, 1
      %p256 = por %p254, %p255
      %p258 = scmp.ne.s32.totalorder %s243, %s257
      %p259 = scmp.eq.s32.totalorder %s34, 0
      %p260 = por %p258, %p259
      %s262 = sadd.s32 %s261, 1
      %p265 = scmp.eq.s32.totalorder %s28, 1
      %p266 = scmp.ne.s32.totalorder %s261, %s263
      %p267 = scmp.eq.s32.totalorder %s28, 0
      %p268 = por %p266, %p267
      %p269 = scmp.ne.s32.totalorder %s261, %s263
      %p270 = scmp.eq.s32.totalorder %s33, 1
      %p271 = por %p269, %p270
      %p272 = scmp.ne.s32.totalorder %s263, %s264
      %p273 = scmp.eq.s32.totalorder %s33, 0
      %p274 = por %p272, %p273
      %p275 = scmp.ne.s32.totalorder %s263, %s264
      %p276 = scmp.eq.s32.totalorder %s34, 1
      %p277 = por %p275, %p276
      %p279 = scmp.ne.s32.totalorder %s264, %s278
      %p280 = scmp.eq.s32.totalorder %s34, 0
      %p281 = por %p279, %p280
      %s283 = sadd.s32 %s282, 1
      %p286 = scmp.eq.s32.totalorder %s28, 1
      %p287 = scmp.ne.s32.totalorder %s282, %s284
      %p288 = scmp.eq.s32.totalorder %s28, 0
      %p289 = por %p287, %p288
      %p290 = scmp.ne.s32.totalorder %s282, %s284
      %p291 = scmp.eq.s32.totalorder %s33, 1
      %p292 = por %p290, %p291
      %p293 = scmp.ne.s32.totalorder %s284, %s285
      %p294 = scmp.eq.s32.totalorder %s33, 0
      %p295 = por %p293, %p294
      %p296 = scmp.ne.s32.totalorder %s284, %s285
      %p297 = scmp.eq.s32.totalorder %s34, 1
      %p298 = por %p296, %p297
      %p300 = scmp.ne.s32.totalorder %s285, %s299
      %p301 = scmp.eq.s32.totalorder %s34, 0
      %p302 = por %p300, %p301
      %s304 = sadd.s32 %s303, 1
      %p307 = scmp.eq.s32.totalorder %s28, 1
      %p308 = scmp.ne.s32.totalorder %s303, %s305
      %p309 = scmp.eq.s32.totalorder %s28, 0
      %p310 = por %p308, %p309
      %p311 = scmp.ne.s32.totalorder %s303, %s305
      %p312 = scmp.eq.s32.totalorder %s33, 1
      %p313 = por %p311, %p312
      %p314 = scmp.ne.s32.totalorder %s305, %s306
      %p315 = scmp.eq.s32.totalorder %s33, 0
      %p316 = por %p314, %p315
      %p317 = scmp.ne.s32.totalorder %s305, %s306
      %p318 = scmp.eq.s32.totalorder %s34, 1
      %p319 = por %p317, %p318
      %p321 = scmp.ne.s32.totalorder %s306, %s320
      %p322 = scmp.eq.s32.totalorder %s34, 0
      %p323 = por %p321, %p322
      %s325 = sadd.s32 %s324, 1
      %p328 = scmp.eq.s32.totalorder %s28, 1
      %p329 = scmp.ne.s32.totalorder %s324, %s326
      %p330 = scmp.eq.s32.totalorder %s28, 0
      %p331 = por %p329, %p330
      %p332 = scmp.ne.s32.totalorder %s324, %s326
      %p333 = scmp.eq.s32.totalorder %s33, 1
      %p334 = por %p332, %p333
      %p335 = scmp.ne.s32.totalorder %s326, %s327
      %p336 = scmp.eq.s32.totalorder %s33, 0
      %p337 = por %p335, %p336
      %p338 = scmp.ne.s32.totalorder %s326, %s327
      %p339 = scmp.eq.s32.totalorder %s34, 1
      %p340 = por %p338, %p339
      %p342 = scmp.ne.s32.totalorder %s327, %s341
      %p343 = scmp.eq.s32.totalorder %s34, 0
      %p344 = por %p342, %p343
      %s346 = sadd.s32 %s345, 1
      %p349 = scmp.eq.s32.totalorder %s28, 1
      %p350 = scmp.ne.s32.totalorder %s345, %s347
      %p351 = scmp.eq.s32.totalorder %s28, 0
      %p352 = por %p350, %p351
      %p353 = scmp.ne.s32.totalorder %s345, %s347
      %p354 = scmp.eq.s32.totalorder %s33, 1
      %p355 = por %p353, %p354
      %p356 = scmp.ne.s32.totalorder %s347, %s348
      %p357 = scmp.eq.s32.totalorder %s33, 0
      %p358 = por %p356, %p357
      %p359 = scmp.ne.s32.totalorder %s347, %s348
      %p360 = scmp.eq.s32.totalorder %s34, 1
      %p361 = por %p359, %p360
      %p363 = scmp.ne.s32.totalorder %s348, %s362
      %p364 = scmp.eq.s32.totalorder %s34, 0
      %p365 = por %p363, %p364
      %s367 = sadd.s32 %s366, 1
      %p370 = scmp.eq.s32.totalorder %s28, 1
      %p371 = scmp.ne.s32.totalorder %s366, %s368
      %p372 = scmp.eq.s32.totalorder %s28, 0
      %p373 = por %p371, %p372
      %p374 = scmp.ne.s32.totalorder %s366, %s368
      %p375 = scmp.eq.s32.totalorder %s33, 1
      %p376 = por %p374, %p375
      %p377 = scmp.ne.s32.totalorder %s368, %s369
      %p378 = scmp.eq.s32.totalorder %s33, 0
      %p379 = por %p377, %p378
      %p380 = scmp.ne.s32.totalorder %s368, %s369
      %p381 = scmp.eq.s32.totalorder %s34, 1
      %p382 = por %p380, %p381
      %p384 = scmp.ne.s32.totalorder %s369, %s383
      %p385 = scmp.eq.s32.totalorder %s34, 0
      %p386 = por %p384, %p385
      %s388 = sadd.s32 %s387, 1
      %p391 = scmp.eq.s32.totalorder %s28, 1
      %p392 = scmp.ne.s32.totalorder %s387, %s389
      %p393 = scmp.eq.s32.totalorder %s28, 0
      %p394 = por %p392, %p393
      %p395 = scmp.ne.s32.totalorder %s387, %s389
      %p396 = scmp.eq.s32.totalorder %s33, 1
      %p397 = por %p395, %p396
      %p398 = scmp.ne.s32.totalorder %s389, %s390
      %p399 = scmp.eq.s32.totalorder %s33, 0
      %p400 = por %p398, %p399
      %p401 = scmp.ne.s32.totalorder %s389, %s390
      %p402 = scmp.eq.s32.totalorder %s34, 1
      %p403 = por %p401, %p402
      %p405 = scmp.ne.s32.totalorder %s390, %s404
      %p406 = scmp.eq.s32.totalorder %s34, 0
      %p407 = por %p405, %p406
      %s408 = ssub.s32 %s28, %s35
      %p409 = scmp.eq.s32.totalorder %s408, 0
      %s411 = sadd.s32 %s410, 1
      %s412 = scalar_select %p409, %s410, %s411
      %p415 = pneg %p409
      %p416 = scmp.eq.s32.totalorder %s28, 1
      %p417 = por %p415, %p416
      %p418 = scmp.ne.s32.totalorder %s410, %s413
      %p419 = scmp.eq.s32.totalorder %s28, 0
      %p420 = por %p418, %p419
      %p421 = scmp.ne.s32.totalorder %s410, %s413
      %p422 = scmp.eq.s32.totalorder %s33, 1
      %p423 = por %p421, %p422
      %p424 = scmp.ne.s32.totalorder %s413, %s414
      %p425 = scmp.eq.s32.totalorder %s33, 0
      %p426 = por %p424, %p425
      %p427 = scmp.ne.s32.totalorder %s413, %s414
      %p428 = scmp.eq.s32.totalorder %s34, 1
      %p429 = por %p427, %p428
      %p431 = scmp.ne.s32.totalorder %s414, %s430
      %p432 = scmp.eq.s32.totalorder %s34, 0
      %p433 = por %p431, %p432
      %s434 = ssub.s32 %s28, %s35
      %p435 = scmp.eq.s32.totalorder %s434, 0
      %s437 = sadd.s32 %s436, 1
      %s438 = scalar_select %p435, %s436, %s437
      %p441 = pneg %p435
      %p442 = scmp.eq.s32.totalorder %s28, 1
      %p443 = por %p441, %p442
      %p444 = scmp.ne.s32.totalorder %s436, %s439
      %p445 = scmp.eq.s32.totalorder %s28, 0
      %p446 = por %p444, %p445
      %p447 = scmp.ne.s32.totalorder %s436, %s439
      %p448 = scmp.eq.s32.totalorder %s33, 1
      %p449 = por %p447, %p448
      %p450 = scmp.ne.s32.totalorder %s439, %s440
      %p451 = scmp.eq.s32.totalorder %s33, 0
      %p452 = por %p450, %p451
      %p453 = scmp.ne.s32.totalorder %s439, %s440
      %p454 = scmp.eq.s32.totalorder %s34, 1
      %p455 = por %p453, %p454
      %p457 = scmp.ne.s32.totalorder %s440, %s456
      %p458 = scmp.eq.s32.totalorder %s34, 0
      %p459 = por %p457, %p458
      %p460 = scmp.le.s32.totalorder 1, %s28
      %p461 = scmp.lt.s32.totalorder %s28, 3
      %p462 = pnand %p460, %p461
      %p463 = pneg %p462
      // Predicated region
      $region9: #{encoder_layer_forward.1} parent=5 // pred_check
        _
      $region10: #{encoder_layer_forward.1} parent=5 // pred_check_branch
        %465 = sbr.rel (%p462) target = $region12
      $region11: #{encoder_layer_forward.1} parent=5 // pred_region
        %s466 = ssub.s32 %s28, 1
        // Predicated region
        $region13: #{encoder_layer_forward.1} parent=11 // pred_check
          %p467 = pneg %p127
        $region14: #{encoder_layer_forward.1} parent=11 // pred_check_branch
          %469 = sbr.rel (%p467) target = $region16
        $region15: #{encoder_layer_forward.1} parent=11 // pred_region
          _
        $region16: #{encoder_layer_forward.1} parent=11 // pred_fallthru
          _
        // Predicated region
        $region17: #{encoder_layer_forward.1} parent=11 // pred_check
          %p470 = pneg %p148
        $region18: #{encoder_layer_forward.1} parent=11 // pred_check_branch
          %472 = sbr.rel (%p470) target = $region20
        $region19: #{encoder_layer_forward.1} parent=11 // pred_region
          _
        $region20: #{encoder_layer_forward.1} parent=11 // pred_fallthru
          _
        // Predicated region
        $region21: #{encoder_layer_forward.1} parent=11 // pred_check
          %p473 = pneg %p169
        $region22: #{encoder_layer_forward.1} parent=11 // pred_check_branch
          %475 = sbr.rel (%p473) target = $region24
        $region23: #{encoder_layer_forward.1} parent=11 // pred_region
          %s477 = ssub.s32 4096, 4096
          %478 = vsyncadd [#allocation7], %s477
          %s479 = sshll.u32 [#allocation6], 4
          %s480 = int_to_ptr.vmem [resolvable:$true] %s479
          %485 = dma.hbm_to_vmem [thread:$0]  %s5, 4096, %s480, [#allocation7], 128, 128, 8
        $region24: #{encoder_layer_forward.1} parent=11 // pred_fallthru
          _
        // Predicated region
        $region25: #{encoder_layer_forward.1} parent=11 // pred_check
          %p486 = pneg %p190
        $region26: #{encoder_layer_forward.1} parent=11 // pred_check_branch
          %488 = sbr.rel (%p486) target = $region28
        $region27: #{encoder_layer_forward.1} parent=11 // pred_region
          _
        $region28: #{encoder_layer_forward.1} parent=11 // pred_fallthru
          _
        // Predicated region
        $region29: #{encoder_layer_forward.1} parent=11 // pred_check
          %p489 = pneg %p211
        $region30: #{encoder_layer_forward.1} parent=11 // pred_check_branch
          %491 = sbr.rel (%p489) target = $region32
        $region31: #{encoder_layer_forward.1} parent=11 // pred_region
          %s493 = ssub.s32 4096, 4096
          %494 = vsyncadd [#allocation9], %s493
          %s495 = sshll.u32 [#allocation8], 4
          %s496 = int_to_ptr.vmem [resolvable:$true] %s495
          %501 = dma.hbm_to_vmem [thread:$0]  %s7, 4096, %s496, [#allocation9], 128, 128, 8
        $region32: #{encoder_layer_forward.1} parent=11 // pred_fallthru
          _
        // Predicated region
        $region33: #{encoder_layer_forward.1} parent=11 // pred_check
          %p502 = pneg %p232
        $region34: #{encoder_layer_forward.1} parent=11 // pred_check_branch
          %504 = sbr.rel (%p502) target = $region36
        $region35: #{encoder_layer_forward.1} parent=11 // pred_region
          %s506 = ssub.s32 32, 32
          %507 = vsyncadd [#allocation9], %s506
          %s509 = sshll.u32 [#allocation10], 4
          %s510 = int_to_ptr.vmem [resolvable:$true] %s509
          %512 = dma.hbm_to_vmem [thread:$0]  %s8, 32, %s510, [#allocation9]
        $region36: #{encoder_layer_forward.1} parent=11 // pred_fallthru
          _
        // Predicated region
        $region37: #{encoder_layer_forward.1} parent=11 // pred_check
          %p513 = pneg %p253
        $region38: #{encoder_layer_forward.1} parent=11 // pred_check_branch
          %515 = sbr.rel (%p513) target = $region40
        $region39: #{encoder_layer_forward.1} parent=11 // pred_region
          _
        $region40: #{encoder_layer_forward.1} parent=11 // pred_fallthru
          _
        // Predicated region
        $region41: #{encoder_layer_forward.1} parent=11 // pred_check
          %p516 = pneg %p274
        $region42: #{encoder_layer_forward.1} parent=11 // pred_check_branch
          %518 = sbr.rel (%p516) target = $region44
        $region43: #{encoder_layer_forward.1} parent=11 // pred_region
          _
        $region44: #{encoder_layer_forward.1} parent=11 // pred_fallthru
          _
        // Predicated region
        $region45: #{encoder_layer_forward.1} parent=11 // pred_check
          %p519 = pneg %p295
        $region46: #{encoder_layer_forward.1} parent=11 // pred_check_branch
          %521 = sbr.rel (%p519) target = $region48
        $region47: #{encoder_layer_forward.1} parent=11 // pred_region
          _
        $region48: #{encoder_layer_forward.1} parent=11 // pred_fallthru
          _
        // Predicated region
        $region49: #{encoder_layer_forward.1} parent=11 // pred_check
          %p522 = pneg %p316
        $region50: #{encoder_layer_forward.1} parent=11 // pred_check_branch
          %524 = sbr.rel (%p522) target = $region52
        $region51: #{encoder_layer_forward.1} parent=11 // pred_region
          %s526 = ssub.s32 64, 64
          %527 = vsyncadd [#allocation12], %s526
          %s529 = sshll.u32 [#allocation11], 4
          %s530 = int_to_ptr.vmem [resolvable:$true] %s529
          %532 = dma.hbm_to_vmem [thread:$0]  %s12, 64, %s530, [#allocation12]
        $region52: #{encoder_layer_forward.1} parent=11 // pred_fallthru
          _
        // Predicated region
        $region53: #{encoder_layer_forward.1} parent=11 // pred_check
          %p533 = pneg %p337
        $region54: #{encoder_layer_forward.1} parent=11 // pred_check_branch
          %535 = sbr.rel (%p533) target = $region56
        $region55: #{encoder_layer_forward.1} parent=11 // pred_region
          _
        $region56: #{encoder_layer_forward.1} parent=11 // pred_fallthru
          _
        // Predicated region
        $region57: #{encoder_layer_forward.1} parent=11 // pred_check
          %p536 = pneg %p358
        $region58: #{encoder_layer_forward.1} parent=11 // pred_check_branch
          %538 = sbr.rel (%p536) target = $region60
        $region59: #{encoder_layer_forward.1} parent=11 // pred_region
          %s540 = ssub.s32 32, 32
          %541 = vsyncadd [#allocation12], %s540
          %s543 = sshll.u32 [#allocation13], 4
          %s544 = int_to_ptr.vmem [resolvable:$true] %s543
          %546 = dma.hbm_to_vmem [thread:$0]  %s14, 32, %s544, [#allocation12]
        $region60: #{encoder_layer_forward.1} parent=11 // pred_fallthru
          _
        // Predicated region
        $region61: #{encoder_layer_forward.1} parent=11 // pred_check
          %p547 = pneg %p379
        $region62: #{encoder_layer_forward.1} parent=11 // pred_check_branch
          %549 = sbr.rel (%p547) target = $region64
        $region63: #{encoder_layer_forward.1} parent=11 // pred_region
          _
        $region64: #{encoder_layer_forward.1} parent=11 // pred_fallthru
          _
        // Predicated region
        $region65: #{encoder_layer_forward.1} parent=11 // pred_check
          %p550 = pneg %p400
        $region66: #{encoder_layer_forward.1} parent=11 // pred_check_branch
          %552 = sbr.rel (%p550) target = $region68
        $region67: #{encoder_layer_forward.1} parent=11 // pred_region
          _
        $region68: #{encoder_layer_forward.1} parent=11 // pred_fallthru
          _
      $region12: #{encoder_layer_forward.1} parent=5 // pred_fallthru
        _
      %p553 = scmp.lt.s32.totalorder %s28, 2
      // Predicated region
      $region69: #{encoder_layer_forward.1} parent=5 // pred_check
        %p554 = pneg %p553
      $region70: #{encoder_layer_forward.1} parent=5 // pred_check_branch
        %556 = sbr.rel (%p554) target = $region72
      $region71: #{encoder_layer_forward.1} parent=5 // pred_region
        // Predicated region
        $region73: #{encoder_layer_forward.1} parent=71 // pred_check
          %p557 = pneg %p48
        $region74: #{encoder_layer_forward.1} parent=71 // pred_check_branch
          %559 = sbr.rel (%p557) target = $region76
        $region75: #{encoder_layer_forward.1} parent=71 // pred_region
          %p560 = scmp.lt.s32.totalorder %s28, 1
          %s561 = scalar_select %p560, %s28, 1
          %s562 = smul.addr %s561, 32
          %s563 = smul.addr %s562, 4
          %s564 = scalar_lea.vmem %s0, %s563
        $region76: #{encoder_layer_forward.1} parent=71 // pred_fallthru
          _
        // Predicated region
        $region77: #{encoder_layer_forward.1} parent=71 // pred_check
          %p565 = pneg %p74
        $region78: #{encoder_layer_forward.1} parent=71 // pred_check_branch
          %567 = sbr.rel (%p565) target = $region80
        $region79: #{encoder_layer_forward.1} parent=71 // pred_region
          %p568 = scmp.lt.s32.totalorder %s28, 1
          %s569 = scalar_select %p568, %s28, 1
          %s570 = smul.addr %s569, 32
          %s571 = smul.addr %s570, 4
          %s572 = scalar_lea.vmem %s1, %s571
        $region80: #{encoder_layer_forward.1} parent=71 // pred_fallthru
          _
        // Predicated region
        $region81: #{encoder_layer_forward.1} parent=71 // pred_check
          %p573 = pneg %p100
        $region82: #{encoder_layer_forward.1} parent=71 // pred_check_branch
          %575 = sbr.rel (%p573) target = $region84
        $region83: #{encoder_layer_forward.1} parent=71 // pred_region
          %p576 = scmp.lt.s32.totalorder %s28, 1
          %s577 = scalar_select %p576, %s28, 1
          %s578 = scalar_lea.vmem %s2, %s577
        $region84: #{encoder_layer_forward.1} parent=71 // pred_fallthru
          _
      $region72: #{encoder_layer_forward.1} parent=5 // pred_fallthru
        _
      %p579 = scmp.le.s32.totalorder 1, %s28
      %p580 = scmp.lt.s32.totalorder %s28, 3
      %p581 = pnand %p579, %p580
      %p582 = pneg %p581
      // Predicated region
      $region85: #{encoder_layer_forward.1} parent=5 // pred_check
        _
      $region86: #{encoder_layer_forward.1} parent=5 // pred_check_branch
        %584 = sbr.rel (%p581) target = $region88
      $region87: #{encoder_layer_forward.1} parent=5 // pred_region
        %s585 = ssub.s32 %s28, 1
        // Predicated region
        $region89: #{encoder_layer_forward.1} parent=87 // pred_check
          %p586 = pneg %p169
        $region90: #{encoder_layer_forward.1} parent=87 // pred_check_branch
          %588 = sbr.rel (%p586) target = $region92
        $region91: #{encoder_layer_forward.1} parent=87 // pred_region
          %589 = dma.done [#allocation7], 4096
        $region92: #{encoder_layer_forward.1} parent=87 // pred_fallthru
          _
        // Predicated region
        $region93: #{encoder_layer_forward.1} parent=87 // pred_check
          %p590 = pneg %p211
        $region94: #{encoder_layer_forward.1} parent=87 // pred_check_branch
          %592 = sbr.rel (%p590) target = $region96
        $region95: #{encoder_layer_forward.1} parent=87 // pred_region
          %593 = dma.done [#allocation9], 4096
        $region96: #{encoder_layer_forward.1} parent=87 // pred_fallthru
          _
        // Predicated region
        $region97: #{encoder_layer_forward.1} parent=87 // pred_check
          %p594 = pneg %p232
        $region98: #{encoder_layer_forward.1} parent=87 // pred_check_branch
          %596 = sbr.rel (%p594) target = $region100
        $region99: #{encoder_layer_forward.1} parent=87 // pred_region
          %597 = dma.done [#allocation9], 32
        $region100: #{encoder_layer_forward.1} parent=87 // pred_fallthru
          _
        // Predicated region
        $region101: #{encoder_layer_forward.1} parent=87 // pred_check
          %p598 = pneg %p316
        $region102: #{encoder_layer_forward.1} parent=87 // pred_check_branch
          %600 = sbr.rel (%p598) target = $region104
        $region103: #{encoder_layer_forward.1} parent=87 // pred_region
          %601 = dma.done [#allocation12], 64
        $region104: #{encoder_layer_forward.1} parent=87 // pred_fallthru
          _
        // Predicated region
        $region105: #{encoder_layer_forward.1} parent=87 // pred_check
          %p602 = pneg %p358
        $region106: #{encoder_layer_forward.1} parent=87 // pred_check_branch
          %604 = sbr.rel (%p602) target = $region108
        $region107: #{encoder_layer_forward.1} parent=87 // pred_region
          %605 = dma.done [#allocation12], 32
        $region108: #{encoder_layer_forward.1} parent=87 // pred_fallthru
          _
        %p606 = scmp.lt.s32.totalorder %s33, 1
        %s607 = scalar_select %p606, %s33, 1
        %s608 = smul.addr %s607, 32
        %s609 = smul.addr %s608, 4
        %s610 = scalar_lea.vmem %s0, %s609
        %p611 = pneg %p54
        %p612 = pneg %p51
        %p613 = scmp.lt.s32.totalorder %s33, 1
        %s614 = scalar_select %p613, %s33, 1
        %s615 = smul.addr %s614, 32
        %s616 = smul.addr %s615, 4
        %s617 = scalar_lea.vmem %s1, %s616
        %p618 = pneg %p80
        %p619 = pneg %p77
        %p620 = scmp.lt.s32.totalorder %s33, 1
        %s621 = scalar_select %p620, %s33, 1
        %s622 = scalar_lea.vmem %s2, %s621
        %p623 = pneg %p106
        %p624 = pneg %p103
        %p625 = pneg %p127
        %p626 = pneg %p124
        %p627 = pneg %p148
        %p628 = pneg %p145
        %p629 = pneg %p169
        %p630 = pneg %p166
        %p631 = pneg %p190
        %p632 = pneg %p187
        %p633 = pneg %p211
        %p634 = pneg %p208
        %p635 = pneg %p232
        %p636 = pneg %p229
        %p637 = pneg %p253
        %p638 = pneg %p250
        %p639 = pneg %p274
        %p640 = pneg %p271
        %p641 = pneg %p295
        %p642 = pneg %p292
        %p643 = pneg %p316
        %p644 = pneg %p313
        %p645 = pneg %p337
        %p646 = pneg %p334
        %p647 = pneg %p358
        %p648 = pneg %p355
        %p649 = pneg %p379
        %p650 = pneg %p376
        %p651 = pneg %p400
        %p652 = pneg %p397
        %p653 = pneg %p426
        %p654 = pneg %p423
        %p655 = scmp.lt.s32.totalorder %s33, 1
        %s656 = scalar_select %p655, %s33, 1
        %s657 = smul.addr %s656, 32
        %s658 = smul.addr %s657, 8
        %s659 = scalar_lea.vmem %s17, %s658
        %p660 = pneg %p452
        %p661 = pneg %p449
        %p662 = scmp.lt.s32.totalorder %s33, 1
        %s663 = scalar_select %p662, %s33, 1
        %s664 = smul.addr %s663, 16
        %s665 = smul.addr %s664, 8
        %s666 = scalar_lea.vmem %s18, %s665
        %p667 = scmp.lt.s32.totalorder %s33, 1
        %s668 = scalar_select %p667, %s33, 1
        %s669 = smul.addr %s668, 32
        %s670 = smul.addr %s669, 4
        %s671 = scalar_lea.vmem %s0, %s670
        %p672 = scmp.lt.s32.totalorder %s33, 1
        %s673 = scalar_select %p672, %s33, 1
        %s674 = smul.addr %s673, 32
        %s675 = smul.addr %s674, 4
        %s676 = scalar_lea.vmem %s1, %s675
        %p677 = scmp.lt.s32.totalorder %s33, 1
        %s678 = scalar_select %p677, %s33, 1
        %s679 = scalar_lea.vmem %s2, %s678
        %p680 = scmp.lt.s32.totalorder %s33, 1
        %s681 = scalar_select %p680, %s33, 1
        %s682 = smul.addr %s681, 32
        %s683 = smul.addr %s682, 8
        %s684 = scalar_lea.vmem %s17, %s683
        %p685 = scmp.lt.s32.totalorder %s33, 1
        %s686 = scalar_select %p685, %s33, 1
        %s687 = smul.addr %s686, 16
        %s688 = smul.addr %s687, 8
        %s689 = scalar_lea.vmem %s18, %s688
        %v691 = vld [vmem:[%s671] sm:$0xff]
        %v692 = vld [vmem:[%s671 + $0x8] sm:$0xff]
        %v693 = vld [vmem:[%s671 + $0x10] sm:$0xff]
        %v694 = vld [vmem:[%s671 + $0x18] sm:$0xff]
        %v695 = vld [vmem:[%s671 + $0x20] sm:$0xff]
        %v696 = vld [vmem:[%s671 + $0x28] sm:$0xff]
        %v697 = vld [vmem:[%s671 + $0x30] sm:$0xff]
        %v698 = vld [vmem:[%s671 + $0x38] sm:$0xff]
        %v699 = vld [vmem:[%s671 + $0x40] sm:$0xff]
        %v700 = vld [vmem:[%s671 + $0x48] sm:$0xff]
        %v701 = vld [vmem:[%s671 + $0x50] sm:$0xff]
        %v702 = vld [vmem:[%s671 + $0x58] sm:$0xff]
        %v703 = vld [vmem:[%s671 + $0x60] sm:$0xff]
        %v704 = vld [vmem:[%s671 + $0x68] sm:$0xff]
        %v705 = vld [vmem:[%s671 + $0x70] sm:$0xff]
        %v706 = vld [vmem:[%s671 + $0x78] sm:$0xff]
        %v707 = vld [vmem:[%s676] sm:$0xff]
        %v708 = vld [vmem:[%s676 + $0x8] sm:$0xff]
        %v709 = vld [vmem:[%s676 + $0x10] sm:$0xff]
        %v710 = vld [vmem:[%s676 + $0x18] sm:$0xff]
        %v711 = vld [vmem:[%s676 + $0x20] sm:$0xff]
        %v712 = vld [vmem:[%s676 + $0x28] sm:$0xff]
        %v713 = vld [vmem:[%s676 + $0x30] sm:$0xff]
        %v714 = vld [vmem:[%s676 + $0x38] sm:$0xff]
        %v715 = vld [vmem:[%s676 + $0x40] sm:$0xff]
        %v716 = vld [vmem:[%s676 + $0x48] sm:$0xff]
        %v717 = vld [vmem:[%s676 + $0x50] sm:$0xff]
        %v718 = vld [vmem:[%s676 + $0x58] sm:$0xff]
        %v719 = vld [vmem:[%s676 + $0x60] sm:$0xff]
        %v720 = vld [vmem:[%s676 + $0x68] sm:$0xff]
        %v721 = vld [vmem:[%s676 + $0x70] sm:$0xff]
        %v722 = vld [vmem:[%s676 + $0x78] sm:$0xff]
        %v723 = vadd.bf16 %v691, %v707
        %v724 = vadd.bf16 %v692, %v708
        %v725 = vadd.bf16 %v693, %v709
        %v726 = vadd.bf16 %v694, %v710
        %v727 = vadd.bf16 %v695, %v711
        %v728 = vadd.bf16 %v696, %v712
        %v729 = vadd.bf16 %v697, %v713
        %v730 = vadd.bf16 %v698, %v714
        %v731 = vadd.bf16 %v699, %v715
        %v732 = vadd.bf16 %v700, %v716
        %v733 = vadd.bf16 %v701, %v717
        %v734 = vadd.bf16 %v702, %v718
        %v735 = vadd.bf16 %v703, %v719
        %v736 = vadd.bf16 %v704, %v720
        %v737 = vadd.bf16 %v705, %v721
        %v738 = vadd.bf16 %v706, %v722
        %v739 = vld [vmem:[%s3] sm:$0xff]
        %v740 = vld [vmem:[%s3 + $0x8] sm:$0xff]
        %v741 = vld [vmem:[%s3 + $0x10] sm:$0xff]
        %v742 = vld [vmem:[%s3 + $0x18] sm:$0xff]
        %v743 = vld [vmem:[%s3 + $0x20] sm:$0xff]
        %v744 = vld [vmem:[%s3 + $0x28] sm:$0xff]
        %v745 = vld [vmem:[%s3 + $0x30] sm:$0xff]
        %v746 = vld [vmem:[%s3 + $0x38] sm:$0xff]
        %v747 = vld [vmem:[%s3 + $0x40] sm:$0xff]
        %v748 = vld [vmem:[%s3 + $0x48] sm:$0xff]
        %v749 = vld [vmem:[%s3 + $0x50] sm:$0xff]
        %v750 = vld [vmem:[%s3 + $0x58] sm:$0xff]
        %v751 = vld [vmem:[%s3 + $0x60] sm:$0xff]
        %v752 = vld [vmem:[%s3 + $0x68] sm:$0xff]
        %v753 = vld [vmem:[%s3 + $0x70] sm:$0xff]
        %v754 = vld [vmem:[%s3 + $0x78] sm:$0xff]
        %v755 = vld [vmem:[%s3 + $0x80] sm:$0xff]
        %v756 = vld [vmem:[%s3 + $0x88] sm:$0xff]
        %v757 = vld [vmem:[%s3 + $0x90] sm:$0xff]
        %v758 = vld [vmem:[%s3 + $0x98] sm:$0xff]
        %v759 = vld [vmem:[%s3 + $0xa0] sm:$0xff]
        %v760 = vld [vmem:[%s3 + $0xa8] sm:$0xff]
        %v761 = vld [vmem:[%s3 + $0xb0] sm:$0xff]
        %v762 = vld [vmem:[%s3 + $0xb8] sm:$0xff]
        %v763 = vld [vmem:[%s3 + $0xc0] sm:$0xff]
        %v764 = vld [vmem:[%s3 + $0xc8] sm:$0xff]
        %v765 = vld [vmem:[%s3 + $0xd0] sm:$0xff]
        %v766 = vld [vmem:[%s3 + $0xd8] sm:$0xff]
        %v767 = vld [vmem:[%s3 + $0xe0] sm:$0xff]
        %v768 = vld [vmem:[%s3 + $0xe8] sm:$0xff]
        %v769 = vld [vmem:[%s3 + $0xf0] sm:$0xff]
        %v770 = vld [vmem:[%s3 + $0xf8] sm:$0xff]
        %v771 = vld [vmem:[%s3 + $0x100] sm:$0xff]
        %v772 = vld [vmem:[%s3 + $0x108] sm:$0xff]
        %v773 = vld [vmem:[%s3 + $0x110] sm:$0xff]
        %v774 = vld [vmem:[%s3 + $0x118] sm:$0xff]
        %v775 = vld [vmem:[%s3 + $0x120] sm:$0xff]
        %v776 = vld [vmem:[%s3 + $0x128] sm:$0xff]
        %v777 = vld [vmem:[%s3 + $0x130] sm:$0xff]
        %v778 = vld [vmem:[%s3 + $0x138] sm:$0xff]
        %v779 = vld [vmem:[%s3 + $0x140] sm:$0xff]
        %v780 = vld [vmem:[%s3 + $0x148] sm:$0xff]
        %v781 = vld [vmem:[%s3 + $0x150] sm:$0xff]
        %v782 = vld [vmem:[%s3 + $0x158] sm:$0xff]
        %v783 = vld [vmem:[%s3 + $0x160] sm:$0xff]
        %v784 = vld [vmem:[%s3 + $0x168] sm:$0xff]
        %v785 = vld [vmem:[%s3 + $0x170] sm:$0xff]
        %v786 = vld [vmem:[%s3 + $0x178] sm:$0xff]
        %v787 = vld [vmem:[%s3 + $0x180] sm:$0xff]
        %v788 = vld [vmem:[%s3 + $0x188] sm:$0xff]
        %v789 = vld [vmem:[%s3 + $0x190] sm:$0xff]
        %v790 = vld [vmem:[%s3 + $0x198] sm:$0xff]
        %v791 = vld [vmem:[%s3 + $0x1a0] sm:$0xff]
        %v792 = vld [vmem:[%s3 + $0x1a8] sm:$0xff]
        %v793 = vld [vmem:[%s3 + $0x1b0] sm:$0xff]
        %v794 = vld [vmem:[%s3 + $0x1b8] sm:$0xff]
        %v795 = vld [vmem:[%s3 + $0x1c0] sm:$0xff]
        %v796 = vld [vmem:[%s3 + $0x1c8] sm:$0xff]
        %v797 = vld [vmem:[%s3 + $0x1d0] sm:$0xff]
        %v798 = vld [vmem:[%s3 + $0x1d8] sm:$0xff]
        %v799 = vld [vmem:[%s3 + $0x1e0] sm:$0xff]
        %v800 = vld [vmem:[%s3 + $0x1e8] sm:$0xff]
        %v801 = vld [vmem:[%s3 + $0x1f0] sm:$0xff]
        %v802 = vld [vmem:[%s3 + $0x1f8] sm:$0xff]
        %v803 = vld [vmem:[%s4] sm:$0xf]
        %v805 = vlaneseq
        %v806 = vshrl.u32 %v805, 7
        %v807 = vsub.s32 0, %v806
        %v808 = vrot.slane %v803, %v807
        %v809 = vlaneseq
        %v810 = vshrl.u32 %v809, 7
        %v811 = vsub.s32 1, %v810
        %v812 = vrot.slane %v803, %v811
        %v813 = vlaneseq
        %v814 = vshrl.u32 %v813, 7
        %v815 = vsub.s32 2, %v814
        %v816 = vrot.slane %v803, %v815
        %v817 = vlaneseq
        %v818 = vshrl.u32 %v817, 7
        %v819 = vsub.s32 3, %v818
        %v820 = vrot.slane %v803, %v819
        %v841 = vunpack.c.l.b16 %v723
        %v842 = vunpack.c.h.b16 %v723
        %v843 = vunpack.c.l.b16 %v724
        %v844 = vunpack.c.h.b16 %v724
        %v845 = vunpack.c.l.b16 %v725
        %v846 = vunpack.c.h.b16 %v725
        %v847 = vunpack.c.l.b16 %v726
        %v848 = vunpack.c.h.b16 %v726
        %v849 = vunpack.c.l.b16 %v727
        %v850 = vunpack.c.h.b16 %v727
        %v851 = vunpack.c.l.b16 %v728
        %v852 = vunpack.c.h.b16 %v728
        %v853 = vunpack.c.l.b16 %v729
        %v854 = vunpack.c.h.b16 %v729
        %v855 = vunpack.c.l.b16 %v730
        %v856 = vunpack.c.h.b16 %v730
        %v857 = vunpack.c.l.b16 %v731
        %v858 = vunpack.c.h.b16 %v731
        %v859 = vunpack.c.l.b16 %v732
        %v860 = vunpack.c.h.b16 %v732
        %v861 = vunpack.c.l.b16 %v733
        %v862 = vunpack.c.h.b16 %v733
        %v863 = vunpack.c.l.b16 %v734
        %v864 = vunpack.c.h.b16 %v734
        %v865 = vunpack.c.l.b16 %v735
        %v866 = vunpack.c.h.b16 %v735
        %v867 = vunpack.c.l.b16 %v736
        %v868 = vunpack.c.h.b16 %v736
        %v869 = vunpack.c.l.b16 %v737
        %v870 = vunpack.c.h.b16 %v737
        %v871 = vunpack.c.l.b16 %v738
        %v872 = vunpack.c.h.b16 %v738
        %v873 = vpack.c.b16 %v843, %v841
        %v874 = vpack.c.b16 %v844, %v842
        %v875 = vpack.c.b16 %v847, %v845
        %v876 = vpack.c.b16 %v848, %v846
        %v877 = vpack.c.b16 %v851, %v849
        %v878 = vpack.c.b16 %v852, %v850
        %v879 = vpack.c.b16 %v855, %v853
        %v880 = vpack.c.b16 %v856, %v854
        %v881 = vpack.c.b16 %v859, %v857
        %v882 = vpack.c.b16 %v860, %v858
        %v883 = vpack.c.b16 %v863, %v861
        %v884 = vpack.c.b16 %v864, %v862
        %v885 = vpack.c.b16 %v867, %v865
        %v886 = vpack.c.b16 %v868, %v866
        %v887 = vpack.c.b16 %v871, %v869
        %v888 = vpack.c.b16 %v872, %v870
        %v969 = vunpack.c.l.b16 %v739
        %v970 = vunpack.c.h.b16 %v739
        %v971 = vunpack.c.l.b16 %v740
        %v972 = vunpack.c.h.b16 %v740
        %v973 = vunpack.c.l.b16 %v741
        %v974 = vunpack.c.h.b16 %v741
        %v975 = vunpack.c.l.b16 %v742
        %v976 = vunpack.c.h.b16 %v742
        %v977 = vunpack.c.l.b16 %v743
        %v978 = vunpack.c.h.b16 %v743
        %v979 = vunpack.c.l.b16 %v744
        %v980 = vunpack.c.h.b16 %v744
        %v981 = vunpack.c.l.b16 %v745
        %v982 = vunpack.c.h.b16 %v745
        %v983 = vunpack.c.l.b16 %v746
        %v984 = vunpack.c.h.b16 %v746
        %v985 = vunpack.c.l.b16 %v747
        %v986 = vunpack.c.h.b16 %v747
        %v987 = vunpack.c.l.b16 %v748
        %v988 = vunpack.c.h.b16 %v748
        %v989 = vunpack.c.l.b16 %v749
        %v990 = vunpack.c.h.b16 %v749
        %v991 = vunpack.c.l.b16 %v750
        %v992 = vunpack.c.h.b16 %v750
        %v993 = vunpack.c.l.b16 %v751
        %v994 = vunpack.c.h.b16 %v751
        %v995 = vunpack.c.l.b16 %v752
        %v996 = vunpack.c.h.b16 %v752
        %v997 = vunpack.c.l.b16 %v753
        %v998 = vunpack.c.h.b16 %v753
        %v999 = vunpack.c.l.b16 %v754
        %v1000 = vunpack.c.h.b16 %v754
        %v1001 = vunpack.c.l.b16 %v755
        %v1002 = vunpack.c.h.b16 %v755
        %v1003 = vunpack.c.l.b16 %v756
        %v1004 = vunpack.c.h.b16 %v756
        %v1005 = vunpack.c.l.b16 %v757
        %v1006 = vunpack.c.h.b16 %v757
        %v1007 = vunpack.c.l.b16 %v758
        %v1008 = vunpack.c.h.b16 %v758
        %v1009 = vunpack.c.l.b16 %v759
        %v1010 = vunpack.c.h.b16 %v759
        %v1011 = vunpack.c.l.b16 %v760
        %v1012 = vunpack.c.h.b16 %v760
        %v1013 = vunpack.c.l.b16 %v761
        %v1014 = vunpack.c.h.b16 %v761
        %v1015 = vunpack.c.l.b16 %v762
        %v1016 = vunpack.c.h.b16 %v762
        %v1017 = vunpack.c.l.b16 %v763
        %v1018 = vunpack.c.h.b16 %v763
        %v1019 = vunpack.c.l.b16 %v764
        %v1020 = vunpack.c.h.b16 %v764
        %v1021 = vunpack.c.l.b16 %v765
        %v1022 = vunpack.c.h.b16 %v765
        %v1023 = vunpack.c.l.b16 %v766
        %v1024 = vunpack.c.h.b16 %v766
        %v1025 = vunpack.c.l.b16 %v767
        %v1026 = vunpack.c.h.b16 %v767
        %v1027 = vunpack.c.l.b16 %v768
        %v1028 = vunpack.c.h.b16 %v768
        %v1029 = vunpack.c.l.b16 %v769
        %v1030 = vunpack.c.h.b16 %v769
        %v1031 = vunpack.c.l.b16 %v770
        %v1032 = vunpack.c.h.b16 %v770
        %v1033 = vunpack.c.l.b16 %v771
        %v1034 = vunpack.c.h.b16 %v771
        %v1035 = vunpack.c.l.b16 %v772
        %v1036 = vunpack.c.h.b16 %v772
        %v1037 = vunpack.c.l.b16 %v773
        %v1038 = vunpack.c.h.b16 %v773
        %v1039 = vunpack.c.l.b16 %v774
        %v1040 = vunpack.c.h.b16 %v774
        %v1041 = vunpack.c.l.b16 %v775
        %v1042 = vunpack.c.h.b16 %v775
        %v1043 = vunpack.c.l.b16 %v776
        %v1044 = vunpack.c.h.b16 %v776
        %v1045 = vunpack.c.l.b16 %v777
        %v1046 = vunpack.c.h.b16 %v777
        %v1047 = vunpack.c.l.b16 %v778
        %v1048 = vunpack.c.h.b16 %v778
        %v1049 = vunpack.c.l.b16 %v779
        %v1050 = vunpack.c.h.b16 %v779
        %v1051 = vunpack.c.l.b16 %v780
        %v1052 = vunpack.c.h.b16 %v780
        %v1053 = vunpack.c.l.b16 %v781
        %v1054 = vunpack.c.h.b16 %v781
        %v1055 = vunpack.c.l.b16 %v782
        %v1056 = vunpack.c.h.b16 %v782
        %v1057 = vunpack.c.l.b16 %v783
        %v1058 = vunpack.c.h.b16 %v783
        %v1059 = vunpack.c.l.b16 %v784
        %v1060 = vunpack.c.h.b16 %v784
        %v1061 = vunpack.c.l.b16 %v785
        %v1062 = vunpack.c.h.b16 %v785
        %v1063 = vunpack.c.l.b16 %v786
        %v1064 = vunpack.c.h.b16 %v786
        %v1065 = vunpack.c.l.b16 %v787
        %v1066 = vunpack.c.h.b16 %v787
        %v1067 = vunpack.c.l.b16 %v788
        %v1068 = vunpack.c.h.b16 %v788
        %v1069 = vunpack.c.l.b16 %v789
        %v1070 = vunpack.c.h.b16 %v789
        %v1071 = vunpack.c.l.b16 %v790
        %v1072 = vunpack.c.h.b16 %v790
        %v1073 = vunpack.c.l.b16 %v791
        %v1074 = vunpack.c.h.b16 %v791
        %v1075 = vunpack.c.l.b16 %v792
        %v1076 = vunpack.c.h.b16 %v792
        %v1077 = vunpack.c.l.b16 %v793
        %v1078 = vunpack.c.h.b16 %v793
        %v1079 = vunpack.c.l.b16 %v794
        %v1080 = vunpack.c.h.b16 %v794
        %v1081 = vunpack.c.l.b16 %v795
        %v1082 = vunpack.c.h.b16 %v795
        %v1083 = vunpack.c.l.b16 %v796
        %v1084 = vunpack.c.h.b16 %v796
        %v1085 = vunpack.c.l.b16 %v797
        %v1086 = vunpack.c.h.b16 %v797
        %v1087 = vunpack.c.l.b16 %v798
        %v1088 = vunpack.c.h.b16 %v798
        %v1089 = vunpack.c.l.b16 %v799
        %v1090 = vunpack.c.h.b16 %v799
        %v1091 = vunpack.c.l.b16 %v800
        %v1092 = vunpack.c.h.b16 %v800
        %v1093 = vunpack.c.l.b16 %v801
        %v1094 = vunpack.c.h.b16 %v801
        %v1095 = vunpack.c.l.b16 %v802
        %v1096 = vunpack.c.h.b16 %v802
        %v1097 = vpack.c.b16 %v973, %v969
        %v1098 = vpack.c.b16 %v974, %v970
        %v1099 = vpack.c.b16 %v975, %v971
        %v1100 = vpack.c.b16 %v976, %v972
        %v1101 = vpack.c.b16 %v981, %v977
        %v1102 = vpack.c.b16 %v982, %v978
        %v1103 = vpack.c.b16 %v983, %v979
        %v1104 = vpack.c.b16 %v984, %v980
        %v1105 = vpack.c.b16 %v989, %v985
        %v1106 = vpack.c.b16 %v990, %v986
        %v1107 = vpack.c.b16 %v991, %v987
        %v1108 = vpack.c.b16 %v992, %v988
        %v1109 = vpack.c.b16 %v997, %v993
        %v1110 = vpack.c.b16 %v998, %v994
        %v1111 = vpack.c.b16 %v999, %v995
        %v1112 = vpack.c.b16 %v1000, %v996
        %v1113 = vpack.c.b16 %v1005, %v1001
        %v1114 = vpack.c.b16 %v1006, %v1002
        %v1115 = vpack.c.b16 %v1007, %v1003
        %v1116 = vpack.c.b16 %v1008, %v1004
        %v1117 = vpack.c.b16 %v1013, %v1009
        %v1118 = vpack.c.b16 %v1014, %v1010
        %v1119 = vpack.c.b16 %v1015, %v1011
        %v1120 = vpack.c.b16 %v1016, %v1012
        %v1121 = vpack.c.b16 %v1021, %v1017
        %v1122 = vpack.c.b16 %v1022, %v1018
        %v1123 = vpack.c.b16 %v1023, %v1019
        %v1124 = vpack.c.b16 %v1024, %v1020
        %v1125 = vpack.c.b16 %v1029, %v1025
        %v1126 = vpack.c.b16 %v1030, %v1026
        %v1127 = vpack.c.b16 %v1031, %v1027
        %v1128 = vpack.c.b16 %v1032, %v1028
        %v1129 = vpack.c.b16 %v1037, %v1033
        %v1130 = vpack.c.b16 %v1038, %v1034
        %v1131 = vpack.c.b16 %v1039, %v1035
        %v1132 = vpack.c.b16 %v1040, %v1036
        %v1133 = vpack.c.b16 %v1045, %v1041
        %v1134 = vpack.c.b16 %v1046, %v1042
        %v1135 = vpack.c.b16 %v1047, %v1043
        %v1136 = vpack.c.b16 %v1048, %v1044
        %v1137 = vpack.c.b16 %v1053, %v1049
        %v1138 = vpack.c.b16 %v1054, %v1050
        %v1139 = vpack.c.b16 %v1055, %v1051
        %v1140 = vpack.c.b16 %v1056, %v1052
        %v1141 = vpack.c.b16 %v1061, %v1057
        %v1142 = vpack.c.b16 %v1062, %v1058
        %v1143 = vpack.c.b16 %v1063, %v1059
        %v1144 = vpack.c.b16 %v1064, %v1060
        %v1145 = vpack.c.b16 %v1069, %v1065
        %v1146 = vpack.c.b16 %v1070, %v1066
        %v1147 = vpack.c.b16 %v1071, %v1067
        %v1148 = vpack.c.b16 %v1072, %v1068
        %v1149 = vpack.c.b16 %v1077, %v1073
        %v1150 = vpack.c.b16 %v1078, %v1074
        %v1151 = vpack.c.b16 %v1079, %v1075
        %v1152 = vpack.c.b16 %v1080, %v1076
        %v1153 = vpack.c.b16 %v1085, %v1081
        %v1154 = vpack.c.b16 %v1086, %v1082
        %v1155 = vpack.c.b16 %v1087, %v1083
        %v1156 = vpack.c.b16 %v1088, %v1084
        %v1157 = vpack.c.b16 %v1093, %v1089
        %v1158 = vpack.c.b16 %v1094, %v1090
        %v1159 = vpack.c.b16 %v1095, %v1091
        %v1160 = vpack.c.b16 %v1096, %v1092
        %1225 = vmatprep.subr.bf16.mxu0 %v1098
        %1226 = vmatpush1.bf16.msra.mxu0 %v1097
        %1227 = vmatprep.subr.bf16.mxu0 %v1102
        %1228 = vmatpush1.bf16.msra.mxu0 %v1101
        %1229 = vmatprep.subr.bf16.mxu0 %v1106
        %1230 = vmatpush1.bf16.msra.mxu0 %v1105
        %1231 = vmatprep.subr.bf16.mxu0 %v1110
        %1232 = vmatpush1.bf16.msra.mxu0 %v1109
        %1233 = vmatprep.subr.bf16.mxu0 %v1114
        %1234 = vmatpush1.bf16.msra.mxu0 %v1113
        %1235 = vmatprep.subr.bf16.mxu0 %v1118
        %1236 = vmatpush1.bf16.msra.mxu0 %v1117
        %1237 = vmatprep.subr.bf16.mxu0 %v1122
        %1238 = vmatpush1.bf16.msra.mxu0 %v1121
        %1239 = vmatprep.subr.bf16.mxu0 %v1126
        %1240 = vmatpush1.bf16.msra.mxu0 %v1125
        %1241 = vmatprep.subr.bf16.mxu0 %v1130
        %1242 = vmatpush1.bf16.msra.mxu0 %v1129
        %1243 = vmatprep.subr.bf16.mxu0 %v1134
        %1244 = vmatpush1.bf16.msra.mxu0 %v1133
        %1245 = vmatprep.subr.bf16.mxu0 %v1138
        %1246 = vmatpush1.bf16.msra.mxu0 %v1137
        %1247 = vmatprep.subr.bf16.mxu0 %v1142
        %1248 = vmatpush1.bf16.msra.mxu0 %v1141
        %1249 = vmatprep.subr.bf16.mxu0 %v1146
        %1250 = vmatpush1.bf16.msra.mxu0 %v1145
        %1251 = vmatprep.subr.bf16.mxu0 %v1150
        %1252 = vmatpush1.bf16.msra.mxu0 %v1149
        %1253 = vmatprep.subr.bf16.mxu0 %v1154
        %1254 = vmatpush1.bf16.msra.mxu0 %v1153
        %1255 = vmatprep.subr.bf16.mxu0 %v1158
        %1256 = vmatpush1.bf16.msra.mxu0 %v1157
        %1257 = vmatprep.mubr.bf16.mxu0 %v874
        %1258 = vmatmul.mubr.bf16.gmra.mrb[0].mxu0 %v873
        %v1259 = vpop.f32.mrb[0].mxu0
        %v1260 = vadd.f32 %v808, %v1259
        %v1261 = vpop.f32.mrb[0].mxu0
        %v1262 = vadd.f32 %v812, %v1261
        %v1263 = vpop.f32.mrb[0].mxu0
        %v1264 = vadd.f32 %v808, %v1263
        %v1265 = vpop.f32.mrb[0].mxu0
        %v1266 = vadd.f32 %v812, %v1265
        %1267 = vmatprep.mubr.bf16.mxu0 %v876
        %1268 = vmatmul.mubr.bf16.gmra.mrb[0].mxu0 %v875
        %v1269 = vpop.f32.mrb[0].mxu0
        %v1270 = vadd.f32 %v808, %v1269
        %v1271 = vpop.f32.mrb[0].mxu0
        %v1272 = vadd.f32 %v812, %v1271
        %v1273 = vpop.f32.mrb[0].mxu0
        %v1274 = vadd.f32 %v808, %v1273
        %v1275 = vpop.f32.mrb[0].mxu0
        %v1276 = vadd.f32 %v812, %v1275
        %1277 = vmatprep.mubr.bf16.mxu0 %v878
        %1278 = vmatmul.mubr.bf16.gmra.mrb[0].mxu0 %v877
        %v1279 = vpop.f32.mrb[0].mxu0
        %v1280 = vadd.f32 %v808, %v1279
        %v1281 = vpop.f32.mrb[0].mxu0
        %v1282 = vadd.f32 %v812, %v1281
        %v1283 = vpop.f32.mrb[0].mxu0
        %v1284 = vadd.f32 %v808, %v1283
        %v1285 = vpop.f32.mrb[0].mxu0
        %v1286 = vadd.f32 %v812, %v1285
        %1287 = vmatprep.mubr.bf16.mxu0 %v880
        %1288 = vmatmul.mubr.bf16.gmra.mrb[0].mxu0 %v879
        %v1289 = vpop.f32.mrb[0].mxu0
        %v1290 = vadd.f32 %v808, %v1289
        %v1291 = vpop.f32.mrb[0].mxu0
        %v1292 = vadd.f32 %v812, %v1291
        %v1293 = vpop.f32.mrb[0].mxu0
        %v1294 = vadd.f32 %v808, %v1293
        %v1295 = vpop.f32.mrb[0].mxu0
        %v1296 = vadd.f32 %v812, %v1295
        %1297 = vmatprep.mubr.bf16.mxu0 %v882
        %1298 = vmatmul.mubr.bf16.gmra.mrb[0].mxu0 %v881
        %v1299 = vpop.f32.mrb[0].mxu0
        %v1300 = vadd.f32 %v808, %v1299
        %v1301 = vpop.f32.mrb[0].mxu0
        %v1302 = vadd.f32 %v812, %v1301
        %v1303 = vpop.f32.mrb[0].mxu0
        %v1304 = vadd.f32 %v808, %v1303
        %v1305 = vpop.f32.mrb[0].mxu0
        %v1306 = vadd.f32 %v812, %v1305
        %1307 = vmatprep.mubr.bf16.mxu0 %v884
        %1308 = vmatmul.mubr.bf16.gmra.mrb[0].mxu0 %v883
        %v1309 = vpop.f32.mrb[0].mxu0
        %v1310 = vadd.f32 %v808, %v1309
        %v1311 = vpop.f32.mrb[0].mxu0
        %v1312 = vadd.f32 %v812, %v1311
        %v1313 = vpop.f32.mrb[0].mxu0
        %v1314 = vadd.f32 %v808, %v1313
        %v1315 = vpop.f32.mrb[0].mxu0
        %v1316 = vadd.f32 %v812, %v1315
        %1317 = vmatprep.mubr.bf16.mxu0 %v886
        %1318 = vmatmul.mubr.bf16.gmra.mrb[0].mxu0 %v885
        %v1319 = vpop.f32.mrb[0].mxu0
        %v1320 = vadd.f32 %v808, %v1319
        %v1321 = vpop.f32.mrb[0].mxu0
        %v1322 = vadd.f32 %v812, %v1321
        %v1323 = vpop.f32.mrb[0].mxu0
        %v1324 = vadd.f32 %v808, %v1323
        %v1325 = vpop.f32.mrb[0].mxu0
        %v1326 = vadd.f32 %v812, %v1325
        %1327 = vmatprep.mubr.bf16.mxu0 %v888
        %1328 = vmatmul.mubr.bf16.gmra.mrb[0].mxu0 %v887
        %v1329 = vpop.f32.mrb[0].mxu0
        %v1330 = vadd.f32 %v808, %v1329
        %v1331 = vpop.f32.mrb[0].mxu0
        %v1332 = vadd.f32 %v812, %v1331
        %v1333 = vpop.f32.mrb[0].mxu0
        %v1334 = vadd.f32 %v808, %v1333
        %v1335 = vpop.f32.mrb[0].mxu0
        %v1336 = vadd.f32 %v812, %v1335
        %1337 = vdwg.mxu0
        %1338 = vmatprep.subr.bf16.mxu0 %v1100
        %1339 = vmatpush1.bf16.msra.mxu0 %v1099
        %1340 = vmatprep.subr.bf16.mxu0 %v1104
        %1341 = vmatpush1.bf16.msra.mxu0 %v1103
        %1342 = vmatprep.subr.bf16.mxu0 %v1108
        %1343 = vmatpush1.bf16.msra.mxu0 %v1107
        %1344 = vmatprep.subr.bf16.mxu0 %v1112
        %1345 = vmatpush1.bf16.msra.mxu0 %v1111
        %1346 = vmatprep.subr.bf16.mxu0 %v1116
        %1347 = vmatpush1.bf16.msra.mxu0 %v1115
        %1348 = vmatprep.subr.bf16.mxu0 %v1120
        %1349 = vmatpush1.bf16.msra.mxu0 %v1119
        %1350 = vmatprep.subr.bf16.mxu0 %v1124
        %1351 = vmatpush1.bf16.msra.mxu0 %v1123
        %1352 = vmatprep.subr.bf16.mxu0 %v1128
        %1353 = vmatpush1.bf16.msra.mxu0 %v1127
        %1354 = vmatprep.subr.bf16.mxu0 %v1132
        %1355 = vmatpush1.bf16.msra.mxu0 %v1131
        %1356 = vmatprep.subr.bf16.mxu0 %v1136
        %1357 = vmatpush1.bf16.msra.mxu0 %v1135
        %1358 = vmatprep.subr.bf16.mxu0 %v1140
        %1359 = vmatpush1.bf16.msra.mxu0 %v1139
        %1360 = vmatprep.subr.bf16.mxu0 %v1144
        %1361 = vmatpush1.bf16.msra.mxu0 %v1143
        %1362 = vmatprep.subr.bf16.mxu0 %v1148
        %1363 = vmatpush1.bf16.msra.mxu0 %v1147
        %1364 = vmatprep.subr.bf16.mxu0 %v1152
        %1365 = vmatpush1.bf16.msra.mxu0 %v1151
        %1366 = vmatprep.subr.bf16.mxu0 %v1156
        %1367 = vmatpush1.bf16.msra.mxu0 %v1155
        %1368 = vmatprep.subr.bf16.mxu0 %v1160
        %1369 = vmatpush1.bf16.msra.mxu0 %v1159
        %1370 = vmatprep.mubr.bf16.mxu0 %v874
        %1371 = vmatmul.mubr.bf16.gmra.mrb[0].mxu0 %v873
        %v1372 = vpop.f32.mrb[0].mxu0
        %v1373 = vadd.f32 %v816, %v1372
        %v1374 = vpop.f32.mrb[0].mxu0
        %v1375 = vadd.f32 %v820, %v1374
        %v1376 = vpop.f32.mrb[0].mxu0
        %v1377 = vadd.f32 %v816, %v1376
        %v1378 = vpop.f32.mrb[0].mxu0
        %v1379 = vadd.f32 %v820, %v1378
        %1380 = vmatprep.mubr.bf16.mxu0 %v876
        %1381 = vmatmul.mubr.bf16.gmra.mrb[0].mxu0 %v875
        %v1382 = vpop.f32.mrb[0].mxu0
        %v1383 = vadd.f32 %v816, %v1382
        %v1384 = vpop.f32.mrb[0].mxu0
        %v1385 = vadd.f32 %v820, %v1384
        %v1386 = vpop.f32.mrb[0].mxu0
        %v1387 = vadd.f32 %v816, %v1386
        %v1388 = vpop.f32.mrb[0].mxu0
        %v1389 = vadd.f32 %v820, %v1388
        %1390 = vmatprep.mubr.bf16.mxu0 %v878
        %1391 = vmatmul.mubr.bf16.gmra.mrb[0].mxu0 %v877
        %v1392 = vpop.f32.mrb[0].mxu0
        %v1393 = vadd.f32 %v816, %v1392
        %v1394 = vpop.f32.mrb[0].mxu0
        %v1395 = vadd.f32 %v820, %v1394
        %v1396 = vpop.f32.mrb[0].mxu0
        %v1397 = vadd.f32 %v816, %v1396
        %v1398 = vpop.f32.mrb[0].mxu0
        %v1399 = vadd.f32 %v820, %v1398
        %1400 = vmatprep.mubr.bf16.mxu0 %v880
        %1401 = vmatmul.mubr.bf16.gmra.mrb[0].mxu0 %v879
        %v1402 = vpop.f32.mrb[0].mxu0
        %v1403 = vadd.f32 %v816, %v1402
        %v1404 = vpop.f32.mrb[0].mxu0
        %v1405 = vadd.f32 %v820, %v1404
        %v1406 = vpop.f32.mrb[0].mxu0
        %v1407 = vadd.f32 %v816, %v1406
        %v1408 = vpop.f32.mrb[0].mxu0
        %v1409 = vadd.f32 %v820, %v1408
        %1410 = vmatprep.mubr.bf16.mxu0 %v882
        %1411 = vmatmul.mubr.bf16.gmra.mrb[0].mxu0 %v881
        %v1412 = vpop.f32.mrb[0].mxu0
        %v1413 = vadd.f32 %v816, %v1412
        %v1414 = vpop.f32.mrb[0].mxu0
        %v1415 = vadd.f32 %v820, %v1414
        %v1416 = vpop.f32.mrb[0].mxu0
        %v1417 = vadd.f32 %v816, %v1416
        %v1418 = vpop.f32.mrb[0].mxu0
        %v1419 = vadd.f32 %v820, %v1418
        %1420 = vmatprep.mubr.bf16.mxu0 %v884
        %1421 = vmatmul.mubr.bf16.gmra.mrb[0].mxu0 %v883
        %v1422 = vpop.f32.mrb[0].mxu0
        %v1423 = vadd.f32 %v816, %v1422
        %v1424 = vpop.f32.mrb[0].mxu0
        %v1425 = vadd.f32 %v820, %v1424
        %v1426 = vpop.f32.mrb[0].mxu0
        %v1427 = vadd.f32 %v816, %v1426
        %v1428 = vpop.f32.mrb[0].mxu0
        %v1429 = vadd.f32 %v820, %v1428
        %1430 = vmatprep.mubr.bf16.mxu0 %v886
        %1431 = vmatmul.mubr.bf16.gmra.mrb[0].mxu0 %v885
        %v1432 = vpop.f32.mrb[0].mxu0
        %v1433 = vadd.f32 %v816, %v1432
        %v1434 = vpop.f32.mrb[0].mxu0
        %v1435 = vadd.f32 %v820, %v1434
        %v1436 = vpop.f32.mrb[0].mxu0
        %v1437 = vadd.f32 %v816, %v1436
        %v1438 = vpop.f32.mrb[0].mxu0
        %v1439 = vadd.f32 %v820, %v1438
        %1440 = vmatprep.mubr.bf16.mxu0 %v888
        %1441 = vmatmul.mubr.bf16.gmra.mrb[0].mxu0 %v887
        %v1442 = vpop.f32.mrb[0].mxu0
        %v1443 = vadd.f32 %v816, %v1442
        %v1444 = vpop.f32.mrb[0].mxu0
        %v1445 = vadd.f32 %v820, %v1444
        %v1446 = vpop.f32.mrb[0].mxu0
        %v1447 = vadd.f32 %v816, %v1446
        %v1448 = vpop.f32.mrb[0].mxu0
        %v1449 = vadd.f32 %v820, %v1448
        %1450 = vdwg.mxu0
        %v1451 = vpack.c.bf16 %v1264, %v1260
        %v1452 = vpack.c.bf16 %v1266, %v1262
        %v1453 = vpack.c.bf16 %v1274, %v1270
        %v1454 = vpack.c.bf16 %v1276, %v1272
        %v1455 = vpack.c.bf16 %v1284, %v1280
        %v1456 = vpack.c.bf16 %v1286, %v1282
        %v1457 = vpack.c.bf16 %v1294, %v1290
        %v1458 = vpack.c.bf16 %v1296, %v1292
        %v1459 = vpack.c.bf16 %v1304, %v1300
        %v1460 = vpack.c.bf16 %v1306, %v1302
        %v1461 = vpack.c.bf16 %v1314, %v1310
        %v1462 = vpack.c.bf16 %v1316, %v1312
        %v1463 = vpack.c.bf16 %v1324, %v1320
        %v1464 = vpack.c.bf16 %v1326, %v1322
        %v1465 = vpack.c.bf16 %v1334, %v1330
        %v1466 = vpack.c.bf16 %v1336, %v1332
        %1467 = vst [vmem:[#allocation2] sm:$0xff] %v1451
        %1468 = vst [vmem:[#allocation2 + $0x8] sm:$0xff] %v1452
        %1469 = vst [vmem:[#allocation2 + $0x10] sm:$0xff] %v1453
        %1470 = vst [vmem:[#allocation2 + $0x18] sm:$0xff] %v1454
        %1471 = vst [vmem:[#allocation2 + $0x20] sm:$0xff] %v1455
        %1472 = vst [vmem:[#allocation2 + $0x28] sm:$0xff] %v1456
        %1473 = vst [vmem:[#allocation2 + $0x30] sm:$0xff] %v1457
        %1474 = vst [vmem:[#allocation2 + $0x38] sm:$0xff] %v1458
        %1475 = vst [vmem:[#allocation2 + $0x40] sm:$0xff] %v1459
        %1476 = vst [vmem:[#allocation2 + $0x48] sm:$0xff] %v1460
        %1477 = vst [vmem:[#allocation2 + $0x50] sm:$0xff] %v1461
        %1478 = vst [vmem:[#allocation2 + $0x58] sm:$0xff] %v1462
        %1479 = vst [vmem:[#allocation2 + $0x60] sm:$0xff] %v1463
        %1480 = vst [vmem:[#allocation2 + $0x68] sm:$0xff] %v1464
        %1481 = vst [vmem:[#allocation2 + $0x70] sm:$0xff] %v1465
        %1482 = vst [vmem:[#allocation2 + $0x78] sm:$0xff] %v1466
        %v1483 = vpack.c.bf16 %v1377, %v1373
        %v1484 = vpack.c.bf16 %v1379, %v1375
        %v1485 = vpack.c.bf16 %v1387, %v1383
        %v1486 = vpack.c.bf16 %v1389, %v1385
        %v1487 = vpack.c.bf16 %v1397, %v1393
        %v1488 = vpack.c.bf16 %v1399, %v1395
        %v1489 = vpack.c.bf16 %v1407, %v1403
        %v1490 = vpack.c.bf16 %v1409, %v1405
        %v1491 = vpack.c.bf16 %v1417, %v1413
        %v1492 = vpack.c.bf16 %v1419, %v1415
        %v1493 = vpack.c.bf16 %v1427, %v1423
        %v1494 = vpack.c.bf16 %v1429, %v1425
        %v1495 = vpack.c.bf16 %v1437, %v1433
        %v1496 = vpack.c.bf16 %v1439, %v1435
        %v1497 = vpack.c.bf16 %v1447, %v1443
        %v1498 = vpack.c.bf16 %v1449, %v1445
        %1499 = vst [vmem:[#allocation3] sm:$0xff] %v1483
        %1500 = vst [vmem:[#allocation3 + $0x8] sm:$0xff] %v1484
        %1501 = vst [vmem:[#allocation3 + $0x10] sm:$0xff] %v1485
        %1502 = vst [vmem:[#allocation3 + $0x18] sm:$0xff] %v1486
        %1503 = vst [vmem:[#allocation3 + $0x20] sm:$0xff] %v1487
        %1504 = vst [vmem:[#allocation3 + $0x28] sm:$0xff] %v1488
        %1505 = vst [vmem:[#allocation3 + $0x30] sm:$0xff] %v1489
        %1506 = vst [vmem:[#allocation3 + $0x38] sm:$0xff] %v1490
        %1507 = vst [vmem:[#allocation3 + $0x40] sm:$0xff] %v1491
        %1508 = vst [vmem:[#allocation3 + $0x48] sm:$0xff] %v1492
        %1509 = vst [vmem:[#allocation3 + $0x50] sm:$0xff] %v1493
        %1510 = vst [vmem:[#allocation3 + $0x58] sm:$0xff] %v1494
        %1511 = vst [vmem:[#allocation3 + $0x60] sm:$0xff] %v1495
        %1512 = vst [vmem:[#allocation3 + $0x68] sm:$0xff] %v1496
        %1513 = vst [vmem:[#allocation3 + $0x70] sm:$0xff] %v1497
        %1514 = vst [vmem:[#allocation3 + $0x78] sm:$0xff] %v1498
        %v1515 = vld [vmem:[#allocation6] sm:$0xff]
        %v1516 = vld [vmem:[#allocation6 + $0x8] sm:$0xff]
        %v1517 = vld [vmem:[#allocation6 + $0x10] sm:$0xff]
        %v1518 = vld [vmem:[#allocation6 + $0x18] sm:$0xff]
        %v1519 = vld [vmem:[#allocation6 + $0x20] sm:$0xff]
        %v1520 = vld [vmem:[#allocation6 + $0x28] sm:$0xff]
        %v1521 = vld [vmem:[#allocation6 + $0x30] sm:$0xff]
        %v1522 = vld [vmem:[#allocation6 + $0x38] sm:$0xff]
        %v1523 = vld [vmem:[#allocation6 + $0x40] sm:$0xff]
        %v1524 = vld [vmem:[#allocation6 + $0x48] sm:$0xff]
        %v1525 = vld [vmem:[#allocation6 + $0x50] sm:$0xff]
        %v1526 = vld [vmem:[#allocation6 + $0x58] sm:$0xff]
        %v1527 = vld [vmem:[#allocation6 + $0x60] sm:$0xff]
        %v1528 = vld [vmem:[#allocation6 + $0x68] sm:$0xff]
        %v1529 = vld [vmem:[#allocation6 + $0x70] sm:$0xff]
        %v1530 = vld [vmem:[#allocation6 + $0x78] sm:$0xff]
        %v1531 = vld [vmem:[#allocation6 + $0x80] sm:$0xff]
        %v1532 = vld [vmem:[#allocation6 + $0x88] sm:$0xff]
        %v1533 = vld [vmem:[#allocation6 + $0x90] sm:$0xff]
        %v1534 = vld [vmem:[#allocation6 + $0x98] sm:$0xff]
        %v1535 = vld [vmem:[#allocation6 + $0xa0] sm:$0xff]
        %v1536 = vld [vmem:[#allocation6 + $0xa8] sm:$0xff]
        %v1537 = vld [vmem:[#allocation6 + $0xb0] sm:$0xff]
        %v1538 = vld [vmem:[#allocation6 + $0xb8] sm:$0xff]
        %v1539 = vld [vmem:[#allocation6 + $0xc0] sm:$0xff]
        %v1540 = vld [vmem:[#allocation6 + $0xc8] sm:$0xff]
        %v1541 = vld [vmem:[#allocation6 + $0xd0] sm:$0xff]
        %v1542 = vld [vmem:[#allocation6 + $0xd8] sm:$0xff]
        %v1543 = vld [vmem:[#allocation6 + $0xe0] sm:$0xff]
        %v1544 = vld [vmem:[#allocation6 + $0xe8] sm:$0xff]
        %v1545 = vld [vmem:[#allocation6 + $0xf0] sm:$0xff]
        %v1546 = vld [vmem:[#allocation6 + $0xf8] sm:$0xff]
        %v1547 = vld [vmem:[%s6] sm:$0x3]
        %v1549 = vlaneseq
        %v1550 = vshrl.u32 %v1549, 7
        %v1551 = vsub.s32 0, %v1550
        %v1552 = vrot.slane %v1547, %v1551
        %v1553 = vlaneseq
        %v1554 = vshrl.u32 %v1553, 7
        %v1555 = vsub.s32 1, %v1554
        %v1556 = vrot.slane %v1547, %v1555
        %v1575 = vunpack.c.l.b16 %v691
        %v1576 = vunpack.c.h.b16 %v691
        %v1577 = vunpack.c.l.b16 %v692
        %v1578 = vunpack.c.h.b16 %v692
        %v1579 = vunpack.c.l.b16 %v693
        %v1580 = vunpack.c.h.b16 %v693
        %v1581 = vunpack.c.l.b16 %v694
        %v1582 = vunpack.c.h.b16 %v694
        %v1583 = vunpack.c.l.b16 %v695
        %v1584 = vunpack.c.h.b16 %v695
        %v1585 = vunpack.c.l.b16 %v696
        %v1586 = vunpack.c.h.b16 %v696
        %v1587 = vunpack.c.l.b16 %v697
        %v1588 = vunpack.c.h.b16 %v697
        %v1589 = vunpack.c.l.b16 %v698
        %v1590 = vunpack.c.h.b16 %v698
        %v1591 = vunpack.c.l.b16 %v699
        %v1592 = vunpack.c.h.b16 %v699
        %v1593 = vunpack.c.l.b16 %v700
        %v1594 = vunpack.c.h.b16 %v700
        %v1595 = vunpack.c.l.b16 %v701
        %v1596 = vunpack.c.h.b16 %v701
        %v1597 = vunpack.c.l.b16 %v702
        %v1598 = vunpack.c.h.b16 %v702
        %v1599 = vunpack.c.l.b16 %v703
        %v1600 = vunpack.c.h.b16 %v703
        %v1601 = vunpack.c.l.b16 %v704
        %v1602 = vunpack.c.h.b16 %v704
        %v1603 = vunpack.c.l.b16 %v705
        %v1604 = vunpack.c.h.b16 %v705
        %v1605 = vunpack.c.l.b16 %v706
        %v1606 = vunpack.c.h.b16 %v706
        %v1607 = vpack.c.b16 %v1577, %v1575
        %v1608 = vpack.c.b16 %v1578, %v1576
        %v1609 = vpack.c.b16 %v1581, %v1579
        %v1610 = vpack.c.b16 %v1582, %v1580
        %v1611 = vpack.c.b16 %v1585, %v1583
        %v1612 = vpack.c.b16 %v1586, %v1584
        %v1613 = vpack.c.b16 %v1589, %v1587
        %v1614 = vpack.c.b16 %v1590, %v1588
        %v1615 = vpack.c.b16 %v1593, %v1591
        %v1616 = vpack.c.b16 %v1594, %v1592
        %v1617 = vpack.c.b16 %v1597, %v1595
        %v1618 = vpack.c.b16 %v1598, %v1596
        %v1619 = vpack.c.b16 %v1601, %v1599
        %v1620 = vpack.c.b16 %v1602, %v1600
        %v1621 = vpack.c.b16 %v1605, %v1603
        %v1622 = vpack.c.b16 %v1606, %v1604
        %v1671 = vunpack.c.l.b16 %v1515
        %v1672 = vunpack.c.h.b16 %v1515
        %v1673 = vunpack.c.l.b16 %v1516
        %v1674 = vunpack.c.h.b16 %v1516
        %v1675 = vunpack.c.l.b16 %v1517
        %v1676 = vunpack.c.h.b16 %v1517
        %v1677 = vunpack.c.l.b16 %v1518
        %v1678 = vunpack.c.h.b16 %v1518
        %v1679 = vunpack.c.l.b16 %v1519
        %v1680 = vunpack.c.h.b16 %v1519
        %v1681 = vunpack.c.l.b16 %v1520
        %v1682 = vunpack.c.h.b16 %v1520
        %v1683 = vunpack.c.l.b16 %v1521
        %v1684 = vunpack.c.h.b16 %v1521
        %v1685 = vunpack.c.l.b16 %v1522
        %v1686 = vunpack.c.h.b16 %v1522
        %v1687 = vunpack.c.l.b16 %v1523
        %v1688 = vunpack.c.h.b16 %v1523
        %v1689 = vunpack.c.l.b16 %v1524
        %v1690 = vunpack.c.h.b16 %v1524
        %v1691 = vunpack.c.l.b16 %v1525
        %v1692 = vunpack.c.h.b16 %v1525
        %v1693 = vunpack.c.l.b16 %v1526
        %v1694 = vunpack.c.h.b16 %v1526
        %v1695 = vunpack.c.l.b16 %v1527
        %v1696 = vunpack.c.h.b16 %v1527
        %v1697 = vunpack.c.l.b16 %v1528
        %v1698 = vunpack.c.h.b16 %v1528
        %v1699 = vunpack.c.l.b16 %v1529
        %v1700 = vunpack.c.h.b16 %v1529
        %v1701 = vunpack.c.l.b16 %v1530
        %v1702 = vunpack.c.h.b16 %v1530
        %v1703 = vunpack.c.l.b16 %v1531
        %v1704 = vunpack.c.h.b16 %v1531
        %v1705 = vunpack.c.l.b16 %v1532
        %v1706 = vunpack.c.h.b16 %v1532
        %v1707 = vunpack.c.l.b16 %v1533
        %v1708 = vunpack.c.h.b16 %v1533
        %v1709 = vunpack.c.l.b16 %v1534
        %v1710 = vunpack.c.h.b16 %v1534
        %v1711 = vunpack.c.l.b16 %v1535
        %v1712 = vunpack.c.h.b16 %v1535
        %v1713 = vunpack.c.l.b16 %v1536
        %v1714 = vunpack.c.h.b16 %v1536
        %v1715 = vunpack.c.l.b16 %v1537
        %v1716 = vunpack.c.h.b16 %v1537
        %v1717 = vunpack.c.l.b16 %v1538
        %v1718 = vunpack.c.h.b16 %v1538
        %v1719 = vunpack.c.l.b16 %v1539
        %v1720 = vunpack.c.h.b16 %v1539
        %v1721 = vunpack.c.l.b16 %v1540
        %v1722 = vunpack.c.h.b16 %v1540
        %v1723 = vunpack.c.l.b16 %v1541
        %v1724 = vunpack.c.h.b16 %v1541
        %v1725 = vunpack.c.l.b16 %v1542
        %v1726 = vunpack.c.h.b16 %v1542
        %v1727 = vunpack.c.l.b16 %v1543
        %v1728 = vunpack.c.h.b16 %v1543
        %v1729 = vunpack.c.l.b16 %v1544
        %v1730 = vunpack.c.h.b16 %v1544
        %v1731 = vunpack.c.l.b16 %v1545
        %v1732 = vunpack.c.h.b16 %v1545
        %v1733 = vunpack.c.l.b16 %v1546
        %v1734 = vunpack.c.h.b16 %v1546
        %v1735 = vpack.c.b16 %v1673, %v1671
        %v1736 = vpack.c.b16 %v1674, %v1672
        %v1737 = vpack.c.b16 %v1677, %v1675
        %v1738 = vpack.c.b16 %v1678, %v1676
        %v1739 = vpack.c.b16 %v1681, %v1679
        %v1740 = vpack.c.b16 %v1682, %v1680
        %v1741 = vpack.c.b16 %v1685, %v1683
        %v1742 = vpack.c.b16 %v1686, %v1684
        %v1743 = vpack.c.b16 %v1689, %v1687
        %v1744 = vpack.c.b16 %v1690, %v1688
        %v1745 = vpack.c.b16 %v1693, %v1691
        %v1746 = vpack.c.b16 %v1694, %v1692
        %v1747 = vpack.c.b16 %v1697, %v1695
        %v1748 = vpack.c.b16 %v1698, %v1696
        %v1749 = vpack.c.b16 %v1701, %v1699
        %v1750 = vpack.c.b16 %v1702, %v1700
        %v1751 = vpack.c.b16 %v1705, %v1703
        %v1752 = vpack.c.b16 %v1706, %v1704
        %v1753 = vpack.c.b16 %v1709, %v1707
        %v1754 = vpack.c.b16 %v1710, %v1708
        %v1755 = vpack.c.b16 %v1713, %v1711
        %v1756 = vpack.c.b16 %v1714, %v1712
        %v1757 = vpack.c.b16 %v1717, %v1715
        %v1758 = vpack.c.b16 %v1718, %v1716
        %v1759 = vpack.c.b16 %v1721, %v1719
        %v1760 = vpack.c.b16 %v1722, %v1720
        %v1761 = vpack.c.b16 %v1725, %v1723
        %v1762 = vpack.c.b16 %v1726, %v1724
        %v1763 = vpack.c.b16 %v1729, %v1727
        %v1764 = vpack.c.b16 %v1730, %v1728
        %v1765 = vpack.c.b16 %v1733, %v1731
        %v1766 = vpack.c.b16 %v1734, %v1732
        %1799 = vmatprep.subr.bf16.mxu0 %v1736
        %1800 = vmatpush1.bf16.msra.mxu0 %v1735
        %1801 = vmatprep.subr.bf16.mxu0 %v1738
        %1802 = vmatpush1.bf16.msra.mxu0 %v1737
        %1803 = vmatprep.subr.bf16.mxu0 %v1740
        %1804 = vmatpush1.bf16.msra.mxu0 %v1739
        %1805 = vmatprep.subr.bf16.mxu0 %v1742
        %1806 = vmatpush1.bf16.msra.mxu0 %v1741
        %1807 = vmatprep.subr.bf16.mxu0 %v1744
        %1808 = vmatpush1.bf16.msra.mxu0 %v1743
        %1809 = vmatprep.subr.bf16.mxu0 %v1746
        %1810 = vmatpush1.bf16.msra.mxu0 %v1745
        %1811 = vmatprep.subr.bf16.mxu0 %v1748
        %1812 = vmatpush1.bf16.msra.mxu0 %v1747
        %1813 = vmatprep.subr.bf16.mxu0 %v1750
        %1814 = vmatpush1.bf16.msra.mxu0 %v1749
        %1815 = vmatprep.subr.bf16.mxu0 %v1752
        %1816 = vmatpush1.bf16.msra.mxu0 %v1751
        %1817 = vmatprep.subr.bf16.mxu0 %v1754
        %1818 = vmatpush1.bf16.msra.mxu0 %v1753
        %1819 = vmatprep.subr.bf16.mxu0 %v1756
        %1820 = vmatpush1.bf16.msra.mxu0 %v1755
        %1821 = vmatprep.subr.bf16.mxu0 %v1758
        %1822 = vmatpush1.bf16.msra.mxu0 %v1757
        %1823 = vmatprep.subr.bf16.mxu0 %v1760
        %1824 = vmatpush1.bf16.msra.mxu0 %v1759
        %1825 = vmatprep.subr.bf16.mxu0 %v1762
        %1826 = vmatpush1.bf16.msra.mxu0 %v1761
        %1827 = vmatprep.subr.bf16.mxu0 %v1764
        %1828 = vmatpush1.bf16.msra.mxu0 %v1763
        %1829 = vmatprep.subr.bf16.mxu0 %v1766
        %1830 = vmatpush1.bf16.msra.mxu0 %v1765
        %1831 = vmatprep.mubr.bf16.mxu0 %v1608
        %1832 = vmatmul.mubr.bf16.gmra.mrb[0].mxu0 %v1607
        %v1833 = vpop.f32.mrb[0].mxu0
        %v1834 = vadd.f32 %v1552, %v1833
        %v1835 = vpop.f32.mrb[0].mxu0
        %v1836 = vadd.f32 %v1556, %v1835
        %v1837 = vpop.f32.mrb[0].mxu0
        %v1838 = vadd.f32 %v1552, %v1837
        %v1839 = vpop.f32.mrb[0].mxu0
        %v1840 = vadd.f32 %v1556, %v1839
        %1841 = vmatprep.mubr.bf16.mxu0 %v1610
        %1842 = vmatmul.mubr.bf16.gmra.mrb[0].mxu0 %v1609
        %v1843 = vpop.f32.mrb[0].mxu0
        %v1844 = vadd.f32 %v1552, %v1843
        %v1845 = vpop.f32.mrb[0].mxu0
        %v1846 = vadd.f32 %v1556, %v1845
        %v1847 = vpop.f32.mrb[0].mxu0
        %v1848 = vadd.f32 %v1552, %v1847
        %v1849 = vpop.f32.mrb[0].mxu0
        %v1850 = vadd.f32 %v1556, %v1849
        %1851 = vmatprep.mubr.bf16.mxu0 %v1612
        %1852 = vmatmul.mubr.bf16.gmra.mrb[0].mxu0 %v1611
        %v1853 = vpop.f32.mrb[0].mxu0
        %v1854 = vadd.f32 %v1552, %v1853
        %v1855 = vpop.f32.mrb[0].mxu0
        %v1856 = vadd.f32 %v1556, %v1855
        %v1857 = vpop.f32.mrb[0].mxu0
        %v1858 = vadd.f32 %v1552, %v1857
        %v1859 = vpop.f32.mrb[0].mxu0
        %v1860 = vadd.f32 %v1556, %v1859
        %1861 = vmatprep.mubr.bf16.mxu0 %v1614
        %1862 = vmatmul.mubr.bf16.gmra.mrb[0].mxu0 %v1613
        %v1863 = vpop.f32.mrb[0].mxu0
        %v1864 = vadd.f32 %v1552, %v1863
        %v1865 = vpop.f32.mrb[0].mxu0
        %v1866 = vadd.f32 %v1556, %v1865
        %v1867 = vpop.f32.mrb[0].mxu0
        %v1868 = vadd.f32 %v1552, %v1867
        %v1869 = vpop.f32.mrb[0].mxu0
        %v1870 = vadd.f32 %v1556, %v1869
        %1871 = vmatprep.mubr.bf16.mxu0 %v1616
        %1872 = vmatmul.mubr.bf16.gmra.mrb[0].mxu0 %v1615
        %v1873 = vpop.f32.mrb[0].mxu0
        %v1874 = vadd.f32 %v1552, %v1873
        %v1875 = vpop.f32.mrb[0].mxu0
        %v1876 = vadd.f32 %v1556, %v1875
        %v1877 = vpop.f32.mrb[0].mxu0
        %v1878 = vadd.f32 %v1552, %v1877
        %v1879 = vpop.f32.mrb[0].mxu0
        %v1880 = vadd.f32 %v1556, %v1879
        %1881 = vmatprep.mubr.bf16.mxu0 %v1618
        %1882 = vmatmul.mubr.bf16.gmra.mrb[0].mxu0 %v1617
        %v1883 = vpop.f32.mrb[0].mxu0
        %v1884 = vadd.f32 %v1552, %v1883
        %v1885 = vpop.f32.mrb[0].mxu0
        %v1886 = vadd.f32 %v1556, %v1885
        %v1887 = vpop.f32.mrb[0].mxu0
        %v1888 = vadd.f32 %v1552, %v1887
        %v1889 = vpop.f32.mrb[0].mxu0
        %v1890 = vadd.f32 %v1556, %v1889
        %1891 = vmatprep.mubr.bf16.mxu0 %v1620
        %1892 = vmatmul.mubr.bf16.gmra.mrb[0].mxu0 %v1619
        %v1893 = vpop.f32.mrb[0].mxu0
        %v1894 = vadd.f32 %v1552, %v1893
        %v1895 = vpop.f32.mrb[0].mxu0
        %v1896 = vadd.f32 %v1556, %v1895
        %v1897 = vpop.f32.mrb[0].mxu0
        %v1898 = vadd.f32 %v1552, %v1897
        %v1899 = vpop.f32.mrb[0].mxu0
        %v1900 = vadd.f32 %v1556, %v1899
        %1901 = vmatprep.mubr.bf16.mxu0 %v1622
        %1902 = vmatmul.mubr.bf16.gmra.mrb[0].mxu0 %v1621
        %v1903 = vpop.f32.mrb[0].mxu0
        %v1904 = vadd.f32 %v1552, %v1903
        %v1905 = vpop.f32.mrb[0].mxu0
        %v1906 = vadd.f32 %v1556, %v1905
        %v1907 = vpop.f32.mrb[0].mxu0
        %v1908 = vadd.f32 %v1552, %v1907
        %v1909 = vpop.f32.mrb[0].mxu0
        %v1910 = vadd.f32 %v1556, %v1909
        %1911 = vdwg.mxu0
        %v1912 = vpack.c.bf16 %v1838, %v1834
        %v1913 = vpack.c.bf16 %v1840, %v1836
        %v1914 = vpack.c.bf16 %v1848, %v1844
        %v1915 = vpack.c.bf16 %v1850, %v1846
        %v1916 = vpack.c.bf16 %v1858, %v1854
        %v1917 = vpack.c.bf16 %v1860, %v1856
        %v1918 = vpack.c.bf16 %v1868, %v1864
        %v1919 = vpack.c.bf16 %v1870, %v1866
        %v1920 = vpack.c.bf16 %v1878, %v1874
        %v1921 = vpack.c.bf16 %v1880, %v1876
        %v1922 = vpack.c.bf16 %v1888, %v1884
        %v1923 = vpack.c.bf16 %v1890, %v1886
        %v1924 = vpack.c.bf16 %v1898, %v1894
        %v1925 = vpack.c.bf16 %v1900, %v1896
        %v1926 = vpack.c.bf16 %v1908, %v1904
        %v1927 = vpack.c.bf16 %v1910, %v1906
        %1928 = vst [vmem:[#allocation4] sm:$0xff] %v1912
        %1929 = vst [vmem:[#allocation4 + $0x8] sm:$0xff] %v1913
        %1930 = vst [vmem:[#allocation4 + $0x10] sm:$0xff] %v1914
        %1931 = vst [vmem:[#allocation4 + $0x18] sm:$0xff] %v1915
        %1932 = vst [vmem:[#allocation4 + $0x20] sm:$0xff] %v1916
        %1933 = vst [vmem:[#allocation4 + $0x28] sm:$0xff] %v1917
        %1934 = vst [vmem:[#allocation4 + $0x30] sm:$0xff] %v1918
        %1935 = vst [vmem:[#allocation4 + $0x38] sm:$0xff] %v1919
        %1936 = vst [vmem:[#allocation4 + $0x40] sm:$0xff] %v1920
        %1937 = vst [vmem:[#allocation4 + $0x48] sm:$0xff] %v1921
        %1938 = vst [vmem:[#allocation4 + $0x50] sm:$0xff] %v1922
        %1939 = vst [vmem:[#allocation4 + $0x58] sm:$0xff] %v1923
        %1940 = vst [vmem:[#allocation4 + $0x60] sm:$0xff] %v1924
        %1941 = vst [vmem:[#allocation4 + $0x68] sm:$0xff] %v1925
        %1942 = vst [vmem:[#allocation4 + $0x70] sm:$0xff] %v1926
        %1943 = vst [vmem:[#allocation4 + $0x78] sm:$0xff] %v1927
        %v1944 = vld [vmem:[%s679] sm:$0x1]
        %v1946 = vlaneseq
        %v1947 = vshrl.u32 %v1946, 7
        %v1948 = vsub.s32 0, %v1947
        %v1949 = vrot.slane %v1944, %v1948
        %v1951 = vld [vmem:[#allocation2] sm:$0xff]
        %v1952 = vld [vmem:[#allocation2 + $0x10] sm:$0xff]
        %v1953 = vld [vmem:[#allocation2 + $0x20] sm:$0xff]
        %v1954 = vld [vmem:[#allocation2 + $0x30] sm:$0xff]
        %v1955 = vld [vmem:[#allocation2 + $0x40] sm:$0xff]
        %v1956 = vld [vmem:[#allocation2 + $0x50] sm:$0xff]
        %v1957 = vld [vmem:[#allocation2 + $0x60] sm:$0xff]
        %v1958 = vld [vmem:[#allocation2 + $0x70] sm:$0xff]
        %v1959 = vld [vmem:[#allocation3] sm:$0xff]
        %v1960 = vld [vmem:[#allocation3 + $0x10] sm:$0xff]
        %v1961 = vld [vmem:[#allocation3 + $0x20] sm:$0xff]
        %v1962 = vld [vmem:[#allocation3 + $0x30] sm:$0xff]
        %v1963 = vld [vmem:[#allocation3 + $0x40] sm:$0xff]
        %v1964 = vld [vmem:[#allocation3 + $0x50] sm:$0xff]
        %v1965 = vld [vmem:[#allocation3 + $0x60] sm:$0xff]
        %v1966 = vld [vmem:[#allocation3 + $0x70] sm:$0xff]
        %vm1967 = vcmask 261120
        %v1969 = vsel %vm1967, %v1951, 0
        %v1972 = vsel %vm1967, %v1952, 0
        %v1975 = vsel %vm1967, %v1953, 0
        %v1978 = vsel %vm1967, %v1954, 0
        %v1981 = vsel %vm1967, %v1955, 0
        %v1984 = vsel %vm1967, %v1956, 0
        %v1987 = vsel %vm1967, %v1957, 0
        %v1990 = vsel %vm1967, %v1958, 0
        %v1993 = vsel %vm1967, %v1959, 0
        %v1996 = vsel %vm1967, %v1960, 0
        %v1999 = vsel %vm1967, %v1961, 0
        %v2002 = vsel %vm1967, %v1962, 0
        %v2005 = vsel %vm1967, %v1963, 0
        %v2008 = vsel %vm1967, %v1964, 0
        %v2011 = vsel %vm1967, %v1965, 0
        %v2014 = vsel %vm1967, %v1966, 0
        %2016 = vmatprep.subr.bf16.mxu0 0
        %2017 = vmatpush1.bf16.xpose.msra.mxu0 %v1993
        %2018 = vmatprep.subr.bf16.mxu0 0
        %2019 = vmatpush1.bf16.xpose.msra.mxu0 %v1996
        %2020 = vmatprep.subr.bf16.mxu0 0
        %2021 = vmatpush1.bf16.xpose.msra.mxu0 %v1999
        %2022 = vmatprep.subr.bf16.mxu0 0
        %2023 = vmatpush1.bf16.xpose.msra.mxu0 %v2002
        %2024 = vmatprep.subr.bf16.mxu0 0
        %2025 = vmatpush1.bf16.xpose.msra.mxu0 %v2005
        %2026 = vmatprep.subr.bf16.mxu0 0
        %2027 = vmatpush1.bf16.xpose.msra.mxu0 %v2008
        %2028 = vmatprep.subr.bf16.mxu0 0
        %2029 = vmatpush1.bf16.xpose.msra.mxu0 %v2011
        %2030 = vmatprep.subr.bf16.mxu0 0
        %2031 = vmatpush1.bf16.xpose.msra.mxu0 %v2014
        %2032 = vmatprep.subr.bf16.mxu0 0
        %2033 = vmatpush1.bf16.xpose.msra.mxu0 0
        %2034 = vmatprep.subr.bf16.mxu0 0
        %2035 = vmatpush1.bf16.xpose.msra.mxu0 0
        %2036 = vmatprep.subr.bf16.mxu0 0
        %2037 = vmatpush1.bf16.xpose.msra.mxu0 0
        %2038 = vmatprep.subr.bf16.mxu0 0
        %2039 = vmatpush1.bf16.xpose.msra.mxu0 0
        %2040 = vmatprep.subr.bf16.mxu0 0
        %2041 = vmatpush1.bf16.xpose.msra.mxu0 0
        %2042 = vmatprep.subr.bf16.mxu0 0
        %2043 = vmatpush1.bf16.xpose.msra.mxu0 0
        %2044 = vmatprep.subr.bf16.mxu0 0
        %2045 = vmatpush1.bf16.xpose.msra.mxu0 0
        %2046 = vmatprep.subr.bf16.mxu0 0
        %2047 = vmatpush1.bf16.xpose.msra.mxu0 0
        %2048 = vmatprep.mubr.bf16.mxu0 0
        %2049 = vmatmul.mubr.bf16.gmra.mrb[0].mxu0 %v1969
        %v2050 = vpop.f32.mrb[0].mxu0
        %v2051 = vadd.f32 %v1949, %v2050
        %v2052 = vpop.f32.mrb[0].mxu0
        %v2053 = vpop.f32.mrb[0].mxu0
        %v2054 = vadd.f32 %v1949, %v2053
        %v2055 = vpop.f32.mrb[0].mxu0
        %2056 = vmatprep.mubr.bf16.mxu0 0
        %2057 = vmatmul.mubr.bf16.gmra.mrb[0].mxu0 %v1972
        %v2058 = vpop.f32.mrb[0].mxu0
        %v2059 = vadd.f32 %v1949, %v2058
        %v2060 = vpop.f32.mrb[0].mxu0
        %v2061 = vpop.f32.mrb[0].mxu0
        %v2062 = vadd.f32 %v1949, %v2061
        %v2063 = vpop.f32.mrb[0].mxu0
        %2064 = vmatprep.mubr.bf16.mxu0 0
        %2065 = vmatmul.mubr.bf16.gmra.mrb[0].mxu0 %v1975
        %v2066 = vpop.f32.mrb[0].mxu0
        %v2067 = vadd.f32 %v1949, %v2066
        %v2068 = vpop.f32.mrb[0].mxu0
        %v2069 = vpop.f32.mrb[0].mxu0
        %v2070 = vadd.f32 %v1949, %v2069
        %v2071 = vpop.f32.mrb[0].mxu0
        %2072 = vmatprep.mubr.bf16.mxu0 0
        %2073 = vmatmul.mubr.bf16.gmra.mrb[0].mxu0 %v1978
        %v2074 = vpop.f32.mrb[0].mxu0
        %v2075 = vadd.f32 %v1949, %v2074
        %v2076 = vpop.f32.mrb[0].mxu0
        %v2077 = vpop.f32.mrb[0].mxu0
        %v2078 = vadd.f32 %v1949, %v2077
        %v2079 = vpop.f32.mrb[0].mxu0
        %2080 = vmatprep.mubr.bf16.mxu0 0
        %2081 = vmatmul.mubr.bf16.gmra.mrb[0].mxu0 %v1981
        %v2082 = vpop.f32.mrb[0].mxu0
        %v2083 = vadd.f32 %v1949, %v2082
        %v2084 = vpop.f32.mrb[0].mxu0
        %v2085 = vpop.f32.mrb[0].mxu0
        %v2086 = vadd.f32 %v1949, %v2085
        %v2087 = vpop.f32.mrb[0].mxu0
        %2088 = vmatprep.mubr.bf16.mxu0 0
        %2089 = vmatmul.mubr.bf16.gmra.mrb[0].mxu0 %v1984
        %v2090 = vpop.f32.mrb[0].mxu0
        %v2091 = vadd.f32 %v1949, %v2090
        %v2092 = vpop.f32.mrb[0].mxu0
        %v2093 = vpop.f32.mrb[0].mxu0
        %v2094 = vadd.f32 %v1949, %v2093
        %v2095 = vpop.f32.mrb[0].mxu0
        %2096 = vmatprep.mubr.bf16.mxu0 0
        %2097 = vmatmul.mubr.bf16.gmra.mrb[0].mxu0 %v1987
        %v2098 = vpop.f32.mrb[0].mxu0
        %v2099 = vadd.f32 %v1949, %v2098
        %v2100 = vpop.f32.mrb[0].mxu0
        %v2101 = vpop.f32.mrb[0].mxu0
        %v2102 = vadd.f32 %v1949, %v2101
        %v2103 = vpop.f32.mrb[0].mxu0
        %2104 = vmatprep.mubr.bf16.mxu0 0
        %2105 = vmatmul.mubr.bf16.gmra.mrb[0].mxu0 %v1990
        %v2106 = vpop.f32.mrb[0].mxu0
        %v2107 = vadd.f32 %v1949, %v2106
        %v2108 = vpop.f32.mrb[0].mxu0
        %v2109 = vpop.f32.mrb[0].mxu0
        %v2110 = vadd.f32 %v1949, %v2109
        %v2111 = vpop.f32.mrb[0].mxu0
        %2112 = vdwg.mxu0
        %2113 = vmax.xlane.f32.xlu0 %v2051
        %v2114 = vpop.xlane.xlu0 %2113
        %2115 = vmax.xlane.f32.xlu0 %v2054
        %v2116 = vpop.xlane.xlu0 %2115
        %2117 = vmax.xlane.f32.xlu0 %v2059
        %v2118 = vpop.xlane.xlu0 %2117
        %2119 = vmax.xlane.f32.xlu0 %v2062
        %v2120 = vpop.xlane.xlu0 %2119
        %2121 = vmax.xlane.f32.xlu0 %v2067
        %v2122 = vpop.xlane.xlu0 %2121
        %2123 = vmax.xlane.f32.xlu0 %v2070
        %v2124 = vpop.xlane.xlu0 %2123
        %2125 = vmax.xlane.f32.xlu0 %v2075
        %v2126 = vpop.xlane.xlu0 %2125
        %2127 = vmax.xlane.f32.xlu0 %v2078
        %v2128 = vpop.xlane.xlu0 %2127
        %2129 = vmax.xlane.f32.xlu0 %v2083
        %v2130 = vpop.xlane.xlu0 %2129
        %2131 = vmax.xlane.f32.xlu0 %v2086
        %v2132 = vpop.xlane.xlu0 %2131
        %2133 = vmax.xlane.f32.xlu0 %v2091
        %v2134 = vpop.xlane.xlu0 %2133
        %2135 = vmax.xlane.f32.xlu0 %v2094
        %v2136 = vpop.xlane.xlu0 %2135
        %2137 = vmax.xlane.f32.xlu0 %v2099
        %v2138 = vpop.xlane.xlu0 %2137
        %2139 = vmax.xlane.f32.xlu0 %v2102
        %v2140 = vpop.xlane.xlu0 %2139
        %2141 = vmax.xlane.f32.xlu0 %v2107
        %v2142 = vpop.xlane.xlu0 %2141
        %2143 = vmax.xlane.f32.xlu0 %v2110
        %v2144 = vpop.xlane.xlu0 %2143
        %v2145 = vsub.f32 %v2051, %v2114
        %v2146 = vsub.f32 %v2054, %v2116
        %v2147 = vsub.f32 %v2059, %v2118
        %v2148 = vsub.f32 %v2062, %v2120
        %v2149 = vsub.f32 %v2067, %v2122
        %v2150 = vsub.f32 %v2070, %v2124
        %v2151 = vsub.f32 %v2075, %v2126
        %v2152 = vsub.f32 %v2078, %v2128
        %v2153 = vsub.f32 %v2083, %v2130
        %v2154 = vsub.f32 %v2086, %v2132
        %v2155 = vsub.f32 %v2091, %v2134
        %v2156 = vsub.f32 %v2094, %v2136
        %v2157 = vsub.f32 %v2099, %v2138
        %v2158 = vsub.f32 %v2102, %v2140
        %v2159 = vsub.f32 %v2107, %v2142
        %v2160 = vsub.f32 %v2110, %v2144
        %v2161 = vmul.f32 %v2145, 1.442695
        %v2162 = vpow.pop %v2161
        %v2163 = vmul.f32 %v2146, 1.442695
        %v2164 = vpow.pop %v2163
        %v2165 = vmul.f32 %v2147, 1.442695
        %v2166 = vpow.pop %v2165
        %v2167 = vmul.f32 %v2148, 1.442695
        %v2168 = vpow.pop %v2167
        %v2169 = vmul.f32 %v2149, 1.442695
        %v2170 = vpow.pop %v2169
        %v2171 = vmul.f32 %v2150, 1.442695
        %v2172 = vpow.pop %v2171
        %v2173 = vmul.f32 %v2151, 1.442695
        %v2174 = vpow.pop %v2173
        %v2175 = vmul.f32 %v2152, 1.442695
        %v2176 = vpow.pop %v2175
        %v2177 = vmul.f32 %v2153, 1.442695
        %v2178 = vpow.pop %v2177
        %v2179 = vmul.f32 %v2154, 1.442695
        %v2180 = vpow.pop %v2179
        %v2181 = vmul.f32 %v2155, 1.442695
        %v2182 = vpow.pop %v2181
        %v2183 = vmul.f32 %v2156, 1.442695
        %v2184 = vpow.pop %v2183
        %v2185 = vmul.f32 %v2157, 1.442695
        %v2186 = vpow.pop %v2185
        %v2187 = vmul.f32 %v2158, 1.442695
        %v2188 = vpow.pop %v2187
        %v2189 = vmul.f32 %v2159, 1.442695
        %v2190 = vpow.pop %v2189
        %v2191 = vmul.f32 %v2160, 1.442695
        %v2192 = vpow.pop %v2191
        %2193 = vadd.xlane.f32.xlu0 %v2162
        %v2194 = vpop.xlane.xlu0 %2193
        %2195 = vadd.xlane.f32.xlu0 %v2164
        %v2196 = vpop.xlane.xlu0 %2195
        %2197 = vadd.xlane.f32.xlu0 %v2166
        %v2198 = vpop.xlane.xlu0 %2197
        %2199 = vadd.xlane.f32.xlu0 %v2168
        %v2200 = vpop.xlane.xlu0 %2199
        %2201 = vadd.xlane.f32.xlu0 %v2170
        %v2202 = vpop.xlane.xlu0 %2201
        %2203 = vadd.xlane.f32.xlu0 %v2172
        %v2204 = vpop.xlane.xlu0 %2203
        %2205 = vadd.xlane.f32.xlu0 %v2174
        %v2206 = vpop.xlane.xlu0 %2205
        %2207 = vadd.xlane.f32.xlu0 %v2176
        %v2208 = vpop.xlane.xlu0 %2207
        %2209 = vadd.xlane.f32.xlu0 %v2178
        %v2210 = vpop.xlane.xlu0 %2209
        %2211 = vadd.xlane.f32.xlu0 %v2180
        %v2212 = vpop.xlane.xlu0 %2211
        %2213 = vadd.xlane.f32.xlu0 %v2182
        %v2214 = vpop.xlane.xlu0 %2213
        %2215 = vadd.xlane.f32.xlu0 %v2184
        %v2216 = vpop.xlane.xlu0 %2215
        %2217 = vadd.xlane.f32.xlu0 %v2186
        %v2218 = vpop.xlane.xlu0 %2217
        %2219 = vadd.xlane.f32.xlu0 %v2188
        %v2220 = vpop.xlane.xlu0 %2219
        %2221 = vadd.xlane.f32.xlu0 %v2190
        %v2222 = vpop.xlane.xlu0 %2221
        %2223 = vadd.xlane.f32.xlu0 %v2192
        %v2224 = vpop.xlane.xlu0 %2223
        %v2225 = vrcp.pop %v2194
        %v2226 = vrcp.pop %v2196
        %v2227 = vrcp.pop %v2198
        %v2228 = vrcp.pop %v2200
        %v2229 = vrcp.pop %v2202
        %v2230 = vrcp.pop %v2204
        %v2231 = vrcp.pop %v2206
        %v2232 = vrcp.pop %v2208
        %v2233 = vrcp.pop %v2210
        %v2234 = vrcp.pop %v2212
        %v2235 = vrcp.pop %v2214
        %v2236 = vrcp.pop %v2216
        %v2237 = vrcp.pop %v2218
        %v2238 = vrcp.pop %v2220
        %v2239 = vrcp.pop %v2222
        %v2240 = vrcp.pop %v2224
        %v2241 = vmul.f32 %v2162, %v2225
        %v2242 = vmul.f32 %v2164, %v2226
        %v2243 = vmul.f32 %v2166, %v2227
        %v2244 = vmul.f32 %v2168, %v2228
        %v2245 = vmul.f32 %v2170, %v2229
        %v2246 = vmul.f32 %v2172, %v2230
        %v2247 = vmul.f32 %v2174, %v2231
        %v2248 = vmul.f32 %v2176, %v2232
        %v2249 = vmul.f32 %v2178, %v2233
        %v2250 = vmul.f32 %v2180, %v2234
        %v2251 = vmul.f32 %v2182, %v2235
        %v2252 = vmul.f32 %v2184, %v2236
        %v2253 = vmul.f32 %v2186, %v2237
        %v2254 = vmul.f32 %v2188, %v2238
        %v2255 = vmul.f32 %v2190, %v2239
        %v2256 = vmul.f32 %v2192, %v2240
        %2257 = vst [vmem:[%s689] sm:$0xff] %v2241
        %2258 = vst [vmem:[%s689 + $0x8] sm:$0xff] %v2242
        %2259 = vst [vmem:[%s689 + $0x10] sm:$0xff] %v2243
        %2260 = vst [vmem:[%s689 + $0x18] sm:$0xff] %v2244
        %2261 = vst [vmem:[%s689 + $0x20] sm:$0xff] %v2245
        %2262 = vst [vmem:[%s689 + $0x28] sm:$0xff] %v2246
        %2263 = vst [vmem:[%s689 + $0x30] sm:$0xff] %v2247
        %2264 = vst [vmem:[%s689 + $0x38] sm:$0xff] %v2248
        %2265 = vst [vmem:[%s689 + $0x40] sm:$0xff] %v2249
        %2266 = vst [vmem:[%s689 + $0x48] sm:$0xff] %v2250
        %2267 = vst [vmem:[%s689 + $0x50] sm:$0xff] %v2251
        %2268 = vst [vmem:[%s689 + $0x58] sm:$0xff] %v2252
        %2269 = vst [vmem:[%s689 + $0x60] sm:$0xff] %v2253
        %2270 = vst [vmem:[%s689 + $0x68] sm:$0xff] %v2254
        %2271 = vst [vmem:[%s689 + $0x70] sm:$0xff] %v2255
        %2272 = vst [vmem:[%s689 + $0x78] sm:$0xff] %v2256
        %v2273 = vpack.c.bf16 %v2242, %v2241
        %v2274 = vpack.c.bf16 %v2244, %v2243
        %v2275 = vpack.c.bf16 %v2246, %v2245
        %v2276 = vpack.c.bf16 %v2248, %v2247
        %v2277 = vpack.c.bf16 %v2250, %v2249
        %v2278 = vpack.c.bf16 %v2252, %v2251
        %v2279 = vpack.c.bf16 %v2254, %v2253
        %v2280 = vpack.c.bf16 %v2256, %v2255
        %v2281 = vld [vmem:[#allocation4] sm:$0xff]
        %v2282 = vld [vmem:[#allocation4 + $0x10] sm:$0xff]
        %v2283 = vld [vmem:[#allocation4 + $0x20] sm:$0xff]
        %v2284 = vld [vmem:[#allocation4 + $0x30] sm:$0xff]
        %v2285 = vld [vmem:[#allocation4 + $0x40] sm:$0xff]
        %v2286 = vld [vmem:[#allocation4 + $0x50] sm:$0xff]
        %v2287 = vld [vmem:[#allocation4 + $0x60] sm:$0xff]
        %v2288 = vld [vmem:[#allocation4 + $0x70] sm:$0xff]
        %2289 = vmatprep.subr.bf16.mxu0 0
        %2290 = vmatpush1.bf16.msra.mxu0 %v2281
        %2291 = vmatprep.subr.bf16.mxu0 0
        %2292 = vmatpush1.bf16.msra.mxu0 %v2282
        %2293 = vmatprep.subr.bf16.mxu0 0
        %2294 = vmatpush1.bf16.msra.mxu0 %v2283
        %2295 = vmatprep.subr.bf16.mxu0 0
        %2296 = vmatpush1.bf16.msra.mxu0 %v2284
        %2297 = vmatprep.subr.bf16.mxu0 0
        %2298 = vmatpush1.bf16.msra.mxu0 %v2285
        %2299 = vmatprep.subr.bf16.mxu0 0
        %2300 = vmatpush1.bf16.msra.mxu0 %v2286
        %2301 = vmatprep.subr.bf16.mxu0 0
        %2302 = vmatpush1.bf16.msra.mxu0 %v2287
        %2303 = vmatprep.subr.bf16.mxu0 0
        %2304 = vmatpush1.bf16.msra.mxu0 %v2288
        %2305 = vmatprep.subr.bf16.mxu0 0
        %2306 = vmatpush1.bf16.msra.mxu0 0
        %2307 = vmatprep.subr.bf16.mxu0 0
        %2308 = vmatpush1.bf16.msra.mxu0 0
        %2309 = vmatprep.subr.bf16.mxu0 0
        %2310 = vmatpush1.bf16.msra.mxu0 0
        %2311 = vmatprep.subr.bf16.mxu0 0
        %2312 = vmatpush1.bf16.msra.mxu0 0
        %2313 = vmatprep.subr.bf16.mxu0 0
        %2314 = vmatpush1.bf16.msra.mxu0 0
        %2315 = vmatprep.subr.bf16.mxu0 0
        %2316 = vmatpush1.bf16.msra.mxu0 0
        %2317 = vmatprep.subr.bf16.mxu0 0
        %2318 = vmatpush1.bf16.msra.mxu0 0
        %2319 = vmatprep.subr.bf16.mxu0 0
        %2320 = vmatpush1.bf16.msra.mxu0 0
        %2321 = vmatprep.mubr.bf16.mxu0 0
        %2322 = vmatmul.mubr.bf16.gmra.mrb[0].mxu0 %v2273
        %v2323 = vpop.f32.mrb[0].mxu0
        %v2324 = vadd.f32 0.0, %v2323
        %v2325 = vpop.f32.mrb[0].mxu0
        %v2326 = vpop.f32.mrb[0].mxu0
        %v2327 = vadd.f32 0.0, %v2326
        %v2328 = vpop.f32.mrb[0].mxu0
        %2329 = vmatprep.mubr.bf16.mxu0 0
        %2330 = vmatmul.mubr.bf16.gmra.mrb[0].mxu0 %v2274
        %v2331 = vpop.f32.mrb[0].mxu0
        %v2332 = vadd.f32 0.0, %v2331
        %v2333 = vpop.f32.mrb[0].mxu0
        %v2334 = vpop.f32.mrb[0].mxu0
        %v2335 = vadd.f32 0.0, %v2334
        %v2336 = vpop.f32.mrb[0].mxu0
        %2337 = vmatprep.mubr.bf16.mxu0 0
        %2338 = vmatmul.mubr.bf16.gmra.mrb[0].mxu0 %v2275
        %v2339 = vpop.f32.mrb[0].mxu0
        %v2340 = vadd.f32 0.0, %v2339
        %v2341 = vpop.f32.mrb[0].mxu0
        %v2342 = vpop.f32.mrb[0].mxu0
        %v2343 = vadd.f32 0.0, %v2342
        %v2344 = vpop.f32.mrb[0].mxu0
        %2345 = vmatprep.mubr.bf16.mxu0 0
        %2346 = vmatmul.mubr.bf16.gmra.mrb[0].mxu0 %v2276
        %v2347 = vpop.f32.mrb[0].mxu0
        %v2348 = vadd.f32 0.0, %v2347
        %v2349 = vpop.f32.mrb[0].mxu0
        %v2350 = vpop.f32.mrb[0].mxu0
        %v2351 = vadd.f32 0.0, %v2350
        %v2352 = vpop.f32.mrb[0].mxu0
        %2353 = vmatprep.mubr.bf16.mxu0 0
        %2354 = vmatmul.mubr.bf16.gmra.mrb[0].mxu0 %v2277
        %v2355 = vpop.f32.mrb[0].mxu0
        %v2356 = vadd.f32 0.0, %v2355
        %v2357 = vpop.f32.mrb[0].mxu0
        %v2358 = vpop.f32.mrb[0].mxu0
        %v2359 = vadd.f32 0.0, %v2358
        %v2360 = vpop.f32.mrb[0].mxu0
        %2361 = vmatprep.mubr.bf16.mxu0 0
        %2362 = vmatmul.mubr.bf16.gmra.mrb[0].mxu0 %v2278
        %v2363 = vpop.f32.mrb[0].mxu0
        %v2364 = vadd.f32 0.0, %v2363
        %v2365 = vpop.f32.mrb[0].mxu0
        %v2366 = vpop.f32.mrb[0].mxu0
        %v2367 = vadd.f32 0.0, %v2366
        %v2368 = vpop.f32.mrb[0].mxu0
        %2369 = vmatprep.mubr.bf16.mxu0 0
        %2370 = vmatmul.mubr.bf16.gmra.mrb[0].mxu0 %v2279
        %v2371 = vpop.f32.mrb[0].mxu0
        %v2372 = vadd.f32 0.0, %v2371
        %v2373 = vpop.f32.mrb[0].mxu0
        %v2374 = vpop.f32.mrb[0].mxu0
        %v2375 = vadd.f32 0.0, %v2374
        %v2376 = vpop.f32.mrb[0].mxu0
        %2377 = vmatprep.mubr.bf16.mxu0 0
        %2378 = vmatmul.mubr.bf16.gmra.mrb[0].mxu0 %v2280
        %v2379 = vpop.f32.mrb[0].mxu0
        %v2380 = vadd.f32 0.0, %v2379
        %v2381 = vpop.f32.mrb[0].mxu0
        %v2382 = vpop.f32.mrb[0].mxu0
        %v2383 = vadd.f32 0.0, %v2382
        %v2384 = vpop.f32.mrb[0].mxu0
        %2385 = vdwg.mxu0
        %v2386 = vpack.c.bf16 %v2327, %v2324
        %v2387 = vpack.c.bf16 %v2335, %v2332
        %v2388 = vpack.c.bf16 %v2343, %v2340
        %v2389 = vpack.c.bf16 %v2351, %v2348
        %v2390 = vpack.c.bf16 %v2359, %v2356
        %v2391 = vpack.c.bf16 %v2367, %v2364
        %v2392 = vpack.c.bf16 %v2375, %v2372
        %v2393 = vpack.c.bf16 %v2383, %v2380
        %2394 = vst.msk [vmem:[#allocation5] sm:$0xff] %vm1967, %v2386
        %2395 = vst.msk [vmem:[#allocation5 + $0x10] sm:$0xff] %vm1967, %v2387
        %2396 = vst.msk [vmem:[#allocation5 + $0x20] sm:$0xff] %vm1967, %v2388
        %2397 = vst.msk [vmem:[#allocation5 + $0x30] sm:$0xff] %vm1967, %v2389
        %2398 = vst.msk [vmem:[#allocation5 + $0x40] sm:$0xff] %vm1967, %v2390
        %2399 = vst.msk [vmem:[#allocation5 + $0x50] sm:$0xff] %vm1967, %v2391
        %2400 = vst.msk [vmem:[#allocation5 + $0x60] sm:$0xff] %vm1967, %v2392
        %2401 = vst.msk [vmem:[#allocation5 + $0x70] sm:$0xff] %vm1967, %v2393
        %v2402 = vld [vmem:[#allocation2] sm:$0xff]
        %v2403 = vld [vmem:[#allocation2 + $0x10] sm:$0xff]
        %v2404 = vld [vmem:[#allocation2 + $0x20] sm:$0xff]
        %v2405 = vld [vmem:[#allocation2 + $0x30] sm:$0xff]
        %v2406 = vld [vmem:[#allocation2 + $0x40] sm:$0xff]
        %v2407 = vld [vmem:[#allocation2 + $0x50] sm:$0xff]
        %v2408 = vld [vmem:[#allocation2 + $0x60] sm:$0xff]
        %v2409 = vld [vmem:[#allocation2 + $0x70] sm:$0xff]
        %v2410 = vld [vmem:[#allocation3] sm:$0xff]
        %v2411 = vld [vmem:[#allocation3 + $0x10] sm:$0xff]
        %v2412 = vld [vmem:[#allocation3 + $0x20] sm:$0xff]
        %v2413 = vld [vmem:[#allocation3 + $0x30] sm:$0xff]
        %v2414 = vld [vmem:[#allocation3 + $0x40] sm:$0xff]
        %v2415 = vld [vmem:[#allocation3 + $0x50] sm:$0xff]
        %v2416 = vld [vmem:[#allocation3 + $0x60] sm:$0xff]
        %v2417 = vld [vmem:[#allocation3 + $0x70] sm:$0xff]
        %2426 = vrot.lane.b32.xlu0 %v2402, 96
        %v2427 = vpop.permute.xlu0 %2426
        %2428 = vrot.lane.b32.xlu0 %v2403, 96
        %v2429 = vpop.permute.xlu0 %2428
        %2430 = vrot.lane.b32.xlu0 %v2404, 96
        %v2431 = vpop.permute.xlu0 %2430
        %2432 = vrot.lane.b32.xlu0 %v2405, 96
        %v2433 = vpop.permute.xlu0 %2432
        %2434 = vrot.lane.b32.xlu0 %v2406, 96
        %v2435 = vpop.permute.xlu0 %2434
        %2436 = vrot.lane.b32.xlu0 %v2407, 96
        %v2437 = vpop.permute.xlu0 %2436
        %2438 = vrot.lane.b32.xlu0 %v2408, 96
        %v2439 = vpop.permute.xlu0 %2438
        %2440 = vrot.lane.b32.xlu0 %v2409, 96
        %v2441 = vpop.permute.xlu0 %2440
        %2450 = vrot.lane.b32.xlu0 %v2410, 96
        %v2451 = vpop.permute.xlu0 %2450
        %2452 = vrot.lane.b32.xlu0 %v2411, 96
        %v2453 = vpop.permute.xlu0 %2452
        %2454 = vrot.lane.b32.xlu0 %v2412, 96
        %v2455 = vpop.permute.xlu0 %2454
        %2456 = vrot.lane.b32.xlu0 %v2413, 96
        %v2457 = vpop.permute.xlu0 %2456
        %2458 = vrot.lane.b32.xlu0 %v2414, 96
        %v2459 = vpop.permute.xlu0 %2458
        %2460 = vrot.lane.b32.xlu0 %v2415, 96
        %v2461 = vpop.permute.xlu0 %2460
        %2462 = vrot.lane.b32.xlu0 %v2416, 96
        %v2463 = vpop.permute.xlu0 %2462
        %2464 = vrot.lane.b32.xlu0 %v2417, 96
        %v2465 = vpop.permute.xlu0 %2464
        %v2467 = vsel %vm1967, %v2427, 0
        %v2470 = vsel %vm1967, %v2429, 0
        %v2473 = vsel %vm1967, %v2431, 0
        %v2476 = vsel %vm1967, %v2433, 0
        %v2479 = vsel %vm1967, %v2435, 0
        %v2482 = vsel %vm1967, %v2437, 0
        %v2485 = vsel %vm1967, %v2439, 0
        %v2488 = vsel %vm1967, %v2441, 0
        %v2491 = vsel %vm1967, %v2451, 0
        %v2494 = vsel %vm1967, %v2453, 0
        %v2497 = vsel %vm1967, %v2455, 0
        %v2500 = vsel %vm1967, %v2457, 0
        %v2503 = vsel %vm1967, %v2459, 0
        %v2506 = vsel %vm1967, %v2461, 0
        %v2509 = vsel %vm1967, %v2463, 0
        %v2512 = vsel %vm1967, %v2465, 0
        %2514 = vmatprep.subr.bf16.mxu0 0
        %2515 = vmatpush1.bf16.xpose.msra.mxu0 %v2491
        %2516 = vmatprep.subr.bf16.mxu0 0
        %2517 = vmatpush1.bf16.xpose.msra.mxu0 %v2494
        %2518 = vmatprep.subr.bf16.mxu0 0
        %2519 = vmatpush1.bf16.xpose.msra.mxu0 %v2497
        %2520 = vmatprep.subr.bf16.mxu0 0
        %2521 = vmatpush1.bf16.xpose.msra.mxu0 %v2500
        %2522 = vmatprep.subr.bf16.mxu0 0
        %2523 = vmatpush1.bf16.xpose.msra.mxu0 %v2503
        %2524 = vmatprep.subr.bf16.mxu0 0
        %2525 = vmatpush1.bf16.xpose.msra.mxu0 %v2506
        %2526 = vmatprep.subr.bf16.mxu0 0
        %2527 = vmatpush1.bf16.xpose.msra.mxu0 %v2509
        %2528 = vmatprep.subr.bf16.mxu0 0
        %2529 = vmatpush1.bf16.xpose.msra.mxu0 %v2512
        %2530 = vmatprep.subr.bf16.mxu0 0
        %2531 = vmatpush1.bf16.xpose.msra.mxu0 0
        %2532 = vmatprep.subr.bf16.mxu0 0
        %2533 = vmatpush1.bf16.xpose.msra.mxu0 0
        %2534 = vmatprep.subr.bf16.mxu0 0
        %2535 = vmatpush1.bf16.xpose.msra.mxu0 0
        %2536 = vmatprep.subr.bf16.mxu0 0
        %2537 = vmatpush1.bf16.xpose.msra.mxu0 0
        %2538 = vmatprep.subr.bf16.mxu0 0
        %2539 = vmatpush1.bf16.xpose.msra.mxu0 0
        %2540 = vmatprep.subr.bf16.mxu0 0
        %2541 = vmatpush1.bf16.xpose.msra.mxu0 0
        %2542 = vmatprep.subr.bf16.mxu0 0
        %2543 = vmatpush1.bf16.xpose.msra.mxu0 0
        %2544 = vmatprep.subr.bf16.mxu0 0
        %2545 = vmatpush1.bf16.xpose.msra.mxu0 0
        %2546 = vmatprep.mubr.bf16.mxu0 0
        %2547 = vmatmul.mubr.bf16.gmra.mrb[0].mxu0 %v2467
        %v2548 = vpop.f32.mrb[0].mxu0
        %v2549 = vadd.f32 %v1949, %v2548
        %v2550 = vpop.f32.mrb[0].mxu0
        %v2551 = vpop.f32.mrb[0].mxu0
        %v2552 = vadd.f32 %v1949, %v2551
        %v2553 = vpop.f32.mrb[0].mxu0
        %2554 = vmatprep.mubr.bf16.mxu0 0
        %2555 = vmatmul.mubr.bf16.gmra.mrb[0].mxu0 %v2470
        %v2556 = vpop.f32.mrb[0].mxu0
        %v2557 = vadd.f32 %v1949, %v2556
        %v2558 = vpop.f32.mrb[0].mxu0
        %v2559 = vpop.f32.mrb[0].mxu0
        %v2560 = vadd.f32 %v1949, %v2559
        %v2561 = vpop.f32.mrb[0].mxu0
        %2562 = vmatprep.mubr.bf16.mxu0 0
        %2563 = vmatmul.mubr.bf16.gmra.mrb[0].mxu0 %v2473
        %v2564 = vpop.f32.mrb[0].mxu0
        %v2565 = vadd.f32 %v1949, %v2564
        %v2566 = vpop.f32.mrb[0].mxu0
        %v2567 = vpop.f32.mrb[0].mxu0
        %v2568 = vadd.f32 %v1949, %v2567
        %v2569 = vpop.f32.mrb[0].mxu0
        %2570 = vmatprep.mubr.bf16.mxu0 0
        %2571 = vmatmul.mubr.bf16.gmra.mrb[0].mxu0 %v2476
        %v2572 = vpop.f32.mrb[0].mxu0
        %v2573 = vadd.f32 %v1949, %v2572
        %v2574 = vpop.f32.mrb[0].mxu0
        %v2575 = vpop.f32.mrb[0].mxu0
        %v2576 = vadd.f32 %v1949, %v2575
        %v2577 = vpop.f32.mrb[0].mxu0
        %2578 = vmatprep.mubr.bf16.mxu0 0
        %2579 = vmatmul.mubr.bf16.gmra.mrb[0].mxu0 %v2479
        %v2580 = vpop.f32.mrb[0].mxu0
        %v2581 = vadd.f32 %v1949, %v2580
        %v2582 = vpop.f32.mrb[0].mxu0
        %v2583 = vpop.f32.mrb[0].mxu0
        %v2584 = vadd.f32 %v1949, %v2583
        %v2585 = vpop.f32.mrb[0].mxu0
        %2586 = vmatprep.mubr.bf16.mxu0 0
        %2587 = vmatmul.mubr.bf16.gmra.mrb[0].mxu0 %v2482
        %v2588 = vpop.f32.mrb[0].mxu0
        %v2589 = vadd.f32 %v1949, %v2588
        %v2590 = vpop.f32.mrb[0].mxu0
        %v2591 = vpop.f32.mrb[0].mxu0
        %v2592 = vadd.f32 %v1949, %v2591
        %v2593 = vpop.f32.mrb[0].mxu0
        %2594 = vmatprep.mubr.bf16.mxu0 0
        %2595 = vmatmul.mubr.bf16.gmra.mrb[0].mxu0 %v2485
        %v2596 = vpop.f32.mrb[0].mxu0
        %v2597 = vadd.f32 %v1949, %v2596
        %v2598 = vpop.f32.mrb[0].mxu0
        %v2599 = vpop.f32.mrb[0].mxu0
        %v2600 = vadd.f32 %v1949, %v2599
        %v2601 = vpop.f32.mrb[0].mxu0
        %2602 = vmatprep.mubr.bf16.mxu0 0
        %2603 = vmatmul.mubr.bf16.gmra.mrb[0].mxu0 %v2488
        %v2604 = vpop.f32.mrb[0].mxu0
        %v2605 = vadd.f32 %v1949, %v2604
        %v2606 = vpop.f32.mrb[0].mxu0
        %v2607 = vpop.f32.mrb[0].mxu0
        %v2608 = vadd.f32 %v1949, %v2607
        %v2609 = vpop.f32.mrb[0].mxu0
        %2610 = vdwg.mxu0
        %2611 = vmax.xlane.f32.xlu0 %v2549
        %v2612 = vpop.xlane.xlu0 %2611
        %2613 = vmax.xlane.f32.xlu0 %v2552
        %v2614 = vpop.xlane.xlu0 %2613
        %2615 = vmax.xlane.f32.xlu0 %v2557
        %v2616 = vpop.xlane.xlu0 %2615
        %2617 = vmax.xlane.f32.xlu0 %v2560
        %v2618 = vpop.xlane.xlu0 %2617
        %2619 = vmax.xlane.f32.xlu0 %v2565
        %v2620 = vpop.xlane.xlu0 %2619
        %2621 = vmax.xlane.f32.xlu0 %v2568
        %v2622 = vpop.xlane.xlu0 %2621
        %2623 = vmax.xlane.f32.xlu0 %v2573
        %v2624 = vpop.xlane.xlu0 %2623
        %2625 = vmax.xlane.f32.xlu0 %v2576
        %v2626 = vpop.xlane.xlu0 %2625
        %2627 = vmax.xlane.f32.xlu0 %v2581
        %v2628 = vpop.xlane.xlu0 %2627
        %2629 = vmax.xlane.f32.xlu0 %v2584
        %v2630 = vpop.xlane.xlu0 %2629
        %2631 = vmax.xlane.f32.xlu0 %v2589
        %v2632 = vpop.xlane.xlu0 %2631
        %2633 = vmax.xlane.f32.xlu0 %v2592
        %v2634 = vpop.xlane.xlu0 %2633
        %2635 = vmax.xlane.f32.xlu0 %v2597
        %v2636 = vpop.xlane.xlu0 %2635
        %2637 = vmax.xlane.f32.xlu0 %v2600
        %v2638 = vpop.xlane.xlu0 %2637
        %2639 = vmax.xlane.f32.xlu0 %v2605
        %v2640 = vpop.xlane.xlu0 %2639
        %2641 = vmax.xlane.f32.xlu0 %v2608
        %v2642 = vpop.xlane.xlu0 %2641
        %v2643 = vsub.f32 %v2549, %v2612
        %v2644 = vsub.f32 %v2552, %v2614
        %v2645 = vsub.f32 %v2557, %v2616
        %v2646 = vsub.f32 %v2560, %v2618
        %v2647 = vsub.f32 %v2565, %v2620
        %v2648 = vsub.f32 %v2568, %v2622
        %v2649 = vsub.f32 %v2573, %v2624
        %v2650 = vsub.f32 %v2576, %v2626
        %v2651 = vsub.f32 %v2581, %v2628
        %v2652 = vsub.f32 %v2584, %v2630
        %v2653 = vsub.f32 %v2589, %v2632
        %v2654 = vsub.f32 %v2592, %v2634
        %v2655 = vsub.f32 %v2597, %v2636
        %v2656 = vsub.f32 %v2600, %v2638
        %v2657 = vsub.f32 %v2605, %v2640
        %v2658 = vsub.f32 %v2608, %v2642
        %v2659 = vmul.f32 %v2643, 1.442695
        %v2660 = vpow.pop %v2659
        %v2661 = vmul.f32 %v2644, 1.442695
        %v2662 = vpow.pop %v2661
        %v2663 = vmul.f32 %v2645, 1.442695
        %v2664 = vpow.pop %v2663
        %v2665 = vmul.f32 %v2646, 1.442695
        %v2666 = vpow.pop %v2665
        %v2667 = vmul.f32 %v2647, 1.442695
        %v2668 = vpow.pop %v2667
        %v2669 = vmul.f32 %v2648, 1.442695
        %v2670 = vpow.pop %v2669
        %v2671 = vmul.f32 %v2649, 1.442695
        %v2672 = vpow.pop %v2671
        %v2673 = vmul.f32 %v2650, 1.442695
        %v2674 = vpow.pop %v2673
        %v2675 = vmul.f32 %v2651, 1.442695
        %v2676 = vpow.pop %v2675
        %v2677 = vmul.f32 %v2652, 1.442695
        %v2678 = vpow.pop %v2677
        %v2679 = vmul.f32 %v2653, 1.442695
        %v2680 = vpow.pop %v2679
        %v2681 = vmul.f32 %v2654, 1.442695
        %v2682 = vpow.pop %v2681
        %v2683 = vmul.f32 %v2655, 1.442695
        %v2684 = vpow.pop %v2683
        %v2685 = vmul.f32 %v2656, 1.442695
        %v2686 = vpow.pop %v2685
        %v2687 = vmul.f32 %v2657, 1.442695
        %v2688 = vpow.pop %v2687
        %v2689 = vmul.f32 %v2658, 1.442695
        %v2690 = vpow.pop %v2689
        %2691 = vadd.xlane.f32.xlu0 %v2660
        %v2692 = vpop.xlane.xlu0 %2691
        %2693 = vadd.xlane.f32.xlu0 %v2662
        %v2694 = vpop.xlane.xlu0 %2693
        %2695 = vadd.xlane.f32.xlu0 %v2664
        %v2696 = vpop.xlane.xlu0 %2695
        %2697 = vadd.xlane.f32.xlu0 %v2666
        %v2698 = vpop.xlane.xlu0 %2697
        %2699 = vadd.xlane.f32.xlu0 %v2668
        %v2700 = vpop.xlane.xlu0 %2699
        %2701 = vadd.xlane.f32.xlu0 %v2670
        %v2702 = vpop.xlane.xlu0 %2701
        %2703 = vadd.xlane.f32.xlu0 %v2672
        %v2704 = vpop.xlane.xlu0 %2703
        %2705 = vadd.xlane.f32.xlu0 %v2674
        %v2706 = vpop.xlane.xlu0 %2705
        %2707 = vadd.xlane.f32.xlu0 %v2676
        %v2708 = vpop.xlane.xlu0 %2707
        %2709 = vadd.xlane.f32.xlu0 %v2678
        %v2710 = vpop.xlane.xlu0 %2709
        %2711 = vadd.xlane.f32.xlu0 %v2680
        %v2712 = vpop.xlane.xlu0 %2711
        %2713 = vadd.xlane.f32.xlu0 %v2682
        %v2714 = vpop.xlane.xlu0 %2713
        %2715 = vadd.xlane.f32.xlu0 %v2684
        %v2716 = vpop.xlane.xlu0 %2715
        %2717 = vadd.xlane.f32.xlu0 %v2686
        %v2718 = vpop.xlane.xlu0 %2717
        %2719 = vadd.xlane.f32.xlu0 %v2688
        %v2720 = vpop.xlane.xlu0 %2719
        %2721 = vadd.xlane.f32.xlu0 %v2690
        %v2722 = vpop.xlane.xlu0 %2721
        %v2723 = vrcp.pop %v2692
        %v2724 = vrcp.pop %v2694
        %v2725 = vrcp.pop %v2696
        %v2726 = vrcp.pop %v2698
        %v2727 = vrcp.pop %v2700
        %v2728 = vrcp.pop %v2702
        %v2729 = vrcp.pop %v2704
        %v2730 = vrcp.pop %v2706
        %v2731 = vrcp.pop %v2708
        %v2732 = vrcp.pop %v2710
        %v2733 = vrcp.pop %v2712
        %v2734 = vrcp.pop %v2714
        %v2735 = vrcp.pop %v2716
        %v2736 = vrcp.pop %v2718
        %v2737 = vrcp.pop %v2720
        %v2738 = vrcp.pop %v2722
        %v2739 = vmul.f32 %v2660, %v2723
        %v2740 = vmul.f32 %v2662, %v2724
        %v2741 = vmul.f32 %v2664, %v2725
        %v2742 = vmul.f32 %v2666, %v2726
        %v2743 = vmul.f32 %v2668, %v2727
        %v2744 = vmul.f32 %v2670, %v2728
        %v2745 = vmul.f32 %v2672, %v2729
        %v2746 = vmul.f32 %v2674, %v2730
        %v2747 = vmul.f32 %v2676, %v2731
        %v2748 = vmul.f32 %v2678, %v2732
        %v2749 = vmul.f32 %v2680, %v2733
        %v2750 = vmul.f32 %v2682, %v2734
        %v2751 = vmul.f32 %v2684, %v2735
        %v2752 = vmul.f32 %v2686, %v2736
        %v2753 = vmul.f32 %v2688, %v2737
        %v2754 = vmul.f32 %v2690, %v2738
        %v2755 = vld [vmem:[%s689] sm:$0xff]
        %v2756 = vld [vmem:[%s689 + $0x8] sm:$0xff]
        %v2757 = vld [vmem:[%s689 + $0x10] sm:$0xff]
        %v2758 = vld [vmem:[%s689 + $0x18] sm:$0xff]
        %v2759 = vld [vmem:[%s689 + $0x20] sm:$0xff]
        %v2760 = vld [vmem:[%s689 + $0x28] sm:$0xff]
        %v2761 = vld [vmem:[%s689 + $0x30] sm:$0xff]
        %v2762 = vld [vmem:[%s689 + $0x38] sm:$0xff]
        %v2763 = vld [vmem:[%s689 + $0x40] sm:$0xff]
        %v2764 = vld [vmem:[%s689 + $0x48] sm:$0xff]
        %v2765 = vld [vmem:[%s689 + $0x50] sm:$0xff]
        %v2766 = vld [vmem:[%s689 + $0x58] sm:$0xff]
        %v2767 = vld [vmem:[%s689 + $0x60] sm:$0xff]
        %v2768 = vld [vmem:[%s689 + $0x68] sm:$0xff]
        %v2769 = vld [vmem:[%s689 + $0x70] sm:$0xff]
        %v2770 = vld [vmem:[%s689 + $0x78] sm:$0xff]
        %v2771 = vadd.f32 %v2755, %v2739
        %v2772 = vadd.f32 %v2756, %v2740
        %v2773 = vadd.f32 %v2757, %v2741
        %v2774 = vadd.f32 %v2758, %v2742
        %v2775 = vadd.f32 %v2759, %v2743
        %v2776 = vadd.f32 %v2760, %v2744
        %v2777 = vadd.f32 %v2761, %v2745
        %v2778 = vadd.f32 %v2762, %v2746
        %v2779 = vadd.f32 %v2763, %v2747
        %v2780 = vadd.f32 %v2764, %v2748
        %v2781 = vadd.f32 %v2765, %v2749
        %v2782 = vadd.f32 %v2766, %v2750
        %v2783 = vadd.f32 %v2767, %v2751
        %v2784 = vadd.f32 %v2768, %v2752
        %v2785 = vadd.f32 %v2769, %v2753
        %v2786 = vadd.f32 %v2770, %v2754
        %2787 = vst [vmem:[%s689] sm:$0xff] %v2771
        %2788 = vst [vmem:[%s689 + $0x8] sm:$0xff] %v2772
        %2789 = vst [vmem:[%s689 + $0x10] sm:$0xff] %v2773
        %2790 = vst [vmem:[%s689 + $0x18] sm:$0xff] %v2774
        %2791 = vst [vmem:[%s689 + $0x20] sm:$0xff] %v2775
        %2792 = vst [vmem:[%s689 + $0x28] sm:$0xff] %v2776
        %2793 = vst [vmem:[%s689 + $0x30] sm:$0xff] %v2777
        %2794 = vst [vmem:[%s689 + $0x38] sm:$0xff] %v2778
        %2795 = vst [vmem:[%s689 + $0x40] sm:$0xff] %v2779
        %2796 = vst [vmem:[%s689 + $0x48] sm:$0xff] %v2780
        %2797 = vst [vmem:[%s689 + $0x50] sm:$0xff] %v2781
        %2798 = vst [vmem:[%s689 + $0x58] sm:$0xff] %v2782
        %2799 = vst [vmem:[%s689 + $0x60] sm:$0xff] %v2783
        %2800 = vst [vmem:[%s689 + $0x68] sm:$0xff] %v2784
        %2801 = vst [vmem:[%s689 + $0x70] sm:$0xff] %v2785
        %2802 = vst [vmem:[%s689 + $0x78] sm:$0xff] %v2786
        %v2803 = vpack.c.bf16 %v2740, %v2739
        %v2804 = vpack.c.bf16 %v2742, %v2741
        %v2805 = vpack.c.bf16 %v2744, %v2743
        %v2806 = vpack.c.bf16 %v2746, %v2745
        %v2807 = vpack.c.bf16 %v2748, %v2747
        %v2808 = vpack.c.bf16 %v2750, %v2749
        %v2809 = vpack.c.bf16 %v2752, %v2751
        %v2810 = vpack.c.bf16 %v2754, %v2753
        %v2811 = vld [vmem:[#allocation4] sm:$0xff]
        %v2812 = vld [vmem:[#allocation4 + $0x10] sm:$0xff]
        %v2813 = vld [vmem:[#allocation4 + $0x20] sm:$0xff]
        %v2814 = vld [vmem:[#allocation4 + $0x30] sm:$0xff]
        %v2815 = vld [vmem:[#allocation4 + $0x40] sm:$0xff]
        %v2816 = vld [vmem:[#allocation4 + $0x50] sm:$0xff]
        %v2817 = vld [vmem:[#allocation4 + $0x60] sm:$0xff]
        %v2818 = vld [vmem:[#allocation4 + $0x70] sm:$0xff]
        %2827 = vrot.lane.b32.xlu0 %v2811, 96
        %v2828 = vpop.permute.xlu0 %2827
        %2829 = vrot.lane.b32.xlu0 %v2812, 96
        %v2830 = vpop.permute.xlu0 %2829
        %2831 = vrot.lane.b32.xlu0 %v2813, 96
        %v2832 = vpop.permute.xlu0 %2831
        %2833 = vrot.lane.b32.xlu0 %v2814, 96
        %v2834 = vpop.permute.xlu0 %2833
        %2835 = vrot.lane.b32.xlu0 %v2815, 96
        %v2836 = vpop.permute.xlu0 %2835
        %2837 = vrot.lane.b32.xlu0 %v2816, 96
        %v2838 = vpop.permute.xlu0 %2837
        %2839 = vrot.lane.b32.xlu0 %v2817, 96
        %v2840 = vpop.permute.xlu0 %2839
        %2841 = vrot.lane.b32.xlu0 %v2818, 96
        %v2842 = vpop.permute.xlu0 %2841
        %2851 = vmatprep.subr.bf16.mxu0 0
        %2852 = vmatpush1.bf16.msra.mxu0 %v2828
        %2853 = vmatprep.subr.bf16.mxu0 0
        %2854 = vmatpush1.bf16.msra.mxu0 %v2830
        %2855 = vmatprep.subr.bf16.mxu0 0
        %2856 = vmatpush1.bf16.msra.mxu0 %v2832
        %2857 = vmatprep.subr.bf16.mxu0 0
        %2858 = vmatpush1.bf16.msra.mxu0 %v2834
        %2859 = vmatprep.subr.bf16.mxu0 0
        %2860 = vmatpush1.bf16.msra.mxu0 %v2836
        %2861 = vmatprep.subr.bf16.mxu0 0
        %2862 = vmatpush1.bf16.msra.mxu0 %v2838
        %2863 = vmatprep.subr.bf16.mxu0 0
        %2864 = vmatpush1.bf16.msra.mxu0 %v2840
        %2865 = vmatprep.subr.bf16.mxu0 0
        %2866 = vmatpush1.bf16.msra.mxu0 %v2842
        %2867 = vmatprep.subr.bf16.mxu0 0
        %2868 = vmatpush1.bf16.msra.mxu0 0
        %2869 = vmatprep.subr.bf16.mxu0 0
        %2870 = vmatpush1.bf16.msra.mxu0 0
        %2871 = vmatprep.subr.bf16.mxu0 0
        %2872 = vmatpush1.bf16.msra.mxu0 0
        %2873 = vmatprep.subr.bf16.mxu0 0
        %2874 = vmatpush1.bf16.msra.mxu0 0
        %2875 = vmatprep.subr.bf16.mxu0 0
        %2876 = vmatpush1.bf16.msra.mxu0 0
        %2877 = vmatprep.subr.bf16.mxu0 0
        %2878 = vmatpush1.bf16.msra.mxu0 0
        %2879 = vmatprep.subr.bf16.mxu0 0
        %2880 = vmatpush1.bf16.msra.mxu0 0
        %2881 = vmatprep.subr.bf16.mxu0 0
        %2882 = vmatpush1.bf16.msra.mxu0 0
        %2883 = vmatprep.mubr.bf16.mxu0 0
        %2884 = vmatmul.mubr.bf16.gmra.mrb[0].mxu0 %v2803
        %v2885 = vpop.f32.mrb[0].mxu0
        %v2886 = vadd.f32 0.0, %v2885
        %v2887 = vpop.f32.mrb[0].mxu0
        %v2888 = vpop.f32.mrb[0].mxu0
        %v2889 = vadd.f32 0.0, %v2888
        %v2890 = vpop.f32.mrb[0].mxu0
        %2891 = vmatprep.mubr.bf16.mxu0 0
        %2892 = vmatmul.mubr.bf16.gmra.mrb[0].mxu0 %v2804
        %v2893 = vpop.f32.mrb[0].mxu0
        %v2894 = vadd.f32 0.0, %v2893
        %v2895 = vpop.f32.mrb[0].mxu0
        %v2896 = vpop.f32.mrb[0].mxu0
        %v2897 = vadd.f32 0.0, %v2896
        %v2898 = vpop.f32.mrb[0].mxu0
        %2899 = vmatprep.mubr.bf16.mxu0 0
        %2900 = vmatmul.mubr.bf16.gmra.mrb[0].mxu0 %v2805
        %v2901 = vpop.f32.mrb[0].mxu0
        %v2902 = vadd.f32 0.0, %v2901
        %v2903 = vpop.f32.mrb[0].mxu0
        %v2904 = vpop.f32.mrb[0].mxu0
        %v2905 = vadd.f32 0.0, %v2904
        %v2906 = vpop.f32.mrb[0].mxu0
        %2907 = vmatprep.mubr.bf16.mxu0 0
        %2908 = vmatmul.mubr.bf16.gmra.mrb[0].mxu0 %v2806
        %v2909 = vpop.f32.mrb[0].mxu0
        %v2910 = vadd.f32 0.0, %v2909
        %v2911 = vpop.f32.mrb[0].mxu0
        %v2912 = vpop.f32.mrb[0].mxu0
        %v2913 = vadd.f32 0.0, %v2912
        %v2914 = vpop.f32.mrb[0].mxu0
        %2915 = vmatprep.mubr.bf16.mxu0 0
        %2916 = vmatmul.mubr.bf16.gmra.mrb[0].mxu0 %v2807
        %v2917 = vpop.f32.mrb[0].mxu0
        %v2918 = vadd.f32 0.0, %v2917
        %v2919 = vpop.f32.mrb[0].mxu0
        %v2920 = vpop.f32.mrb[0].mxu0
        %v2921 = vadd.f32 0.0, %v2920
        %v2922 = vpop.f32.mrb[0].mxu0
        %2923 = vmatprep.mubr.bf16.mxu0 0
        %2924 = vmatmul.mubr.bf16.gmra.mrb[0].mxu0 %v2808
        %v2925 = vpop.f32.mrb[0].mxu0
        %v2926 = vadd.f32 0.0, %v2925
        %v2927 = vpop.f32.mrb[0].mxu0
        %v2928 = vpop.f32.mrb[0].mxu0
        %v2929 = vadd.f32 0.0, %v2928
        %v2930 = vpop.f32.mrb[0].mxu0
        %2931 = vmatprep.mubr.bf16.mxu0 0
        %2932 = vmatmul.mubr.bf16.gmra.mrb[0].mxu0 %v2809
        %v2933 = vpop.f32.mrb[0].mxu0
        %v2934 = vadd.f32 0.0, %v2933
        %v2935 = vpop.f32.mrb[0].mxu0
        %v2936 = vpop.f32.mrb[0].mxu0
        %v2937 = vadd.f32 0.0, %v2936
        %v2938 = vpop.f32.mrb[0].mxu0
        %2939 = vmatprep.mubr.bf16.mxu0 0
        %2940 = vmatmul.mubr.bf16.gmra.mrb[0].mxu0 %v2810
        %v2941 = vpop.f32.mrb[0].mxu0
        %v2942 = vadd.f32 0.0, %v2941
        %v2943 = vpop.f32.mrb[0].mxu0
        %v2944 = vpop.f32.mrb[0].mxu0
        %v2945 = vadd.f32 0.0, %v2944
        %v2946 = vpop.f32.mrb[0].mxu0
        %2947 = vdwg.mxu0
        %v2948 = vpack.c.bf16 %v2889, %v2886
        %v2949 = vpack.c.bf16 %v2897, %v2894
        %v2950 = vpack.c.bf16 %v2905, %v2902
        %v2951 = vpack.c.bf16 %v2913, %v2910
        %v2952 = vpack.c.bf16 %v2921, %v2918
        %v2953 = vpack.c.bf16 %v2929, %v2926
        %v2954 = vpack.c.bf16 %v2937, %v2934
        %v2955 = vpack.c.bf16 %v2945, %v2942
        %2964 = vrot.lane.b32.xlu0 %v2948, 32
        %v2965 = vpop.permute.xlu0 %2964
        %2966 = vrot.lane.b32.xlu0 %v2949, 32
        %v2967 = vpop.permute.xlu0 %2966
        %2968 = vrot.lane.b32.xlu0 %v2950, 32
        %v2969 = vpop.permute.xlu0 %2968
        %2970 = vrot.lane.b32.xlu0 %v2951, 32
        %v2971 = vpop.permute.xlu0 %2970
        %2972 = vrot.lane.b32.xlu0 %v2952, 32
        %v2973 = vpop.permute.xlu0 %2972
        %2974 = vrot.lane.b32.xlu0 %v2953, 32
        %v2975 = vpop.permute.xlu0 %2974
        %2976 = vrot.lane.b32.xlu0 %v2954, 32
        %v2977 = vpop.permute.xlu0 %2976
        %2978 = vrot.lane.b32.xlu0 %v2955, 32
        %v2979 = vpop.permute.xlu0 %2978
        %vm2988 = vcmask 523520
        %2989 = vst.msk [vmem:[#allocation5] sm:$0xff] %vm2988, %v2965
        %2990 = vst.msk [vmem:[#allocation5 + $0x10] sm:$0xff] %vm2988, %v2967
        %2991 = vst.msk [vmem:[#allocation5 + $0x20] sm:$0xff] %vm2988, %v2969
        %2992 = vst.msk [vmem:[#allocation5 + $0x30] sm:$0xff] %vm2988, %v2971
        %2993 = vst.msk [vmem:[#allocation5 + $0x40] sm:$0xff] %vm2988, %v2973
        %2994 = vst.msk [vmem:[#allocation5 + $0x50] sm:$0xff] %vm2988, %v2975
        %2995 = vst.msk [vmem:[#allocation5 + $0x60] sm:$0xff] %vm2988, %v2977
        %2996 = vst.msk [vmem:[#allocation5 + $0x70] sm:$0xff] %vm2988, %v2979
        %v2997 = vld [vmem:[#allocation2] sm:$0xff]
        %v2998 = vld [vmem:[#allocation2 + $0x10] sm:$0xff]
        %v2999 = vld [vmem:[#allocation2 + $0x20] sm:$0xff]
        %v3000 = vld [vmem:[#allocation2 + $0x30] sm:$0xff]
        %v3001 = vld [vmem:[#allocation2 + $0x40] sm:$0xff]
        %v3002 = vld [vmem:[#allocation2 + $0x50] sm:$0xff]
        %v3003 = vld [vmem:[#allocation2 + $0x60] sm:$0xff]
        %v3004 = vld [vmem:[#allocation2 + $0x70] sm:$0xff]
        %v3005 = vld [vmem:[#allocation3] sm:$0xff]
        %v3006 = vld [vmem:[#allocation3 + $0x10] sm:$0xff]
        %v3007 = vld [vmem:[#allocation3 + $0x20] sm:$0xff]
        %v3008 = vld [vmem:[#allocation3 + $0x30] sm:$0xff]
        %v3009 = vld [vmem:[#allocation3 + $0x40] sm:$0xff]
        %v3010 = vld [vmem:[#allocation3 + $0x50] sm:$0xff]
        %v3011 = vld [vmem:[#allocation3 + $0x60] sm:$0xff]
        %v3012 = vld [vmem:[#allocation3 + $0x70] sm:$0xff]
        %3021 = vrot.lane.b32.xlu0 %v2997, 64
        %v3022 = vpop.permute.xlu0 %3021
        %3023 = vrot.lane.b32.xlu0 %v2998, 64
        %v3024 = vpop.permute.xlu0 %3023
        %3025 = vrot.lane.b32.xlu0 %v2999, 64
        %v3026 = vpop.permute.xlu0 %3025
        %3027 = vrot.lane.b32.xlu0 %v3000, 64
        %v3028 = vpop.permute.xlu0 %3027
        %3029 = vrot.lane.b32.xlu0 %v3001, 64
        %v3030 = vpop.permute.xlu0 %3029
        %3031 = vrot.lane.b32.xlu0 %v3002, 64
        %v3032 = vpop.permute.xlu0 %3031
        %3033 = vrot.lane.b32.xlu0 %v3003, 64
        %v3034 = vpop.permute.xlu0 %3033
        %3035 = vrot.lane.b32.xlu0 %v3004, 64
        %v3036 = vpop.permute.xlu0 %3035
        %3045 = vrot.lane.b32.xlu0 %v3005, 64
        %v3046 = vpop.permute.xlu0 %3045
        %3047 = vrot.lane.b32.xlu0 %v3006, 64
        %v3048 = vpop.permute.xlu0 %3047
        %3049 = vrot.lane.b32.xlu0 %v3007, 64
        %v3050 = vpop.permute.xlu0 %3049
        %3051 = vrot.lane.b32.xlu0 %v3008, 64
        %v3052 = vpop.permute.xlu0 %3051
        %3053 = vrot.lane.b32.xlu0 %v3009, 64
        %v3054 = vpop.permute.xlu0 %3053
        %3055 = vrot.lane.b32.xlu0 %v3010, 64
        %v3056 = vpop.permute.xlu0 %3055
        %3057 = vrot.lane.b32.xlu0 %v3011, 64
        %v3058 = vpop.permute.xlu0 %3057
        %3059 = vrot.lane.b32.xlu0 %v3012, 64
        %v3060 = vpop.permute.xlu0 %3059
        %v3062 = vsel %vm1967, %v3022, 0
        %v3065 = vsel %vm1967, %v3024, 0
        %v3068 = vsel %vm1967, %v3026, 0
        %v3071 = vsel %vm1967, %v3028, 0
        %v3074 = vsel %vm1967, %v3030, 0
        %v3077 = vsel %vm1967, %v3032, 0
        %v3080 = vsel %vm1967, %v3034, 0
        %v3083 = vsel %vm1967, %v3036, 0
        %v3086 = vsel %vm1967, %v3046, 0
        %v3089 = vsel %vm1967, %v3048, 0
        %v3092 = vsel %vm1967, %v3050, 0
        %v3095 = vsel %vm1967, %v3052, 0
        %v3098 = vsel %vm1967, %v3054, 0
        %v3101 = vsel %vm1967, %v3056, 0
        %v3104 = vsel %vm1967, %v3058, 0
        %v3107 = vsel %vm1967, %v3060, 0
        %3109 = vmatprep.subr.bf16.mxu0 0
        %3110 = vmatpush1.bf16.xpose.msra.mxu0 %v3086
        %3111 = vmatprep.subr.bf16.mxu0 0
        %3112 = vmatpush1.bf16.xpose.msra.mxu0 %v3089
        %3113 = vmatprep.subr.bf16.mxu0 0
        %3114 = vmatpush1.bf16.xpose.msra.mxu0 %v3092
        %3115 = vmatprep.subr.bf16.mxu0 0
        %3116 = vmatpush1.bf16.xpose.msra.mxu0 %v3095
        %3117 = vmatprep.subr.bf16.mxu0 0
        %3118 = vmatpush1.bf16.xpose.msra.mxu0 %v3098
        %3119 = vmatprep.subr.bf16.mxu0 0
        %3120 = vmatpush1.bf16.xpose.msra.mxu0 %v3101
        %3121 = vmatprep.subr.bf16.mxu0 0
        %3122 = vmatpush1.bf16.xpose.msra.mxu0 %v3104
        %3123 = vmatprep.subr.bf16.mxu0 0
        %3124 = vmatpush1.bf16.xpose.msra.mxu0 %v3107
        %3125 = vmatprep.subr.bf16.mxu0 0
        %3126 = vmatpush1.bf16.xpose.msra.mxu0 0
        %3127 = vmatprep.subr.bf16.mxu0 0
        %3128 = vmatpush1.bf16.xpose.msra.mxu0 0
        %3129 = vmatprep.subr.bf16.mxu0 0
        %3130 = vmatpush1.bf16.xpose.msra.mxu0 0
        %3131 = vmatprep.subr.bf16.mxu0 0
        %3132 = vmatpush1.bf16.xpose.msra.mxu0 0
        %3133 = vmatprep.subr.bf16.mxu0 0
        %3134 = vmatpush1.bf16.xpose.msra.mxu0 0
        %3135 = vmatprep.subr.bf16.mxu0 0
        %3136 = vmatpush1.bf16.xpose.msra.mxu0 0
        %3137 = vmatprep.subr.bf16.mxu0 0
        %3138 = vmatpush1.bf16.xpose.msra.mxu0 0
        %3139 = vmatprep.subr.bf16.mxu0 0
        %3140 = vmatpush1.bf16.xpose.msra.mxu0 0
        %3141 = vmatprep.mubr.bf16.mxu0 0
        %3142 = vmatmul.mubr.bf16.gmra.mrb[0].mxu0 %v3062
        %v3143 = vpop.f32.mrb[0].mxu0
        %v3144 = vadd.f32 %v1949, %v3143
        %v3145 = vpop.f32.mrb[0].mxu0
        %v3146 = vpop.f32.mrb[0].mxu0
        %v3147 = vadd.f32 %v1949, %v3146
        %v3148 = vpop.f32.mrb[0].mxu0
        %3149 = vmatprep.mubr.bf16.mxu0 0
        %3150 = vmatmul.mubr.bf16.gmra.mrb[0].mxu0 %v3065
        %v3151 = vpop.f32.mrb[0].mxu0
        %v3152 = vadd.f32 %v1949, %v3151
        %v3153 = vpop.f32.mrb[0].mxu0
        %v3154 = vpop.f32.mrb[0].mxu0
        %v3155 = vadd.f32 %v1949, %v3154
        %v3156 = vpop.f32.mrb[0].mxu0
        %3157 = vmatprep.mubr.bf16.mxu0 0
        %3158 = vmatmul.mubr.bf16.gmra.mrb[0].mxu0 %v3068
        %v3159 = vpop.f32.mrb[0].mxu0
        %v3160 = vadd.f32 %v1949, %v3159
        %v3161 = vpop.f32.mrb[0].mxu0
        %v3162 = vpop.f32.mrb[0].mxu0
        %v3163 = vadd.f32 %v1949, %v3162
        %v3164 = vpop.f32.mrb[0].mxu0
        %3165 = vmatprep.mubr.bf16.mxu0 0
        %3166 = vmatmul.mubr.bf16.gmra.mrb[0].mxu0 %v3071
        %v3167 = vpop.f32.mrb[0].mxu0
        %v3168 = vadd.f32 %v1949, %v3167
        %v3169 = vpop.f32.mrb[0].mxu0
        %v3170 = vpop.f32.mrb[0].mxu0
        %v3171 = vadd.f32 %v1949, %v3170
        %v3172 = vpop.f32.mrb[0].mxu0
        %3173 = vmatprep.mubr.bf16.mxu0 0
        %3174 = vmatmul.mubr.bf16.gmra.mrb[0].mxu0 %v3074
        %v3175 = vpop.f32.mrb[0].mxu0
        %v3176 = vadd.f32 %v1949, %v3175
        %v3177 = vpop.f32.mrb[0].mxu0
        %v3178 = vpop.f32.mrb[0].mxu0
        %v3179 = vadd.f32 %v1949, %v3178
        %v3180 = vpop.f32.mrb[0].mxu0
        %3181 = vmatprep.mubr.bf16.mxu0 0
        %3182 = vmatmul.mubr.bf16.gmra.mrb[0].mxu0 %v3077
        %v3183 = vpop.f32.mrb[0].mxu0
        %v3184 = vadd.f32 %v1949, %v3183
        %v3185 = vpop.f32.mrb[0].mxu0
        %v3186 = vpop.f32.mrb[0].mxu0
        %v3187 = vadd.f32 %v1949, %v3186
        %v3188 = vpop.f32.mrb[0].mxu0
        %3189 = vmatprep.mubr.bf16.mxu0 0
        %3190 = vmatmul.mubr.bf16.gmra.mrb[0].mxu0 %v3080
        %v3191 = vpop.f32.mrb[0].mxu0
        %v3192 = vadd.f32 %v1949, %v3191
        %v3193 = vpop.f32.mrb[0].mxu0
        %v3194 = vpop.f32.mrb[0].mxu0
        %v3195 = vadd.f32 %v1949, %v3194
        %v3196 = vpop.f32.mrb[0].mxu0
        %3197 = vmatprep.mubr.bf16.mxu0 0
        %3198 = vmatmul.mubr.bf16.gmra.mrb[0].mxu0 %v3083
        %v3199 = vpop.f32.mrb[0].mxu0
        %v3200 = vadd.f32 %v1949, %v3199
        %v3201 = vpop.f32.mrb[0].mxu0
        %v3202 = vpop.f32.mrb[0].mxu0
        %v3203 = vadd.f32 %v1949, %v3202
        %v3204 = vpop.f32.mrb[0].mxu0
        %3205 = vdwg.mxu0
        %3206 = vmax.xlane.f32.xlu0 %v3144
        %v3207 = vpop.xlane.xlu0 %3206
        %3208 = vmax.xlane.f32.xlu0 %v3147
        %v3209 = vpop.xlane.xlu0 %3208
        %3210 = vmax.xlane.f32.xlu0 %v3152
        %v3211 = vpop.xlane.xlu0 %3210
        %3212 = vmax.xlane.f32.xlu0 %v3155
        %v3213 = vpop.xlane.xlu0 %3212
        %3214 = vmax.xlane.f32.xlu0 %v3160
        %v3215 = vpop.xlane.xlu0 %3214
        %3216 = vmax.xlane.f32.xlu0 %v3163
        %v3217 = vpop.xlane.xlu0 %3216
        %3218 = vmax.xlane.f32.xlu0 %v3168
        %v3219 = vpop.xlane.xlu0 %3218
        %3220 = vmax.xlane.f32.xlu0 %v3171
        %v3221 = vpop.xlane.xlu0 %3220
        %3222 = vmax.xlane.f32.xlu0 %v3176
        %v3223 = vpop.xlane.xlu0 %3222
        %3224 = vmax.xlane.f32.xlu0 %v3179
        %v3225 = vpop.xlane.xlu0 %3224
        %3226 = vmax.xlane.f32.xlu0 %v3184
        %v3227 = vpop.xlane.xlu0 %3226
        %3228 = vmax.xlane.f32.xlu0 %v3187
        %v3229 = vpop.xlane.xlu0 %3228
        %3230 = vmax.xlane.f32.xlu0 %v3192
        %v3231 = vpop.xlane.xlu0 %3230
        %3232 = vmax.xlane.f32.xlu0 %v3195
        %v3233 = vpop.xlane.xlu0 %3232
        %3234 = vmax.xlane.f32.xlu0 %v3200
        %v3235 = vpop.xlane.xlu0 %3234
        %3236 = vmax.xlane.f32.xlu0 %v3203
        %v3237 = vpop.xlane.xlu0 %3236
        %v3238 = vsub.f32 %v3144, %v3207
        %v3239 = vsub.f32 %v3147, %v3209
        %v3240 = vsub.f32 %v3152, %v3211
        %v3241 = vsub.f32 %v3155, %v3213
        %v3242 = vsub.f32 %v3160, %v3215
        %v3243 = vsub.f32 %v3163, %v3217
        %v3244 = vsub.f32 %v3168, %v3219
        %v3245 = vsub.f32 %v3171, %v3221
        %v3246 = vsub.f32 %v3176, %v3223
        %v3247 = vsub.f32 %v3179, %v3225
        %v3248 = vsub.f32 %v3184, %v3227
        %v3249 = vsub.f32 %v3187, %v3229
        %v3250 = vsub.f32 %v3192, %v3231
        %v3251 = vsub.f32 %v3195, %v3233
        %v3252 = vsub.f32 %v3200, %v3235
        %v3253 = vsub.f32 %v3203, %v3237
        %v3254 = vmul.f32 %v3238, 1.442695
        %v3255 = vpow.pop %v3254
        %v3256 = vmul.f32 %v3239, 1.442695
        %v3257 = vpow.pop %v3256
        %v3258 = vmul.f32 %v3240, 1.442695
        %v3259 = vpow.pop %v3258
        %v3260 = vmul.f32 %v3241, 1.442695
        %v3261 = vpow.pop %v3260
        %v3262 = vmul.f32 %v3242, 1.442695
        %v3263 = vpow.pop %v3262
        %v3264 = vmul.f32 %v3243, 1.442695
        %v3265 = vpow.pop %v3264
        %v3266 = vmul.f32 %v3244, 1.442695
        %v3267 = vpow.pop %v3266
        %v3268 = vmul.f32 %v3245, 1.442695
        %v3269 = vpow.pop %v3268
        %v3270 = vmul.f32 %v3246, 1.442695
        %v3271 = vpow.pop %v3270
        %v3272 = vmul.f32 %v3247, 1.442695
        %v3273 = vpow.pop %v3272
        %v3274 = vmul.f32 %v3248, 1.442695
        %v3275 = vpow.pop %v3274
        %v3276 = vmul.f32 %v3249, 1.442695
        %v3277 = vpow.pop %v3276
        %v3278 = vmul.f32 %v3250, 1.442695
        %v3279 = vpow.pop %v3278
        %v3280 = vmul.f32 %v3251, 1.442695
        %v3281 = vpow.pop %v3280
        %v3282 = vmul.f32 %v3252, 1.442695
        %v3283 = vpow.pop %v3282
        %v3284 = vmul.f32 %v3253, 1.442695
        %v3285 = vpow.pop %v3284
        %3286 = vadd.xlane.f32.xlu0 %v3255
        %v3287 = vpop.xlane.xlu0 %3286
        %3288 = vadd.xlane.f32.xlu0 %v3257
        %v3289 = vpop.xlane.xlu0 %3288
        %3290 = vadd.xlane.f32.xlu0 %v3259
        %v3291 = vpop.xlane.xlu0 %3290
        %3292 = vadd.xlane.f32.xlu0 %v3261
        %v3293 = vpop.xlane.xlu0 %3292
        %3294 = vadd.xlane.f32.xlu0 %v3263
        %v3295 = vpop.xlane.xlu0 %3294
        %3296 = vadd.xlane.f32.xlu0 %v3265
        %v3297 = vpop.xlane.xlu0 %3296
        %3298 = vadd.xlane.f32.xlu0 %v3267
        %v3299 = vpop.xlane.xlu0 %3298
        %3300 = vadd.xlane.f32.xlu0 %v3269
        %v3301 = vpop.xlane.xlu0 %3300
        %3302 = vadd.xlane.f32.xlu0 %v3271
        %v3303 = vpop.xlane.xlu0 %3302
        %3304 = vadd.xlane.f32.xlu0 %v3273
        %v3305 = vpop.xlane.xlu0 %3304
        %3306 = vadd.xlane.f32.xlu0 %v3275
        %v3307 = vpop.xlane.xlu0 %3306
        %3308 = vadd.xlane.f32.xlu0 %v3277
        %v3309 = vpop.xlane.xlu0 %3308
        %3310 = vadd.xlane.f32.xlu0 %v3279
        %v3311 = vpop.xlane.xlu0 %3310
        %3312 = vadd.xlane.f32.xlu0 %v3281
        %v3313 = vpop.xlane.xlu0 %3312
        %3314 = vadd.xlane.f32.xlu0 %v3283
        %v3315 = vpop.xlane.xlu0 %3314
        %3316 = vadd.xlane.f32.xlu0 %v3285
        %v3317 = vpop.xlane.xlu0 %3316
        %v3318 = vrcp.pop %v3287
        %v3319 = vrcp.pop %v3289
        %v3320 = vrcp.pop %v3291
        %v3321 = vrcp.pop %v3293
        %v3322 = vrcp.pop %v3295
        %v3323 = vrcp.pop %v3297
        %v3324 = vrcp.pop %v3299
        %v3325 = vrcp.pop %v3301
        %v3326 = vrcp.pop %v3303
        %v3327 = vrcp.pop %v3305
        %v3328 = vrcp.pop %v3307
        %v3329 = vrcp.pop %v3309
        %v3330 = vrcp.pop %v3311
        %v3331 = vrcp.pop %v3313
        %v3332 = vrcp.pop %v3315
        %v3333 = vrcp.pop %v3317
        %v3334 = vmul.f32 %v3255, %v3318
        %v3335 = vmul.f32 %v3257, %v3319
        %v3336 = vmul.f32 %v3259, %v3320
        %v3337 = vmul.f32 %v3261, %v3321
        %v3338 = vmul.f32 %v3263, %v3322
        %v3339 = vmul.f32 %v3265, %v3323
        %v3340 = vmul.f32 %v3267, %v3324
        %v3341 = vmul.f32 %v3269, %v3325
        %v3342 = vmul.f32 %v3271, %v3326
        %v3343 = vmul.f32 %v3273, %v3327
        %v3344 = vmul.f32 %v3275, %v3328
        %v3345 = vmul.f32 %v3277, %v3329
        %v3346 = vmul.f32 %v3279, %v3330
        %v3347 = vmul.f32 %v3281, %v3331
        %v3348 = vmul.f32 %v3283, %v3332
        %v3349 = vmul.f32 %v3285, %v3333
        %v3350 = vld [vmem:[%s689] sm:$0xff]
        %v3351 = vld [vmem:[%s689 + $0x8] sm:$0xff]
        %v3352 = vld [vmem:[%s689 + $0x10] sm:$0xff]
        %v3353 = vld [vmem:[%s689 + $0x18] sm:$0xff]
        %v3354 = vld [vmem:[%s689 + $0x20] sm:$0xff]
        %v3355 = vld [vmem:[%s689 + $0x28] sm:$0xff]
        %v3356 = vld [vmem:[%s689 + $0x30] sm:$0xff]
        %v3357 = vld [vmem:[%s689 + $0x38] sm:$0xff]
        %v3358 = vld [vmem:[%s689 + $0x40] sm:$0xff]
        %v3359 = vld [vmem:[%s689 + $0x48] sm:$0xff]
        %v3360 = vld [vmem:[%s689 + $0x50] sm:$0xff]
        %v3361 = vld [vmem:[%s689 + $0x58] sm:$0xff]
        %v3362 = vld [vmem:[%s689 + $0x60] sm:$0xff]
        %v3363 = vld [vmem:[%s689 + $0x68] sm:$0xff]
        %v3364 = vld [vmem:[%s689 + $0x70] sm:$0xff]
        %v3365 = vld [vmem:[%s689 + $0x78] sm:$0xff]
        %v3366 = vadd.f32 %v3350, %v3334
        %v3367 = vadd.f32 %v3351, %v3335
        %v3368 = vadd.f32 %v3352, %v3336
        %v3369 = vadd.f32 %v3353, %v3337
        %v3370 = vadd.f32 %v3354, %v3338
        %v3371 = vadd.f32 %v3355, %v3339
        %v3372 = vadd.f32 %v3356, %v3340
        %v3373 = vadd.f32 %v3357, %v3341
        %v3374 = vadd.f32 %v3358, %v3342
        %v3375 = vadd.f32 %v3359, %v3343
        %v3376 = vadd.f32 %v3360, %v3344
        %v3377 = vadd.f32 %v3361, %v3345
        %v3378 = vadd.f32 %v3362, %v3346
        %v3379 = vadd.f32 %v3363, %v3347
        %v3380 = vadd.f32 %v3364, %v3348
        %v3381 = vadd.f32 %v3365, %v3349
        %3382 = vst [vmem:[%s689] sm:$0xff] %v3366
        %3383 = vst [vmem:[%s689 + $0x8] sm:$0xff] %v3367
        %3384 = vst [vmem:[%s689 + $0x10] sm:$0xff] %v3368
        %3385 = vst [vmem:[%s689 + $0x18] sm:$0xff] %v3369
        %3386 = vst [vmem:[%s689 + $0x20] sm:$0xff] %v3370
        %3387 = vst [vmem:[%s689 + $0x28] sm:$0xff] %v3371
        %3388 = vst [vmem:[%s689 + $0x30] sm:$0xff] %v3372
        %3389 = vst [vmem:[%s689 + $0x38] sm:$0xff] %v3373
        %3390 = vst [vmem:[%s689 + $0x40] sm:$0xff] %v3374
        %3391 = vst [vmem:[%s689 + $0x48] sm:$0xff] %v3375
        %3392 = vst [vmem:[%s689 + $0x50] sm:$0xff] %v3376
        %3393 = vst [vmem:[%s689 + $0x58] sm:$0xff] %v3377
        %3394 = vst [vmem:[%s689 + $0x60] sm:$0xff] %v3378
        %3395 = vst [vmem:[%s689 + $0x68] sm:$0xff] %v3379
        %3396 = vst [vmem:[%s689 + $0x70] sm:$0xff] %v3380
        %3397 = vst [vmem:[%s689 + $0x78] sm:$0xff] %v3381
        %v3398 = vpack.c.bf16 %v3335, %v3334
        %v3399 = vpack.c.bf16 %v3337, %v3336
        %v3400 = vpack.c.bf16 %v3339, %v3338
        %v3401 = vpack.c.bf16 %v3341, %v3340
        %v3402 = vpack.c.bf16 %v3343, %v3342
        %v3403 = vpack.c.bf16 %v3345, %v3344
        %v3404 = vpack.c.bf16 %v3347, %v3346
        %v3405 = vpack.c.bf16 %v3349, %v3348
        %v3406 = vld [vmem:[#allocation4] sm:$0xff]
        %v3407 = vld [vmem:[#allocation4 + $0x10] sm:$0xff]
        %v3408 = vld [vmem:[#allocation4 + $0x20] sm:$0xff]
        %v3409 = vld [vmem:[#allocation4 + $0x30] sm:$0xff]
        %v3410 = vld [vmem:[#allocation4 + $0x40] sm:$0xff]
        %v3411 = vld [vmem:[#allocation4 + $0x50] sm:$0xff]
        %v3412 = vld [vmem:[#allocation4 + $0x60] sm:$0xff]
        %v3413 = vld [vmem:[#allocation4 + $0x70] sm:$0xff]
        %3422 = vrot.lane.b32.xlu0 %v3406, 64
        %v3423 = vpop.permute.xlu0 %3422
        %3424 = vrot.lane.b32.xlu0 %v3407, 64
        %v3425 = vpop.permute.xlu0 %3424
        %3426 = vrot.lane.b32.xlu0 %v3408, 64
        %v3427 = vpop.permute.xlu0 %3426
        %3428 = vrot.lane.b32.xlu0 %v3409, 64
        %v3429 = vpop.permute.xlu0 %3428
        %3430 = vrot.lane.b32.xlu0 %v3410, 64
        %v3431 = vpop.permute.xlu0 %3430
        %3432 = vrot.lane.b32.xlu0 %v3411, 64
        %v3433 = vpop.permute.xlu0 %3432
        %3434 = vrot.lane.b32.xlu0 %v3412, 64
        %v3435 = vpop.permute.xlu0 %3434
        %3436 = vrot.lane.b32.xlu0 %v3413, 64
        %v3437 = vpop.permute.xlu0 %3436
        %3446 = vmatprep.subr.bf16.mxu0 0
        %3447 = vmatpush1.bf16.msra.mxu0 %v3423
        %3448 = vmatprep.subr.bf16.mxu0 0
        %3449 = vmatpush1.bf16.msra.mxu0 %v3425
        %3450 = vmatprep.subr.bf16.mxu0 0
        %3451 = vmatpush1.bf16.msra.mxu0 %v3427
        %3452 = vmatprep.subr.bf16.mxu0 0
        %3453 = vmatpush1.bf16.msra.mxu0 %v3429
        %3454 = vmatprep.subr.bf16.mxu0 0
        %3455 = vmatpush1.bf16.msra.mxu0 %v3431
        %3456 = vmatprep.subr.bf16.mxu0 0
        %3457 = vmatpush1.bf16.msra.mxu0 %v3433
        %3458 = vmatprep.subr.bf16.mxu0 0
        %3459 = vmatpush1.bf16.msra.mxu0 %v3435
        %3460 = vmatprep.subr.bf16.mxu0 0
        %3461 = vmatpush1.bf16.msra.mxu0 %v3437
        %3462 = vmatprep.subr.bf16.mxu0 0
        %3463 = vmatpush1.bf16.msra.mxu0 0
        %3464 = vmatprep.subr.bf16.mxu0 0
        %3465 = vmatpush1.bf16.msra.mxu0 0
        %3466 = vmatprep.subr.bf16.mxu0 0
        %3467 = vmatpush1.bf16.msra.mxu0 0
        %3468 = vmatprep.subr.bf16.mxu0 0
        %3469 = vmatpush1.bf16.msra.mxu0 0
        %3470 = vmatprep.subr.bf16.mxu0 0
        %3471 = vmatpush1.bf16.msra.mxu0 0
        %3472 = vmatprep.subr.bf16.mxu0 0
        %3473 = vmatpush1.bf16.msra.mxu0 0
        %3474 = vmatprep.subr.bf16.mxu0 0
        %3475 = vmatpush1.bf16.msra.mxu0 0
        %3476 = vmatprep.subr.bf16.mxu0 0
        %3477 = vmatpush1.bf16.msra.mxu0 0
        %3478 = vmatprep.mubr.bf16.mxu0 0
        %3479 = vmatmul.mubr.bf16.gmra.mrb[0].mxu0 %v3398
        %v3480 = vpop.f32.mrb[0].mxu0
        %v3481 = vadd.f32 0.0, %v3480
        %v3482 = vpop.f32.mrb[0].mxu0
        %v3483 = vpop.f32.mrb[0].mxu0
        %v3484 = vadd.f32 0.0, %v3483
        %v3485 = vpop.f32.mrb[0].mxu0
        %3486 = vmatprep.mubr.bf16.mxu0 0
        %3487 = vmatmul.mubr.bf16.gmra.mrb[0].mxu0 %v3399
        %v3488 = vpop.f32.mrb[0].mxu0
        %v3489 = vadd.f32 0.0, %v3488
        %v3490 = vpop.f32.mrb[0].mxu0
        %v3491 = vpop.f32.mrb[0].mxu0
        %v3492 = vadd.f32 0.0, %v3491
        %v3493 = vpop.f32.mrb[0].mxu0
        %3494 = vmatprep.mubr.bf16.mxu0 0
        %3495 = vmatmul.mubr.bf16.gmra.mrb[0].mxu0 %v3400
        %v3496 = vpop.f32.mrb[0].mxu0
        %v3497 = vadd.f32 0.0, %v3496
        %v3498 = vpop.f32.mrb[0].mxu0
        %v3499 = vpop.f32.mrb[0].mxu0
        %v3500 = vadd.f32 0.0, %v3499
        %v3501 = vpop.f32.mrb[0].mxu0
        %3502 = vmatprep.mubr.bf16.mxu0 0
        %3503 = vmatmul.mubr.bf16.gmra.mrb[0].mxu0 %v3401
        %v3504 = vpop.f32.mrb[0].mxu0
        %v3505 = vadd.f32 0.0, %v3504
        %v3506 = vpop.f32.mrb[0].mxu0
        %v3507 = vpop.f32.mrb[0].mxu0
        %v3508 = vadd.f32 0.0, %v3507
        %v3509 = vpop.f32.mrb[0].mxu0
        %3510 = vmatprep.mubr.bf16.mxu0 0
        %3511 = vmatmul.mubr.bf16.gmra.mrb[0].mxu0 %v3402
        %v3512 = vpop.f32.mrb[0].mxu0
        %v3513 = vadd.f32 0.0, %v3512
        %v3514 = vpop.f32.mrb[0].mxu0
        %v3515 = vpop.f32.mrb[0].mxu0
        %v3516 = vadd.f32 0.0, %v3515
        %v3517 = vpop.f32.mrb[0].mxu0
        %3518 = vmatprep.mubr.bf16.mxu0 0
        %3519 = vmatmul.mubr.bf16.gmra.mrb[0].mxu0 %v3403
        %v3520 = vpop.f32.mrb[0].mxu0
        %v3521 = vadd.f32 0.0, %v3520
        %v3522 = vpop.f32.mrb[0].mxu0
        %v3523 = vpop.f32.mrb[0].mxu0
        %v3524 = vadd.f32 0.0, %v3523
        %v3525 = vpop.f32.mrb[0].mxu0
        %3526 = vmatprep.mubr.bf16.mxu0 0
        %3527 = vmatmul.mubr.bf16.gmra.mrb[0].mxu0 %v3404
        %v3528 = vpop.f32.mrb[0].mxu0
        %v3529 = vadd.f32 0.0, %v3528
        %v3530 = vpop.f32.mrb[0].mxu0
        %v3531 = vpop.f32.mrb[0].mxu0
        %v3532 = vadd.f32 0.0, %v3531
        %v3533 = vpop.f32.mrb[0].mxu0
        %3534 = vmatprep.mubr.bf16.mxu0 0
        %3535 = vmatmul.mubr.bf16.gmra.mrb[0].mxu0 %v3405
        %v3536 = vpop.f32.mrb[0].mxu0
        %v3537 = vadd.f32 0.0, %v3536
        %v3538 = vpop.f32.mrb[0].mxu0
        %v3539 = vpop.f32.mrb[0].mxu0
        %v3540 = vadd.f32 0.0, %v3539
        %v3541 = vpop.f32.mrb[0].mxu0
        %3542 = vdwg.mxu0
        %v3543 = vpack.c.bf16 %v3484, %v3481
        %v3544 = vpack.c.bf16 %v3492, %v3489
        %v3545 = vpack.c.bf16 %v3500, %v3497
        %v3546 = vpack.c.bf16 %v3508, %v3505
        %v3547 = vpack.c.bf16 %v3516, %v3513
        %v3548 = vpack.c.bf16 %v3524, %v3521
        %v3549 = vpack.c.bf16 %v3532, %v3529
        %v3550 = vpack.c.bf16 %v3540, %v3537
        %3559 = vrot.lane.b32.xlu0 %v3543, 64
        %v3560 = vpop.permute.xlu0 %3559
        %3561 = vrot.lane.b32.xlu0 %v3544, 64
        %v3562 = vpop.permute.xlu0 %3561
        %3563 = vrot.lane.b32.xlu0 %v3545, 64
        %v3564 = vpop.permute.xlu0 %3563
        %3565 = vrot.lane.b32.xlu0 %v3546, 64
        %v3566 = vpop.permute.xlu0 %3565
        %3567 = vrot.lane.b32.xlu0 %v3547, 64
        %v3568 = vpop.permute.xlu0 %3567
        %3569 = vrot.lane.b32.xlu0 %v3548, 64
        %v3570 = vpop.permute.xlu0 %3569
        %3571 = vrot.lane.b32.xlu0 %v3549, 64
        %v3572 = vpop.permute.xlu0 %3571
        %3573 = vrot.lane.b32.xlu0 %v3550, 64
        %v3574 = vpop.permute.xlu0 %3573
        %vm3583 = vcmask 785920
        %3584 = vst.msk [vmem:[#allocation5] sm:$0xff] %vm3583, %v3560
        %3585 = vst.msk [vmem:[#allocation5 + $0x10] sm:$0xff] %vm3583, %v3562
        %3586 = vst.msk [vmem:[#allocation5 + $0x20] sm:$0xff] %vm3583, %v3564
        %3587 = vst.msk [vmem:[#allocation5 + $0x30] sm:$0xff] %vm3583, %v3566
        %3588 = vst.msk [vmem:[#allocation5 + $0x40] sm:$0xff] %vm3583, %v3568
        %3589 = vst.msk [vmem:[#allocation5 + $0x50] sm:$0xff] %vm3583, %v3570
        %3590 = vst.msk [vmem:[#allocation5 + $0x60] sm:$0xff] %vm3583, %v3572
        %3591 = vst.msk [vmem:[#allocation5 + $0x70] sm:$0xff] %vm3583, %v3574
        %v3592 = vld [vmem:[#allocation2] sm:$0xff]
        %v3593 = vld [vmem:[#allocation2 + $0x10] sm:$0xff]
        %v3594 = vld [vmem:[#allocation2 + $0x20] sm:$0xff]
        %v3595 = vld [vmem:[#allocation2 + $0x30] sm:$0xff]
        %v3596 = vld [vmem:[#allocation2 + $0x40] sm:$0xff]
        %v3597 = vld [vmem:[#allocation2 + $0x50] sm:$0xff]
        %v3598 = vld [vmem:[#allocation2 + $0x60] sm:$0xff]
        %v3599 = vld [vmem:[#allocation2 + $0x70] sm:$0xff]
        %v3600 = vld [vmem:[#allocation3] sm:$0xff]
        %v3601 = vld [vmem:[#allocation3 + $0x10] sm:$0xff]
        %v3602 = vld [vmem:[#allocation3 + $0x20] sm:$0xff]
        %v3603 = vld [vmem:[#allocation3 + $0x30] sm:$0xff]
        %v3604 = vld [vmem:[#allocation3 + $0x40] sm:$0xff]
        %v3605 = vld [vmem:[#allocation3 + $0x50] sm:$0xff]
        %v3606 = vld [vmem:[#allocation3 + $0x60] sm:$0xff]
        %v3607 = vld [vmem:[#allocation3 + $0x70] sm:$0xff]
        %3616 = vrot.lane.b32.xlu0 %v3592, 32
        %v3617 = vpop.permute.xlu0 %3616
        %3618 = vrot.lane.b32.xlu0 %v3593, 32
        %v3619 = vpop.permute.xlu0 %3618
        %3620 = vrot.lane.b32.xlu0 %v3594, 32
        %v3621 = vpop.permute.xlu0 %3620
        %3622 = vrot.lane.b32.xlu0 %v3595, 32
        %v3623 = vpop.permute.xlu0 %3622
        %3624 = vrot.lane.b32.xlu0 %v3596, 32
        %v3625 = vpop.permute.xlu0 %3624
        %3626 = vrot.lane.b32.xlu0 %v3597, 32
        %v3627 = vpop.permute.xlu0 %3626
        %3628 = vrot.lane.b32.xlu0 %v3598, 32
        %v3629 = vpop.permute.xlu0 %3628
        %3630 = vrot.lane.b32.xlu0 %v3599, 32
        %v3631 = vpop.permute.xlu0 %3630
        %3640 = vrot.lane.b32.xlu0 %v3600, 32
        %v3641 = vpop.permute.xlu0 %3640
        %3642 = vrot.lane.b32.xlu0 %v3601, 32
        %v3643 = vpop.permute.xlu0 %3642
        %3644 = vrot.lane.b32.xlu0 %v3602, 32
        %v3645 = vpop.permute.xlu0 %3644
        %3646 = vrot.lane.b32.xlu0 %v3603, 32
        %v3647 = vpop.permute.xlu0 %3646
        %3648 = vrot.lane.b32.xlu0 %v3604, 32
        %v3649 = vpop.permute.xlu0 %3648
        %3650 = vrot.lane.b32.xlu0 %v3605, 32
        %v3651 = vpop.permute.xlu0 %3650
        %3652 = vrot.lane.b32.xlu0 %v3606, 32
        %v3653 = vpop.permute.xlu0 %3652
        %3654 = vrot.lane.b32.xlu0 %v3607, 32
        %v3655 = vpop.permute.xlu0 %3654
        %v3657 = vsel %vm1967, %v3617, 0
        %v3660 = vsel %vm1967, %v3619, 0
        %v3663 = vsel %vm1967, %v3621, 0
        %v3666 = vsel %vm1967, %v3623, 0
        %v3669 = vsel %vm1967, %v3625, 0
        %v3672 = vsel %vm1967, %v3627, 0
        %v3675 = vsel %vm1967, %v3629, 0
        %v3678 = vsel %vm1967, %v3631, 0
        %v3681 = vsel %vm1967, %v3641, 0
        %v3684 = vsel %vm1967, %v3643, 0
        %v3687 = vsel %vm1967, %v3645, 0
        %v3690 = vsel %vm1967, %v3647, 0
        %v3693 = vsel %vm1967, %v3649, 0
        %v3696 = vsel %vm1967, %v3651, 0
        %v3699 = vsel %vm1967, %v3653, 0
        %v3702 = vsel %vm1967, %v3655, 0
        %3704 = vmatprep.subr.bf16.mxu0 0
        %3705 = vmatpush1.bf16.xpose.msra.mxu0 %v3681
        %3706 = vmatprep.subr.bf16.mxu0 0
        %3707 = vmatpush1.bf16.xpose.msra.mxu0 %v3684
        %3708 = vmatprep.subr.bf16.mxu0 0
        %3709 = vmatpush1.bf16.xpose.msra.mxu0 %v3687
        %3710 = vmatprep.subr.bf16.mxu0 0
        %3711 = vmatpush1.bf16.xpose.msra.mxu0 %v3690
        %3712 = vmatprep.subr.bf16.mxu0 0
        %3713 = vmatpush1.bf16.xpose.msra.mxu0 %v3693
        %3714 = vmatprep.subr.bf16.mxu0 0
        %3715 = vmatpush1.bf16.xpose.msra.mxu0 %v3696
        %3716 = vmatprep.subr.bf16.mxu0 0
        %3717 = vmatpush1.bf16.xpose.msra.mxu0 %v3699
        %3718 = vmatprep.subr.bf16.mxu0 0
        %3719 = vmatpush1.bf16.xpose.msra.mxu0 %v3702
        %3720 = vmatprep.subr.bf16.mxu0 0
        %3721 = vmatpush1.bf16.xpose.msra.mxu0 0
        %3722 = vmatprep.subr.bf16.mxu0 0
        %3723 = vmatpush1.bf16.xpose.msra.mxu0 0
        %3724 = vmatprep.subr.bf16.mxu0 0
        %3725 = vmatpush1.bf16.xpose.msra.mxu0 0
        %3726 = vmatprep.subr.bf16.mxu0 0
        %3727 = vmatpush1.bf16.xpose.msra.mxu0 0
        %3728 = vmatprep.subr.bf16.mxu0 0
        %3729 = vmatpush1.bf16.xpose.msra.mxu0 0
        %3730 = vmatprep.subr.bf16.mxu0 0
        %3731 = vmatpush1.bf16.xpose.msra.mxu0 0
        %3732 = vmatprep.subr.bf16.mxu0 0
        %3733 = vmatpush1.bf16.xpose.msra.mxu0 0
        %3734 = vmatprep.subr.bf16.mxu0 0
        %3735 = vmatpush1.bf16.xpose.msra.mxu0 0
        %3736 = vmatprep.mubr.bf16.mxu0 0
        %3737 = vmatmul.mubr.bf16.gmra.mrb[0].mxu0 %v3657
        %v3738 = vpop.f32.mrb[0].mxu0
        %v3739 = vadd.f32 %v1949, %v3738
        %v3740 = vpop.f32.mrb[0].mxu0
        %v3741 = vpop.f32.mrb[0].mxu0
        %v3742 = vadd.f32 %v1949, %v3741
        %v3743 = vpop.f32.mrb[0].mxu0
        %3744 = vmatprep.mubr.bf16.mxu0 0
        %3745 = vmatmul.mubr.bf16.gmra.mrb[0].mxu0 %v3660
        %v3746 = vpop.f32.mrb[0].mxu0
        %v3747 = vadd.f32 %v1949, %v3746
        %v3748 = vpop.f32.mrb[0].mxu0
        %v3749 = vpop.f32.mrb[0].mxu0
        %v3750 = vadd.f32 %v1949, %v3749
        %v3751 = vpop.f32.mrb[0].mxu0
        %3752 = vmatprep.mubr.bf16.mxu0 0
        %3753 = vmatmul.mubr.bf16.gmra.mrb[0].mxu0 %v3663
        %v3754 = vpop.f32.mrb[0].mxu0
        %v3755 = vadd.f32 %v1949, %v3754
        %v3756 = vpop.f32.mrb[0].mxu0
        %v3757 = vpop.f32.mrb[0].mxu0
        %v3758 = vadd.f32 %v1949, %v3757
        %v3759 = vpop.f32.mrb[0].mxu0
        %3760 = vmatprep.mubr.bf16.mxu0 0
        %3761 = vmatmul.mubr.bf16.gmra.mrb[0].mxu0 %v3666
        %v3762 = vpop.f32.mrb[0].mxu0
        %v3763 = vadd.f32 %v1949, %v3762
        %v3764 = vpop.f32.mrb[0].mxu0
        %v3765 = vpop.f32.mrb[0].mxu0
        %v3766 = vadd.f32 %v1949, %v3765
        %v3767 = vpop.f32.mrb[0].mxu0
        %3768 = vmatprep.mubr.bf16.mxu0 0
        %3769 = vmatmul.mubr.bf16.gmra.mrb[0].mxu0 %v3669
        %v3770 = vpop.f32.mrb[0].mxu0
        %v3771 = vadd.f32 %v1949, %v3770
        %v3772 = vpop.f32.mrb[0].mxu0
        %v3773 = vpop.f32.mrb[0].mxu0
        %v3774 = vadd.f32 %v1949, %v3773
        %v3775 = vpop.f32.mrb[0].mxu0
        %3776 = vmatprep.mubr.bf16.mxu0 0
        %3777 = vmatmul.mubr.bf16.gmra.mrb[0].mxu0 %v3672
        %v3778 = vpop.f32.mrb[0].mxu0
        %v3779 = vadd.f32 %v1949, %v3778
        %v3780 = vpop.f32.mrb[0].mxu0
        %v3781 = vpop.f32.mrb[0].mxu0
        %v3782 = vadd.f32 %v1949, %v3781
        %v3783 = vpop.f32.mrb[0].mxu0
        %3784 = vmatprep.mubr.bf16.mxu0 0
        %3785 = vmatmul.mubr.bf16.gmra.mrb[0].mxu0 %v3675
        %v3786 = vpop.f32.mrb[0].mxu0
        %v3787 = vadd.f32 %v1949, %v3786
        %v3788 = vpop.f32.mrb[0].mxu0
        %v3789 = vpop.f32.mrb[0].mxu0
        %v3790 = vadd.f32 %v1949, %v3789
        %v3791 = vpop.f32.mrb[0].mxu0
        %3792 = vmatprep.mubr.bf16.mxu0 0
        %3793 = vmatmul.mubr.bf16.gmra.mrb[0].mxu0 %v3678
        %v3794 = vpop.f32.mrb[0].mxu0
        %v3795 = vadd.f32 %v1949, %v3794
        %v3796 = vpop.f32.mrb[0].mxu0
        %v3797 = vpop.f32.mrb[0].mxu0
        %v3798 = vadd.f32 %v1949, %v3797
        %v3799 = vpop.f32.mrb[0].mxu0
        %3800 = vdwg.mxu0
        %3801 = vmax.xlane.f32.xlu0 %v3739
        %v3802 = vpop.xlane.xlu0 %3801
        %3803 = vmax.xlane.f32.xlu0 %v3742
        %v3804 = vpop.xlane.xlu0 %3803
        %3805 = vmax.xlane.f32.xlu0 %v3747
        %v3806 = vpop.xlane.xlu0 %3805
        %3807 = vmax.xlane.f32.xlu0 %v3750
        %v3808 = vpop.xlane.xlu0 %3807
        %3809 = vmax.xlane.f32.xlu0 %v3755
        %v3810 = vpop.xlane.xlu0 %3809
        %3811 = vmax.xlane.f32.xlu0 %v3758
        %v3812 = vpop.xlane.xlu0 %3811
        %3813 = vmax.xlane.f32.xlu0 %v3763
        %v3814 = vpop.xlane.xlu0 %3813
        %3815 = vmax.xlane.f32.xlu0 %v3766
        %v3816 = vpop.xlane.xlu0 %3815
        %3817 = vmax.xlane.f32.xlu0 %v3771
        %v3818 = vpop.xlane.xlu0 %3817
        %3819 = vmax.xlane.f32.xlu0 %v3774
        %v3820 = vpop.xlane.xlu0 %3819
        %3821 = vmax.xlane.f32.xlu0 %v3779
        %v3822 = vpop.xlane.xlu0 %3821
        %3823 = vmax.xlane.f32.xlu0 %v3782
        %v3824 = vpop.xlane.xlu0 %3823
        %3825 = vmax.xlane.f32.xlu0 %v3787
        %v3826 = vpop.xlane.xlu0 %3825
        %3827 = vmax.xlane.f32.xlu0 %v3790
        %v3828 = vpop.xlane.xlu0 %3827
        %3829 = vmax.xlane.f32.xlu0 %v3795
        %v3830 = vpop.xlane.xlu0 %3829
        %3831 = vmax.xlane.f32.xlu0 %v3798
        %v3832 = vpop.xlane.xlu0 %3831
        %v3833 = vsub.f32 %v3739, %v3802
        %v3834 = vsub.f32 %v3742, %v3804
        %v3835 = vsub.f32 %v3747, %v3806
        %v3836 = vsub.f32 %v3750, %v3808
        %v3837 = vsub.f32 %v3755, %v3810
        %v3838 = vsub.f32 %v3758, %v3812
        %v3839 = vsub.f32 %v3763, %v3814
        %v3840 = vsub.f32 %v3766, %v3816
        %v3841 = vsub.f32 %v3771, %v3818
        %v3842 = vsub.f32 %v3774, %v3820
        %v3843 = vsub.f32 %v3779, %v3822
        %v3844 = vsub.f32 %v3782, %v3824
        %v3845 = vsub.f32 %v3787, %v3826
        %v3846 = vsub.f32 %v3790, %v3828
        %v3847 = vsub.f32 %v3795, %v3830
        %v3848 = vsub.f32 %v3798, %v3832
        %v3849 = vmul.f32 %v3833, 1.442695
        %v3850 = vpow.pop %v3849
        %v3851 = vmul.f32 %v3834, 1.442695
        %v3852 = vpow.pop %v3851
        %v3853 = vmul.f32 %v3835, 1.442695
        %v3854 = vpow.pop %v3853
        %v3855 = vmul.f32 %v3836, 1.442695
        %v3856 = vpow.pop %v3855
        %v3857 = vmul.f32 %v3837, 1.442695
        %v3858 = vpow.pop %v3857
        %v3859 = vmul.f32 %v3838, 1.442695
        %v3860 = vpow.pop %v3859
        %v3861 = vmul.f32 %v3839, 1.442695
        %v3862 = vpow.pop %v3861
        %v3863 = vmul.f32 %v3840, 1.442695
        %v3864 = vpow.pop %v3863
        %v3865 = vmul.f32 %v3841, 1.442695
        %v3866 = vpow.pop %v3865
        %v3867 = vmul.f32 %v3842, 1.442695
        %v3868 = vpow.pop %v3867
        %v3869 = vmul.f32 %v3843, 1.442695
        %v3870 = vpow.pop %v3869
        %v3871 = vmul.f32 %v3844, 1.442695
        %v3872 = vpow.pop %v3871
        %v3873 = vmul.f32 %v3845, 1.442695
        %v3874 = vpow.pop %v3873
        %v3875 = vmul.f32 %v3846, 1.442695
        %v3876 = vpow.pop %v3875
        %v3877 = vmul.f32 %v3847, 1.442695
        %v3878 = vpow.pop %v3877
        %v3879 = vmul.f32 %v3848, 1.442695
        %v3880 = vpow.pop %v3879
        %3881 = vadd.xlane.f32.xlu0 %v3850
        %v3882 = vpop.xlane.xlu0 %3881
        %3883 = vadd.xlane.f32.xlu0 %v3852
        %v3884 = vpop.xlane.xlu0 %3883
        %3885 = vadd.xlane.f32.xlu0 %v3854
        %v3886 = vpop.xlane.xlu0 %3885
        %3887 = vadd.xlane.f32.xlu0 %v3856
        %v3888 = vpop.xlane.xlu0 %3887
        %3889 = vadd.xlane.f32.xlu0 %v3858
        %v3890 = vpop.xlane.xlu0 %3889
        %3891 = vadd.xlane.f32.xlu0 %v3860
        %v3892 = vpop.xlane.xlu0 %3891
        %3893 = vadd.xlane.f32.xlu0 %v3862
        %v3894 = vpop.xlane.xlu0 %3893
        %3895 = vadd.xlane.f32.xlu0 %v3864
        %v3896 = vpop.xlane.xlu0 %3895
        %3897 = vadd.xlane.f32.xlu0 %v3866
        %v3898 = vpop.xlane.xlu0 %3897
        %3899 = vadd.xlane.f32.xlu0 %v3868
        %v3900 = vpop.xlane.xlu0 %3899
        %3901 = vadd.xlane.f32.xlu0 %v3870
        %v3902 = vpop.xlane.xlu0 %3901
        %3903 = vadd.xlane.f32.xlu0 %v3872
        %v3904 = vpop.xlane.xlu0 %3903
        %3905 = vadd.xlane.f32.xlu0 %v3874
        %v3906 = vpop.xlane.xlu0 %3905
        %3907 = vadd.xlane.f32.xlu0 %v3876
        %v3908 = vpop.xlane.xlu0 %3907
        %3909 = vadd.xlane.f32.xlu0 %v3878
        %v3910 = vpop.xlane.xlu0 %3909
        %3911 = vadd.xlane.f32.xlu0 %v3880
        %v3912 = vpop.xlane.xlu0 %3911
        %v3913 = vrcp.pop %v3882
        %v3914 = vrcp.pop %v3884
        %v3915 = vrcp.pop %v3886
        %v3916 = vrcp.pop %v3888
        %v3917 = vrcp.pop %v3890
        %v3918 = vrcp.pop %v3892
        %v3919 = vrcp.pop %v3894
        %v3920 = vrcp.pop %v3896
        %v3921 = vrcp.pop %v3898
        %v3922 = vrcp.pop %v3900
        %v3923 = vrcp.pop %v3902
        %v3924 = vrcp.pop %v3904
        %v3925 = vrcp.pop %v3906
        %v3926 = vrcp.pop %v3908
        %v3927 = vrcp.pop %v3910
        %v3928 = vrcp.pop %v3912
        %v3929 = vmul.f32 %v3850, %v3913
        %v3930 = vmul.f32 %v3852, %v3914
        %v3931 = vmul.f32 %v3854, %v3915
        %v3932 = vmul.f32 %v3856, %v3916
        %v3933 = vmul.f32 %v3858, %v3917
        %v3934 = vmul.f32 %v3860, %v3918
        %v3935 = vmul.f32 %v3862, %v3919
        %v3936 = vmul.f32 %v3864, %v3920
        %v3937 = vmul.f32 %v3866, %v3921
        %v3938 = vmul.f32 %v3868, %v3922
        %v3939 = vmul.f32 %v3870, %v3923
        %v3940 = vmul.f32 %v3872, %v3924
        %v3941 = vmul.f32 %v3874, %v3925
        %v3942 = vmul.f32 %v3876, %v3926
        %v3943 = vmul.f32 %v3878, %v3927
        %v3944 = vmul.f32 %v3880, %v3928
        %v3945 = vld [vmem:[%s689] sm:$0xff]
        %v3946 = vld [vmem:[%s689 + $0x8] sm:$0xff]
        %v3947 = vld [vmem:[%s689 + $0x10] sm:$0xff]
        %v3948 = vld [vmem:[%s689 + $0x18] sm:$0xff]
        %v3949 = vld [vmem:[%s689 + $0x20] sm:$0xff]
        %v3950 = vld [vmem:[%s689 + $0x28] sm:$0xff]
        %v3951 = vld [vmem:[%s689 + $0x30] sm:$0xff]
        %v3952 = vld [vmem:[%s689 + $0x38] sm:$0xff]
        %v3953 = vld [vmem:[%s689 + $0x40] sm:$0xff]
        %v3954 = vld [vmem:[%s689 + $0x48] sm:$0xff]
        %v3955 = vld [vmem:[%s689 + $0x50] sm:$0xff]
        %v3956 = vld [vmem:[%s689 + $0x58] sm:$0xff]
        %v3957 = vld [vmem:[%s689 + $0x60] sm:$0xff]
        %v3958 = vld [vmem:[%s689 + $0x68] sm:$0xff]
        %v3959 = vld [vmem:[%s689 + $0x70] sm:$0xff]
        %v3960 = vld [vmem:[%s689 + $0x78] sm:$0xff]
        %v3961 = vadd.f32 %v3945, %v3929
        %v3962 = vadd.f32 %v3946, %v3930
        %v3963 = vadd.f32 %v3947, %v3931
        %v3964 = vadd.f32 %v3948, %v3932
        %v3965 = vadd.f32 %v3949, %v3933
        %v3966 = vadd.f32 %v3950, %v3934
        %v3967 = vadd.f32 %v3951, %v3935
        %v3968 = vadd.f32 %v3952, %v3936
        %v3969 = vadd.f32 %v3953, %v3937
        %v3970 = vadd.f32 %v3954, %v3938
        %v3971 = vadd.f32 %v3955, %v3939
        %v3972 = vadd.f32 %v3956, %v3940
        %v3973 = vadd.f32 %v3957, %v3941
        %v3974 = vadd.f32 %v3958, %v3942
        %v3975 = vadd.f32 %v3959, %v3943
        %v3976 = vadd.f32 %v3960, %v3944
        %3977 = vst [vmem:[%s689] sm:$0xff] %v3961
        %3978 = vst [vmem:[%s689 + $0x8] sm:$0xff] %v3962
        %3979 = vst [vmem:[%s689 + $0x10] sm:$0xff] %v3963
        %3980 = vst [vmem:[%s689 + $0x18] sm:$0xff] %v3964
        %3981 = vst [vmem:[%s689 + $0x20] sm:$0xff] %v3965
        %3982 = vst [vmem:[%s689 + $0x28] sm:$0xff] %v3966
        %3983 = vst [vmem:[%s689 + $0x30] sm:$0xff] %v3967
        %3984 = vst [vmem:[%s689 + $0x38] sm:$0xff] %v3968
        %3985 = vst [vmem:[%s689 + $0x40] sm:$0xff] %v3969
        %3986 = vst [vmem:[%s689 + $0x48] sm:$0xff] %v3970
        %3987 = vst [vmem:[%s689 + $0x50] sm:$0xff] %v3971
        %3988 = vst [vmem:[%s689 + $0x58] sm:$0xff] %v3972
        %3989 = vst [vmem:[%s689 + $0x60] sm:$0xff] %v3973
        %3990 = vst [vmem:[%s689 + $0x68] sm:$0xff] %v3974
        %3991 = vst [vmem:[%s689 + $0x70] sm:$0xff] %v3975
        %3992 = vst [vmem:[%s689 + $0x78] sm:$0xff] %v3976
        %v3993 = vpack.c.bf16 %v3930, %v3929
        %v3994 = vpack.c.bf16 %v3932, %v3931
        %v3995 = vpack.c.bf16 %v3934, %v3933
        %v3996 = vpack.c.bf16 %v3936, %v3935
        %v3997 = vpack.c.bf16 %v3938, %v3937
        %v3998 = vpack.c.bf16 %v3940, %v3939
        %v3999 = vpack.c.bf16 %v3942, %v3941
        %v4000 = vpack.c.bf16 %v3944, %v3943
        %v4001 = vld [vmem:[#allocation4] sm:$0xff]
        %v4002 = vld [vmem:[#allocation4 + $0x10] sm:$0xff]
        %v4003 = vld [vmem:[#allocation4 + $0x20] sm:$0xff]
        %v4004 = vld [vmem:[#allocation4 + $0x30] sm:$0xff]
        %v4005 = vld [vmem:[#allocation4 + $0x40] sm:$0xff]
        %v4006 = vld [vmem:[#allocation4 + $0x50] sm:$0xff]
        %v4007 = vld [vmem:[#allocation4 + $0x60] sm:$0xff]
        %v4008 = vld [vmem:[#allocation4 + $0x70] sm:$0xff]
        %4017 = vrot.lane.b32.xlu0 %v4001, 32
        %v4018 = vpop.permute.xlu0 %4017
        %4019 = vrot.lane.b32.xlu0 %v4002, 32
        %v4020 = vpop.permute.xlu0 %4019
        %4021 = vrot.lane.b32.xlu0 %v4003, 32
        %v4022 = vpop.permute.xlu0 %4021
        %4023 = vrot.lane.b32.xlu0 %v4004, 32
        %v4024 = vpop.permute.xlu0 %4023
        %4025 = vrot.lane.b32.xlu0 %v4005, 32
        %v4026 = vpop.permute.xlu0 %4025
        %4027 = vrot.lane.b32.xlu0 %v4006, 32
        %v4028 = vpop.permute.xlu0 %4027
        %4029 = vrot.lane.b32.xlu0 %v4007, 32
        %v4030 = vpop.permute.xlu0 %4029
        %4031 = vrot.lane.b32.xlu0 %v4008, 32
        %v4032 = vpop.permute.xlu0 %4031
        %4041 = vmatprep.subr.bf16.mxu0 0
        %4042 = vmatpush1.bf16.msra.mxu0 %v4018
        %4043 = vmatprep.subr.bf16.mxu0 0
        %4044 = vmatpush1.bf16.msra.mxu0 %v4020
        %4045 = vmatprep.subr.bf16.mxu0 0
        %4046 = vmatpush1.bf16.msra.mxu0 %v4022
        %4047 = vmatprep.subr.bf16.mxu0 0
        %4048 = vmatpush1.bf16.msra.mxu0 %v4024
        %4049 = vmatprep.subr.bf16.mxu0 0
        %4050 = vmatpush1.bf16.msra.mxu0 %v4026
        %4051 = vmatprep.subr.bf16.mxu0 0
        %4052 = vmatpush1.bf16.msra.mxu0 %v4028
        %4053 = vmatprep.subr.bf16.mxu0 0
        %4054 = vmatpush1.bf16.msra.mxu0 %v4030
        %4055 = vmatprep.subr.bf16.mxu0 0
        %4056 = vmatpush1.bf16.msra.mxu0 %v4032
        %4057 = vmatprep.subr.bf16.mxu0 0
        %4058 = vmatpush1.bf16.msra.mxu0 0
        %4059 = vmatprep.subr.bf16.mxu0 0
        %4060 = vmatpush1.bf16.msra.mxu0 0
        %4061 = vmatprep.subr.bf16.mxu0 0
        %4062 = vmatpush1.bf16.msra.mxu0 0
        %4063 = vmatprep.subr.bf16.mxu0 0
        %4064 = vmatpush1.bf16.msra.mxu0 0
        %4065 = vmatprep.subr.bf16.mxu0 0
        %4066 = vmatpush1.bf16.msra.mxu0 0
        %4067 = vmatprep.subr.bf16.mxu0 0
        %4068 = vmatpush1.bf16.msra.mxu0 0
        %4069 = vmatprep.subr.bf16.mxu0 0
        %4070 = vmatpush1.bf16.msra.mxu0 0
        %4071 = vmatprep.subr.bf16.mxu0 0
        %4072 = vmatpush1.bf16.msra.mxu0 0
        %4073 = vmatprep.mubr.bf16.mxu0 0
        %4074 = vmatmul.mubr.bf16.gmra.mrb[0].mxu0 %v3993
        %v4075 = vpop.f32.mrb[0].mxu0
        %v4076 = vadd.f32 0.0, %v4075
        %v4077 = vpop.f32.mrb[0].mxu0
        %v4078 = vpop.f32.mrb[0].mxu0
        %v4079 = vadd.f32 0.0, %v4078
        %v4080 = vpop.f32.mrb[0].mxu0
        %4081 = vmatprep.mubr.bf16.mxu0 0
        %4082 = vmatmul.mubr.bf16.gmra.mrb[0].mxu0 %v3994
        %v4083 = vpop.f32.mrb[0].mxu0
        %v4084 = vadd.f32 0.0, %v4083
        %v4085 = vpop.f32.mrb[0].mxu0
        %v4086 = vpop.f32.mrb[0].mxu0
        %v4087 = vadd.f32 0.0, %v4086
        %v4088 = vpop.f32.mrb[0].mxu0
        %4089 = vmatprep.mubr.bf16.mxu0 0
        %4090 = vmatmul.mubr.bf16.gmra.mrb[0].mxu0 %v3995
        %v4091 = vpop.f32.mrb[0].mxu0
        %v4092 = vadd.f32 0.0, %v4091
        %v4093 = vpop.f32.mrb[0].mxu0
        %v4094 = vpop.f32.mrb[0].mxu0
        %v4095 = vadd.f32 0.0, %v4094
        %v4096 = vpop.f32.mrb[0].mxu0
        %4097 = vmatprep.mubr.bf16.mxu0 0
        %4098 = vmatmul.mubr.bf16.gmra.mrb[0].mxu0 %v3996
        %v4099 = vpop.f32.mrb[0].mxu0
        %v4100 = vadd.f32 0.0, %v4099
        %v4101 = vpop.f32.mrb[0].mxu0
        %v4102 = vpop.f32.mrb[0].mxu0
        %v4103 = vadd.f32 0.0, %v4102
        %v4104 = vpop.f32.mrb[0].mxu0
        %4105 = vmatprep.mubr.bf16.mxu0 0
        %4106 = vmatmul.mubr.bf16.gmra.mrb[0].mxu0 %v3997
        %v4107 = vpop.f32.mrb[0].mxu0
        %v4108 = vadd.f32 0.0, %v4107
        %v4109 = vpop.f32.mrb[0].mxu0
        %v4110 = vpop.f32.mrb[0].mxu0
        %v4111 = vadd.f32 0.0, %v4110
        %v4112 = vpop.f32.mrb[0].mxu0
        %4113 = vmatprep.mubr.bf16.mxu0 0
        %4114 = vmatmul.mubr.bf16.gmra.mrb[0].mxu0 %v3998
        %v4115 = vpop.f32.mrb[0].mxu0
        %v4116 = vadd.f32 0.0, %v4115
        %v4117 = vpop.f32.mrb[0].mxu0
        %v4118 = vpop.f32.mrb[0].mxu0
        %v4119 = vadd.f32 0.0, %v4118
        %v4120 = vpop.f32.mrb[0].mxu0
        %4121 = vmatprep.mubr.bf16.mxu0 0
        %4122 = vmatmul.mubr.bf16.gmra.mrb[0].mxu0 %v3999
        %v4123 = vpop.f32.mrb[0].mxu0
        %v4124 = vadd.f32 0.0, %v4123
        %v4125 = vpop.f32.mrb[0].mxu0
        %v4126 = vpop.f32.mrb[0].mxu0
        %v4127 = vadd.f32 0.0, %v4126
        %v4128 = vpop.f32.mrb[0].mxu0
        %4129 = vmatprep.mubr.bf16.mxu0 0
        %4130 = vmatmul.mubr.bf16.gmra.mrb[0].mxu0 %v4000
        %v4131 = vpop.f32.mrb[0].mxu0
        %v4132 = vadd.f32 0.0, %v4131
        %v4133 = vpop.f32.mrb[0].mxu0
        %v4134 = vpop.f32.mrb[0].mxu0
        %v4135 = vadd.f32 0.0, %v4134
        %v4136 = vpop.f32.mrb[0].mxu0
        %4137 = vdwg.mxu0
        %v4138 = vpack.c.bf16 %v4079, %v4076
        %v4139 = vpack.c.bf16 %v4087, %v4084
        %v4140 = vpack.c.bf16 %v4095, %v4092
        %v4141 = vpack.c.bf16 %v4103, %v4100
        %v4142 = vpack.c.bf16 %v4111, %v4108
        %v4143 = vpack.c.bf16 %v4119, %v4116
        %v4144 = vpack.c.bf16 %v4127, %v4124
        %v4145 = vpack.c.bf16 %v4135, %v4132
        %4154 = vrot.lane.b32.xlu0 %v4138, 96
        %v4155 = vpop.permute.xlu0 %4154
        %4156 = vrot.lane.b32.xlu0 %v4139, 96
        %v4157 = vpop.permute.xlu0 %4156
        %4158 = vrot.lane.b32.xlu0 %v4140, 96
        %v4159 = vpop.permute.xlu0 %4158
        %4160 = vrot.lane.b32.xlu0 %v4141, 96
        %v4161 = vpop.permute.xlu0 %4160
        %4162 = vrot.lane.b32.xlu0 %v4142, 96
        %v4163 = vpop.permute.xlu0 %4162
        %4164 = vrot.lane.b32.xlu0 %v4143, 96
        %v4165 = vpop.permute.xlu0 %4164
        %4166 = vrot.lane.b32.xlu0 %v4144, 96
        %v4167 = vpop.permute.xlu0 %4166
        %4168 = vrot.lane.b32.xlu0 %v4145, 96
        %v4169 = vpop.permute.xlu0 %4168
        %vm4178 = vcmask 1048320
        %4179 = vst.msk [vmem:[#allocation5] sm:$0xff] %vm4178, %v4155
        %4180 = vst.msk [vmem:[#allocation5 + $0x10] sm:$0xff] %vm4178, %v4157
        %4181 = vst.msk [vmem:[#allocation5 + $0x20] sm:$0xff] %vm4178, %v4159
        %4182 = vst.msk [vmem:[#allocation5 + $0x30] sm:$0xff] %vm4178, %v4161
        %4183 = vst.msk [vmem:[#allocation5 + $0x40] sm:$0xff] %vm4178, %v4163
        %4184 = vst.msk [vmem:[#allocation5 + $0x50] sm:$0xff] %vm4178, %v4165
        %4185 = vst.msk [vmem:[#allocation5 + $0x60] sm:$0xff] %vm4178, %v4167
        %4186 = vst.msk [vmem:[#allocation5 + $0x70] sm:$0xff] %vm4178, %v4169
        %v4187 = vld [vmem:[#allocation2 + $0x8] sm:$0xff]
        %v4188 = vld [vmem:[#allocation2 + $0x18] sm:$0xff]
        %v4189 = vld [vmem:[#allocation2 + $0x28] sm:$0xff]
        %v4190 = vld [vmem:[#allocation2 + $0x38] sm:$0xff]
        %v4191 = vld [vmem:[#allocation2 + $0x48] sm:$0xff]
        %v4192 = vld [vmem:[#allocation2 + $0x58] sm:$0xff]
        %v4193 = vld [vmem:[#allocation2 + $0x68] sm:$0xff]
        %v4194 = vld [vmem:[#allocation2 + $0x78] sm:$0xff]
        %v4195 = vld [vmem:[#allocation3 + $0x8] sm:$0xff]
        %v4196 = vld [vmem:[#allocation3 + $0x18] sm:$0xff]
        %v4197 = vld [vmem:[#allocation3 + $0x28] sm:$0xff]
        %v4198 = vld [vmem:[#allocation3 + $0x38] sm:$0xff]
        %v4199 = vld [vmem:[#allocation3 + $0x48] sm:$0xff]
        %v4200 = vld [vmem:[#allocation3 + $0x58] sm:$0xff]
        %v4201 = vld [vmem:[#allocation3 + $0x68] sm:$0xff]
        %v4202 = vld [vmem:[#allocation3 + $0x78] sm:$0xff]
        %v4204 = vsel %vm1967, %v4187, 0
        %v4207 = vsel %vm1967, %v4188, 0
        %v4210 = vsel %vm1967, %v4189, 0
        %v4213 = vsel %vm1967, %v4190, 0
        %v4216 = vsel %vm1967, %v4191, 0
        %v4219 = vsel %vm1967, %v4192, 0
        %v4222 = vsel %vm1967, %v4193, 0
        %v4225 = vsel %vm1967, %v4194, 0
        %v4228 = vsel %vm1967, %v4195, 0
        %v4231 = vsel %vm1967, %v4196, 0
        %v4234 = vsel %vm1967, %v4197, 0
        %v4237 = vsel %vm1967, %v4198, 0
        %v4240 = vsel %vm1967, %v4199, 0
        %v4243 = vsel %vm1967, %v4200, 0
        %v4246 = vsel %vm1967, %v4201, 0
        %v4249 = vsel %vm1967, %v4202, 0
        %4251 = vmatprep.subr.bf16.mxu0 0
        %4252 = vmatpush1.bf16.xpose.msra.mxu0 %v4228
        %4253 = vmatprep.subr.bf16.mxu0 0
        %4254 = vmatpush1.bf16.xpose.msra.mxu0 %v4231
        %4255 = vmatprep.subr.bf16.mxu0 0
        %4256 = vmatpush1.bf16.xpose.msra.mxu0 %v4234
        %4257 = vmatprep.subr.bf16.mxu0 0
        %4258 = vmatpush1.bf16.xpose.msra.mxu0 %v4237
        %4259 = vmatprep.subr.bf16.mxu0 0
        %4260 = vmatpush1.bf16.xpose.msra.mxu0 %v4240
        %4261 = vmatprep.subr.bf16.mxu0 0
        %4262 = vmatpush1.bf16.xpose.msra.mxu0 %v4243
        %4263 = vmatprep.subr.bf16.mxu0 0
        %4264 = vmatpush1.bf16.xpose.msra.mxu0 %v4246
        %4265 = vmatprep.subr.bf16.mxu0 0
        %4266 = vmatpush1.bf16.xpose.msra.mxu0 %v4249
        %4267 = vmatprep.subr.bf16.mxu0 0
        %4268 = vmatpush1.bf16.xpose.msra.mxu0 0
        %4269 = vmatprep.subr.bf16.mxu0 0
        %4270 = vmatpush1.bf16.xpose.msra.mxu0 0
        %4271 = vmatprep.subr.bf16.mxu0 0
        %4272 = vmatpush1.bf16.xpose.msra.mxu0 0
        %4273 = vmatprep.subr.bf16.mxu0 0
        %4274 = vmatpush1.bf16.xpose.msra.mxu0 0
        %4275 = vmatprep.subr.bf16.mxu0 0
        %4276 = vmatpush1.bf16.xpose.msra.mxu0 0
        %4277 = vmatprep.subr.bf16.mxu0 0
        %4278 = vmatpush1.bf16.xpose.msra.mxu0 0
        %4279 = vmatprep.subr.bf16.mxu0 0
        %4280 = vmatpush1.bf16.xpose.msra.mxu0 0
        %4281 = vmatprep.subr.bf16.mxu0 0
        %4282 = vmatpush1.bf16.xpose.msra.mxu0 0
        %4283 = vmatprep.mubr.bf16.mxu0 0
        %4284 = vmatmul.mubr.bf16.gmra.mrb[0].mxu0 %v4204
        %v4285 = vpop.f32.mrb[0].mxu0
        %v4286 = vadd.f32 %v1949, %v4285
        %v4287 = vpop.f32.mrb[0].mxu0
        %v4288 = vpop.f32.mrb[0].mxu0
        %v4289 = vadd.f32 %v1949, %v4288
        %v4290 = vpop.f32.mrb[0].mxu0
        %4291 = vmatprep.mubr.bf16.mxu0 0
        %4292 = vmatmul.mubr.bf16.gmra.mrb[0].mxu0 %v4207
        %v4293 = vpop.f32.mrb[0].mxu0
        %v4294 = vadd.f32 %v1949, %v4293
        %v4295 = vpop.f32.mrb[0].mxu0
        %v4296 = vpop.f32.mrb[0].mxu0
        %v4297 = vadd.f32 %v1949, %v4296
        %v4298 = vpop.f32.mrb[0].mxu0
        %4299 = vmatprep.mubr.bf16.mxu0 0
        %4300 = vmatmul.mubr.bf16.gmra.mrb[0].mxu0 %v4210
        %v4301 = vpop.f32.mrb[0].mxu0
        %v4302 = vadd.f32 %v1949, %v4301
        %v4303 = vpop.f32.mrb[0].mxu0
        %v4304 = vpop.f32.mrb[0].mxu0
        %v4305 = vadd.f32 %v1949, %v4304
        %v4306 = vpop.f32.mrb[0].mxu0
        %4307 = vmatprep.mubr.bf16.mxu0 0
        %4308 = vmatmul.mubr.bf16.gmra.mrb[0].mxu0 %v4213
        %v4309 = vpop.f32.mrb[0].mxu0
        %v4310 = vadd.f32 %v1949, %v4309
        %v4311 = vpop.f32.mrb[0].mxu0
        %v4312 = vpop.f32.mrb[0].mxu0
        %v4313 = vadd.f32 %v1949, %v4312
        %v4314 = vpop.f32.mrb[0].mxu0
        %4315 = vmatprep.mubr.bf16.mxu0 0
        %4316 = vmatmul.mubr.bf16.gmra.mrb[0].mxu0 %v4216
        %v4317 = vpop.f32.mrb[0].mxu0
        %v4318 = vadd.f32 %v1949, %v4317
        %v4319 = vpop.f32.mrb[0].mxu0
        %v4320 = vpop.f32.mrb[0].mxu0
        %v4321 = vadd.f32 %v1949, %v4320
        %v4322 = vpop.f32.mrb[0].mxu0
        %4323 = vmatprep.mubr.bf16.mxu0 0
        %4324 = vmatmul.mubr.bf16.gmra.mrb[0].mxu0 %v4219
        %v4325 = vpop.f32.mrb[0].mxu0
        %v4326 = vadd.f32 %v1949, %v4325
        %v4327 = vpop.f32.mrb[0].mxu0
        %v4328 = vpop.f32.mrb[0].mxu0
        %v4329 = vadd.f32 %v1949, %v4328
        %v4330 = vpop.f32.mrb[0].mxu0
        %4331 = vmatprep.mubr.bf16.mxu0 0
        %4332 = vmatmul.mubr.bf16.gmra.mrb[0].mxu0 %v4222
        %v4333 = vpop.f32.mrb[0].mxu0
        %v4334 = vadd.f32 %v1949, %v4333
        %v4335 = vpop.f32.mrb[0].mxu0
        %v4336 = vpop.f32.mrb[0].mxu0
        %v4337 = vadd.f32 %v1949, %v4336
        %v4338 = vpop.f32.mrb[0].mxu0
        %4339 = vmatprep.mubr.bf16.mxu0 0
        %4340 = vmatmul.mubr.bf16.gmra.mrb[0].mxu0 %v4225
        %v4341 = vpop.f32.mrb[0].mxu0
        %v4342 = vadd.f32 %v1949, %v4341
        %v4343 = vpop.f32.mrb[0].mxu0
        %v4344 = vpop.f32.mrb[0].mxu0
        %v4345 = vadd.f32 %v1949, %v4344
        %v4346 = vpop.f32.mrb[0].mxu0
        %4347 = vdwg.mxu0
        %4348 = vmax.xlane.f32.xlu0 %v4286
        %v4349 = vpop.xlane.xlu0 %4348
        %4350 = vmax.xlane.f32.xlu0 %v4289
        %v4351 = vpop.xlane.xlu0 %4350
        %4352 = vmax.xlane.f32.xlu0 %v4294
        %v4353 = vpop.xlane.xlu0 %4352
        %4354 = vmax.xlane.f32.xlu0 %v4297
        %v4355 = vpop.xlane.xlu0 %4354
        %4356 = vmax.xlane.f32.xlu0 %v4302
        %v4357 = vpop.xlane.xlu0 %4356
        %4358 = vmax.xlane.f32.xlu0 %v4305
        %v4359 = vpop.xlane.xlu0 %4358
        %4360 = vmax.xlane.f32.xlu0 %v4310
        %v4361 = vpop.xlane.xlu0 %4360
        %4362 = vmax.xlane.f32.xlu0 %v4313
        %v4363 = vpop.xlane.xlu0 %4362
        %4364 = vmax.xlane.f32.xlu0 %v4318
        %v4365 = vpop.xlane.xlu0 %4364
        %4366 = vmax.xlane.f32.xlu0 %v4321
        %v4367 = vpop.xlane.xlu0 %4366
        %4368 = vmax.xlane.f32.xlu0 %v4326
        %v4369 = vpop.xlane.xlu0 %4368
        %4370 = vmax.xlane.f32.xlu0 %v4329
        %v4371 = vpop.xlane.xlu0 %4370
        %4372 = vmax.xlane.f32.xlu0 %v4334
        %v4373 = vpop.xlane.xlu0 %4372
        %4374 = vmax.xlane.f32.xlu0 %v4337
        %v4375 = vpop.xlane.xlu0 %4374
        %4376 = vmax.xlane.f32.xlu0 %v4342
        %v4377 = vpop.xlane.xlu0 %4376
        %4378 = vmax.xlane.f32.xlu0 %v4345
        %v4379 = vpop.xlane.xlu0 %4378
        %v4380 = vsub.f32 %v4286, %v4349
        %v4381 = vsub.f32 %v4289, %v4351
        %v4382 = vsub.f32 %v4294, %v4353
        %v4383 = vsub.f32 %v4297, %v4355
        %v4384 = vsub.f32 %v4302, %v4357
        %v4385 = vsub.f32 %v4305, %v4359
        %v4386 = vsub.f32 %v4310, %v4361
        %v4387 = vsub.f32 %v4313, %v4363
        %v4388 = vsub.f32 %v4318, %v4365
        %v4389 = vsub.f32 %v4321, %v4367
        %v4390 = vsub.f32 %v4326, %v4369
        %v4391 = vsub.f32 %v4329, %v4371
        %v4392 = vsub.f32 %v4334, %v4373
        %v4393 = vsub.f32 %v4337, %v4375
        %v4394 = vsub.f32 %v4342, %v4377
        %v4395 = vsub.f32 %v4345, %v4379
        %v4396 = vmul.f32 %v4380, 1.442695
        %v4397 = vpow.pop %v4396
        %v4398 = vmul.f32 %v4381, 1.442695
        %v4399 = vpow.pop %v4398
        %v4400 = vmul.f32 %v4382, 1.442695
        %v4401 = vpow.pop %v4400
        %v4402 = vmul.f32 %v4383, 1.442695
        %v4403 = vpow.pop %v4402
        %v4404 = vmul.f32 %v4384, 1.442695
        %v4405 = vpow.pop %v4404
        %v4406 = vmul.f32 %v4385, 1.442695
        %v4407 = vpow.pop %v4406
        %v4408 = vmul.f32 %v4386, 1.442695
        %v4409 = vpow.pop %v4408
        %v4410 = vmul.f32 %v4387, 1.442695
        %v4411 = vpow.pop %v4410
        %v4412 = vmul.f32 %v4388, 1.442695
        %v4413 = vpow.pop %v4412
        %v4414 = vmul.f32 %v4389, 1.442695
        %v4415 = vpow.pop %v4414
        %v4416 = vmul.f32 %v4390, 1.442695
        %v4417 = vpow.pop %v4416
        %v4418 = vmul.f32 %v4391, 1.442695
        %v4419 = vpow.pop %v4418
        %v4420 = vmul.f32 %v4392, 1.442695
        %v4421 = vpow.pop %v4420
        %v4422 = vmul.f32 %v4393, 1.442695
        %v4423 = vpow.pop %v4422
        %v4424 = vmul.f32 %v4394, 1.442695
        %v4425 = vpow.pop %v4424
        %v4426 = vmul.f32 %v4395, 1.442695
        %v4427 = vpow.pop %v4426
        %4428 = vadd.xlane.f32.xlu0 %v4397
        %v4429 = vpop.xlane.xlu0 %4428
        %4430 = vadd.xlane.f32.xlu0 %v4399
        %v4431 = vpop.xlane.xlu0 %4430
        %4432 = vadd.xlane.f32.xlu0 %v4401
        %v4433 = vpop.xlane.xlu0 %4432
        %4434 = vadd.xlane.f32.xlu0 %v4403
        %v4435 = vpop.xlane.xlu0 %4434
        %4436 = vadd.xlane.f32.xlu0 %v4405
        %v4437 = vpop.xlane.xlu0 %4436
        %4438 = vadd.xlane.f32.xlu0 %v4407
        %v4439 = vpop.xlane.xlu0 %4438
        %4440 = vadd.xlane.f32.xlu0 %v4409
        %v4441 = vpop.xlane.xlu0 %4440
        %4442 = vadd.xlane.f32.xlu0 %v4411
        %v4443 = vpop.xlane.xlu0 %4442
        %4444 = vadd.xlane.f32.xlu0 %v4413
        %v4445 = vpop.xlane.xlu0 %4444
        %4446 = vadd.xlane.f32.xlu0 %v4415
        %v4447 = vpop.xlane.xlu0 %4446
        %4448 = vadd.xlane.f32.xlu0 %v4417
        %v4449 = vpop.xlane.xlu0 %4448
        %4450 = vadd.xlane.f32.xlu0 %v4419
        %v4451 = vpop.xlane.xlu0 %4450
        %4452 = vadd.xlane.f32.xlu0 %v4421
        %v4453 = vpop.xlane.xlu0 %4452
        %4454 = vadd.xlane.f32.xlu0 %v4423
        %v4455 = vpop.xlane.xlu0 %4454
        %4456 = vadd.xlane.f32.xlu0 %v4425
        %v4457 = vpop.xlane.xlu0 %4456
        %4458 = vadd.xlane.f32.xlu0 %v4427
        %v4459 = vpop.xlane.xlu0 %4458
        %v4460 = vrcp.pop %v4429
        %v4461 = vrcp.pop %v4431
        %v4462 = vrcp.pop %v4433
        %v4463 = vrcp.pop %v4435
        %v4464 = vrcp.pop %v4437
        %v4465 = vrcp.pop %v4439
        %v4466 = vrcp.pop %v4441
        %v4467 = vrcp.pop %v4443
        %v4468 = vrcp.pop %v4445
        %v4469 = vrcp.pop %v4447
        %v4470 = vrcp.pop %v4449
        %v4471 = vrcp.pop %v4451
        %v4472 = vrcp.pop %v4453
        %v4473 = vrcp.pop %v4455
        %v4474 = vrcp.pop %v4457
        %v4475 = vrcp.pop %v4459
        %v4476 = vmul.f32 %v4397, %v4460
        %v4477 = vmul.f32 %v4399, %v4461
        %v4478 = vmul.f32 %v4401, %v4462
        %v4479 = vmul.f32 %v4403, %v4463
        %v4480 = vmul.f32 %v4405, %v4464
        %v4481 = vmul.f32 %v4407, %v4465
        %v4482 = vmul.f32 %v4409, %v4466
        %v4483 = vmul.f32 %v4411, %v4467
        %v4484 = vmul.f32 %v4413, %v4468
        %v4485 = vmul.f32 %v4415, %v4469
        %v4486 = vmul.f32 %v4417, %v4470
        %v4487 = vmul.f32 %v4419, %v4471
        %v4488 = vmul.f32 %v4421, %v4472
        %v4489 = vmul.f32 %v4423, %v4473
        %v4490 = vmul.f32 %v4425, %v4474
        %v4491 = vmul.f32 %v4427, %v4475
        %v4492 = vld [vmem:[%s689] sm:$0xff]
        %v4493 = vld [vmem:[%s689 + $0x8] sm:$0xff]
        %v4494 = vld [vmem:[%s689 + $0x10] sm:$0xff]
        %v4495 = vld [vmem:[%s689 + $0x18] sm:$0xff]
        %v4496 = vld [vmem:[%s689 + $0x20] sm:$0xff]
        %v4497 = vld [vmem:[%s689 + $0x28] sm:$0xff]
        %v4498 = vld [vmem:[%s689 + $0x30] sm:$0xff]
        %v4499 = vld [vmem:[%s689 + $0x38] sm:$0xff]
        %v4500 = vld [vmem:[%s689 + $0x40] sm:$0xff]
        %v4501 = vld [vmem:[%s689 + $0x48] sm:$0xff]
        %v4502 = vld [vmem:[%s689 + $0x50] sm:$0xff]
        %v4503 = vld [vmem:[%s689 + $0x58] sm:$0xff]
        %v4504 = vld [vmem:[%s689 + $0x60] sm:$0xff]
        %v4505 = vld [vmem:[%s689 + $0x68] sm:$0xff]
        %v4506 = vld [vmem:[%s689 + $0x70] sm:$0xff]
        %v4507 = vld [vmem:[%s689 + $0x78] sm:$0xff]
        %v4508 = vadd.f32 %v4492, %v4476
        %v4509 = vadd.f32 %v4493, %v4477
        %v4510 = vadd.f32 %v4494, %v4478
        %v4511 = vadd.f32 %v4495, %v4479
        %v4512 = vadd.f32 %v4496, %v4480
        %v4513 = vadd.f32 %v4497, %v4481
        %v4514 = vadd.f32 %v4498, %v4482
        %v4515 = vadd.f32 %v4499, %v4483
        %v4516 = vadd.f32 %v4500, %v4484
        %v4517 = vadd.f32 %v4501, %v4485
        %v4518 = vadd.f32 %v4502, %v4486
        %v4519 = vadd.f32 %v4503, %v4487
        %v4520 = vadd.f32 %v4504, %v4488
        %v4521 = vadd.f32 %v4505, %v4489
        %v4522 = vadd.f32 %v4506, %v4490
        %v4523 = vadd.f32 %v4507, %v4491
        %4524 = vst [vmem:[%s689] sm:$0xff] %v4508
        %4525 = vst [vmem:[%s689 + $0x8] sm:$0xff] %v4509
        %4526 = vst [vmem:[%s689 + $0x10] sm:$0xff] %v4510
        %4527 = vst [vmem:[%s689 + $0x18] sm:$0xff] %v4511
        %4528 = vst [vmem:[%s689 + $0x20] sm:$0xff] %v4512
        %4529 = vst [vmem:[%s689 + $0x28] sm:$0xff] %v4513
        %4530 = vst [vmem:[%s689 + $0x30] sm:$0xff] %v4514
        %4531 = vst [vmem:[%s689 + $0x38] sm:$0xff] %v4515
        %4532 = vst [vmem:[%s689 + $0x40] sm:$0xff] %v4516
        %4533 = vst [vmem:[%s689 + $0x48] sm:$0xff] %v4517
        %4534 = vst [vmem:[%s689 + $0x50] sm:$0xff] %v4518
        %4535 = vst [vmem:[%s689 + $0x58] sm:$0xff] %v4519
        %4536 = vst [vmem:[%s689 + $0x60] sm:$0xff] %v4520
        %4537 = vst [vmem:[%s689 + $0x68] sm:$0xff] %v4521
        %4538 = vst [vmem:[%s689 + $0x70] sm:$0xff] %v4522
        %4539 = vst [vmem:[%s689 + $0x78] sm:$0xff] %v4523
        %v4540 = vpack.c.bf16 %v4477, %v4476
        %v4541 = vpack.c.bf16 %v4479, %v4478
        %v4542 = vpack.c.bf16 %v4481, %v4480
        %v4543 = vpack.c.bf16 %v4483, %v4482
        %v4544 = vpack.c.bf16 %v4485, %v4484
        %v4545 = vpack.c.bf16 %v4487, %v4486
        %v4546 = vpack.c.bf16 %v4489, %v4488
        %v4547 = vpack.c.bf16 %v4491, %v4490
        %v4548 = vld [vmem:[#allocation4 + $0x8] sm:$0xff]
        %v4549 = vld [vmem:[#allocation4 + $0x18] sm:$0xff]
        %v4550 = vld [vmem:[#allocation4 + $0x28] sm:$0xff]
        %v4551 = vld [vmem:[#allocation4 + $0x38] sm:$0xff]
        %v4552 = vld [vmem:[#allocation4 + $0x48] sm:$0xff]
        %v4553 = vld [vmem:[#allocation4 + $0x58] sm:$0xff]
        %v4554 = vld [vmem:[#allocation4 + $0x68] sm:$0xff]
        %v4555 = vld [vmem:[#allocation4 + $0x78] sm:$0xff]
        %4556 = vmatprep.subr.bf16.mxu0 0
        %4557 = vmatpush1.bf16.msra.mxu0 %v4548
        %4558 = vmatprep.subr.bf16.mxu0 0
        %4559 = vmatpush1.bf16.msra.mxu0 %v4549
        %4560 = vmatprep.subr.bf16.mxu0 0
        %4561 = vmatpush1.bf16.msra.mxu0 %v4550
        %4562 = vmatprep.subr.bf16.mxu0 0
        %4563 = vmatpush1.bf16.msra.mxu0 %v4551
        %4564 = vmatprep.subr.bf16.mxu0 0
        %4565 = vmatpush1.bf16.msra.mxu0 %v4552
        %4566 = vmatprep.subr.bf16.mxu0 0
        %4567 = vmatpush1.bf16.msra.mxu0 %v4553
        %4568 = vmatprep.subr.bf16.mxu0 0
        %4569 = vmatpush1.bf16.msra.mxu0 %v4554
        %4570 = vmatprep.subr.bf16.mxu0 0
        %4571 = vmatpush1.bf16.msra.mxu0 %v4555
        %4572 = vmatprep.subr.bf16.mxu0 0
        %4573 = vmatpush1.bf16.msra.mxu0 0
        %4574 = vmatprep.subr.bf16.mxu0 0
        %4575 = vmatpush1.bf16.msra.mxu0 0
        %4576 = vmatprep.subr.bf16.mxu0 0
        %4577 = vmatpush1.bf16.msra.mxu0 0
        %4578 = vmatprep.subr.bf16.mxu0 0
        %4579 = vmatpush1.bf16.msra.mxu0 0
        %4580 = vmatprep.subr.bf16.mxu0 0
        %4581 = vmatpush1.bf16.msra.mxu0 0
        %4582 = vmatprep.subr.bf16.mxu0 0
        %4583 = vmatpush1.bf16.msra.mxu0 0
        %4584 = vmatprep.subr.bf16.mxu0 0
        %4585 = vmatpush1.bf16.msra.mxu0 0
        %4586 = vmatprep.subr.bf16.mxu0 0
        %4587 = vmatpush1.bf16.msra.mxu0 0
        %4588 = vmatprep.mubr.bf16.mxu0 0
        %4589 = vmatmul.mubr.bf16.gmra.mrb[0].mxu0 %v4540
        %v4590 = vpop.f32.mrb[0].mxu0
        %v4591 = vadd.f32 0.0, %v4590
        %v4592 = vpop.f32.mrb[0].mxu0
        %v4593 = vpop.f32.mrb[0].mxu0
        %v4594 = vadd.f32 0.0, %v4593
        %v4595 = vpop.f32.mrb[0].mxu0
        %4596 = vmatprep.mubr.bf16.mxu0 0
        %4597 = vmatmul.mubr.bf16.gmra.mrb[0].mxu0 %v4541
        %v4598 = vpop.f32.mrb[0].mxu0
        %v4599 = vadd.f32 0.0, %v4598
        %v4600 = vpop.f32.mrb[0].mxu0
        %v4601 = vpop.f32.mrb[0].mxu0
        %v4602 = vadd.f32 0.0, %v4601
        %v4603 = vpop.f32.mrb[0].mxu0
        %4604 = vmatprep.mubr.bf16.mxu0 0
        %4605 = vmatmul.mubr.bf16.gmra.mrb[0].mxu0 %v4542
        %v4606 = vpop.f32.mrb[0].mxu0
        %v4607 = vadd.f32 0.0, %v4606
        %v4608 = vpop.f32.mrb[0].mxu0
        %v4609 = vpop.f32.mrb[0].mxu0
        %v4610 = vadd.f32 0.0, %v4609
        %v4611 = vpop.f32.mrb[0].mxu0
        %4612 = vmatprep.mubr.bf16.mxu0 0
        %4613 = vmatmul.mubr.bf16.gmra.mrb[0].mxu0 %v4543
        %v4614 = vpop.f32.mrb[0].mxu0
        %v4615 = vadd.f32 0.0, %v4614
        %v4616 = vpop.f32.mrb[0].mxu0
        %v4617 = vpop.f32.mrb[0].mxu0
        %v4618 = vadd.f32 0.0, %v4617
        %v4619 = vpop.f32.mrb[0].mxu0
        %4620 = vmatprep.mubr.bf16.mxu0 0
        %4621 = vmatmul.mubr.bf16.gmra.mrb[0].mxu0 %v4544
        %v4622 = vpop.f32.mrb[0].mxu0
        %v4623 = vadd.f32 0.0, %v4622
        %v4624 = vpop.f32.mrb[0].mxu0
        %v4625 = vpop.f32.mrb[0].mxu0
        %v4626 = vadd.f32 0.0, %v4625
        %v4627 = vpop.f32.mrb[0].mxu0
        %4628 = vmatprep.mubr.bf16.mxu0 0
        %4629 = vmatmul.mubr.bf16.gmra.mrb[0].mxu0 %v4545
        %v4630 = vpop.f32.mrb[0].mxu0
        %v4631 = vadd.f32 0.0, %v4630
        %v4632 = vpop.f32.mrb[0].mxu0
        %v4633 = vpop.f32.mrb[0].mxu0
        %v4634 = vadd.f32 0.0, %v4633
        %v4635 = vpop.f32.mrb[0].mxu0
        %4636 = vmatprep.mubr.bf16.mxu0 0
        %4637 = vmatmul.mubr.bf16.gmra.mrb[0].mxu0 %v4546
        %v4638 = vpop.f32.mrb[0].mxu0
        %v4639 = vadd.f32 0.0, %v4638
        %v4640 = vpop.f32.mrb[0].mxu0
        %v4641 = vpop.f32.mrb[0].mxu0
        %v4642 = vadd.f32 0.0, %v4641
        %v4643 = vpop.f32.mrb[0].mxu0
        %4644 = vmatprep.mubr.bf16.mxu0 0
        %4645 = vmatmul.mubr.bf16.gmra.mrb[0].mxu0 %v4547
        %v4646 = vpop.f32.mrb[0].mxu0
        %v4647 = vadd.f32 0.0, %v4646
        %v4648 = vpop.f32.mrb[0].mxu0
        %v4649 = vpop.f32.mrb[0].mxu0
        %v4650 = vadd.f32 0.0, %v4649
        %v4651 = vpop.f32.mrb[0].mxu0
        %4652 = vdwg.mxu0
        %v4653 = vpack.c.bf16 %v4594, %v4591
        %v4654 = vpack.c.bf16 %v4602, %v4599
        %v4655 = vpack.c.bf16 %v4610, %v4607
        %v4656 = vpack.c.bf16 %v4618, %v4615
        %v4657 = vpack.c.bf16 %v4626, %v4623
        %v4658 = vpack.c.bf16 %v4634, %v4631
        %v4659 = vpack.c.bf16 %v4642, %v4639
        %v4660 = vpack.c.bf16 %v4650, %v4647
        %4661 = vst.msk [vmem:[#allocation5 + $0x8] sm:$0xff] %vm1967, %v4653
        %4662 = vst.msk [vmem:[#allocation5 + $0x18] sm:$0xff] %vm1967, %v4654
        %4663 = vst.msk [vmem:[#allocation5 + $0x28] sm:$0xff] %vm1967, %v4655
        %4664 = vst.msk [vmem:[#allocation5 + $0x38] sm:$0xff] %vm1967, %v4656
        %4665 = vst.msk [vmem:[#allocation5 + $0x48] sm:$0xff] %vm1967, %v4657
        %4666 = vst.msk [vmem:[#allocation5 + $0x58] sm:$0xff] %vm1967, %v4658
        %4667 = vst.msk [vmem:[#allocation5 + $0x68] sm:$0xff] %vm1967, %v4659
        %4668 = vst.msk [vmem:[#allocation5 + $0x78] sm:$0xff] %vm1967, %v4660
        %v4669 = vld [vmem:[#allocation2 + $0x8] sm:$0xff]
        %v4670 = vld [vmem:[#allocation2 + $0x18] sm:$0xff]
        %v4671 = vld [vmem:[#allocation2 + $0x28] sm:$0xff]
        %v4672 = vld [vmem:[#allocation2 + $0x38] sm:$0xff]
        %v4673 = vld [vmem:[#allocation2 + $0x48] sm:$0xff]
        %v4674 = vld [vmem:[#allocation2 + $0x58] sm:$0xff]
        %v4675 = vld [vmem:[#allocation2 + $0x68] sm:$0xff]
        %v4676 = vld [vmem:[#allocation2 + $0x78] sm:$0xff]
        %v4677 = vld [vmem:[#allocation3 + $0x8] sm:$0xff]
        %v4678 = vld [vmem:[#allocation3 + $0x18] sm:$0xff]
        %v4679 = vld [vmem:[#allocation3 + $0x28] sm:$0xff]
        %v4680 = vld [vmem:[#allocation3 + $0x38] sm:$0xff]
        %v4681 = vld [vmem:[#allocation3 + $0x48] sm:$0xff]
        %v4682 = vld [vmem:[#allocation3 + $0x58] sm:$0xff]
        %v4683 = vld [vmem:[#allocation3 + $0x68] sm:$0xff]
        %v4684 = vld [vmem:[#allocation3 + $0x78] sm:$0xff]
        %4693 = vrot.lane.b32.xlu0 %v4669, 96
        %v4694 = vpop.permute.xlu0 %4693
        %4695 = vrot.lane.b32.xlu0 %v4670, 96
        %v4696 = vpop.permute.xlu0 %4695
        %4697 = vrot.lane.b32.xlu0 %v4671, 96
        %v4698 = vpop.permute.xlu0 %4697
        %4699 = vrot.lane.b32.xlu0 %v4672, 96
        %v4700 = vpop.permute.xlu0 %4699
        %4701 = vrot.lane.b32.xlu0 %v4673, 96
        %v4702 = vpop.permute.xlu0 %4701
        %4703 = vrot.lane.b32.xlu0 %v4674, 96
        %v4704 = vpop.permute.xlu0 %4703
        %4705 = vrot.lane.b32.xlu0 %v4675, 96
        %v4706 = vpop.permute.xlu0 %4705
        %4707 = vrot.lane.b32.xlu0 %v4676, 96
        %v4708 = vpop.permute.xlu0 %4707
        %4717 = vrot.lane.b32.xlu0 %v4677, 96
        %v4718 = vpop.permute.xlu0 %4717
        %4719 = vrot.lane.b32.xlu0 %v4678, 96
        %v4720 = vpop.permute.xlu0 %4719
        %4721 = vrot.lane.b32.xlu0 %v4679, 96
        %v4722 = vpop.permute.xlu0 %4721
        %4723 = vrot.lane.b32.xlu0 %v4680, 96
        %v4724 = vpop.permute.xlu0 %4723
        %4725 = vrot.lane.b32.xlu0 %v4681, 96
        %v4726 = vpop.permute.xlu0 %4725
        %4727 = vrot.lane.b32.xlu0 %v4682, 96
        %v4728 = vpop.permute.xlu0 %4727
        %4729 = vrot.lane.b32.xlu0 %v4683, 96
        %v4730 = vpop.permute.xlu0 %4729
        %4731 = vrot.lane.b32.xlu0 %v4684, 96
        %v4732 = vpop.permute.xlu0 %4731
        %v4734 = vsel %vm1967, %v4694, 0
        %v4737 = vsel %vm1967, %v4696, 0
        %v4740 = vsel %vm1967, %v4698, 0
        %v4743 = vsel %vm1967, %v4700, 0
        %v4746 = vsel %vm1967, %v4702, 0
        %v4749 = vsel %vm1967, %v4704, 0
        %v4752 = vsel %vm1967, %v4706, 0
        %v4755 = vsel %vm1967, %v4708, 0
        %v4758 = vsel %vm1967, %v4718, 0
        %v4761 = vsel %vm1967, %v4720, 0
        %v4764 = vsel %vm1967, %v4722, 0
        %v4767 = vsel %vm1967, %v4724, 0
        %v4770 = vsel %vm1967, %v4726, 0
        %v4773 = vsel %vm1967, %v4728, 0
        %v4776 = vsel %vm1967, %v4730, 0
        %v4779 = vsel %vm1967, %v4732, 0
        %4781 = vmatprep.subr.bf16.mxu0 0
        %4782 = vmatpush1.bf16.xpose.msra.mxu0 %v4758
        %4783 = vmatprep.subr.bf16.mxu0 0
        %4784 = vmatpush1.bf16.xpose.msra.mxu0 %v4761
        %4785 = vmatprep.subr.bf16.mxu0 0
        %4786 = vmatpush1.bf16.xpose.msra.mxu0 %v4764
        %4787 = vmatprep.subr.bf16.mxu0 0
        %4788 = vmatpush1.bf16.xpose.msra.mxu0 %v4767
        %4789 = vmatprep.subr.bf16.mxu0 0
        %4790 = vmatpush1.bf16.xpose.msra.mxu0 %v4770
        %4791 = vmatprep.subr.bf16.mxu0 0
        %4792 = vmatpush1.bf16.xpose.msra.mxu0 %v4773
        %4793 = vmatprep.subr.bf16.mxu0 0
        %4794 = vmatpush1.bf16.xpose.msra.mxu0 %v4776
        %4795 = vmatprep.subr.bf16.mxu0 0
        %4796 = vmatpush1.bf16.xpose.msra.mxu0 %v4779
        %4797 = vmatprep.subr.bf16.mxu0 0
        %4798 = vmatpush1.bf16.xpose.msra.mxu0 0
        %4799 = vmatprep.subr.bf16.mxu0 0
        %4800 = vmatpush1.bf16.xpose.msra.mxu0 0
        %4801 = vmatprep.subr.bf16.mxu0 0
        %4802 = vmatpush1.bf16.xpose.msra.mxu0 0
        %4803 = vmatprep.subr.bf16.mxu0 0
        %4804 = vmatpush1.bf16.xpose.msra.mxu0 0
        %4805 = vmatprep.subr.bf16.mxu0 0
        %4806 = vmatpush1.bf16.xpose.msra.mxu0 0
        %4807 = vmatprep.subr.bf16.mxu0 0
        %4808 = vmatpush1.bf16.xpose.msra.mxu0 0
        %4809 = vmatprep.subr.bf16.mxu0 0
        %4810 = vmatpush1.bf16.xpose.msra.mxu0 0
        %4811 = vmatprep.subr.bf16.mxu0 0
        %4812 = vmatpush1.bf16.xpose.msra.mxu0 0
        %4813 = vmatprep.mubr.bf16.mxu0 0
        %4814 = vmatmul.mubr.bf16.gmra.mrb[0].mxu0 %v4734
        %v4815 = vpop.f32.mrb[0].mxu0
        %v4816 = vadd.f32 %v1949, %v4815
        %v4817 = vpop.f32.mrb[0].mxu0
        %v4818 = vpop.f32.mrb[0].mxu0
        %v4819 = vadd.f32 %v1949, %v4818
        %v4820 = vpop.f32.mrb[0].mxu0
        %4821 = vmatprep.mubr.bf16.mxu0 0
        %4822 = vmatmul.mubr.bf16.gmra.mrb[0].mxu0 %v4737
        %v4823 = vpop.f32.mrb[0].mxu0
        %v4824 = vadd.f32 %v1949, %v4823
        %v4825 = vpop.f32.mrb[0].mxu0
        %v4826 = vpop.f32.mrb[0].mxu0
        %v4827 = vadd.f32 %v1949, %v4826
        %v4828 = vpop.f32.mrb[0].mxu0
        %4829 = vmatprep.mubr.bf16.mxu0 0
        %4830 = vmatmul.mubr.bf16.gmra.mrb[0].mxu0 %v4740
        %v4831 = vpop.f32.mrb[0].mxu0
        %v4832 = vadd.f32 %v1949, %v4831
        %v4833 = vpop.f32.mrb[0].mxu0
        %v4834 = vpop.f32.mrb[0].mxu0
        %v4835 = vadd.f32 %v1949, %v4834
        %v4836 = vpop.f32.mrb[0].mxu0
        %4837 = vmatprep.mubr.bf16.mxu0 0
        %4838 = vmatmul.mubr.bf16.gmra.mrb[0].mxu0 %v4743
        %v4839 = vpop.f32.mrb[0].mxu0
        %v4840 = vadd.f32 %v1949, %v4839
        %v4841 = vpop.f32.mrb[0].mxu0
        %v4842 = vpop.f32.mrb[0].mxu0
        %v4843 = vadd.f32 %v1949, %v4842
        %v4844 = vpop.f32.mrb[0].mxu0
        %4845 = vmatprep.mubr.bf16.mxu0 0
        %4846 = vmatmul.mubr.bf16.gmra.mrb[0].mxu0 %v4746
        %v4847 = vpop.f32.mrb[0].mxu0
        %v4848 = vadd.f32 %v1949, %v4847
        %v4849 = vpop.f32.mrb[0].mxu0
        %v4850 = vpop.f32.mrb[0].mxu0
        %v4851 = vadd.f32 %v1949, %v4850
        %v4852 = vpop.f32.mrb[0].mxu0
        %4853 = vmatprep.mubr.bf16.mxu0 0
        %4854 = vmatmul.mubr.bf16.gmra.mrb[0].mxu0 %v4749
        %v4855 = vpop.f32.mrb[0].mxu0
        %v4856 = vadd.f32 %v1949, %v4855
        %v4857 = vpop.f32.mrb[0].mxu0
        %v4858 = vpop.f32.mrb[0].mxu0
        %v4859 = vadd.f32 %v1949, %v4858
        %v4860 = vpop.f32.mrb[0].mxu0
        %4861 = vmatprep.mubr.bf16.mxu0 0
        %4862 = vmatmul.mubr.bf16.gmra.mrb[0].mxu0 %v4752
        %v4863 = vpop.f32.mrb[0].mxu0
        %v4864 = vadd.f32 %v1949, %v4863
        %v4865 = vpop.f32.mrb[0].mxu0
        %v4866 = vpop.f32.mrb[0].mxu0
        %v4867 = vadd.f32 %v1949, %v4866
        %v4868 = vpop.f32.mrb[0].mxu0
        %4869 = vmatprep.mubr.bf16.mxu0 0
        %4870 = vmatmul.mubr.bf16.gmra.mrb[0].mxu0 %v4755
        %v4871 = vpop.f32.mrb[0].mxu0
        %v4872 = vadd.f32 %v1949, %v4871
        %v4873 = vpop.f32.mrb[0].mxu0
        %v4874 = vpop.f32.mrb[0].mxu0
        %v4875 = vadd.f32 %v1949, %v4874
        %v4876 = vpop.f32.mrb[0].mxu0
        %4877 = vdwg.mxu0
        %4878 = vmax.xlane.f32.xlu0 %v4816
        %v4879 = vpop.xlane.xlu0 %4878
        %4880 = vmax.xlane.f32.xlu0 %v4819
        %v4881 = vpop.xlane.xlu0 %4880
        %4882 = vmax.xlane.f32.xlu0 %v4824
        %v4883 = vpop.xlane.xlu0 %4882
        %4884 = vmax.xlane.f32.xlu0 %v4827
        %v4885 = vpop.xlane.xlu0 %4884
        %4886 = vmax.xlane.f32.xlu0 %v4832
        %v4887 = vpop.xlane.xlu0 %4886
        %4888 = vmax.xlane.f32.xlu0 %v4835
        %v4889 = vpop.xlane.xlu0 %4888
        %4890 = vmax.xlane.f32.xlu0 %v4840
        %v4891 = vpop.xlane.xlu0 %4890
        %4892 = vmax.xlane.f32.xlu0 %v4843
        %v4893 = vpop.xlane.xlu0 %4892
        %4894 = vmax.xlane.f32.xlu0 %v4848
        %v4895 = vpop.xlane.xlu0 %4894
        %4896 = vmax.xlane.f32.xlu0 %v4851
        %v4897 = vpop.xlane.xlu0 %4896
        %4898 = vmax.xlane.f32.xlu0 %v4856
        %v4899 = vpop.xlane.xlu0 %4898
        %4900 = vmax.xlane.f32.xlu0 %v4859
        %v4901 = vpop.xlane.xlu0 %4900
        %4902 = vmax.xlane.f32.xlu0 %v4864
        %v4903 = vpop.xlane.xlu0 %4902
        %4904 = vmax.xlane.f32.xlu0 %v4867
        %v4905 = vpop.xlane.xlu0 %4904
        %4906 = vmax.xlane.f32.xlu0 %v4872
        %v4907 = vpop.xlane.xlu0 %4906
        %4908 = vmax.xlane.f32.xlu0 %v4875
        %v4909 = vpop.xlane.xlu0 %4908
        %v4910 = vsub.f32 %v4816, %v4879
        %v4911 = vsub.f32 %v4819, %v4881
        %v4912 = vsub.f32 %v4824, %v4883
        %v4913 = vsub.f32 %v4827, %v4885
        %v4914 = vsub.f32 %v4832, %v4887
        %v4915 = vsub.f32 %v4835, %v4889
        %v4916 = vsub.f32 %v4840, %v4891
        %v4917 = vsub.f32 %v4843, %v4893
        %v4918 = vsub.f32 %v4848, %v4895
        %v4919 = vsub.f32 %v4851, %v4897
        %v4920 = vsub.f32 %v4856, %v4899
        %v4921 = vsub.f32 %v4859, %v4901
        %v4922 = vsub.f32 %v4864, %v4903
        %v4923 = vsub.f32 %v4867, %v4905
        %v4924 = vsub.f32 %v4872, %v4907
        %v4925 = vsub.f32 %v4875, %v4909
        %v4926 = vmul.f32 %v4910, 1.442695
        %v4927 = vpow.pop %v4926
        %v4928 = vmul.f32 %v4911, 1.442695
        %v4929 = vpow.pop %v4928
        %v4930 = vmul.f32 %v4912, 1.442695
        %v4931 = vpow.pop %v4930
        %v4932 = vmul.f32 %v4913, 1.442695
        %v4933 = vpow.pop %v4932
        %v4934 = vmul.f32 %v4914, 1.442695
        %v4935 = vpow.pop %v4934
        %v4936 = vmul.f32 %v4915, 1.442695
        %v4937 = vpow.pop %v4936
        %v4938 = vmul.f32 %v4916, 1.442695
        %v4939 = vpow.pop %v4938
        %v4940 = vmul.f32 %v4917, 1.442695
        %v4941 = vpow.pop %v4940
        %v4942 = vmul.f32 %v4918, 1.442695
        %v4943 = vpow.pop %v4942
        %v4944 = vmul.f32 %v4919, 1.442695
        %v4945 = vpow.pop %v4944
        %v4946 = vmul.f32 %v4920, 1.442695
        %v4947 = vpow.pop %v4946
        %v4948 = vmul.f32 %v4921, 1.442695
        %v4949 = vpow.pop %v4948
        %v4950 = vmul.f32 %v4922, 1.442695
        %v4951 = vpow.pop %v4950
        %v4952 = vmul.f32 %v4923, 1.442695
        %v4953 = vpow.pop %v4952
        %v4954 = vmul.f32 %v4924, 1.442695
        %v4955 = vpow.pop %v4954
        %v4956 = vmul.f32 %v4925, 1.442695
        %v4957 = vpow.pop %v4956
        %4958 = vadd.xlane.f32.xlu0 %v4927
        %v4959 = vpop.xlane.xlu0 %4958
        %4960 = vadd.xlane.f32.xlu0 %v4929
        %v4961 = vpop.xlane.xlu0 %4960
        %4962 = vadd.xlane.f32.xlu0 %v4931
        %v4963 = vpop.xlane.xlu0 %4962
        %4964 = vadd.xlane.f32.xlu0 %v4933
        %v4965 = vpop.xlane.xlu0 %4964
        %4966 = vadd.xlane.f32.xlu0 %v4935
        %v4967 = vpop.xlane.xlu0 %4966
        %4968 = vadd.xlane.f32.xlu0 %v4937
        %v4969 = vpop.xlane.xlu0 %4968
        %4970 = vadd.xlane.f32.xlu0 %v4939
        %v4971 = vpop.xlane.xlu0 %4970
        %4972 = vadd.xlane.f32.xlu0 %v4941
        %v4973 = vpop.xlane.xlu0 %4972
        %4974 = vadd.xlane.f32.xlu0 %v4943
        %v4975 = vpop.xlane.xlu0 %4974
        %4976 = vadd.xlane.f32.xlu0 %v4945
        %v4977 = vpop.xlane.xlu0 %4976
        %4978 = vadd.xlane.f32.xlu0 %v4947
        %v4979 = vpop.xlane.xlu0 %4978
        %4980 = vadd.xlane.f32.xlu0 %v4949
        %v4981 = vpop.xlane.xlu0 %4980
        %4982 = vadd.xlane.f32.xlu0 %v4951
        %v4983 = vpop.xlane.xlu0 %4982
        %4984 = vadd.xlane.f32.xlu0 %v4953
        %v4985 = vpop.xlane.xlu0 %4984
        %4986 = vadd.xlane.f32.xlu0 %v4955
        %v4987 = vpop.xlane.xlu0 %4986
        %4988 = vadd.xlane.f32.xlu0 %v4957
        %v4989 = vpop.xlane.xlu0 %4988
        %v4990 = vrcp.pop %v4959
        %v4991 = vrcp.pop %v4961
        %v4992 = vrcp.pop %v4963
        %v4993 = vrcp.pop %v4965
        %v4994 = vrcp.pop %v4967
        %v4995 = vrcp.pop %v4969
        %v4996 = vrcp.pop %v4971
        %v4997 = vrcp.pop %v4973
        %v4998 = vrcp.pop %v4975
        %v4999 = vrcp.pop %v4977
        %v5000 = vrcp.pop %v4979
        %v5001 = vrcp.pop %v4981
        %v5002 = vrcp.pop %v4983
        %v5003 = vrcp.pop %v4985
        %v5004 = vrcp.pop %v4987
        %v5005 = vrcp.pop %v4989
        %v5006 = vmul.f32 %v4927, %v4990
        %v5007 = vmul.f32 %v4929, %v4991
        %v5008 = vmul.f32 %v4931, %v4992
        %v5009 = vmul.f32 %v4933, %v4993
        %v5010 = vmul.f32 %v4935, %v4994
        %v5011 = vmul.f32 %v4937, %v4995
        %v5012 = vmul.f32 %v4939, %v4996
        %v5013 = vmul.f32 %v4941, %v4997
        %v5014 = vmul.f32 %v4943, %v4998
        %v5015 = vmul.f32 %v4945, %v4999
        %v5016 = vmul.f32 %v4947, %v5000
        %v5017 = vmul.f32 %v4949, %v5001
        %v5018 = vmul.f32 %v4951, %v5002
        %v5019 = vmul.f32 %v4953, %v5003
        %v5020 = vmul.f32 %v4955, %v5004
        %v5021 = vmul.f32 %v4957, %v5005
        %v5022 = vld [vmem:[%s689] sm:$0xff]
        %v5023 = vld [vmem:[%s689 + $0x8] sm:$0xff]
        %v5024 = vld [vmem:[%s689 + $0x10] sm:$0xff]
        %v5025 = vld [vmem:[%s689 + $0x18] sm:$0xff]
        %v5026 = vld [vmem:[%s689 + $0x20] sm:$0xff]
        %v5027 = vld [vmem:[%s689 + $0x28] sm:$0xff]
        %v5028 = vld [vmem:[%s689 + $0x30] sm:$0xff]
        %v5029 = vld [vmem:[%s689 + $0x38] sm:$0xff]
        %v5030 = vld [vmem:[%s689 + $0x40] sm:$0xff]
        %v5031 = vld [vmem:[%s689 + $0x48] sm:$0xff]
        %v5032 = vld [vmem:[%s689 + $0x50] sm:$0xff]
        %v5033 = vld [vmem:[%s689 + $0x58] sm:$0xff]
        %v5034 = vld [vmem:[%s689 + $0x60] sm:$0xff]
        %v5035 = vld [vmem:[%s689 + $0x68] sm:$0xff]
        %v5036 = vld [vmem:[%s689 + $0x70] sm:$0xff]
        %v5037 = vld [vmem:[%s689 + $0x78] sm:$0xff]
        %v5038 = vadd.f32 %v5022, %v5006
        %v5039 = vadd.f32 %v5023, %v5007
        %v5040 = vadd.f32 %v5024, %v5008
        %v5041 = vadd.f32 %v5025, %v5009
        %v5042 = vadd.f32 %v5026, %v5010
        %v5043 = vadd.f32 %v5027, %v5011
        %v5044 = vadd.f32 %v5028, %v5012
        %v5045 = vadd.f32 %v5029, %v5013
        %v5046 = vadd.f32 %v5030, %v5014
        %v5047 = vadd.f32 %v5031, %v5015
        %v5048 = vadd.f32 %v5032, %v5016
        %v5049 = vadd.f32 %v5033, %v5017
        %v5050 = vadd.f32 %v5034, %v5018
        %v5051 = vadd.f32 %v5035, %v5019
        %v5052 = vadd.f32 %v5036, %v5020
        %v5053 = vadd.f32 %v5037, %v5021
        %5054 = vst [vmem:[%s689] sm:$0xff] %v5038
        %5055 = vst [vmem:[%s689 + $0x8] sm:$0xff] %v5039
        %5056 = vst [vmem:[%s689 + $0x10] sm:$0xff] %v5040
        %5057 = vst [vmem:[%s689 + $0x18] sm:$0xff] %v5041
        %5058 = vst [vmem:[%s689 + $0x20] sm:$0xff] %v5042
        %5059 = vst [vmem:[%s689 + $0x28] sm:$0xff] %v5043
        %5060 = vst [vmem:[%s689 + $0x30] sm:$0xff] %v5044
        %5061 = vst [vmem:[%s689 + $0x38] sm:$0xff] %v5045
        %5062 = vst [vmem:[%s689 + $0x40] sm:$0xff] %v5046
        %5063 = vst [vmem:[%s689 + $0x48] sm:$0xff] %v5047
        %5064 = vst [vmem:[%s689 + $0x50] sm:$0xff] %v5048
        %5065 = vst [vmem:[%s689 + $0x58] sm:$0xff] %v5049
        %5066 = vst [vmem:[%s689 + $0x60] sm:$0xff] %v5050
        %5067 = vst [vmem:[%s689 + $0x68] sm:$0xff] %v5051
        %5068 = vst [vmem:[%s689 + $0x70] sm:$0xff] %v5052
        %5069 = vst [vmem:[%s689 + $0x78] sm:$0xff] %v5053
        %v5070 = vpack.c.bf16 %v5007, %v5006
        %v5071 = vpack.c.bf16 %v5009, %v5008
        %v5072 = vpack.c.bf16 %v5011, %v5010
        %v5073 = vpack.c.bf16 %v5013, %v5012
        %v5074 = vpack.c.bf16 %v5015, %v5014
        %v5075 = vpack.c.bf16 %v5017, %v5016
        %v5076 = vpack.c.bf16 %v5019, %v5018
        %v5077 = vpack.c.bf16 %v5021, %v5020
        %v5078 = vld [vmem:[#allocation4 + $0x8] sm:$0xff]
        %v5079 = vld [vmem:[#allocation4 + $0x18] sm:$0xff]
        %v5080 = vld [vmem:[#allocation4 + $0x28] sm:$0xff]
        %v5081 = vld [vmem:[#allocation4 + $0x38] sm:$0xff]
        %v5082 = vld [vmem:[#allocation4 + $0x48] sm:$0xff]
        %v5083 = vld [vmem:[#allocation4 + $0x58] sm:$0xff]
        %v5084 = vld [vmem:[#allocation4 + $0x68] sm:$0xff]
        %v5085 = vld [vmem:[#allocation4 + $0x78] sm:$0xff]
        %5094 = vrot.lane.b32.xlu0 %v5078, 96
        %v5095 = vpop.permute.xlu0 %5094
        %5096 = vrot.lane.b32.xlu0 %v5079, 96
        %v5097 = vpop.permute.xlu0 %5096
        %5098 = vrot.lane.b32.xlu0 %v5080, 96
        %v5099 = vpop.permute.xlu0 %5098
        %5100 = vrot.lane.b32.xlu0 %v5081, 96
        %v5101 = vpop.permute.xlu0 %5100
        %5102 = vrot.lane.b32.xlu0 %v5082, 96
        %v5103 = vpop.permute.xlu0 %5102
        %5104 = vrot.lane.b32.xlu0 %v5083, 96
        %v5105 = vpop.permute.xlu0 %5104
        %5106 = vrot.lane.b32.xlu0 %v5084, 96
        %v5107 = vpop.permute.xlu0 %5106
        %5108 = vrot.lane.b32.xlu0 %v5085, 96
        %v5109 = vpop.permute.xlu0 %5108
        %5118 = vmatprep.subr.bf16.mxu0 0
        %5119 = vmatpush1.bf16.msra.mxu0 %v5095
        %5120 = vmatprep.subr.bf16.mxu0 0
        %5121 = vmatpush1.bf16.msra.mxu0 %v5097
        %5122 = vmatprep.subr.bf16.mxu0 0
        %5123 = vmatpush1.bf16.msra.mxu0 %v5099
        %5124 = vmatprep.subr.bf16.mxu0 0
        %5125 = vmatpush1.bf16.msra.mxu0 %v5101
        %5126 = vmatprep.subr.bf16.mxu0 0
        %5127 = vmatpush1.bf16.msra.mxu0 %v5103
        %5128 = vmatprep.subr.bf16.mxu0 0
        %5129 = vmatpush1.bf16.msra.mxu0 %v5105
        %5130 = vmatprep.subr.bf16.mxu0 0
        %5131 = vmatpush1.bf16.msra.mxu0 %v5107
        %5132 = vmatprep.subr.bf16.mxu0 0
        %5133 = vmatpush1.bf16.msra.mxu0 %v5109
        %5134 = vmatprep.subr.bf16.mxu0 0
        %5135 = vmatpush1.bf16.msra.mxu0 0
        %5136 = vmatprep.subr.bf16.mxu0 0
        %5137 = vmatpush1.bf16.msra.mxu0 0
        %5138 = vmatprep.subr.bf16.mxu0 0
        %5139 = vmatpush1.bf16.msra.mxu0 0
        %5140 = vmatprep.subr.bf16.mxu0 0
        %5141 = vmatpush1.bf16.msra.mxu0 0
        %5142 = vmatprep.subr.bf16.mxu0 0
        %5143 = vmatpush1.bf16.msra.mxu0 0
        %5144 = vmatprep.subr.bf16.mxu0 0
        %5145 = vmatpush1.bf16.msra.mxu0 0
        %5146 = vmatprep.subr.bf16.mxu0 0
        %5147 = vmatpush1.bf16.msra.mxu0 0
        %5148 = vmatprep.subr.bf16.mxu0 0
        %5149 = vmatpush1.bf16.msra.mxu0 0
        %5150 = vmatprep.mubr.bf16.mxu0 0
        %5151 = vmatmul.mubr.bf16.gmra.mrb[0].mxu0 %v5070
        %v5152 = vpop.f32.mrb[0].mxu0
        %v5153 = vadd.f32 0.0, %v5152
        %v5154 = vpop.f32.mrb[0].mxu0
        %v5155 = vpop.f32.mrb[0].mxu0
        %v5156 = vadd.f32 0.0, %v5155
        %v5157 = vpop.f32.mrb[0].mxu0
        %5158 = vmatprep.mubr.bf16.mxu0 0
        %5159 = vmatmul.mubr.bf16.gmra.mrb[0].mxu0 %v5071
        %v5160 = vpop.f32.mrb[0].mxu0
        %v5161 = vadd.f32 0.0, %v5160
        %v5162 = vpop.f32.mrb[0].mxu0
        %v5163 = vpop.f32.mrb[0].mxu0
        %v5164 = vadd.f32 0.0, %v5163
        %v5165 = vpop.f32.mrb[0].mxu0
        %5166 = vmatprep.mubr.bf16.mxu0 0
        %5167 = vmatmul.mubr.bf16.gmra.mrb[0].mxu0 %v5072
        %v5168 = vpop.f32.mrb[0].mxu0
        %v5169 = vadd.f32 0.0, %v5168
        %v5170 = vpop.f32.mrb[0].mxu0
        %v5171 = vpop.f32.mrb[0].mxu0
        %v5172 = vadd.f32 0.0, %v5171
        %v5173 = vpop.f32.mrb[0].mxu0
        %5174 = vmatprep.mubr.bf16.mxu0 0
        %5175 = vmatmul.mubr.bf16.gmra.mrb[0].mxu0 %v5073
        %v5176 = vpop.f32.mrb[0].mxu0
        %v5177 = vadd.f32 0.0, %v5176
        %v5178 = vpop.f32.mrb[0].mxu0
        %v5179 = vpop.f32.mrb[0].mxu0
        %v5180 = vadd.f32 0.0, %v5179
        %v5181 = vpop.f32.mrb[0].mxu0
        %5182 = vmatprep.mubr.bf16.mxu0 0
        %5183 = vmatmul.mubr.bf16.gmra.mrb[0].mxu0 %v5074
        %v5184 = vpop.f32.mrb[0].mxu0
        %v5185 = vadd.f32 0.0, %v5184
        %v5186 = vpop.f32.mrb[0].mxu0
        %v5187 = vpop.f32.mrb[0].mxu0
        %v5188 = vadd.f32 0.0, %v5187
        %v5189 = vpop.f32.mrb[0].mxu0
        %5190 = vmatprep.mubr.bf16.mxu0 0
        %5191 = vmatmul.mubr.bf16.gmra.mrb[0].mxu0 %v5075
        %v5192 = vpop.f32.mrb[0].mxu0
        %v5193 = vadd.f32 0.0, %v5192
        %v5194 = vpop.f32.mrb[0].mxu0
        %v5195 = vpop.f32.mrb[0].mxu0
        %v5196 = vadd.f32 0.0, %v5195
        %v5197 = vpop.f32.mrb[0].mxu0
        %5198 = vmatprep.mubr.bf16.mxu0 0
        %5199 = vmatmul.mubr.bf16.gmra.mrb[0].mxu0 %v5076
        %v5200 = vpop.f32.mrb[0].mxu0
        %v5201 = vadd.f32 0.0, %v5200
        %v5202 = vpop.f32.mrb[0].mxu0
        %v5203 = vpop.f32.mrb[0].mxu0
        %v5204 = vadd.f32 0.0, %v5203
        %v5205 = vpop.f32.mrb[0].mxu0
        %5206 = vmatprep.mubr.bf16.mxu0 0
        %5207 = vmatmul.mubr.bf16.gmra.mrb[0].mxu0 %v5077
        %v5208 = vpop.f32.mrb[0].mxu0
        %v5209 = vadd.f32 0.0, %v5208
        %v5210 = vpop.f32.mrb[0].mxu0
        %v5211 = vpop.f32.mrb[0].mxu0
        %v5212 = vadd.f32 0.0, %v5211
        %v5213 = vpop.f32.mrb[0].mxu0
        %5214 = vdwg.mxu0
        %v5215 = vpack.c.bf16 %v5156, %v5153
        %v5216 = vpack.c.bf16 %v5164, %v5161
        %v5217 = vpack.c.bf16 %v5172, %v5169
        %v5218 = vpack.c.bf16 %v5180, %v5177
        %v5219 = vpack.c.bf16 %v5188, %v5185
        %v5220 = vpack.c.bf16 %v5196, %v5193
        %v5221 = vpack.c.bf16 %v5204, %v5201
        %v5222 = vpack.c.bf16 %v5212, %v5209
        %5231 = vrot.lane.b32.xlu0 %v5215, 32
        %v5232 = vpop.permute.xlu0 %5231
        %5233 = vrot.lane.b32.xlu0 %v5216, 32
        %v5234 = vpop.permute.xlu0 %5233
        %5235 = vrot.lane.b32.xlu0 %v5217, 32
        %v5236 = vpop.permute.xlu0 %5235
        %5237 = vrot.lane.b32.xlu0 %v5218, 32
        %v5238 = vpop.permute.xlu0 %5237
        %5239 = vrot.lane.b32.xlu0 %v5219, 32
        %v5240 = vpop.permute.xlu0 %5239
        %5241 = vrot.lane.b32.xlu0 %v5220, 32
        %v5242 = vpop.permute.xlu0 %5241
        %5243 = vrot.lane.b32.xlu0 %v5221, 32
        %v5244 = vpop.permute.xlu0 %5243
        %5245 = vrot.lane.b32.xlu0 %v5222, 32
        %v5246 = vpop.permute.xlu0 %5245
        %5255 = vst.msk [vmem:[#allocation5 + $0x8] sm:$0xff] %vm2988, %v5232
        %5256 = vst.msk [vmem:[#allocation5 + $0x18] sm:$0xff] %vm2988, %v5234
        %5257 = vst.msk [vmem:[#allocation5 + $0x28] sm:$0xff] %vm2988, %v5236
        %5258 = vst.msk [vmem:[#allocation5 + $0x38] sm:$0xff] %vm2988, %v5238
        %5259 = vst.msk [vmem:[#allocation5 + $0x48] sm:$0xff] %vm2988, %v5240
        %5260 = vst.msk [vmem:[#allocation5 + $0x58] sm:$0xff] %vm2988, %v5242
        %5261 = vst.msk [vmem:[#allocation5 + $0x68] sm:$0xff] %vm2988, %v5244
        %5262 = vst.msk [vmem:[#allocation5 + $0x78] sm:$0xff] %vm2988, %v5246
        %v5263 = vld [vmem:[#allocation2 + $0x8] sm:$0xff]
        %v5264 = vld [vmem:[#allocation2 + $0x18] sm:$0xff]
        %v5265 = vld [vmem:[#allocation2 + $0x28] sm:$0xff]
        %v5266 = vld [vmem:[#allocation2 + $0x38] sm:$0xff]
        %v5267 = vld [vmem:[#allocation2 + $0x48] sm:$0xff]
        %v5268 = vld [vmem:[#allocation2 + $0x58] sm:$0xff]
        %v5269 = vld [vmem:[#allocation2 + $0x68] sm:$0xff]
        %v5270 = vld [vmem:[#allocation2 + $0x78] sm:$0xff]
        %v5271 = vld [vmem:[#allocation3 + $0x8] sm:$0xff]
        %v5272 = vld [vmem:[#allocation3 + $0x18] sm:$0xff]
        %v5273 = vld [vmem:[#allocation3 + $0x28] sm:$0xff]
        %v5274 = vld [vmem:[#allocation3 + $0x38] sm:$0xff]
        %v5275 = vld [vmem:[#allocation3 + $0x48] sm:$0xff]
        %v5276 = vld [vmem:[#allocation3 + $0x58] sm:$0xff]
        %v5277 = vld [vmem:[#allocation3 + $0x68] sm:$0xff]
        %v5278 = vld [vmem:[#allocation3 + $0x78] sm:$0xff]
        %5287 = vrot.lane.b32.xlu0 %v5263, 64
        %v5288 = vpop.permute.xlu0 %5287
        %5289 = vrot.lane.b32.xlu0 %v5264, 64
        %v5290 = vpop.permute.xlu0 %5289
        %5291 = vrot.lane.b32.xlu0 %v5265, 64
        %v5292 = vpop.permute.xlu0 %5291
        %5293 = vrot.lane.b32.xlu0 %v5266, 64
        %v5294 = vpop.permute.xlu0 %5293
        %5295 = vrot.lane.b32.xlu0 %v5267, 64
        %v5296 = vpop.permute.xlu0 %5295
        %5297 = vrot.lane.b32.xlu0 %v5268, 64
        %v5298 = vpop.permute.xlu0 %5297
        %5299 = vrot.lane.b32.xlu0 %v5269, 64
        %v5300 = vpop.permute.xlu0 %5299
        %5301 = vrot.lane.b32.xlu0 %v5270, 64
        %v5302 = vpop.permute.xlu0 %5301
        %5311 = vrot.lane.b32.xlu0 %v5271, 64
        %v5312 = vpop.permute.xlu0 %5311
        %5313 = vrot.lane.b32.xlu0 %v5272, 64
        %v5314 = vpop.permute.xlu0 %5313
        %5315 = vrot.lane.b32.xlu0 %v5273, 64
        %v5316 = vpop.permute.xlu0 %5315
        %5317 = vrot.lane.b32.xlu0 %v5274, 64
        %v5318 = vpop.permute.xlu0 %5317
        %5319 = vrot.lane.b32.xlu0 %v5275, 64
        %v5320 = vpop.permute.xlu0 %5319
        %5321 = vrot.lane.b32.xlu0 %v5276, 64
        %v5322 = vpop.permute.xlu0 %5321
        %5323 = vrot.lane.b32.xlu0 %v5277, 64
        %v5324 = vpop.permute.xlu0 %5323
        %5325 = vrot.lane.b32.xlu0 %v5278, 64
        %v5326 = vpop.permute.xlu0 %5325
        %v5328 = vsel %vm1967, %v5288, 0
        %v5331 = vsel %vm1967, %v5290, 0
        %v5334 = vsel %vm1967, %v5292, 0
        %v5337 = vsel %vm1967, %v5294, 0
        %v5340 = vsel %vm1967, %v5296, 0
        %v5343 = vsel %vm1967, %v5298, 0
        %v5346 = vsel %vm1967, %v5300, 0
        %v5349 = vsel %vm1967, %v5302, 0
        %v5352 = vsel %vm1967, %v5312, 0
        %v5355 = vsel %vm1967, %v5314, 0
        %v5358 = vsel %vm1967, %v5316, 0
        %v5361 = vsel %vm1967, %v5318, 0
        %v5364 = vsel %vm1967, %v5320, 0
        %v5367 = vsel %vm1967, %v5322, 0
        %v5370 = vsel %vm1967, %v5324, 0
        %v5373 = vsel %vm1967, %v5326, 0
        %5375 = vmatprep.subr.bf16.mxu0 0
        %5376 = vmatpush1.bf16.xpose.msra.mxu0 %v5352
        %5377 = vmatprep.subr.bf16.mxu0 0
        %5378 = vmatpush1.bf16.xpose.msra.mxu0 %v5355
        %5379 = vmatprep.subr.bf16.mxu0 0
        %5380 = vmatpush1.bf16.xpose.msra.mxu0 %v5358
        %5381 = vmatprep.subr.bf16.mxu0 0
        %5382 = vmatpush1.bf16.xpose.msra.mxu0 %v5361
        %5383 = vmatprep.subr.bf16.mxu0 0
        %5384 = vmatpush1.bf16.xpose.msra.mxu0 %v5364
        %5385 = vmatprep.subr.bf16.mxu0 0
        %5386 = vmatpush1.bf16.xpose.msra.mxu0 %v5367
        %5387 = vmatprep.subr.bf16.mxu0 0
        %5388 = vmatpush1.bf16.xpose.msra.mxu0 %v5370
        %5389 = vmatprep.subr.bf16.mxu0 0
        %5390 = vmatpush1.bf16.xpose.msra.mxu0 %v5373
        %5391 = vmatprep.subr.bf16.mxu0 0
        %5392 = vmatpush1.bf16.xpose.msra.mxu0 0
        %5393 = vmatprep.subr.bf16.mxu0 0
        %5394 = vmatpush1.bf16.xpose.msra.mxu0 0
        %5395 = vmatprep.subr.bf16.mxu0 0
        %5396 = vmatpush1.bf16.xpose.msra.mxu0 0
        %5397 = vmatprep.subr.bf16.mxu0 0
        %5398 = vmatpush1.bf16.xpose.msra.mxu0 0
        %5399 = vmatprep.subr.bf16.mxu0 0
        %5400 = vmatpush1.bf16.xpose.msra.mxu0 0
        %5401 = vmatprep.subr.bf16.mxu0 0
        %5402 = vmatpush1.bf16.xpose.msra.mxu0 0
        %5403 = vmatprep.subr.bf16.mxu0 0
        %5404 = vmatpush1.bf16.xpose.msra.mxu0 0
        %5405 = vmatprep.subr.bf16.mxu0 0
        %5406 = vmatpush1.bf16.xpose.msra.mxu0 0
        %5407 = vmatprep.mubr.bf16.mxu0 0
        %5408 = vmatmul.mubr.bf16.gmra.mrb[0].mxu0 %v5328
        %v5409 = vpop.f32.mrb[0].mxu0
        %v5410 = vadd.f32 %v1949, %v5409
        %v5411 = vpop.f32.mrb[0].mxu0
        %v5412 = vpop.f32.mrb[0].mxu0
        %v5413 = vadd.f32 %v1949, %v5412
        %v5414 = vpop.f32.mrb[0].mxu0
        %5415 = vmatprep.mubr.bf16.mxu0 0
        %5416 = vmatmul.mubr.bf16.gmra.mrb[0].mxu0 %v5331
        %v5417 = vpop.f32.mrb[0].mxu0
        %v5418 = vadd.f32 %v1949, %v5417
        %v5419 = vpop.f32.mrb[0].mxu0
        %v5420 = vpop.f32.mrb[0].mxu0
        %v5421 = vadd.f32 %v1949, %v5420
        %v5422 = vpop.f32.mrb[0].mxu0
        %5423 = vmatprep.mubr.bf16.mxu0 0
        %5424 = vmatmul.mubr.bf16.gmra.mrb[0].mxu0 %v5334
        %v5425 = vpop.f32.mrb[0].mxu0
        %v5426 = vadd.f32 %v1949, %v5425
        %v5427 = vpop.f32.mrb[0].mxu0
        %v5428 = vpop.f32.mrb[0].mxu0
        %v5429 = vadd.f32 %v1949, %v5428
        %v5430 = vpop.f32.mrb[0].mxu0
        %5431 = vmatprep.mubr.bf16.mxu0 0
        %5432 = vmatmul.mubr.bf16.gmra.mrb[0].mxu0 %v5337
        %v5433 = vpop.f32.mrb[0].mxu0
        %v5434 = vadd.f32 %v1949, %v5433
        %v5435 = vpop.f32.mrb[0].mxu0
        %v5436 = vpop.f32.mrb[0].mxu0
        %v5437 = vadd.f32 %v1949, %v5436
        %v5438 = vpop.f32.mrb[0].mxu0
        %5439 = vmatprep.mubr.bf16.mxu0 0
        %5440 = vmatmul.mubr.bf16.gmra.mrb[0].mxu0 %v5340
        %v5441 = vpop.f32.mrb[0].mxu0
        %v5442 = vadd.f32 %v1949, %v5441
        %v5443 = vpop.f32.mrb[0].mxu0
        %v5444 = vpop.f32.mrb[0].mxu0
        %v5445 = vadd.f32 %v1949, %v5444
        %v5446 = vpop.f32.mrb[0].mxu0
        %5447 = vmatprep.mubr.bf16.mxu0 0
        %5448 = vmatmul.mubr.bf16.gmra.mrb[0].mxu0 %v5343
        %v5449 = vpop.f32.mrb[0].mxu0
        %v5450 = vadd.f32 %v1949, %v5449
        %v5451 = vpop.f32.mrb[0].mxu0
        %v5452 = vpop.f32.mrb[0].mxu0
        %v5453 = vadd.f32 %v1949, %v5452
        %v5454 = vpop.f32.mrb[0].mxu0
        %5455 = vmatprep.mubr.bf16.mxu0 0
        %5456 = vmatmul.mubr.bf16.gmra.mrb[0].mxu0 %v5346
        %v5457 = vpop.f32.mrb[0].mxu0
        %v5458 = vadd.f32 %v1949, %v5457
        %v5459 = vpop.f32.mrb[0].mxu0
        %v5460 = vpop.f32.mrb[0].mxu0
        %v5461 = vadd.f32 %v1949, %v5460
        %v5462 = vpop.f32.mrb[0].mxu0
        %5463 = vmatprep.mubr.bf16.mxu0 0
        %5464 = vmatmul.mubr.bf16.gmra.mrb[0].mxu0 %v5349
        %v5465 = vpop.f32.mrb[0].mxu0
        %v5466 = vadd.f32 %v1949, %v5465
        %v5467 = vpop.f32.mrb[0].mxu0
        %v5468 = vpop.f32.mrb[0].mxu0
        %v5469 = vadd.f32 %v1949, %v5468
        %v5470 = vpop.f32.mrb[0].mxu0
        %5471 = vdwg.mxu0
        %5472 = vmax.xlane.f32.xlu0 %v5410
        %v5473 = vpop.xlane.xlu0 %5472
        %5474 = vmax.xlane.f32.xlu0 %v5413
        %v5475 = vpop.xlane.xlu0 %5474
        %5476 = vmax.xlane.f32.xlu0 %v5418
        %v5477 = vpop.xlane.xlu0 %5476
        %5478 = vmax.xlane.f32.xlu0 %v5421
        %v5479 = vpop.xlane.xlu0 %5478
        %5480 = vmax.xlane.f32.xlu0 %v5426
        %v5481 = vpop.xlane.xlu0 %5480
        %5482 = vmax.xlane.f32.xlu0 %v5429
        %v5483 = vpop.xlane.xlu0 %5482
        %5484 = vmax.xlane.f32.xlu0 %v5434
        %v5485 = vpop.xlane.xlu0 %5484
        %5486 = vmax.xlane.f32.xlu0 %v5437
        %v5487 = vpop.xlane.xlu0 %5486
        %5488 = vmax.xlane.f32.xlu0 %v5442
        %v5489 = vpop.xlane.xlu0 %5488
        %5490 = vmax.xlane.f32.xlu0 %v5445
        %v5491 = vpop.xlane.xlu0 %5490
        %5492 = vmax.xlane.f32.xlu0 %v5450
        %v5493 = vpop.xlane.xlu0 %5492
        %5494 = vmax.xlane.f32.xlu0 %v5453
        %v5495 = vpop.xlane.xlu0 %5494
        %5496 = vmax.xlane.f32.xlu0 %v5458
        %v5497 = vpop.xlane.xlu0 %5496
        %5498 = vmax.xlane.f32.xlu0 %v5461
        %v5499 = vpop.xlane.xlu0 %5498
        %5500 = vmax.xlane.f32.xlu0 %v5466
        %v5501 = vpop.xlane.xlu0 %5500
        %5502 = vmax.xlane.f32.xlu0 %v5469
        %v5503 = vpop.xlane.xlu0 %5502
        %v5504 = vsub.f32 %v5410, %v5473
        %v5505 = vsub.f32 %v5413, %v5475
        %v5506 = vsub.f32 %v5418, %v5477
        %v5507 = vsub.f32 %v5421, %v5479
        %v5508 = vsub.f32 %v5426, %v5481
        %v5509 = vsub.f32 %v5429, %v5483
        %v5510 = vsub.f32 %v5434, %v5485
        %v5511 = vsub.f32 %v5437, %v5487
        %v5512 = vsub.f32 %v5442, %v5489
        %v5513 = vsub.f32 %v5445, %v5491
        %v5514 = vsub.f32 %v5450, %v5493
        %v5515 = vsub.f32 %v5453, %v5495
        %v5516 = vsub.f32 %v5458, %v5497
        %v5517 = vsub.f32 %v5461, %v5499
        %v5518 = vsub.f32 %v5466, %v5501
        %v5519 = vsub.f32 %v5469, %v5503
        %v5520 = vmul.f32 %v5504, 1.442695
        %v5521 = vpow.pop %v5520
        %v5522 = vmul.f32 %v5505, 1.442695
        %v5523 = vpow.pop %v5522
        %v5524 = vmul.f32 %v5506, 1.442695
        %v5525 = vpow.pop %v5524
        %v5526 = vmul.f32 %v5507, 1.442695
        %v5527 = vpow.pop %v5526
        %v5528 = vmul.f32 %v5508, 1.442695
        %v5529 = vpow.pop %v5528
        %v5530 = vmul.f32 %v5509, 1.442695
        %v5531 = vpow.pop %v5530
        %v5532 = vmul.f32 %v5510, 1.442695
        %v5533 = vpow.pop %v5532
        %v5534 = vmul.f32 %v5511, 1.442695
        %v5535 = vpow.pop %v5534
        %v5536 = vmul.f32 %v5512, 1.442695
        %v5537 = vpow.pop %v5536
        %v5538 = vmul.f32 %v5513, 1.442695
        %v5539 = vpow.pop %v5538
        %v5540 = vmul.f32 %v5514, 1.442695
        %v5541 = vpow.pop %v5540
        %v5542 = vmul.f32 %v5515, 1.442695
        %v5543 = vpow.pop %v5542
        %v5544 = vmul.f32 %v5516, 1.442695
        %v5545 = vpow.pop %v5544
        %v5546 = vmul.f32 %v5517, 1.442695
        %v5547 = vpow.pop %v5546
        %v5548 = vmul.f32 %v5518, 1.442695
        %v5549 = vpow.pop %v5548
        %v5550 = vmul.f32 %v5519, 1.442695
        %v5551 = vpow.pop %v5550
        %5552 = vadd.xlane.f32.xlu0 %v5521
        %v5553 = vpop.xlane.xlu0 %5552
        %5554 = vadd.xlane.f32.xlu0 %v5523
        %v5555 = vpop.xlane.xlu0 %5554
        %5556 = vadd.xlane.f32.xlu0 %v5525
        %v5557 = vpop.xlane.xlu0 %5556
        %5558 = vadd.xlane.f32.xlu0 %v5527
        %v5559 = vpop.xlane.xlu0 %5558
        %5560 = vadd.xlane.f32.xlu0 %v5529
        %v5561 = vpop.xlane.xlu0 %5560
        %5562 = vadd.xlane.f32.xlu0 %v5531
        %v5563 = vpop.xlane.xlu0 %5562
        %5564 = vadd.xlane.f32.xlu0 %v5533
        %v5565 = vpop.xlane.xlu0 %5564
        %5566 = vadd.xlane.f32.xlu0 %v5535
        %v5567 = vpop.xlane.xlu0 %5566
        %5568 = vadd.xlane.f32.xlu0 %v5537
        %v5569 = vpop.xlane.xlu0 %5568
        %5570 = vadd.xlane.f32.xlu0 %v5539
        %v5571 = vpop.xlane.xlu0 %5570
        %5572 = vadd.xlane.f32.xlu0 %v5541
        %v5573 = vpop.xlane.xlu0 %5572
        %5574 = vadd.xlane.f32.xlu0 %v5543
        %v5575 = vpop.xlane.xlu0 %5574
        %5576 = vadd.xlane.f32.xlu0 %v5545
        %v5577 = vpop.xlane.xlu0 %5576
        %5578 = vadd.xlane.f32.xlu0 %v5547
        %v5579 = vpop.xlane.xlu0 %5578
        %5580 = vadd.xlane.f32.xlu0 %v5549
        %v5581 = vpop.xlane.xlu0 %5580
        %5582 = vadd.xlane.f32.xlu0 %v5551
        %v5583 = vpop.xlane.xlu0 %5582
        %v5584 = vrcp.pop %v5553
        %v5585 = vrcp.pop %v5555
        %v5586 = vrcp.pop %v5557
        %v5587 = vrcp.pop %v5559
        %v5588 = vrcp.pop %v5561
        %v5589 = vrcp.pop %v5563
        %v5590 = vrcp.pop %v5565
        %v5591 = vrcp.pop %v5567
        %v5592 = vrcp.pop %v5569
        %v5593 = vrcp.pop %v5571
        %v5594 = vrcp.pop %v5573
        %v5595 = vrcp.pop %v5575
        %v5596 = vrcp.pop %v5577
        %v5597 = vrcp.pop %v5579
        %v5598 = vrcp.pop %v5581
        %v5599 = vrcp.pop %v5583
        %v5600 = vmul.f32 %v5521, %v5584
        %v5601 = vmul.f32 %v5523, %v5585
        %v5602 = vmul.f32 %v5525, %v5586
        %v5603 = vmul.f32 %v5527, %v5587
        %v5604 = vmul.f32 %v5529, %v5588
        %v5605 = vmul.f32 %v5531, %v5589
        %v5606 = vmul.f32 %v5533, %v5590
        %v5607 = vmul.f32 %v5535, %v5591
        %v5608 = vmul.f32 %v5537, %v5592
        %v5609 = vmul.f32 %v5539, %v5593
        %v5610 = vmul.f32 %v5541, %v5594
        %v5611 = vmul.f32 %v5543, %v5595
        %v5612 = vmul.f32 %v5545, %v5596
        %v5613 = vmul.f32 %v5547, %v5597
        %v5614 = vmul.f32 %v5549, %v5598
        %v5615 = vmul.f32 %v5551, %v5599
        %v5616 = vld [vmem:[%s689] sm:$0xff]
        %v5617 = vld [vmem:[%s689 + $0x8] sm:$0xff]
        %v5618 = vld [vmem:[%s689 + $0x10] sm:$0xff]
        %v5619 = vld [vmem:[%s689 + $0x18] sm:$0xff]
        %v5620 = vld [vmem:[%s689 + $0x20] sm:$0xff]
        %v5621 = vld [vmem:[%s689 + $0x28] sm:$0xff]
        %v5622 = vld [vmem:[%s689 + $0x30] sm:$0xff]
        %v5623 = vld [vmem:[%s689 + $0x38] sm:$0xff]
        %v5624 = vld [vmem:[%s689 + $0x40] sm:$0xff]
        %v5625 = vld [vmem:[%s689 + $0x48] sm:$0xff]
        %v5626 = vld [vmem:[%s689 + $0x50] sm:$0xff]
        %v5627 = vld [vmem:[%s689 + $0x58] sm:$0xff]
        %v5628 = vld [vmem:[%s689 + $0x60] sm:$0xff]
        %v5629 = vld [vmem:[%s689 + $0x68] sm:$0xff]
        %v5630 = vld [vmem:[%s689 + $0x70] sm:$0xff]
        %v5631 = vld [vmem:[%s689 + $0x78] sm:$0xff]
        %v5632 = vadd.f32 %v5616, %v5600
        %v5633 = vadd.f32 %v5617, %v5601
        %v5634 = vadd.f32 %v5618, %v5602
        %v5635 = vadd.f32 %v5619, %v5603
        %v5636 = vadd.f32 %v5620, %v5604
        %v5637 = vadd.f32 %v5621, %v5605
        %v5638 = vadd.f32 %v5622, %v5606
        %v5639 = vadd.f32 %v5623, %v5607
        %v5640 = vadd.f32 %v5624, %v5608
        %v5641 = vadd.f32 %v5625, %v5609
        %v5642 = vadd.f32 %v5626, %v5610
        %v5643 = vadd.f32 %v5627, %v5611
        %v5644 = vadd.f32 %v5628, %v5612
        %v5645 = vadd.f32 %v5629, %v5613
        %v5646 = vadd.f32 %v5630, %v5614
        %v5647 = vadd.f32 %v5631, %v5615
        %5648 = vst [vmem:[%s689] sm:$0xff] %v5632
        %5649 = vst [vmem:[%s689 + $0x8] sm:$0xff] %v5633
        %5650 = vst [vmem:[%s689 + $0x10] sm:$0xff] %v5634
        %5651 = vst [vmem:[%s689 + $0x18] sm:$0xff] %v5635
        %5652 = vst [vmem:[%s689 + $0x20] sm:$0xff] %v5636
        %5653 = vst [vmem:[%s689 + $0x28] sm:$0xff] %v5637
        %5654 = vst [vmem:[%s689 + $0x30] sm:$0xff] %v5638
        %5655 = vst [vmem:[%s689 + $0x38] sm:$0xff] %v5639
        %5656 = vst [vmem:[%s689 + $0x40] sm:$0xff] %v5640
        %5657 = vst [vmem:[%s689 + $0x48] sm:$0xff] %v5641
        %5658 = vst [vmem:[%s689 + $0x50] sm:$0xff] %v5642
        %5659 = vst [vmem:[%s689 + $0x58] sm:$0xff] %v5643
        %5660 = vst [vmem:[%s689 + $0x60] sm:$0xff] %v5644
        %5661 = vst [vmem:[%s689 + $0x68] sm:$0xff] %v5645
        %5662 = vst [vmem:[%s689 + $0x70] sm:$0xff] %v5646
        %5663 = vst [vmem:[%s689 + $0x78] sm:$0xff] %v5647
        %v5664 = vpack.c.bf16 %v5601, %v5600
        %v5665 = vpack.c.bf16 %v5603, %v5602
        %v5666 = vpack.c.bf16 %v5605, %v5604
        %v5667 = vpack.c.bf16 %v5607, %v5606
        %v5668 = vpack.c.bf16 %v5609, %v5608
        %v5669 = vpack.c.bf16 %v5611, %v5610
        %v5670 = vpack.c.bf16 %v5613, %v5612
        %v5671 = vpack.c.bf16 %v5615, %v5614
        %v5672 = vld [vmem:[#allocation4 + $0x8] sm:$0xff]
        %v5673 = vld [vmem:[#allocation4 + $0x18] sm:$0xff]
        %v5674 = vld [vmem:[#allocation4 + $0x28] sm:$0xff]
        %v5675 = vld [vmem:[#allocation4 + $0x38] sm:$0xff]
        %v5676 = vld [vmem:[#allocation4 + $0x48] sm:$0xff]
        %v5677 = vld [vmem:[#allocation4 + $0x58] sm:$0xff]
        %v5678 = vld [vmem:[#allocation4 + $0x68] sm:$0xff]
        %v5679 = vld [vmem:[#allocation4 + $0x78] sm:$0xff]
        %5688 = vrot.lane.b32.xlu0 %v5672, 64
        %v5689 = vpop.permute.xlu0 %5688
        %5690 = vrot.lane.b32.xlu0 %v5673, 64
        %v5691 = vpop.permute.xlu0 %5690
        %5692 = vrot.lane.b32.xlu0 %v5674, 64
        %v5693 = vpop.permute.xlu0 %5692
        %5694 = vrot.lane.b32.xlu0 %v5675, 64
        %v5695 = vpop.permute.xlu0 %5694
        %5696 = vrot.lane.b32.xlu0 %v5676, 64
        %v5697 = vpop.permute.xlu0 %5696
        %5698 = vrot.lane.b32.xlu0 %v5677, 64
        %v5699 = vpop.permute.xlu0 %5698
        %5700 = vrot.lane.b32.xlu0 %v5678, 64
        %v5701 = vpop.permute.xlu0 %5700
        %5702 = vrot.lane.b32.xlu0 %v5679, 64
        %v5703 = vpop.permute.xlu0 %5702
        %5712 = vmatprep.subr.bf16.mxu0 0
        %5713 = vmatpush1.bf16.msra.mxu0 %v5689
        %5714 = vmatprep.subr.bf16.mxu0 0
        %5715 = vmatpush1.bf16.msra.mxu0 %v5691
        %5716 = vmatprep.subr.bf16.mxu0 0
        %5717 = vmatpush1.bf16.msra.mxu0 %v5693
        %5718 = vmatprep.subr.bf16.mxu0 0
        %5719 = vmatpush1.bf16.msra.mxu0 %v5695
        %5720 = vmatprep.subr.bf16.mxu0 0
        %5721 = vmatpush1.bf16.msra.mxu0 %v5697
        %5722 = vmatprep.subr.bf16.mxu0 0
        %5723 = vmatpush1.bf16.msra.mxu0 %v5699
        %5724 = vmatprep.subr.bf16.mxu0 0
        %5725 = vmatpush1.bf16.msra.mxu0 %v5701
        %5726 = vmatprep.subr.bf16.mxu0 0
        %5727 = vmatpush1.bf16.msra.mxu0 %v5703
        %5728 = vmatprep.subr.bf16.mxu0 0
        %5729 = vmatpush1.bf16.msra.mxu0 0
        %5730 = vmatprep.subr.bf16.mxu0 0
        %5731 = vmatpush1.bf16.msra.mxu0 0
        %5732 = vmatprep.subr.bf16.mxu0 0
        %5733 = vmatpush1.bf16.msra.mxu0 0
        %5734 = vmatprep.subr.bf16.mxu0 0
        %5735 = vmatpush1.bf16.msra.mxu0 0
        %5736 = vmatprep.subr.bf16.mxu0 0
        %5737 = vmatpush1.bf16.msra.mxu0 0
        %5738 = vmatprep.subr.bf16.mxu0 0
        %5739 = vmatpush1.bf16.msra.mxu0 0
        %5740 = vmatprep.subr.bf16.mxu0 0
        %5741 = vmatpush1.bf16.msra.mxu0 0
        %5742 = vmatprep.subr.bf16.mxu0 0
        %5743 = vmatpush1.bf16.msra.mxu0 0
        %5744 = vmatprep.mubr.bf16.mxu0 0
        %5745 = vmatmul.mubr.bf16.gmra.mrb[0].mxu0 %v5664
        %v5746 = vpop.f32.mrb[0].mxu0
        %v5747 = vadd.f32 0.0, %v5746
        %v5748 = vpop.f32.mrb[0].mxu0
        %v5749 = vpop.f32.mrb[0].mxu0
        %v5750 = vadd.f32 0.0, %v5749
        %v5751 = vpop.f32.mrb[0].mxu0
        %5752 = vmatprep.mubr.bf16.mxu0 0
        %5753 = vmatmul.mubr.bf16.gmra.mrb[0].mxu0 %v5665
        %v5754 = vpop.f32.mrb[0].mxu0
        %v5755 = vadd.f32 0.0, %v5754
        %v5756 = vpop.f32.mrb[0].mxu0
        %v5757 = vpop.f32.mrb[0].mxu0
        %v5758 = vadd.f32 0.0, %v5757
        %v5759 = vpop.f32.mrb[0].mxu0
        %5760 = vmatprep.mubr.bf16.mxu0 0
        %5761 = vmatmul.mubr.bf16.gmra.mrb[0].mxu0 %v5666
        %v5762 = vpop.f32.mrb[0].mxu0
        %v5763 = vadd.f32 0.0, %v5762
        %v5764 = vpop.f32.mrb[0].mxu0
        %v5765 = vpop.f32.mrb[0].mxu0
        %v5766 = vadd.f32 0.0, %v5765
        %v5767 = vpop.f32.mrb[0].mxu0
        %5768 = vmatprep.mubr.bf16.mxu0 0
        %5769 = vmatmul.mubr.bf16.gmra.mrb[0].mxu0 %v5667
        %v5770 = vpop.f32.mrb[0].mxu0
        %v5771 = vadd.f32 0.0, %v5770
        %v5772 = vpop.f32.mrb[0].mxu0
        %v5773 = vpop.f32.mrb[0].mxu0
        %v5774 = vadd.f32 0.0, %v5773
        %v5775 = vpop.f32.mrb[0].mxu0
        %5776 = vmatprep.mubr.bf16.mxu0 0
        %5777 = vmatmul.mubr.bf16.gmra.mrb[0].mxu0 %v5668
        %v5778 = vpop.f32.mrb[0].mxu0
        %v5779 = vadd.f32 0.0, %v5778
        %v5780 = vpop.f32.mrb[0].mxu0
        %v5781 = vpop.f32.mrb[0].mxu0
        %v5782 = vadd.f32 0.0, %v5781
        %v5783 = vpop.f32.mrb[0].mxu0
        %5784 = vmatprep.mubr.bf16.mxu0 0
        %5785 = vmatmul.mubr.bf16.gmra.mrb[0].mxu0 %v5669
        %v5786 = vpop.f32.mrb[0].mxu0
        %v5787 = vadd.f32 0.0, %v5786
        %v5788 = vpop.f32.mrb[0].mxu0
        %v5789 = vpop.f32.mrb[0].mxu0
        %v5790 = vadd.f32 0.0, %v5789
        %v5791 = vpop.f32.mrb[0].mxu0
        %5792 = vmatprep.mubr.bf16.mxu0 0
        %5793 = vmatmul.mubr.bf16.gmra.mrb[0].mxu0 %v5670
        %v5794 = vpop.f32.mrb[0].mxu0
        %v5795 = vadd.f32 0.0, %v5794
        %v5796 = vpop.f32.mrb[0].mxu0
        %v5797 = vpop.f32.mrb[0].mxu0
        %v5798 = vadd.f32 0.0, %v5797
        %v5799 = vpop.f32.mrb[0].mxu0
        %5800 = vmatprep.mubr.bf16.mxu0 0
        %5801 = vmatmul.mubr.bf16.gmra.mrb[0].mxu0 %v5671
        %v5802 = vpop.f32.mrb[0].mxu0
        %v5803 = vadd.f32 0.0, %v5802
        %v5804 = vpop.f32.mrb[0].mxu0
        %v5805 = vpop.f32.mrb[0].mxu0
        %v5806 = vadd.f32 0.0, %v5805
        %v5807 = vpop.f32.mrb[0].mxu0
        %5808 = vdwg.mxu0
        %v5809 = vpack.c.bf16 %v5750, %v5747
        %v5810 = vpack.c.bf16 %v5758, %v5755
        %v5811 = vpack.c.bf16 %v5766, %v5763
        %v5812 = vpack.c.bf16 %v5774, %v5771
        %v5813 = vpack.c.bf16 %v5782, %v5779
        %v5814 = vpack.c.bf16 %v5790, %v5787
        %v5815 = vpack.c.bf16 %v5798, %v5795
        %v5816 = vpack.c.bf16 %v5806, %v5803
        %5825 = vrot.lane.b32.xlu0 %v5809, 64
        %v5826 = vpop.permute.xlu0 %5825
        %5827 = vrot.lane.b32.xlu0 %v5810, 64
        %v5828 = vpop.permute.xlu0 %5827
        %5829 = vrot.lane.b32.xlu0 %v5811, 64
        %v5830 = vpop.permute.xlu0 %5829
        %5831 = vrot.lane.b32.xlu0 %v5812, 64
        %v5832 = vpop.permute.xlu0 %5831
        %5833 = vrot.lane.b32.xlu0 %v5813, 64
        %v5834 = vpop.permute.xlu0 %5833
        %5835 = vrot.lane.b32.xlu0 %v5814, 64
        %v5836 = vpop.permute.xlu0 %5835
        %5837 = vrot.lane.b32.xlu0 %v5815, 64
        %v5838 = vpop.permute.xlu0 %5837
        %5839 = vrot.lane.b32.xlu0 %v5816, 64
        %v5840 = vpop.permute.xlu0 %5839
        %5849 = vst.msk [vmem:[#allocation5 + $0x8] sm:$0xff] %vm3583, %v5826
        %5850 = vst.msk [vmem:[#allocation5 + $0x18] sm:$0xff] %vm3583, %v5828
        %5851 = vst.msk [vmem:[#allocation5 + $0x28] sm:$0xff] %vm3583, %v5830
        %5852 = vst.msk [vmem:[#allocation5 + $0x38] sm:$0xff] %vm3583, %v5832
        %5853 = vst.msk [vmem:[#allocation5 + $0x48] sm:$0xff] %vm3583, %v5834
        %5854 = vst.msk [vmem:[#allocation5 + $0x58] sm:$0xff] %vm3583, %v5836
        %5855 = vst.msk [vmem:[#allocation5 + $0x68] sm:$0xff] %vm3583, %v5838
        %5856 = vst.msk [vmem:[#allocation5 + $0x78] sm:$0xff] %vm3583, %v5840
        %v5857 = vld [vmem:[#allocation2 + $0x8] sm:$0xff]
        %v5858 = vld [vmem:[#allocation2 + $0x18] sm:$0xff]
        %v5859 = vld [vmem:[#allocation2 + $0x28] sm:$0xff]
        %v5860 = vld [vmem:[#allocation2 + $0x38] sm:$0xff]
        %v5861 = vld [vmem:[#allocation2 + $0x48] sm:$0xff]
        %v5862 = vld [vmem:[#allocation2 + $0x58] sm:$0xff]
        %v5863 = vld [vmem:[#allocation2 + $0x68] sm:$0xff]
        %v5864 = vld [vmem:[#allocation2 + $0x78] sm:$0xff]
        %v5865 = vld [vmem:[#allocation3 + $0x8] sm:$0xff]
        %v5866 = vld [vmem:[#allocation3 + $0x18] sm:$0xff]
        %v5867 = vld [vmem:[#allocation3 + $0x28] sm:$0xff]
        %v5868 = vld [vmem:[#allocation3 + $0x38] sm:$0xff]
        %v5869 = vld [vmem:[#allocation3 + $0x48] sm:$0xff]
        %v5870 = vld [vmem:[#allocation3 + $0x58] sm:$0xff]
        %v5871 = vld [vmem:[#allocation3 + $0x68] sm:$0xff]
        %v5872 = vld [vmem:[#allocation3 + $0x78] sm:$0xff]
        %5881 = vrot.lane.b32.xlu0 %v5857, 32
        %v5882 = vpop.permute.xlu0 %5881
        %5883 = vrot.lane.b32.xlu0 %v5858, 32
        %v5884 = vpop.permute.xlu0 %5883
        %5885 = vrot.lane.b32.xlu0 %v5859, 32
        %v5886 = vpop.permute.xlu0 %5885
        %5887 = vrot.lane.b32.xlu0 %v5860, 32
        %v5888 = vpop.permute.xlu0 %5887
        %5889 = vrot.lane.b32.xlu0 %v5861, 32
        %v5890 = vpop.permute.xlu0 %5889
        %5891 = vrot.lane.b32.xlu0 %v5862, 32
        %v5892 = vpop.permute.xlu0 %5891
        %5893 = vrot.lane.b32.xlu0 %v5863, 32
        %v5894 = vpop.permute.xlu0 %5893
        %5895 = vrot.lane.b32.xlu0 %v5864, 32
        %v5896 = vpop.permute.xlu0 %5895
        %5905 = vrot.lane.b32.xlu0 %v5865, 32
        %v5906 = vpop.permute.xlu0 %5905
        %5907 = vrot.lane.b32.xlu0 %v5866, 32
        %v5908 = vpop.permute.xlu0 %5907
        %5909 = vrot.lane.b32.xlu0 %v5867, 32
        %v5910 = vpop.permute.xlu0 %5909
        %5911 = vrot.lane.b32.xlu0 %v5868, 32
        %v5912 = vpop.permute.xlu0 %5911
        %5913 = vrot.lane.b32.xlu0 %v5869, 32
        %v5914 = vpop.permute.xlu0 %5913
        %5915 = vrot.lane.b32.xlu0 %v5870, 32
        %v5916 = vpop.permute.xlu0 %5915
        %5917 = vrot.lane.b32.xlu0 %v5871, 32
        %v5918 = vpop.permute.xlu0 %5917
        %5919 = vrot.lane.b32.xlu0 %v5872, 32
        %v5920 = vpop.permute.xlu0 %5919
        %v5922 = vsel %vm1967, %v5882, 0
        %v5925 = vsel %vm1967, %v5884, 0
        %v5928 = vsel %vm1967, %v5886, 0
        %v5931 = vsel %vm1967, %v5888, 0
        %v5934 = vsel %vm1967, %v5890, 0
        %v5937 = vsel %vm1967, %v5892, 0
        %v5940 = vsel %vm1967, %v5894, 0
        %v5943 = vsel %vm1967, %v5896, 0
        %v5946 = vsel %vm1967, %v5906, 0
        %v5949 = vsel %vm1967, %v5908, 0
        %v5952 = vsel %vm1967, %v5910, 0
        %v5955 = vsel %vm1967, %v5912, 0
        %v5958 = vsel %vm1967, %v5914, 0
        %v5961 = vsel %vm1967, %v5916, 0
        %v5964 = vsel %vm1967, %v5918, 0
        %v5967 = vsel %vm1967, %v5920, 0
        %5969 = vmatprep.subr.bf16.mxu0 0
        %5970 = vmatpush1.bf16.xpose.msra.mxu0 %v5946
        %5971 = vmatprep.subr.bf16.mxu0 0
        %5972 = vmatpush1.bf16.xpose.msra.mxu0 %v5949
        %5973 = vmatprep.subr.bf16.mxu0 0
        %5974 = vmatpush1.bf16.xpose.msra.mxu0 %v5952
        %5975 = vmatprep.subr.bf16.mxu0 0
        %5976 = vmatpush1.bf16.xpose.msra.mxu0 %v5955
        %5977 = vmatprep.subr.bf16.mxu0 0
        %5978 = vmatpush1.bf16.xpose.msra.mxu0 %v5958
        %5979 = vmatprep.subr.bf16.mxu0 0
        %5980 = vmatpush1.bf16.xpose.msra.mxu0 %v5961
        %5981 = vmatprep.subr.bf16.mxu0 0
        %5982 = vmatpush1.bf16.xpose.msra.mxu0 %v5964
        %5983 = vmatprep.subr.bf16.mxu0 0
        %5984 = vmatpush1.bf16.xpose.msra.mxu0 %v5967
        %5985 = vmatprep.subr.bf16.mxu0 0
        %5986 = vmatpush1.bf16.xpose.msra.mxu0 0
        %5987 = vmatprep.subr.bf16.mxu0 0
        %5988 = vmatpush1.bf16.xpose.msra.mxu0 0
        %5989 = vmatprep.subr.bf16.mxu0 0
        %5990 = vmatpush1.bf16.xpose.msra.mxu0 0
        %5991 = vmatprep.subr.bf16.mxu0 0
        %5992 = vmatpush1.bf16.xpose.msra.mxu0 0
        %5993 = vmatprep.subr.bf16.mxu0 0
        %5994 = vmatpush1.bf16.xpose.msra.mxu0 0
        %5995 = vmatprep.subr.bf16.mxu0 0
        %5996 = vmatpush1.bf16.xpose.msra.mxu0 0
        %5997 = vmatprep.subr.bf16.mxu0 0
        %5998 = vmatpush1.bf16.xpose.msra.mxu0 0
        %5999 = vmatprep.subr.bf16.mxu0 0
        %6000 = vmatpush1.bf16.xpose.msra.mxu0 0
        %6001 = vmatprep.mubr.bf16.mxu0 0
        %6002 = vmatmul.mubr.bf16.gmra.mrb[0].mxu0 %v5922
        %v6003 = vpop.f32.mrb[0].mxu0
        %v6004 = vadd.f32 %v1949, %v6003
        %v6005 = vpop.f32.mrb[0].mxu0
        %v6006 = vpop.f32.mrb[0].mxu0
        %v6007 = vadd.f32 %v1949, %v6006
        %v6008 = vpop.f32.mrb[0].mxu0
        %6009 = vmatprep.mubr.bf16.mxu0 0
        %6010 = vmatmul.mubr.bf16.gmra.mrb[0].mxu0 %v5925
        %v6011 = vpop.f32.mrb[0].mxu0
        %v6012 = vadd.f32 %v1949, %v6011
        %v6013 = vpop.f32.mrb[0].mxu0
        %v6014 = vpop.f32.mrb[0].mxu0
        %v6015 = vadd.f32 %v1949, %v6014
        %v6016 = vpop.f32.mrb[0].mxu0
        %6017 = vmatprep.mubr.bf16.mxu0 0
        %6018 = vmatmul.mubr.bf16.gmra.mrb[0].mxu0 %v5928
        %v6019 = vpop.f32.mrb[0].mxu0
        %v6020 = vadd.f32 %v1949, %v6019
        %v6021 = vpop.f32.mrb[0].mxu0
        %v6022 = vpop.f32.mrb[0].mxu0
        %v6023 = vadd.f32 %v1949, %v6022
        %v6024 = vpop.f32.mrb[0].mxu0
        %6025 = vmatprep.mubr.bf16.mxu0 0
        %6026 = vmatmul.mubr.bf16.gmra.mrb[0].mxu0 %v5931
        %v6027 = vpop.f32.mrb[0].mxu0
        %v6028 = vadd.f32 %v1949, %v6027
        %v6029 = vpop.f32.mrb[0].mxu0
        %v6030 = vpop.f32.mrb[0].mxu0
        %v6031 = vadd.f32 %v1949, %v6030
        %v6032 = vpop.f32.mrb[0].mxu0
        %6033 = vmatprep.mubr.bf16.mxu0 0
        %6034 = vmatmul.mubr.bf16.gmra.mrb[0].mxu0 %v5934
        %v6035 = vpop.f32.mrb[0].mxu0
        %v6036 = vadd.f32 %v1949, %v6035
        %v6037 = vpop.f32.mrb[0].mxu0
        %v6038 = vpop.f32.mrb[0].mxu0
        %v6039 = vadd.f32 %v1949, %v6038
        %v6040 = vpop.f32.mrb[0].mxu0
        %6041 = vmatprep.mubr.bf16.mxu0 0
        %6042 = vmatmul.mubr.bf16.gmra.mrb[0].mxu0 %v5937
        %v6043 = vpop.f32.mrb[0].mxu0
        %v6044 = vadd.f32 %v1949, %v6043
        %v6045 = vpop.f32.mrb[0].mxu0
        %v6046 = vpop.f32.mrb[0].mxu0
        %v6047 = vadd.f32 %v1949, %v6046
        %v6048 = vpop.f32.mrb[0].mxu0
        %6049 = vmatprep.mubr.bf16.mxu0 0
        %6050 = vmatmul.mubr.bf16.gmra.mrb[0].mxu0 %v5940
        %v6051 = vpop.f32.mrb[0].mxu0
        %v6052 = vadd.f32 %v1949, %v6051
        %v6053 = vpop.f32.mrb[0].mxu0
        %v6054 = vpop.f32.mrb[0].mxu0
        %v6055 = vadd.f32 %v1949, %v6054
        %v6056 = vpop.f32.mrb[0].mxu0
        %6057 = vmatprep.mubr.bf16.mxu0 0
        %6058 = vmatmul.mubr.bf16.gmra.mrb[0].mxu0 %v5943
        %v6059 = vpop.f32.mrb[0].mxu0
        %v6060 = vadd.f32 %v1949, %v6059
        %v6061 = vpop.f32.mrb[0].mxu0
        %v6062 = vpop.f32.mrb[0].mxu0
        %v6063 = vadd.f32 %v1949, %v6062
        %v6064 = vpop.f32.mrb[0].mxu0
        %6065 = vdwg.mxu0
        %6066 = vmax.xlane.f32.xlu0 %v6004
        %v6067 = vpop.xlane.xlu0 %6066
        %6068 = vmax.xlane.f32.xlu0 %v6007
        %v6069 = vpop.xlane.xlu0 %6068
        %6070 = vmax.xlane.f32.xlu0 %v6012
        %v6071 = vpop.xlane.xlu0 %6070
        %6072 = vmax.xlane.f32.xlu0 %v6015
        %v6073 = vpop.xlane.xlu0 %6072
        %6074 = vmax.xlane.f32.xlu0 %v6020
        %v6075 = vpop.xlane.xlu0 %6074
        %6076 = vmax.xlane.f32.xlu0 %v6023
        %v6077 = vpop.xlane.xlu0 %6076
        %6078 = vmax.xlane.f32.xlu0 %v6028
        %v6079 = vpop.xlane.xlu0 %6078
        %6080 = vmax.xlane.f32.xlu0 %v6031
        %v6081 = vpop.xlane.xlu0 %6080
        %6082 = vmax.xlane.f32.xlu0 %v6036
        %v6083 = vpop.xlane.xlu0 %6082
        %6084 = vmax.xlane.f32.xlu0 %v6039
        %v6085 = vpop.xlane.xlu0 %6084
        %6086 = vmax.xlane.f32.xlu0 %v6044
        %v6087 = vpop.xlane.xlu0 %6086
        %6088 = vmax.xlane.f32.xlu0 %v6047
        %v6089 = vpop.xlane.xlu0 %6088
        %6090 = vmax.xlane.f32.xlu0 %v6052
        %v6091 = vpop.xlane.xlu0 %6090
        %6092 = vmax.xlane.f32.xlu0 %v6055
        %v6093 = vpop.xlane.xlu0 %6092
        %6094 = vmax.xlane.f32.xlu0 %v6060
        %v6095 = vpop.xlane.xlu0 %6094
        %6096 = vmax.xlane.f32.xlu0 %v6063
        %v6097 = vpop.xlane.xlu0 %6096
        %v6098 = vsub.f32 %v6004, %v6067
        %v6099 = vsub.f32 %v6007, %v6069
        %v6100 = vsub.f32 %v6012, %v6071
        %v6101 = vsub.f32 %v6015, %v6073
        %v6102 = vsub.f32 %v6020, %v6075
        %v6103 = vsub.f32 %v6023, %v6077
        %v6104 = vsub.f32 %v6028, %v6079
        %v6105 = vsub.f32 %v6031, %v6081
        %v6106 = vsub.f32 %v6036, %v6083
        %v6107 = vsub.f32 %v6039, %v6085
        %v6108 = vsub.f32 %v6044, %v6087
        %v6109 = vsub.f32 %v6047, %v6089
        %v6110 = vsub.f32 %v6052, %v6091
        %v6111 = vsub.f32 %v6055, %v6093
        %v6112 = vsub.f32 %v6060, %v6095
        %v6113 = vsub.f32 %v6063, %v6097
        %v6114 = vmul.f32 %v6098, 1.442695
        %v6115 = vpow.pop %v6114
        %v6116 = vmul.f32 %v6099, 1.442695
        %v6117 = vpow.pop %v6116
        %v6118 = vmul.f32 %v6100, 1.442695
        %v6119 = vpow.pop %v6118
        %v6120 = vmul.f32 %v6101, 1.442695
        %v6121 = vpow.pop %v6120
        %v6122 = vmul.f32 %v6102, 1.442695
        %v6123 = vpow.pop %v6122
        %v6124 = vmul.f32 %v6103, 1.442695
        %v6125 = vpow.pop %v6124
        %v6126 = vmul.f32 %v6104, 1.442695
        %v6127 = vpow.pop %v6126
        %v6128 = vmul.f32 %v6105, 1.442695
        %v6129 = vpow.pop %v6128
        %v6130 = vmul.f32 %v6106, 1.442695
        %v6131 = vpow.pop %v6130
        %v6132 = vmul.f32 %v6107, 1.442695
        %v6133 = vpow.pop %v6132
        %v6134 = vmul.f32 %v6108, 1.442695
        %v6135 = vpow.pop %v6134
        %v6136 = vmul.f32 %v6109, 1.442695
        %v6137 = vpow.pop %v6136
        %v6138 = vmul.f32 %v6110, 1.442695
        %v6139 = vpow.pop %v6138
        %v6140 = vmul.f32 %v6111, 1.442695
        %v6141 = vpow.pop %v6140
        %v6142 = vmul.f32 %v6112, 1.442695
        %v6143 = vpow.pop %v6142
        %v6144 = vmul.f32 %v6113, 1.442695
        %v6145 = vpow.pop %v6144
        %6146 = vadd.xlane.f32.xlu0 %v6115
        %v6147 = vpop.xlane.xlu0 %6146
        %6148 = vadd.xlane.f32.xlu0 %v6117
        %v6149 = vpop.xlane.xlu0 %6148
        %6150 = vadd.xlane.f32.xlu0 %v6119
        %v6151 = vpop.xlane.xlu0 %6150
        %6152 = vadd.xlane.f32.xlu0 %v6121
        %v6153 = vpop.xlane.xlu0 %6152
        %6154 = vadd.xlane.f32.xlu0 %v6123
        %v6155 = vpop.xlane.xlu0 %6154
        %6156 = vadd.xlane.f32.xlu0 %v6125
        %v6157 = vpop.xlane.xlu0 %6156
        %6158 = vadd.xlane.f32.xlu0 %v6127
        %v6159 = vpop.xlane.xlu0 %6158
        %6160 = vadd.xlane.f32.xlu0 %v6129
        %v6161 = vpop.xlane.xlu0 %6160
        %6162 = vadd.xlane.f32.xlu0 %v6131
        %v6163 = vpop.xlane.xlu0 %6162
        %6164 = vadd.xlane.f32.xlu0 %v6133
        %v6165 = vpop.xlane.xlu0 %6164
        %6166 = vadd.xlane.f32.xlu0 %v6135
        %v6167 = vpop.xlane.xlu0 %6166
        %6168 = vadd.xlane.f32.xlu0 %v6137
        %v6169 = vpop.xlane.xlu0 %6168
        %6170 = vadd.xlane.f32.xlu0 %v6139
        %v6171 = vpop.xlane.xlu0 %6170
        %6172 = vadd.xlane.f32.xlu0 %v6141
        %v6173 = vpop.xlane.xlu0 %6172
        %6174 = vadd.xlane.f32.xlu0 %v6143
        %v6175 = vpop.xlane.xlu0 %6174
        %6176 = vadd.xlane.f32.xlu0 %v6145
        %v6177 = vpop.xlane.xlu0 %6176
        %v6178 = vrcp.pop %v6147
        %v6179 = vrcp.pop %v6149
        %v6180 = vrcp.pop %v6151
        %v6181 = vrcp.pop %v6153
        %v6182 = vrcp.pop %v6155
        %v6183 = vrcp.pop %v6157
        %v6184 = vrcp.pop %v6159
        %v6185 = vrcp.pop %v6161
        %v6186 = vrcp.pop %v6163
        %v6187 = vrcp.pop %v6165
        %v6188 = vrcp.pop %v6167
        %v6189 = vrcp.pop %v6169
        %v6190 = vrcp.pop %v6171
        %v6191 = vrcp.pop %v6173
        %v6192 = vrcp.pop %v6175
        %v6193 = vrcp.pop %v6177
        %v6194 = vmul.f32 %v6115, %v6178
        %v6195 = vmul.f32 %v6117, %v6179
        %v6196 = vmul.f32 %v6119, %v6180
        %v6197 = vmul.f32 %v6121, %v6181
        %v6198 = vmul.f32 %v6123, %v6182
        %v6199 = vmul.f32 %v6125, %v6183
        %v6200 = vmul.f32 %v6127, %v6184
        %v6201 = vmul.f32 %v6129, %v6185
        %v6202 = vmul.f32 %v6131, %v6186
        %v6203 = vmul.f32 %v6133, %v6187
        %v6204 = vmul.f32 %v6135, %v6188
        %v6205 = vmul.f32 %v6137, %v6189
        %v6206 = vmul.f32 %v6139, %v6190
        %v6207 = vmul.f32 %v6141, %v6191
        %v6208 = vmul.f32 %v6143, %v6192
        %v6209 = vmul.f32 %v6145, %v6193
        %v6210 = vld [vmem:[%s689] sm:$0xff]
        %v6211 = vld [vmem:[%s689 + $0x8] sm:$0xff]
        %v6212 = vld [vmem:[%s689 + $0x10] sm:$0xff]
        %v6213 = vld [vmem:[%s689 + $0x18] sm:$0xff]
        %v6214 = vld [vmem:[%s689 + $0x20] sm:$0xff]
        %v6215 = vld [vmem:[%s689 + $0x28] sm:$0xff]
        %v6216 = vld [vmem:[%s689 + $0x30] sm:$0xff]
        %v6217 = vld [vmem:[%s689 + $0x38] sm:$0xff]
        %v6218 = vld [vmem:[%s689 + $0x40] sm:$0xff]
        %v6219 = vld [vmem:[%s689 + $0x48] sm:$0xff]
        %v6220 = vld [vmem:[%s689 + $0x50] sm:$0xff]
        %v6221 = vld [vmem:[%s689 + $0x58] sm:$0xff]
        %v6222 = vld [vmem:[%s689 + $0x60] sm:$0xff]
        %v6223 = vld [vmem:[%s689 + $0x68] sm:$0xff]
        %v6224 = vld [vmem:[%s689 + $0x70] sm:$0xff]
        %v6225 = vld [vmem:[%s689 + $0x78] sm:$0xff]
        %v6226 = vadd.f32 %v6210, %v6194
        %v6227 = vadd.f32 %v6211, %v6195
        %v6228 = vadd.f32 %v6212, %v6196
        %v6229 = vadd.f32 %v6213, %v6197
        %v6230 = vadd.f32 %v6214, %v6198
        %v6231 = vadd.f32 %v6215, %v6199
        %v6232 = vadd.f32 %v6216, %v6200
        %v6233 = vadd.f32 %v6217, %v6201
        %v6234 = vadd.f32 %v6218, %v6202
        %v6235 = vadd.f32 %v6219, %v6203
        %v6236 = vadd.f32 %v6220, %v6204
        %v6237 = vadd.f32 %v6221, %v6205
        %v6238 = vadd.f32 %v6222, %v6206
        %v6239 = vadd.f32 %v6223, %v6207
        %v6240 = vadd.f32 %v6224, %v6208
        %v6241 = vadd.f32 %v6225, %v6209
        %6242 = vst [vmem:[%s689] sm:$0xff] %v6226
        %6243 = vst [vmem:[%s689 + $0x8] sm:$0xff] %v6227
        %6244 = vst [vmem:[%s689 + $0x10] sm:$0xff] %v6228
        %6245 = vst [vmem:[%s689 + $0x18] sm:$0xff] %v6229
        %6246 = vst [vmem:[%s689 + $0x20] sm:$0xff] %v6230
        %6247 = vst [vmem:[%s689 + $0x28] sm:$0xff] %v6231
        %6248 = vst [vmem:[%s689 + $0x30] sm:$0xff] %v6232
        %6249 = vst [vmem:[%s689 + $0x38] sm:$0xff] %v6233
        %6250 = vst [vmem:[%s689 + $0x40] sm:$0xff] %v6234
        %6251 = vst [vmem:[%s689 + $0x48] sm:$0xff] %v6235
        %6252 = vst [vmem:[%s689 + $0x50] sm:$0xff] %v6236
        %6253 = vst [vmem:[%s689 + $0x58] sm:$0xff] %v6237
        %6254 = vst [vmem:[%s689 + $0x60] sm:$0xff] %v6238
        %6255 = vst [vmem:[%s689 + $0x68] sm:$0xff] %v6239
        %6256 = vst [vmem:[%s689 + $0x70] sm:$0xff] %v6240
        %6257 = vst [vmem:[%s689 + $0x78] sm:$0xff] %v6241
        %v6258 = vpack.c.bf16 %v6195, %v6194
        %v6259 = vpack.c.bf16 %v6197, %v6196
        %v6260 = vpack.c.bf16 %v6199, %v6198
        %v6261 = vpack.c.bf16 %v6201, %v6200
        %v6262 = vpack.c.bf16 %v6203, %v6202
        %v6263 = vpack.c.bf16 %v6205, %v6204
        %v6264 = vpack.c.bf16 %v6207, %v6206
        %v6265 = vpack.c.bf16 %v6209, %v6208
        %v6266 = vld [vmem:[#allocation4 + $0x8] sm:$0xff]
        %v6267 = vld [vmem:[#allocation4 + $0x18] sm:$0xff]
        %v6268 = vld [vmem:[#allocation4 + $0x28] sm:$0xff]
        %v6269 = vld [vmem:[#allocation4 + $0x38] sm:$0xff]
        %v6270 = vld [vmem:[#allocation4 + $0x48] sm:$0xff]
        %v6271 = vld [vmem:[#allocation4 + $0x58] sm:$0xff]
        %v6272 = vld [vmem:[#allocation4 + $0x68] sm:$0xff]
        %v6273 = vld [vmem:[#allocation4 + $0x78] sm:$0xff]
        %6282 = vrot.lane.b32.xlu0 %v6266, 32
        %v6283 = vpop.permute.xlu0 %6282
        %6284 = vrot.lane.b32.xlu0 %v6267, 32
        %v6285 = vpop.permute.xlu0 %6284
        %6286 = vrot.lane.b32.xlu0 %v6268, 32
        %v6287 = vpop.permute.xlu0 %6286
        %6288 = vrot.lane.b32.xlu0 %v6269, 32
        %v6289 = vpop.permute.xlu0 %6288
        %6290 = vrot.lane.b32.xlu0 %v6270, 32
        %v6291 = vpop.permute.xlu0 %6290
        %6292 = vrot.lane.b32.xlu0 %v6271, 32
        %v6293 = vpop.permute.xlu0 %6292
        %6294 = vrot.lane.b32.xlu0 %v6272, 32
        %v6295 = vpop.permute.xlu0 %6294
        %6296 = vrot.lane.b32.xlu0 %v6273, 32
        %v6297 = vpop.permute.xlu0 %6296
        %6306 = vmatprep.subr.bf16.mxu0 0
        %6307 = vmatpush1.bf16.msra.mxu0 %v6283
        %6308 = vmatprep.subr.bf16.mxu0 0
        %6309 = vmatpush1.bf16.msra.mxu0 %v6285
        %6310 = vmatprep.subr.bf16.mxu0 0
        %6311 = vmatpush1.bf16.msra.mxu0 %v6287
        %6312 = vmatprep.subr.bf16.mxu0 0
        %6313 = vmatpush1.bf16.msra.mxu0 %v6289
        %6314 = vmatprep.subr.bf16.mxu0 0
        %6315 = vmatpush1.bf16.msra.mxu0 %v6291
        %6316 = vmatprep.subr.bf16.mxu0 0
        %6317 = vmatpush1.bf16.msra.mxu0 %v6293
        %6318 = vmatprep.subr.bf16.mxu0 0
        %6319 = vmatpush1.bf16.msra.mxu0 %v6295
        %6320 = vmatprep.subr.bf16.mxu0 0
        %6321 = vmatpush1.bf16.msra.mxu0 %v6297
        %6322 = vmatprep.subr.bf16.mxu0 0
        %6323 = vmatpush1.bf16.msra.mxu0 0
        %6324 = vmatprep.subr.bf16.mxu0 0
        %6325 = vmatpush1.bf16.msra.mxu0 0
        %6326 = vmatprep.subr.bf16.mxu0 0
        %6327 = vmatpush1.bf16.msra.mxu0 0
        %6328 = vmatprep.subr.bf16.mxu0 0
        %6329 = vmatpush1.bf16.msra.mxu0 0
        %6330 = vmatprep.subr.bf16.mxu0 0
        %6331 = vmatpush1.bf16.msra.mxu0 0
        %6332 = vmatprep.subr.bf16.mxu0 0
        %6333 = vmatpush1.bf16.msra.mxu0 0
        %6334 = vmatprep.subr.bf16.mxu0 0
        %6335 = vmatpush1.bf16.msra.mxu0 0
        %6336 = vmatprep.subr.bf16.mxu0 0
        %6337 = vmatpush1.bf16.msra.mxu0 0
        %6338 = vmatprep.mubr.bf16.mxu0 0
        %6339 = vmatmul.mubr.bf16.gmra.mrb[0].mxu0 %v6258
        %v6340 = vpop.f32.mrb[0].mxu0
        %v6341 = vadd.f32 0.0, %v6340
        %v6342 = vpop.f32.mrb[0].mxu0
        %v6343 = vpop.f32.mrb[0].mxu0
        %v6344 = vadd.f32 0.0, %v6343
        %v6345 = vpop.f32.mrb[0].mxu0
        %6346 = vmatprep.mubr.bf16.mxu0 0
        %6347 = vmatmul.mubr.bf16.gmra.mrb[0].mxu0 %v6259
        %v6348 = vpop.f32.mrb[0].mxu0
        %v6349 = vadd.f32 0.0, %v6348
        %v6350 = vpop.f32.mrb[0].mxu0
        %v6351 = vpop.f32.mrb[0].mxu0
        %v6352 = vadd.f32 0.0, %v6351
        %v6353 = vpop.f32.mrb[0].mxu0
        %6354 = vmatprep.mubr.bf16.mxu0 0
        %6355 = vmatmul.mubr.bf16.gmra.mrb[0].mxu0 %v6260
        %v6356 = vpop.f32.mrb[0].mxu0
        %v6357 = vadd.f32 0.0, %v6356
        %v6358 = vpop.f32.mrb[0].mxu0
        %v6359 = vpop.f32.mrb[0].mxu0
        %v6360 = vadd.f32 0.0, %v6359
        %v6361 = vpop.f32.mrb[0].mxu0
        %6362 = vmatprep.mubr.bf16.mxu0 0
        %6363 = vmatmul.mubr.bf16.gmra.mrb[0].mxu0 %v6261
        %v6364 = vpop.f32.mrb[0].mxu0
        %v6365 = vadd.f32 0.0, %v6364
        %v6366 = vpop.f32.mrb[0].mxu0
        %v6367 = vpop.f32.mrb[0].mxu0
        %v6368 = vadd.f32 0.0, %v6367
        %v6369 = vpop.f32.mrb[0].mxu0
        %6370 = vmatprep.mubr.bf16.mxu0 0
        %6371 = vmatmul.mubr.bf16.gmra.mrb[0].mxu0 %v6262
        %v6372 = vpop.f32.mrb[0].mxu0
        %v6373 = vadd.f32 0.0, %v6372
        %v6374 = vpop.f32.mrb[0].mxu0
        %v6375 = vpop.f32.mrb[0].mxu0
        %v6376 = vadd.f32 0.0, %v6375
        %v6377 = vpop.f32.mrb[0].mxu0
        %6378 = vmatprep.mubr.bf16.mxu0 0
        %6379 = vmatmul.mubr.bf16.gmra.mrb[0].mxu0 %v6263
        %v6380 = vpop.f32.mrb[0].mxu0
        %v6381 = vadd.f32 0.0, %v6380
        %v6382 = vpop.f32.mrb[0].mxu0
        %v6383 = vpop.f32.mrb[0].mxu0
        %v6384 = vadd.f32 0.0, %v6383
        %v6385 = vpop.f32.mrb[0].mxu0
        %6386 = vmatprep.mubr.bf16.mxu0 0
        %6387 = vmatmul.mubr.bf16.gmra.mrb[0].mxu0 %v6264
        %v6388 = vpop.f32.mrb[0].mxu0
        %v6389 = vadd.f32 0.0, %v6388
        %v6390 = vpop.f32.mrb[0].mxu0
        %v6391 = vpop.f32.mrb[0].mxu0
        %v6392 = vadd.f32 0.0, %v6391
        %v6393 = vpop.f32.mrb[0].mxu0
        %6394 = vmatprep.mubr.bf16.mxu0 0
        %6395 = vmatmul.mubr.bf16.gmra.mrb[0].mxu0 %v6265
        %v6396 = vpop.f32.mrb[0].mxu0
        %v6397 = vadd.f32 0.0, %v6396
        %v6398 = vpop.f32.mrb[0].mxu0
        %v6399 = vpop.f32.mrb[0].mxu0
        %v6400 = vadd.f32 0.0, %v6399
        %v6401 = vpop.f32.mrb[0].mxu0
        %6402 = vdwg.mxu0
        %v6403 = vpack.c.bf16 %v6344, %v6341
        %v6404 = vpack.c.bf16 %v6352, %v6349
        %v6405 = vpack.c.bf16 %v6360, %v6357
        %v6406 = vpack.c.bf16 %v6368, %v6365
        %v6407 = vpack.c.bf16 %v6376, %v6373
        %v6408 = vpack.c.bf16 %v6384, %v6381
        %v6409 = vpack.c.bf16 %v6392, %v6389
        %v6410 = vpack.c.bf16 %v6400, %v6397
        %6419 = vrot.lane.b32.xlu0 %v6403, 96
        %v6420 = vpop.permute.xlu0 %6419
        %6421 = vrot.lane.b32.xlu0 %v6404, 96
        %v6422 = vpop.permute.xlu0 %6421
        %6423 = vrot.lane.b32.xlu0 %v6405, 96
        %v6424 = vpop.permute.xlu0 %6423
        %6425 = vrot.lane.b32.xlu0 %v6406, 96
        %v6426 = vpop.permute.xlu0 %6425
        %6427 = vrot.lane.b32.xlu0 %v6407, 96
        %v6428 = vpop.permute.xlu0 %6427
        %6429 = vrot.lane.b32.xlu0 %v6408, 96
        %v6430 = vpop.permute.xlu0 %6429
        %6431 = vrot.lane.b32.xlu0 %v6409, 96
        %v6432 = vpop.permute.xlu0 %6431
        %6433 = vrot.lane.b32.xlu0 %v6410, 96
        %v6434 = vpop.permute.xlu0 %6433
        %6443 = vst.msk [vmem:[#allocation5 + $0x8] sm:$0xff] %vm4178, %v6420
        %6444 = vst.msk [vmem:[#allocation5 + $0x18] sm:$0xff] %vm4178, %v6422
        %6445 = vst.msk [vmem:[#allocation5 + $0x28] sm:$0xff] %vm4178, %v6424
        %6446 = vst.msk [vmem:[#allocation5 + $0x38] sm:$0xff] %vm4178, %v6426
        %6447 = vst.msk [vmem:[#allocation5 + $0x48] sm:$0xff] %vm4178, %v6428
        %6448 = vst.msk [vmem:[#allocation5 + $0x58] sm:$0xff] %vm4178, %v6430
        %6449 = vst.msk [vmem:[#allocation5 + $0x68] sm:$0xff] %vm4178, %v6432
        %6450 = vst.msk [vmem:[#allocation5 + $0x78] sm:$0xff] %vm4178, %v6434
        %v6451 = vld [vmem:[%s689] sm:$0xff]
        %v6452 = vld [vmem:[%s689 + $0x8] sm:$0xff]
        %v6453 = vld [vmem:[%s689 + $0x10] sm:$0xff]
        %v6454 = vld [vmem:[%s689 + $0x18] sm:$0xff]
        %v6455 = vld [vmem:[%s689 + $0x20] sm:$0xff]
        %v6456 = vld [vmem:[%s689 + $0x28] sm:$0xff]
        %v6457 = vld [vmem:[%s689 + $0x30] sm:$0xff]
        %v6458 = vld [vmem:[%s689 + $0x38] sm:$0xff]
        %v6459 = vld [vmem:[%s689 + $0x40] sm:$0xff]
        %v6460 = vld [vmem:[%s689 + $0x48] sm:$0xff]
        %v6461 = vld [vmem:[%s689 + $0x50] sm:$0xff]
        %v6462 = vld [vmem:[%s689 + $0x58] sm:$0xff]
        %v6463 = vld [vmem:[%s689 + $0x60] sm:$0xff]
        %v6464 = vld [vmem:[%s689 + $0x68] sm:$0xff]
        %v6465 = vld [vmem:[%s689 + $0x70] sm:$0xff]
        %v6466 = vld [vmem:[%s689 + $0x78] sm:$0xff]
        %v6467 = vmul.f32 %v6451, 0.125
        %v6468 = vmul.f32 %v6452, 0.125
        %v6469 = vmul.f32 %v6453, 0.125
        %v6470 = vmul.f32 %v6454, 0.125
        %v6471 = vmul.f32 %v6455, 0.125
        %v6472 = vmul.f32 %v6456, 0.125
        %v6473 = vmul.f32 %v6457, 0.125
        %v6474 = vmul.f32 %v6458, 0.125
        %v6475 = vmul.f32 %v6459, 0.125
        %v6476 = vmul.f32 %v6460, 0.125
        %v6477 = vmul.f32 %v6461, 0.125
        %v6478 = vmul.f32 %v6462, 0.125
        %v6479 = vmul.f32 %v6463, 0.125
        %v6480 = vmul.f32 %v6464, 0.125
        %v6481 = vmul.f32 %v6465, 0.125
        %v6482 = vmul.f32 %v6466, 0.125
        %6483 = vst [vmem:[%s689] sm:$0xff] %v6467
        %6484 = vst [vmem:[%s689 + $0x8] sm:$0xff] %v6468
        %6485 = vst [vmem:[%s689 + $0x10] sm:$0xff] %v6469
        %6486 = vst [vmem:[%s689 + $0x18] sm:$0xff] %v6470
        %6487 = vst [vmem:[%s689 + $0x20] sm:$0xff] %v6471
        %6488 = vst [vmem:[%s689 + $0x28] sm:$0xff] %v6472
        %6489 = vst [vmem:[%s689 + $0x30] sm:$0xff] %v6473
        %6490 = vst [vmem:[%s689 + $0x38] sm:$0xff] %v6474
        %6491 = vst [vmem:[%s689 + $0x40] sm:$0xff] %v6475
        %6492 = vst [vmem:[%s689 + $0x48] sm:$0xff] %v6476
        %6493 = vst [vmem:[%s689 + $0x50] sm:$0xff] %v6477
        %6494 = vst [vmem:[%s689 + $0x58] sm:$0xff] %v6478
        %6495 = vst [vmem:[%s689 + $0x60] sm:$0xff] %v6479
        %6496 = vst [vmem:[%s689 + $0x68] sm:$0xff] %v6480
        %6497 = vst [vmem:[%s689 + $0x70] sm:$0xff] %v6481
        %6498 = vst [vmem:[%s689 + $0x78] sm:$0xff] %v6482
        %v6499 = vld [vmem:[%s671] sm:$0xff]
        %v6500 = vld [vmem:[%s671 + $0x8] sm:$0xff]
        %v6501 = vld [vmem:[%s671 + $0x10] sm:$0xff]
        %v6502 = vld [vmem:[%s671 + $0x18] sm:$0xff]
        %v6503 = vld [vmem:[%s671 + $0x20] sm:$0xff]
        %v6504 = vld [vmem:[%s671 + $0x28] sm:$0xff]
        %v6505 = vld [vmem:[%s671 + $0x30] sm:$0xff]
        %v6506 = vld [vmem:[%s671 + $0x38] sm:$0xff]
        %v6507 = vld [vmem:[%s671 + $0x40] sm:$0xff]
        %v6508 = vld [vmem:[%s671 + $0x48] sm:$0xff]
        %v6509 = vld [vmem:[%s671 + $0x50] sm:$0xff]
        %v6510 = vld [vmem:[%s671 + $0x58] sm:$0xff]
        %v6511 = vld [vmem:[%s671 + $0x60] sm:$0xff]
        %v6512 = vld [vmem:[%s671 + $0x68] sm:$0xff]
        %v6513 = vld [vmem:[%s671 + $0x70] sm:$0xff]
        %v6514 = vld [vmem:[%s671 + $0x78] sm:$0xff]
        %v6515 = vunpack.c.l.bf16 %v6499
        %v6516 = vunpack.c.h.bf16 %v6499
        %v6517 = vunpack.c.l.bf16 %v6500
        %v6518 = vunpack.c.h.bf16 %v6500
        %v6519 = vunpack.c.l.bf16 %v6501
        %v6520 = vunpack.c.h.bf16 %v6501
        %v6521 = vunpack.c.l.bf16 %v6502
        %v6522 = vunpack.c.h.bf16 %v6502
        %v6523 = vunpack.c.l.bf16 %v6503
        %v6524 = vunpack.c.h.bf16 %v6503
        %v6525 = vunpack.c.l.bf16 %v6504
        %v6526 = vunpack.c.h.bf16 %v6504
        %v6527 = vunpack.c.l.bf16 %v6505
        %v6528 = vunpack.c.h.bf16 %v6505
        %v6529 = vunpack.c.l.bf16 %v6506
        %v6530 = vunpack.c.h.bf16 %v6506
        %v6531 = vunpack.c.l.bf16 %v6507
        %v6532 = vunpack.c.h.bf16 %v6507
        %v6533 = vunpack.c.l.bf16 %v6508
        %v6534 = vunpack.c.h.bf16 %v6508
        %v6535 = vunpack.c.l.bf16 %v6509
        %v6536 = vunpack.c.h.bf16 %v6509
        %v6537 = vunpack.c.l.bf16 %v6510
        %v6538 = vunpack.c.h.bf16 %v6510
        %v6539 = vunpack.c.l.bf16 %v6511
        %v6540 = vunpack.c.h.bf16 %v6511
        %v6541 = vunpack.c.l.bf16 %v6512
        %v6542 = vunpack.c.h.bf16 %v6512
        %v6543 = vunpack.c.l.bf16 %v6513
        %v6544 = vunpack.c.h.bf16 %v6513
        %v6545 = vunpack.c.l.bf16 %v6514
        %v6546 = vunpack.c.h.bf16 %v6514
        %v6547 = vld [vmem:[#allocation5] sm:$0xff]
        %v6548 = vld [vmem:[#allocation5 + $0x8] sm:$0xff]
        %v6549 = vld [vmem:[#allocation5 + $0x10] sm:$0xff]
        %v6550 = vld [vmem:[#allocation5 + $0x18] sm:$0xff]
        %v6551 = vld [vmem:[#allocation5 + $0x20] sm:$0xff]
        %v6552 = vld [vmem:[#allocation5 + $0x28] sm:$0xff]
        %v6553 = vld [vmem:[#allocation5 + $0x30] sm:$0xff]
        %v6554 = vld [vmem:[#allocation5 + $0x38] sm:$0xff]
        %v6555 = vld [vmem:[#allocation5 + $0x40] sm:$0xff]
        %v6556 = vld [vmem:[#allocation5 + $0x48] sm:$0xff]
        %v6557 = vld [vmem:[#allocation5 + $0x50] sm:$0xff]
        %v6558 = vld [vmem:[#allocation5 + $0x58] sm:$0xff]
        %v6559 = vld [vmem:[#allocation5 + $0x60] sm:$0xff]
        %v6560 = vld [vmem:[#allocation5 + $0x68] sm:$0xff]
        %v6561 = vld [vmem:[#allocation5 + $0x70] sm:$0xff]
        %v6562 = vld [vmem:[#allocation5 + $0x78] sm:$0xff]
        %v6563 = vld [vmem:[#allocation8] sm:$0xff]
        %v6564 = vld [vmem:[#allocation8 + $0x8] sm:$0xff]
        %v6565 = vld [vmem:[#allocation8 + $0x10] sm:$0xff]
        %v6566 = vld [vmem:[#allocation8 + $0x18] sm:$0xff]
        %v6567 = vld [vmem:[#allocation8 + $0x20] sm:$0xff]
        %v6568 = vld [vmem:[#allocation8 + $0x28] sm:$0xff]
        %v6569 = vld [vmem:[#allocation8 + $0x30] sm:$0xff]
        %v6570 = vld [vmem:[#allocation8 + $0x38] sm:$0xff]
        %v6571 = vld [vmem:[#allocation8 + $0x40] sm:$0xff]
        %v6572 = vld [vmem:[#allocation8 + $0x48] sm:$0xff]
        %v6573 = vld [vmem:[#allocation8 + $0x50] sm:$0xff]
        %v6574 = vld [vmem:[#allocation8 + $0x58] sm:$0xff]
        %v6575 = vld [vmem:[#allocation8 + $0x60] sm:$0xff]
        %v6576 = vld [vmem:[#allocation8 + $0x68] sm:$0xff]
        %v6577 = vld [vmem:[#allocation8 + $0x70] sm:$0xff]
        %v6578 = vld [vmem:[#allocation8 + $0x78] sm:$0xff]
        %v6579 = vld [vmem:[#allocation8 + $0x80] sm:$0xff]
        %v6580 = vld [vmem:[#allocation8 + $0x88] sm:$0xff]
        %v6581 = vld [vmem:[#allocation8 + $0x90] sm:$0xff]
        %v6582 = vld [vmem:[#allocation8 + $0x98] sm:$0xff]
        %v6583 = vld [vmem:[#allocation8 + $0xa0] sm:$0xff]
        %v6584 = vld [vmem:[#allocation8 + $0xa8] sm:$0xff]
        %v6585 = vld [vmem:[#allocation8 + $0xb0] sm:$0xff]
        %v6586 = vld [vmem:[#allocation8 + $0xb8] sm:$0xff]
        %v6587 = vld [vmem:[#allocation8 + $0xc0] sm:$0xff]
        %v6588 = vld [vmem:[#allocation8 + $0xc8] sm:$0xff]
        %v6589 = vld [vmem:[#allocation8 + $0xd0] sm:$0xff]
        %v6590 = vld [vmem:[#allocation8 + $0xd8] sm:$0xff]
        %v6591 = vld [vmem:[#allocation8 + $0xe0] sm:$0xff]
        %v6592 = vld [vmem:[#allocation8 + $0xe8] sm:$0xff]
        %v6593 = vld [vmem:[#allocation8 + $0xf0] sm:$0xff]
        %v6594 = vld [vmem:[#allocation8 + $0xf8] sm:$0xff]
        %v6595 = vld [vmem:[#allocation10] sm:$0x3]
        %v6597 = vlaneseq
        %v6598 = vshrl.u32 %v6597, 7
        %v6599 = vsub.s32 0, %v6598
        %v6600 = vrot.slane %v6595, %v6599
        %v6601 = vlaneseq
        %v6602 = vshrl.u32 %v6601, 7
        %v6603 = vsub.s32 1, %v6602
        %v6604 = vrot.slane %v6595, %v6603
        %v6639 = vunpack.c.l.b16 %v6563
        %v6640 = vunpack.c.h.b16 %v6563
        %v6641 = vunpack.c.l.b16 %v6564
        %v6642 = vunpack.c.h.b16 %v6564
        %v6643 = vunpack.c.l.b16 %v6565
        %v6644 = vunpack.c.h.b16 %v6565
        %v6645 = vunpack.c.l.b16 %v6566
        %v6646 = vunpack.c.h.b16 %v6566
        %v6647 = vunpack.c.l.b16 %v6567
        %v6648 = vunpack.c.h.b16 %v6567
        %v6649 = vunpack.c.l.b16 %v6568
        %v6650 = vunpack.c.h.b16 %v6568
        %v6651 = vunpack.c.l.b16 %v6569
        %v6652 = vunpack.c.h.b16 %v6569
        %v6653 = vunpack.c.l.b16 %v6570
        %v6654 = vunpack.c.h.b16 %v6570
        %v6655 = vunpack.c.l.b16 %v6571
        %v6656 = vunpack.c.h.b16 %v6571
        %v6657 = vunpack.c.l.b16 %v6572
        %v6658 = vunpack.c.h.b16 %v6572
        %v6659 = vunpack.c.l.b16 %v6573
        %v6660 = vunpack.c.h.b16 %v6573
        %v6661 = vunpack.c.l.b16 %v6574
        %v6662 = vunpack.c.h.b16 %v6574
        %v6663 = vunpack.c.l.b16 %v6575
        %v6664 = vunpack.c.h.b16 %v6575
        %v6665 = vunpack.c.l.b16 %v6576
        %v6666 = vunpack.c.h.b16 %v6576
        %v6667 = vunpack.c.l.b16 %v6577
        %v6668 = vunpack.c.h.b16 %v6577
        %v6669 = vunpack.c.l.b16 %v6578
        %v6670 = vunpack.c.h.b16 %v6578
        %v6671 = vunpack.c.l.b16 %v6579
        %v6672 = vunpack.c.h.b16 %v6579
        %v6673 = vunpack.c.l.b16 %v6580
        %v6674 = vunpack.c.h.b16 %v6580
        %v6675 = vunpack.c.l.b16 %v6581
        %v6676 = vunpack.c.h.b16 %v6581
        %v6677 = vunpack.c.l.b16 %v6582
        %v6678 = vunpack.c.h.b16 %v6582
        %v6679 = vunpack.c.l.b16 %v6583
        %v6680 = vunpack.c.h.b16 %v6583
        %v6681 = vunpack.c.l.b16 %v6584
        %v6682 = vunpack.c.h.b16 %v6584
        %v6683 = vunpack.c.l.b16 %v6585
        %v6684 = vunpack.c.h.b16 %v6585
        %v6685 = vunpack.c.l.b16 %v6586
        %v6686 = vunpack.c.h.b16 %v6586
        %v6687 = vunpack.c.l.b16 %v6587
        %v6688 = vunpack.c.h.b16 %v6587
        %v6689 = vunpack.c.l.b16 %v6588
        %v6690 = vunpack.c.h.b16 %v6588
        %v6691 = vunpack.c.l.b16 %v6589
        %v6692 = vunpack.c.h.b16 %v6589
        %v6693 = vunpack.c.l.b16 %v6590
        %v6694 = vunpack.c.h.b16 %v6590
        %v6695 = vunpack.c.l.b16 %v6591
        %v6696 = vunpack.c.h.b16 %v6591
        %v6697 = vunpack.c.l.b16 %v6592
        %v6698 = vunpack.c.h.b16 %v6592
        %v6699 = vunpack.c.l.b16 %v6593
        %v6700 = vunpack.c.h.b16 %v6593
        %v6701 = vunpack.c.l.b16 %v6594
        %v6702 = vunpack.c.h.b16 %v6594
        %v6703 = vpack.c.b16 %v6641, %v6639
        %v6704 = vpack.c.b16 %v6642, %v6640
        %v6705 = vpack.c.b16 %v6645, %v6643
        %v6706 = vpack.c.b16 %v6646, %v6644
        %v6707 = vpack.c.b16 %v6649, %v6647
        %v6708 = vpack.c.b16 %v6650, %v6648
        %v6709 = vpack.c.b16 %v6653, %v6651
        %v6710 = vpack.c.b16 %v6654, %v6652
        %v6711 = vpack.c.b16 %v6657, %v6655
        %v6712 = vpack.c.b16 %v6658, %v6656
        %v6713 = vpack.c.b16 %v6661, %v6659
        %v6714 = vpack.c.b16 %v6662, %v6660
        %v6715 = vpack.c.b16 %v6665, %v6663
        %v6716 = vpack.c.b16 %v6666, %v6664
        %v6717 = vpack.c.b16 %v6669, %v6667
        %v6718 = vpack.c.b16 %v6670, %v6668
        %v6719 = vpack.c.b16 %v6673, %v6671
        %v6720 = vpack.c.b16 %v6674, %v6672
        %v6721 = vpack.c.b16 %v6677, %v6675
        %v6722 = vpack.c.b16 %v6678, %v6676
        %v6723 = vpack.c.b16 %v6681, %v6679
        %v6724 = vpack.c.b16 %v6682, %v6680
        %v6725 = vpack.c.b16 %v6685, %v6683
        %v6726 = vpack.c.b16 %v6686, %v6684
        %v6727 = vpack.c.b16 %v6689, %v6687
        %v6728 = vpack.c.b16 %v6690, %v6688
        %v6729 = vpack.c.b16 %v6693, %v6691
        %v6730 = vpack.c.b16 %v6694, %v6692
        %v6731 = vpack.c.b16 %v6697, %v6695
        %v6732 = vpack.c.b16 %v6698, %v6696
        %v6733 = vpack.c.b16 %v6701, %v6699
        %v6734 = vpack.c.b16 %v6702, %v6700
        %6767 = vmatprep.subr.bf16.mxu0 %v6704
        %6768 = vmatpush1.bf16.msra.mxu0 %v6703
        %6769 = vmatprep.subr.bf16.mxu0 %v6706
        %6770 = vmatpush1.bf16.msra.mxu0 %v6705
        %6771 = vmatprep.subr.bf16.mxu0 %v6708
        %6772 = vmatpush1.bf16.msra.mxu0 %v6707
        %6773 = vmatprep.subr.bf16.mxu0 %v6710
        %6774 = vmatpush1.bf16.msra.mxu0 %v6709
        %6775 = vmatprep.subr.bf16.mxu0 %v6712
        %6776 = vmatpush1.bf16.msra.mxu0 %v6711
        %6777 = vmatprep.subr.bf16.mxu0 %v6714
        %6778 = vmatpush1.bf16.msra.mxu0 %v6713
        %6779 = vmatprep.subr.bf16.mxu0 %v6716
        %6780 = vmatpush1.bf16.msra.mxu0 %v6715
        %6781 = vmatprep.subr.bf16.mxu0 %v6718
        %6782 = vmatpush1.bf16.msra.mxu0 %v6717
        %6783 = vmatprep.subr.bf16.mxu0 %v6720
        %6784 = vmatpush1.bf16.msra.mxu0 %v6719
        %6785 = vmatprep.subr.bf16.mxu0 %v6722
        %6786 = vmatpush1.bf16.msra.mxu0 %v6721
        %6787 = vmatprep.subr.bf16.mxu0 %v6724
        %6788 = vmatpush1.bf16.msra.mxu0 %v6723
        %6789 = vmatprep.subr.bf16.mxu0 %v6726
        %6790 = vmatpush1.bf16.msra.mxu0 %v6725
        %6791 = vmatprep.subr.bf16.mxu0 %v6728
        %6792 = vmatpush1.bf16.msra.mxu0 %v6727
        %6793 = vmatprep.subr.bf16.mxu0 %v6730
        %6794 = vmatpush1.bf16.msra.mxu0 %v6729
        %6795 = vmatprep.subr.bf16.mxu0 %v6732
        %6796 = vmatpush1.bf16.msra.mxu0 %v6731
        %6797 = vmatprep.subr.bf16.mxu0 %v6734
        %6798 = vmatpush1.bf16.msra.mxu0 %v6733
        %6799 = vmatprep.mubr.bf16.mxu0 %v6548
        %6800 = vmatmul.mubr.bf16.gmra.mrb[0].mxu0 %v6547
        %v6801 = vpop.f32.mrb[0].mxu0
        %v6802 = vadd.f32 %v6600, %v6801
        %v6803 = vpop.f32.mrb[0].mxu0
        %v6804 = vadd.f32 %v6604, %v6803
        %v6805 = vpop.f32.mrb[0].mxu0
        %v6806 = vadd.f32 %v6600, %v6805
        %v6807 = vpop.f32.mrb[0].mxu0
        %v6808 = vadd.f32 %v6604, %v6807
        %6809 = vmatprep.mubr.bf16.mxu0 %v6550
        %6810 = vmatmul.mubr.bf16.gmra.mrb[0].mxu0 %v6549
        %v6811 = vpop.f32.mrb[0].mxu0
        %v6812 = vadd.f32 %v6600, %v6811
        %v6813 = vpop.f32.mrb[0].mxu0
        %v6814 = vadd.f32 %v6604, %v6813
        %v6815 = vpop.f32.mrb[0].mxu0
        %v6816 = vadd.f32 %v6600, %v6815
        %v6817 = vpop.f32.mrb[0].mxu0
        %v6818 = vadd.f32 %v6604, %v6817
        %6819 = vmatprep.mubr.bf16.mxu0 %v6552
        %6820 = vmatmul.mubr.bf16.gmra.mrb[0].mxu0 %v6551
        %v6821 = vpop.f32.mrb[0].mxu0
        %v6822 = vadd.f32 %v6600, %v6821
        %v6823 = vpop.f32.mrb[0].mxu0
        %v6824 = vadd.f32 %v6604, %v6823
        %v6825 = vpop.f32.mrb[0].mxu0
        %v6826 = vadd.f32 %v6600, %v6825
        %v6827 = vpop.f32.mrb[0].mxu0
        %v6828 = vadd.f32 %v6604, %v6827
        %6829 = vmatprep.mubr.bf16.mxu0 %v6554
        %6830 = vmatmul.mubr.bf16.gmra.mrb[0].mxu0 %v6553
        %v6831 = vpop.f32.mrb[0].mxu0
        %v6832 = vadd.f32 %v6600, %v6831
        %v6833 = vpop.f32.mrb[0].mxu0
        %v6834 = vadd.f32 %v6604, %v6833
        %v6835 = vpop.f32.mrb[0].mxu0
        %v6836 = vadd.f32 %v6600, %v6835
        %v6837 = vpop.f32.mrb[0].mxu0
        %v6838 = vadd.f32 %v6604, %v6837
        %6839 = vmatprep.mubr.bf16.mxu0 %v6556
        %6840 = vmatmul.mubr.bf16.gmra.mrb[0].mxu0 %v6555
        %v6841 = vpop.f32.mrb[0].mxu0
        %v6842 = vadd.f32 %v6600, %v6841
        %v6843 = vpop.f32.mrb[0].mxu0
        %v6844 = vadd.f32 %v6604, %v6843
        %v6845 = vpop.f32.mrb[0].mxu0
        %v6846 = vadd.f32 %v6600, %v6845
        %v6847 = vpop.f32.mrb[0].mxu0
        %v6848 = vadd.f32 %v6604, %v6847
        %6849 = vmatprep.mubr.bf16.mxu0 %v6558
        %6850 = vmatmul.mubr.bf16.gmra.mrb[0].mxu0 %v6557
        %v6851 = vpop.f32.mrb[0].mxu0
        %v6852 = vadd.f32 %v6600, %v6851
        %v6853 = vpop.f32.mrb[0].mxu0
        %v6854 = vadd.f32 %v6604, %v6853
        %v6855 = vpop.f32.mrb[0].mxu0
        %v6856 = vadd.f32 %v6600, %v6855
        %v6857 = vpop.f32.mrb[0].mxu0
        %v6858 = vadd.f32 %v6604, %v6857
        %6859 = vmatprep.mubr.bf16.mxu0 %v6560
        %6860 = vmatmul.mubr.bf16.gmra.mrb[0].mxu0 %v6559
        %v6861 = vpop.f32.mrb[0].mxu0
        %v6862 = vadd.f32 %v6600, %v6861
        %v6863 = vpop.f32.mrb[0].mxu0
        %v6864 = vadd.f32 %v6604, %v6863
        %v6865 = vpop.f32.mrb[0].mxu0
        %v6866 = vadd.f32 %v6600, %v6865
        %v6867 = vpop.f32.mrb[0].mxu0
        %v6868 = vadd.f32 %v6604, %v6867
        %6869 = vmatprep.mubr.bf16.mxu0 %v6562
        %6870 = vmatmul.mubr.bf16.gmra.mrb[0].mxu0 %v6561
        %v6871 = vpop.f32.mrb[0].mxu0
        %v6872 = vadd.f32 %v6600, %v6871
        %v6873 = vpop.f32.mrb[0].mxu0
        %v6874 = vadd.f32 %v6604, %v6873
        %v6875 = vpop.f32.mrb[0].mxu0
        %v6876 = vadd.f32 %v6600, %v6875
        %v6877 = vpop.f32.mrb[0].mxu0
        %v6878 = vadd.f32 %v6604, %v6877
        %6879 = vdwg.mxu0
        %v6880 = vadd.f32 %v6515, %v6802
        %v6881 = vadd.f32 %v6516, %v6804
        %v6882 = vadd.f32 %v6517, %v6806
        %v6883 = vadd.f32 %v6518, %v6808
        %v6884 = vadd.f32 %v6519, %v6812
        %v6885 = vadd.f32 %v6520, %v6814
        %v6886 = vadd.f32 %v6521, %v6816
        %v6887 = vadd.f32 %v6522, %v6818
        %v6888 = vadd.f32 %v6523, %v6822
        %v6889 = vadd.f32 %v6524, %v6824
        %v6890 = vadd.f32 %v6525, %v6826
        %v6891 = vadd.f32 %v6526, %v6828
        %v6892 = vadd.f32 %v6527, %v6832
        %v6893 = vadd.f32 %v6528, %v6834
        %v6894 = vadd.f32 %v6529, %v6836
        %v6895 = vadd.f32 %v6530, %v6838
        %v6896 = vadd.f32 %v6531, %v6842
        %v6897 = vadd.f32 %v6532, %v6844
        %v6898 = vadd.f32 %v6533, %v6846
        %v6899 = vadd.f32 %v6534, %v6848
        %v6900 = vadd.f32 %v6535, %v6852
        %v6901 = vadd.f32 %v6536, %v6854
        %v6902 = vadd.f32 %v6537, %v6856
        %v6903 = vadd.f32 %v6538, %v6858
        %v6904 = vadd.f32 %v6539, %v6862
        %v6905 = vadd.f32 %v6540, %v6864
        %v6906 = vadd.f32 %v6541, %v6866
        %v6907 = vadd.f32 %v6542, %v6868
        %v6908 = vadd.f32 %v6543, %v6872
        %v6909 = vadd.f32 %v6544, %v6874
        %v6910 = vadd.f32 %v6545, %v6876
        %v6911 = vadd.f32 %v6546, %v6878
        %v6912 = vld [vmem:[%s9] sm:$0x3]
        %v6913 = vld [vmem:[%s10] sm:$0x3]
        %v6914 = vadd.f32 %v6880, %v6881
        %6915 = vadd.xlane.f32.xlu0 %v6914
        %v6916 = vpop.xlane.xlu0 %6915
        %v6917 = vadd.f32 %v6882, %v6883
        %6918 = vadd.xlane.f32.xlu0 %v6917
        %v6919 = vpop.xlane.xlu0 %6918
        %v6920 = vadd.f32 %v6884, %v6885
        %6921 = vadd.xlane.f32.xlu0 %v6920
        %v6922 = vpop.xlane.xlu0 %6921
        %v6923 = vadd.f32 %v6886, %v6887
        %6924 = vadd.xlane.f32.xlu0 %v6923
        %v6925 = vpop.xlane.xlu0 %6924
        %v6926 = vadd.f32 %v6888, %v6889
        %6927 = vadd.xlane.f32.xlu0 %v6926
        %v6928 = vpop.xlane.xlu0 %6927
        %v6929 = vadd.f32 %v6890, %v6891
        %6930 = vadd.xlane.f32.xlu0 %v6929
        %v6931 = vpop.xlane.xlu0 %6930
        %v6932 = vadd.f32 %v6892, %v6893
        %6933 = vadd.xlane.f32.xlu0 %v6932
        %v6934 = vpop.xlane.xlu0 %6933
        %v6935 = vadd.f32 %v6894, %v6895
        %6936 = vadd.xlane.f32.xlu0 %v6935
        %v6937 = vpop.xlane.xlu0 %6936
        %v6938 = vadd.f32 %v6896, %v6897
        %6939 = vadd.xlane.f32.xlu0 %v6938
        %v6940 = vpop.xlane.xlu0 %6939
        %v6941 = vadd.f32 %v6898, %v6899
        %6942 = vadd.xlane.f32.xlu0 %v6941
        %v6943 = vpop.xlane.xlu0 %6942
        %v6944 = vadd.f32 %v6900, %v6901
        %6945 = vadd.xlane.f32.xlu0 %v6944
        %v6946 = vpop.xlane.xlu0 %6945
        %v6947 = vadd.f32 %v6902, %v6903
        %6948 = vadd.xlane.f32.xlu0 %v6947
        %v6949 = vpop.xlane.xlu0 %6948
        %v6950 = vadd.f32 %v6904, %v6905
        %6951 = vadd.xlane.f32.xlu0 %v6950
        %v6952 = vpop.xlane.xlu0 %6951
        %v6953 = vadd.f32 %v6906, %v6907
        %6954 = vadd.xlane.f32.xlu0 %v6953
        %v6955 = vpop.xlane.xlu0 %6954
        %v6956 = vadd.f32 %v6908, %v6909
        %6957 = vadd.xlane.f32.xlu0 %v6956
        %v6958 = vpop.xlane.xlu0 %6957
        %v6959 = vadd.f32 %v6910, %v6911
        %6960 = vadd.xlane.f32.xlu0 %v6959
        %v6961 = vpop.xlane.xlu0 %6960
        %v6962 = vrcp.pop 256.0
        %v6963 = vmul.f32 %v6916, %v6962
        %v6964 = vmul.f32 %v6919, %v6962
        %v6965 = vmul.f32 %v6922, %v6962
        %v6966 = vmul.f32 %v6925, %v6962
        %v6967 = vmul.f32 %v6928, %v6962
        %v6968 = vmul.f32 %v6931, %v6962
        %v6969 = vmul.f32 %v6934, %v6962
        %v6970 = vmul.f32 %v6937, %v6962
        %v6971 = vmul.f32 %v6940, %v6962
        %v6972 = vmul.f32 %v6943, %v6962
        %v6973 = vmul.f32 %v6946, %v6962
        %v6974 = vmul.f32 %v6949, %v6962
        %v6975 = vmul.f32 %v6952, %v6962
        %v6976 = vmul.f32 %v6955, %v6962
        %v6977 = vmul.f32 %v6958, %v6962
        %v6978 = vmul.f32 %v6961, %v6962
        %v6979 = vsub.f32 %v6880, %v6963
        %v6980 = vsub.f32 %v6881, %v6963
        %v6981 = vsub.f32 %v6882, %v6964
        %v6982 = vsub.f32 %v6883, %v6964
        %v6983 = vsub.f32 %v6884, %v6965
        %v6984 = vsub.f32 %v6885, %v6965
        %v6985 = vsub.f32 %v6886, %v6966
        %v6986 = vsub.f32 %v6887, %v6966
        %v6987 = vsub.f32 %v6888, %v6967
        %v6988 = vsub.f32 %v6889, %v6967
        %v6989 = vsub.f32 %v6890, %v6968
        %v6990 = vsub.f32 %v6891, %v6968
        %v6991 = vsub.f32 %v6892, %v6969
        %v6992 = vsub.f32 %v6893, %v6969
        %v6993 = vsub.f32 %v6894, %v6970
        %v6994 = vsub.f32 %v6895, %v6970
        %v6995 = vsub.f32 %v6896, %v6971
        %v6996 = vsub.f32 %v6897, %v6971
        %v6997 = vsub.f32 %v6898, %v6972
        %v6998 = vsub.f32 %v6899, %v6972
        %v6999 = vsub.f32 %v6900, %v6973
        %v7000 = vsub.f32 %v6901, %v6973
        %v7001 = vsub.f32 %v6902, %v6974
        %v7002 = vsub.f32 %v6903, %v6974
        %v7003 = vsub.f32 %v6904, %v6975
        %v7004 = vsub.f32 %v6905, %v6975
        %v7005 = vsub.f32 %v6906, %v6976
        %v7006 = vsub.f32 %v6907, %v6976
        %v7007 = vsub.f32 %v6908, %v6977
        %v7008 = vsub.f32 %v6909, %v6977
        %v7009 = vsub.f32 %v6910, %v6978
        %v7010 = vsub.f32 %v6911, %v6978
        %v7011 = vmul.f32 %v6979, %v6979
        %v7012 = vmul.f32 %v6980, %v6980
        %v7013 = vmul.f32 %v6981, %v6981
        %v7014 = vmul.f32 %v6982, %v6982
        %v7015 = vmul.f32 %v6983, %v6983
        %v7016 = vmul.f32 %v6984, %v6984
        %v7017 = vmul.f32 %v6985, %v6985
        %v7018 = vmul.f32 %v6986, %v6986
        %v7019 = vmul.f32 %v6987, %v6987
        %v7020 = vmul.f32 %v6988, %v6988
        %v7021 = vmul.f32 %v6989, %v6989
        %v7022 = vmul.f32 %v6990, %v6990
        %v7023 = vmul.f32 %v6991, %v6991
        %v7024 = vmul.f32 %v6992, %v6992
        %v7025 = vmul.f32 %v6993, %v6993
        %v7026 = vmul.f32 %v6994, %v6994
        %v7027 = vmul.f32 %v6995, %v6995
        %v7028 = vmul.f32 %v6996, %v6996
        %v7029 = vmul.f32 %v6997, %v6997
        %v7030 = vmul.f32 %v6998, %v6998
        %v7031 = vmul.f32 %v6999, %v6999
        %v7032 = vmul.f32 %v7000, %v7000
        %v7033 = vmul.f32 %v7001, %v7001
        %v7034 = vmul.f32 %v7002, %v7002
        %v7035 = vmul.f32 %v7003, %v7003
        %v7036 = vmul.f32 %v7004, %v7004
        %v7037 = vmul.f32 %v7005, %v7005
        %v7038 = vmul.f32 %v7006, %v7006
        %v7039 = vmul.f32 %v7007, %v7007
        %v7040 = vmul.f32 %v7008, %v7008
        %v7041 = vmul.f32 %v7009, %v7009
        %v7042 = vmul.f32 %v7010, %v7010
        %v7043 = vadd.f32 %v7011, %v7012
        %7044 = vadd.xlane.f32.xlu0 %v7043
        %v7045 = vpop.xlane.xlu0 %7044
        %v7046 = vadd.f32 %v7013, %v7014
        %7047 = vadd.xlane.f32.xlu0 %v7046
        %v7048 = vpop.xlane.xlu0 %7047
        %v7049 = vadd.f32 %v7015, %v7016
        %7050 = vadd.xlane.f32.xlu0 %v7049
        %v7051 = vpop.xlane.xlu0 %7050
        %v7052 = vadd.f32 %v7017, %v7018
        %7053 = vadd.xlane.f32.xlu0 %v7052
        %v7054 = vpop.xlane.xlu0 %7053
        %v7055 = vadd.f32 %v7019, %v7020
        %7056 = vadd.xlane.f32.xlu0 %v7055
        %v7057 = vpop.xlane.xlu0 %7056
        %v7058 = vadd.f32 %v7021, %v7022
        %7059 = vadd.xlane.f32.xlu0 %v7058
        %v7060 = vpop.xlane.xlu0 %7059
        %v7061 = vadd.f32 %v7023, %v7024
        %7062 = vadd.xlane.f32.xlu0 %v7061
        %v7063 = vpop.xlane.xlu0 %7062
        %v7064 = vadd.f32 %v7025, %v7026
        %7065 = vadd.xlane.f32.xlu0 %v7064
        %v7066 = vpop.xlane.xlu0 %7065
        %v7067 = vadd.f32 %v7027, %v7028
        %7068 = vadd.xlane.f32.xlu0 %v7067
        %v7069 = vpop.xlane.xlu0 %7068
        %v7070 = vadd.f32 %v7029, %v7030
        %7071 = vadd.xlane.f32.xlu0 %v7070
        %v7072 = vpop.xlane.xlu0 %7071
        %v7073 = vadd.f32 %v7031, %v7032
        %7074 = vadd.xlane.f32.xlu0 %v7073
        %v7075 = vpop.xlane.xlu0 %7074
        %v7076 = vadd.f32 %v7033, %v7034
        %7077 = vadd.xlane.f32.xlu0 %v7076
        %v7078 = vpop.xlane.xlu0 %7077
        %v7079 = vadd.f32 %v7035, %v7036
        %7080 = vadd.xlane.f32.xlu0 %v7079
        %v7081 = vpop.xlane.xlu0 %7080
        %v7082 = vadd.f32 %v7037, %v7038
        %7083 = vadd.xlane.f32.xlu0 %v7082
        %v7084 = vpop.xlane.xlu0 %7083
        %v7085 = vadd.f32 %v7039, %v7040
        %7086 = vadd.xlane.f32.xlu0 %v7085
        %v7087 = vpop.xlane.xlu0 %7086
        %v7088 = vadd.f32 %v7041, %v7042
        %7089 = vadd.xlane.f32.xlu0 %v7088
        %v7090 = vpop.xlane.xlu0 %7089
        %v7091 = vmul.f32 %v7045, %v6962
        %v7092 = vmul.f32 %v7048, %v6962
        %v7093 = vmul.f32 %v7051, %v6962
        %v7094 = vmul.f32 %v7054, %v6962
        %v7095 = vmul.f32 %v7057, %v6962
        %v7096 = vmul.f32 %v7060, %v6962
        %v7097 = vmul.f32 %v7063, %v6962
        %v7098 = vmul.f32 %v7066, %v6962
        %v7099 = vmul.f32 %v7069, %v6962
        %v7100 = vmul.f32 %v7072, %v6962
        %v7101 = vmul.f32 %v7075, %v6962
        %v7102 = vmul.f32 %v7078, %v6962
        %v7103 = vmul.f32 %v7081, %v6962
        %v7104 = vmul.f32 %v7084, %v6962
        %v7105 = vmul.f32 %v7087, %v6962
        %v7106 = vmul.f32 %v7090, %v6962
        %v7107 = vadd.f32 %v7091, 1e-05
        %v7108 = vadd.f32 %v7092, 1e-05
        %v7109 = vadd.f32 %v7093, 1e-05
        %v7110 = vadd.f32 %v7094, 1e-05
        %v7111 = vadd.f32 %v7095, 1e-05
        %v7112 = vadd.f32 %v7096, 1e-05
        %v7113 = vadd.f32 %v7097, 1e-05
        %v7114 = vadd.f32 %v7098, 1e-05
        %v7115 = vadd.f32 %v7099, 1e-05
        %v7116 = vadd.f32 %v7100, 1e-05
        %v7117 = vadd.f32 %v7101, 1e-05
        %v7118 = vadd.f32 %v7102, 1e-05
        %v7119 = vadd.f32 %v7103, 1e-05
        %v7120 = vadd.f32 %v7104, 1e-05
        %v7121 = vadd.f32 %v7105, 1e-05
        %v7122 = vadd.f32 %v7106, 1e-05
        %v7123 = vrsqrt.pop %v7107
        %v7124 = vrsqrt.pop %v7108
        %v7125 = vrsqrt.pop %v7109
        %v7126 = vrsqrt.pop %v7110
        %v7127 = vrsqrt.pop %v7111
        %v7128 = vrsqrt.pop %v7112
        %v7129 = vrsqrt.pop %v7113
        %v7130 = vrsqrt.pop %v7114
        %v7131 = vrsqrt.pop %v7115
        %v7132 = vrsqrt.pop %v7116
        %v7133 = vrsqrt.pop %v7117
        %v7134 = vrsqrt.pop %v7118
        %v7135 = vrsqrt.pop %v7119
        %v7136 = vrsqrt.pop %v7120
        %v7137 = vrsqrt.pop %v7121
        %v7138 = vrsqrt.pop %v7122
        %v7139 = vmul.f32 %v6979, %v7123
        %v7140 = vmul.f32 %v6980, %v7123
        %v7141 = vmul.f32 %v6981, %v7124
        %v7142 = vmul.f32 %v6982, %v7124
        %v7143 = vmul.f32 %v6983, %v7125
        %v7144 = vmul.f32 %v6984, %v7125
        %v7145 = vmul.f32 %v6985, %v7126
        %v7146 = vmul.f32 %v6986, %v7126
        %v7147 = vmul.f32 %v6987, %v7127
        %v7148 = vmul.f32 %v6988, %v7127
        %v7149 = vmul.f32 %v6989, %v7128
        %v7150 = vmul.f32 %v6990, %v7128
        %v7151 = vmul.f32 %v6991, %v7129
        %v7152 = vmul.f32 %v6992, %v7129
        %v7153 = vmul.f32 %v6993, %v7130
        %v7154 = vmul.f32 %v6994, %v7130
        %v7155 = vmul.f32 %v6995, %v7131
        %v7156 = vmul.f32 %v6996, %v7131
        %v7157 = vmul.f32 %v6997, %v7132
        %v7158 = vmul.f32 %v6998, %v7132
        %v7159 = vmul.f32 %v6999, %v7133
        %v7160 = vmul.f32 %v7000, %v7133
        %v7161 = vmul.f32 %v7001, %v7134
        %v7162 = vmul.f32 %v7002, %v7134
        %v7163 = vmul.f32 %v7003, %v7135
        %v7164 = vmul.f32 %v7004, %v7135
        %v7165 = vmul.f32 %v7005, %v7136
        %v7166 = vmul.f32 %v7006, %v7136
        %v7167 = vmul.f32 %v7007, %v7137
        %v7168 = vmul.f32 %v7008, %v7137
        %v7169 = vmul.f32 %v7009, %v7138
        %v7170 = vmul.f32 %v7010, %v7138
        %v7172 = vlaneseq
        %v7173 = vshrl.u32 %v7172, 7
        %v7174 = vsub.s32 0, %v7173
        %v7175 = vrot.slane %v6912, %v7174
        %v7176 = vlaneseq
        %v7177 = vshrl.u32 %v7176, 7
        %v7178 = vsub.s32 1, %v7177
        %v7179 = vrot.slane %v6912, %v7178
        %v7182 = vmul.f32 %v7139, %v7175
        %v7183 = vmul.f32 %v7140, %v7179
        %v7184 = vmul.f32 %v7141, %v7175
        %v7185 = vmul.f32 %v7142, %v7179
        %v7186 = vmul.f32 %v7143, %v7175
        %v7187 = vmul.f32 %v7144, %v7179
        %v7188 = vmul.f32 %v7145, %v7175
        %v7189 = vmul.f32 %v7146, %v7179
        %v7190 = vmul.f32 %v7147, %v7175
        %v7191 = vmul.f32 %v7148, %v7179
        %v7192 = vmul.f32 %v7149, %v7175
        %v7193 = vmul.f32 %v7150, %v7179
        %v7194 = vmul.f32 %v7151, %v7175
        %v7195 = vmul.f32 %v7152, %v7179
        %v7196 = vmul.f32 %v7153, %v7175
        %v7197 = vmul.f32 %v7154, %v7179
        %v7198 = vmul.f32 %v7155, %v7175
        %v7199 = vmul.f32 %v7156, %v7179
        %v7200 = vmul.f32 %v7157, %v7175
        %v7201 = vmul.f32 %v7158, %v7179
        %v7202 = vmul.f32 %v7159, %v7175
        %v7203 = vmul.f32 %v7160, %v7179
        %v7204 = vmul.f32 %v7161, %v7175
        %v7205 = vmul.f32 %v7162, %v7179
        %v7206 = vmul.f32 %v7163, %v7175
        %v7207 = vmul.f32 %v7164, %v7179
        %v7208 = vmul.f32 %v7165, %v7175
        %v7209 = vmul.f32 %v7166, %v7179
        %v7210 = vmul.f32 %v7167, %v7175
        %v7211 = vmul.f32 %v7168, %v7179
        %v7212 = vmul.f32 %v7169, %v7175
        %v7213 = vmul.f32 %v7170, %v7179
        %v7215 = vlaneseq
        %v7216 = vshrl.u32 %v7215, 7
        %v7217 = vsub.s32 0, %v7216
        %v7218 = vrot.slane %v6913, %v7217
        %v7219 = vlaneseq
        %v7220 = vshrl.u32 %v7219, 7
        %v7221 = vsub.s32 1, %v7220
        %v7222 = vrot.slane %v6913, %v7221
        %v7225 = vadd.f32 %v7182, %v7218
        %v7226 = vadd.f32 %v7183, %v7222
        %v7227 = vadd.f32 %v7184, %v7218
        %v7228 = vadd.f32 %v7185, %v7222
        %v7229 = vadd.f32 %v7186, %v7218
        %v7230 = vadd.f32 %v7187, %v7222
        %v7231 = vadd.f32 %v7188, %v7218
        %v7232 = vadd.f32 %v7189, %v7222
        %v7233 = vadd.f32 %v7190, %v7218
        %v7234 = vadd.f32 %v7191, %v7222
        %v7235 = vadd.f32 %v7192, %v7218
        %v7236 = vadd.f32 %v7193, %v7222
        %v7237 = vadd.f32 %v7194, %v7218
        %v7238 = vadd.f32 %v7195, %v7222
        %v7239 = vadd.f32 %v7196, %v7218
        %v7240 = vadd.f32 %v7197, %v7222
        %v7241 = vadd.f32 %v7198, %v7218
        %v7242 = vadd.f32 %v7199, %v7222
        %v7243 = vadd.f32 %v7200, %v7218
        %v7244 = vadd.f32 %v7201, %v7222
        %v7245 = vadd.f32 %v7202, %v7218
        %v7246 = vadd.f32 %v7203, %v7222
        %v7247 = vadd.f32 %v7204, %v7218
        %v7248 = vadd.f32 %v7205, %v7222
        %v7249 = vadd.f32 %v7206, %v7218
        %v7250 = vadd.f32 %v7207, %v7222
        %v7251 = vadd.f32 %v7208, %v7218
        %v7252 = vadd.f32 %v7209, %v7222
        %v7253 = vadd.f32 %v7210, %v7218
        %v7254 = vadd.f32 %v7211, %v7222
        %v7255 = vadd.f32 %v7212, %v7218
        %v7256 = vadd.f32 %v7213, %v7222
        %v7257 = vpack.c.bf16 %v7227, %v7225
        %v7258 = vpack.c.bf16 %v7228, %v7226
        %v7259 = vpack.c.bf16 %v7231, %v7229
        %v7260 = vpack.c.bf16 %v7232, %v7230
        %v7261 = vpack.c.bf16 %v7235, %v7233
        %v7262 = vpack.c.bf16 %v7236, %v7234
        %v7263 = vpack.c.bf16 %v7239, %v7237
        %v7264 = vpack.c.bf16 %v7240, %v7238
        %v7265 = vpack.c.bf16 %v7243, %v7241
        %v7266 = vpack.c.bf16 %v7244, %v7242
        %v7267 = vpack.c.bf16 %v7247, %v7245
        %v7268 = vpack.c.bf16 %v7248, %v7246
        %v7269 = vpack.c.bf16 %v7251, %v7249
        %v7270 = vpack.c.bf16 %v7252, %v7250
        %v7271 = vpack.c.bf16 %v7255, %v7253
        %v7272 = vpack.c.bf16 %v7256, %v7254
        %v7273 = vld [vmem:[%s11] sm:$0xff]
        %v7274 = vld [vmem:[%s11 + $0x8] sm:$0xff]
        %v7275 = vld [vmem:[%s11 + $0x10] sm:$0xff]
        %v7276 = vld [vmem:[%s11 + $0x18] sm:$0xff]
        %v7277 = vld [vmem:[%s11 + $0x20] sm:$0xff]
        %v7278 = vld [vmem:[%s11 + $0x28] sm:$0xff]
        %v7279 = vld [vmem:[%s11 + $0x30] sm:$0xff]
        %v7280 = vld [vmem:[%s11 + $0x38] sm:$0xff]
        %v7281 = vld [vmem:[%s11 + $0x40] sm:$0xff]
        %v7282 = vld [vmem:[%s11 + $0x48] sm:$0xff]
        %v7283 = vld [vmem:[%s11 + $0x50] sm:$0xff]
        %v7284 = vld [vmem:[%s11 + $0x58] sm:$0xff]
        %v7285 = vld [vmem:[%s11 + $0x60] sm:$0xff]
        %v7286 = vld [vmem:[%s11 + $0x68] sm:$0xff]
        %v7287 = vld [vmem:[%s11 + $0x70] sm:$0xff]
        %v7288 = vld [vmem:[%s11 + $0x78] sm:$0xff]
        %v7289 = vld [vmem:[%s11 + $0x80] sm:$0xff]
        %v7290 = vld [vmem:[%s11 + $0x88] sm:$0xff]
        %v7291 = vld [vmem:[%s11 + $0x90] sm:$0xff]
        %v7292 = vld [vmem:[%s11 + $0x98] sm:$0xff]
        %v7293 = vld [vmem:[%s11 + $0xa0] sm:$0xff]
        %v7294 = vld [vmem:[%s11 + $0xa8] sm:$0xff]
        %v7295 = vld [vmem:[%s11 + $0xb0] sm:$0xff]
        %v7296 = vld [vmem:[%s11 + $0xb8] sm:$0xff]
        %v7297 = vld [vmem:[%s11 + $0xc0] sm:$0xff]
        %v7298 = vld [vmem:[%s11 + $0xc8] sm:$0xff]
        %v7299 = vld [vmem:[%s11 + $0xd0] sm:$0xff]
        %v7300 = vld [vmem:[%s11 + $0xd8] sm:$0xff]
        %v7301 = vld [vmem:[%s11 + $0xe0] sm:$0xff]
        %v7302 = vld [vmem:[%s11 + $0xe8] sm:$0xff]
        %v7303 = vld [vmem:[%s11 + $0xf0] sm:$0xff]
        %v7304 = vld [vmem:[%s11 + $0xf8] sm:$0xff]
        %v7305 = vld [vmem:[%s11 + $0x100] sm:$0xff]
        %v7306 = vld [vmem:[%s11 + $0x108] sm:$0xff]
        %v7307 = vld [vmem:[%s11 + $0x110] sm:$0xff]
        %v7308 = vld [vmem:[%s11 + $0x118] sm:$0xff]
        %v7309 = vld [vmem:[%s11 + $0x120] sm:$0xff]
        %v7310 = vld [vmem:[%s11 + $0x128] sm:$0xff]
        %v7311 = vld [vmem:[%s11 + $0x130] sm:$0xff]
        %v7312 = vld [vmem:[%s11 + $0x138] sm:$0xff]
        %v7313 = vld [vmem:[%s11 + $0x140] sm:$0xff]
        %v7314 = vld [vmem:[%s11 + $0x148] sm:$0xff]
        %v7315 = vld [vmem:[%s11 + $0x150] sm:$0xff]
        %v7316 = vld [vmem:[%s11 + $0x158] sm:$0xff]
        %v7317 = vld [vmem:[%s11 + $0x160] sm:$0xff]
        %v7318 = vld [vmem:[%s11 + $0x168] sm:$0xff]
        %v7319 = vld [vmem:[%s11 + $0x170] sm:$0xff]
        %v7320 = vld [vmem:[%s11 + $0x178] sm:$0xff]
        %v7321 = vld [vmem:[%s11 + $0x180] sm:$0xff]
        %v7322 = vld [vmem:[%s11 + $0x188] sm:$0xff]
        %v7323 = vld [vmem:[%s11 + $0x190] sm:$0xff]
        %v7324 = vld [vmem:[%s11 + $0x198] sm:$0xff]
        %v7325 = vld [vmem:[%s11 + $0x1a0] sm:$0xff]
        %v7326 = vld [vmem:[%s11 + $0x1a8] sm:$0xff]
        %v7327 = vld [vmem:[%s11 + $0x1b0] sm:$0xff]
        %v7328 = vld [vmem:[%s11 + $0x1b8] sm:$0xff]
        %v7329 = vld [vmem:[%s11 + $0x1c0] sm:$0xff]
        %v7330 = vld [vmem:[%s11 + $0x1c8] sm:$0xff]
        %v7331 = vld [vmem:[%s11 + $0x1d0] sm:$0xff]
        %v7332 = vld [vmem:[%s11 + $0x1d8] sm:$0xff]
        %v7333 = vld [vmem:[%s11 + $0x1e0] sm:$0xff]
        %v7334 = vld [vmem:[%s11 + $0x1e8] sm:$0xff]
        %v7335 = vld [vmem:[%s11 + $0x1f0] sm:$0xff]
        %v7336 = vld [vmem:[%s11 + $0x1f8] sm:$0xff]
        %v7337 = vld [vmem:[#allocation11] sm:$0xf]
        %v7339 = vlaneseq
        %v7340 = vshrl.u32 %v7339, 7
        %v7341 = vsub.s32 0, %v7340
        %v7342 = vrot.slane %v7337, %v7341
        %v7343 = vlaneseq
        %v7344 = vshrl.u32 %v7343, 7
        %v7345 = vsub.s32 1, %v7344
        %v7346 = vrot.slane %v7337, %v7345
        %v7347 = vlaneseq
        %v7348 = vshrl.u32 %v7347, 7
        %v7349 = vsub.s32 2, %v7348
        %v7350 = vrot.slane %v7337, %v7349
        %v7351 = vlaneseq
        %v7352 = vshrl.u32 %v7351, 7
        %v7353 = vsub.s32 3, %v7352
        %v7354 = vrot.slane %v7337, %v7353
        %v7423 = vunpack.c.l.b16 %v7273
        %v7424 = vunpack.c.h.b16 %v7273
        %v7425 = vunpack.c.l.b16 %v7274
        %v7426 = vunpack.c.h.b16 %v7274
        %v7427 = vunpack.c.l.b16 %v7275
        %v7428 = vunpack.c.h.b16 %v7275
        %v7429 = vunpack.c.l.b16 %v7276
        %v7430 = vunpack.c.h.b16 %v7276
        %v7431 = vunpack.c.l.b16 %v7277
        %v7432 = vunpack.c.h.b16 %v7277
        %v7433 = vunpack.c.l.b16 %v7278
        %v7434 = vunpack.c.h.b16 %v7278
        %v7435 = vunpack.c.l.b16 %v7279
        %v7436 = vunpack.c.h.b16 %v7279
        %v7437 = vunpack.c.l.b16 %v7280
        %v7438 = vunpack.c.h.b16 %v7280
        %v7439 = vunpack.c.l.b16 %v7281
        %v7440 = vunpack.c.h.b16 %v7281
        %v7441 = vunpack.c.l.b16 %v7282
        %v7442 = vunpack.c.h.b16 %v7282
        %v7443 = vunpack.c.l.b16 %v7283
        %v7444 = vunpack.c.h.b16 %v7283
        %v7445 = vunpack.c.l.b16 %v7284
        %v7446 = vunpack.c.h.b16 %v7284
        %v7447 = vunpack.c.l.b16 %v7285
        %v7448 = vunpack.c.h.b16 %v7285
        %v7449 = vunpack.c.l.b16 %v7286
        %v7450 = vunpack.c.h.b16 %v7286
        %v7451 = vunpack.c.l.b16 %v7287
        %v7452 = vunpack.c.h.b16 %v7287
        %v7453 = vunpack.c.l.b16 %v7288
        %v7454 = vunpack.c.h.b16 %v7288
        %v7455 = vunpack.c.l.b16 %v7289
        %v7456 = vunpack.c.h.b16 %v7289
        %v7457 = vunpack.c.l.b16 %v7290
        %v7458 = vunpack.c.h.b16 %v7290
        %v7459 = vunpack.c.l.b16 %v7291
        %v7460 = vunpack.c.h.b16 %v7291
        %v7461 = vunpack.c.l.b16 %v7292
        %v7462 = vunpack.c.h.b16 %v7292
        %v7463 = vunpack.c.l.b16 %v7293
        %v7464 = vunpack.c.h.b16 %v7293
        %v7465 = vunpack.c.l.b16 %v7294
        %v7466 = vunpack.c.h.b16 %v7294
        %v7467 = vunpack.c.l.b16 %v7295
        %v7468 = vunpack.c.h.b16 %v7295
        %v7469 = vunpack.c.l.b16 %v7296
        %v7470 = vunpack.c.h.b16 %v7296
        %v7471 = vunpack.c.l.b16 %v7297
        %v7472 = vunpack.c.h.b16 %v7297
        %v7473 = vunpack.c.l.b16 %v7298
        %v7474 = vunpack.c.h.b16 %v7298
        %v7475 = vunpack.c.l.b16 %v7299
        %v7476 = vunpack.c.h.b16 %v7299
        %v7477 = vunpack.c.l.b16 %v7300
        %v7478 = vunpack.c.h.b16 %v7300
        %v7479 = vunpack.c.l.b16 %v7301
        %v7480 = vunpack.c.h.b16 %v7301
        %v7481 = vunpack.c.l.b16 %v7302
        %v7482 = vunpack.c.h.b16 %v7302
        %v7483 = vunpack.c.l.b16 %v7303
        %v7484 = vunpack.c.h.b16 %v7303
        %v7485 = vunpack.c.l.b16 %v7304
        %v7486 = vunpack.c.h.b16 %v7304
        %v7487 = vunpack.c.l.b16 %v7305
        %v7488 = vunpack.c.h.b16 %v7305
        %v7489 = vunpack.c.l.b16 %v7306
        %v7490 = vunpack.c.h.b16 %v7306
        %v7491 = vunpack.c.l.b16 %v7307
        %v7492 = vunpack.c.h.b16 %v7307
        %v7493 = vunpack.c.l.b16 %v7308
        %v7494 = vunpack.c.h.b16 %v7308
        %v7495 = vunpack.c.l.b16 %v7309
        %v7496 = vunpack.c.h.b16 %v7309
        %v7497 = vunpack.c.l.b16 %v7310
        %v7498 = vunpack.c.h.b16 %v7310
        %v7499 = vunpack.c.l.b16 %v7311
        %v7500 = vunpack.c.h.b16 %v7311
        %v7501 = vunpack.c.l.b16 %v7312
        %v7502 = vunpack.c.h.b16 %v7312
        %v7503 = vunpack.c.l.b16 %v7313
        %v7504 = vunpack.c.h.b16 %v7313
        %v7505 = vunpack.c.l.b16 %v7314
        %v7506 = vunpack.c.h.b16 %v7314
        %v7507 = vunpack.c.l.b16 %v7315
        %v7508 = vunpack.c.h.b16 %v7315
        %v7509 = vunpack.c.l.b16 %v7316
        %v7510 = vunpack.c.h.b16 %v7316
        %v7511 = vunpack.c.l.b16 %v7317
        %v7512 = vunpack.c.h.b16 %v7317
        %v7513 = vunpack.c.l.b16 %v7318
        %v7514 = vunpack.c.h.b16 %v7318
        %v7515 = vunpack.c.l.b16 %v7319
        %v7516 = vunpack.c.h.b16 %v7319
        %v7517 = vunpack.c.l.b16 %v7320
        %v7518 = vunpack.c.h.b16 %v7320
        %v7519 = vunpack.c.l.b16 %v7321
        %v7520 = vunpack.c.h.b16 %v7321
        %v7521 = vunpack.c.l.b16 %v7322
        %v7522 = vunpack.c.h.b16 %v7322
        %v7523 = vunpack.c.l.b16 %v7323
        %v7524 = vunpack.c.h.b16 %v7323
        %v7525 = vunpack.c.l.b16 %v7324
        %v7526 = vunpack.c.h.b16 %v7324
        %v7527 = vunpack.c.l.b16 %v7325
        %v7528 = vunpack.c.h.b16 %v7325
        %v7529 = vunpack.c.l.b16 %v7326
        %v7530 = vunpack.c.h.b16 %v7326
        %v7531 = vunpack.c.l.b16 %v7327
        %v7532 = vunpack.c.h.b16 %v7327
        %v7533 = vunpack.c.l.b16 %v7328
        %v7534 = vunpack.c.h.b16 %v7328
        %v7535 = vunpack.c.l.b16 %v7329
        %v7536 = vunpack.c.h.b16 %v7329
        %v7537 = vunpack.c.l.b16 %v7330
        %v7538 = vunpack.c.h.b16 %v7330
        %v7539 = vunpack.c.l.b16 %v7331
        %v7540 = vunpack.c.h.b16 %v7331
        %v7541 = vunpack.c.l.b16 %v7332
        %v7542 = vunpack.c.h.b16 %v7332
        %v7543 = vunpack.c.l.b16 %v7333
        %v7544 = vunpack.c.h.b16 %v7333
        %v7545 = vunpack.c.l.b16 %v7334
        %v7546 = vunpack.c.h.b16 %v7334
        %v7547 = vunpack.c.l.b16 %v7335
        %v7548 = vunpack.c.h.b16 %v7335
        %v7549 = vunpack.c.l.b16 %v7336
        %v7550 = vunpack.c.h.b16 %v7336
        %v7551 = vpack.c.b16 %v7427, %v7423
        %v7552 = vpack.c.b16 %v7428, %v7424
        %v7553 = vpack.c.b16 %v7429, %v7425
        %v7554 = vpack.c.b16 %v7430, %v7426
        %v7555 = vpack.c.b16 %v7435, %v7431
        %v7556 = vpack.c.b16 %v7436, %v7432
        %v7557 = vpack.c.b16 %v7437, %v7433
        %v7558 = vpack.c.b16 %v7438, %v7434
        %v7559 = vpack.c.b16 %v7443, %v7439
        %v7560 = vpack.c.b16 %v7444, %v7440
        %v7561 = vpack.c.b16 %v7445, %v7441
        %v7562 = vpack.c.b16 %v7446, %v7442
        %v7563 = vpack.c.b16 %v7451, %v7447
        %v7564 = vpack.c.b16 %v7452, %v7448
        %v7565 = vpack.c.b16 %v7453, %v7449
        %v7566 = vpack.c.b16 %v7454, %v7450
        %v7567 = vpack.c.b16 %v7459, %v7455
        %v7568 = vpack.c.b16 %v7460, %v7456
        %v7569 = vpack.c.b16 %v7461, %v7457
        %v7570 = vpack.c.b16 %v7462, %v7458
        %v7571 = vpack.c.b16 %v7467, %v7463
        %v7572 = vpack.c.b16 %v7468, %v7464
        %v7573 = vpack.c.b16 %v7469, %v7465
        %v7574 = vpack.c.b16 %v7470, %v7466
        %v7575 = vpack.c.b16 %v7475, %v7471
        %v7576 = vpack.c.b16 %v7476, %v7472
        %v7577 = vpack.c.b16 %v7477, %v7473
        %v7578 = vpack.c.b16 %v7478, %v7474
        %v7579 = vpack.c.b16 %v7483, %v7479
        %v7580 = vpack.c.b16 %v7484, %v7480
        %v7581 = vpack.c.b16 %v7485, %v7481
        %v7582 = vpack.c.b16 %v7486, %v7482
        %v7583 = vpack.c.b16 %v7491, %v7487
        %v7584 = vpack.c.b16 %v7492, %v7488
        %v7585 = vpack.c.b16 %v7493, %v7489
        %v7586 = vpack.c.b16 %v7494, %v7490
        %v7587 = vpack.c.b16 %v7499, %v7495
        %v7588 = vpack.c.b16 %v7500, %v7496
        %v7589 = vpack.c.b16 %v7501, %v7497
        %v7590 = vpack.c.b16 %v7502, %v7498
        %v7591 = vpack.c.b16 %v7507, %v7503
        %v7592 = vpack.c.b16 %v7508, %v7504
        %v7593 = vpack.c.b16 %v7509, %v7505
        %v7594 = vpack.c.b16 %v7510, %v7506
        %v7595 = vpack.c.b16 %v7515, %v7511
        %v7596 = vpack.c.b16 %v7516, %v7512
        %v7597 = vpack.c.b16 %v7517, %v7513
        %v7598 = vpack.c.b16 %v7518, %v7514
        %v7599 = vpack.c.b16 %v7523, %v7519
        %v7600 = vpack.c.b16 %v7524, %v7520
        %v7601 = vpack.c.b16 %v7525, %v7521
        %v7602 = vpack.c.b16 %v7526, %v7522
        %v7603 = vpack.c.b16 %v7531, %v7527
        %v7604 = vpack.c.b16 %v7532, %v7528
        %v7605 = vpack.c.b16 %v7533, %v7529
        %v7606 = vpack.c.b16 %v7534, %v7530
        %v7607 = vpack.c.b16 %v7539, %v7535
        %v7608 = vpack.c.b16 %v7540, %v7536
        %v7609 = vpack.c.b16 %v7541, %v7537
        %v7610 = vpack.c.b16 %v7542, %v7538
        %v7611 = vpack.c.b16 %v7547, %v7543
        %v7612 = vpack.c.b16 %v7548, %v7544
        %v7613 = vpack.c.b16 %v7549, %v7545
        %v7614 = vpack.c.b16 %v7550, %v7546
        %7679 = vmatprep.subr.bf16.mxu0 %v7552
        %7680 = vmatpush1.bf16.msra.mxu0 %v7551
        %7681 = vmatprep.subr.bf16.mxu0 %v7556
        %7682 = vmatpush1.bf16.msra.mxu0 %v7555
        %7683 = vmatprep.subr.bf16.mxu0 %v7560
        %7684 = vmatpush1.bf16.msra.mxu0 %v7559
        %7685 = vmatprep.subr.bf16.mxu0 %v7564
        %7686 = vmatpush1.bf16.msra.mxu0 %v7563
        %7687 = vmatprep.subr.bf16.mxu0 %v7568
        %7688 = vmatpush1.bf16.msra.mxu0 %v7567
        %7689 = vmatprep.subr.bf16.mxu0 %v7572
        %7690 = vmatpush1.bf16.msra.mxu0 %v7571
        %7691 = vmatprep.subr.bf16.mxu0 %v7576
        %7692 = vmatpush1.bf16.msra.mxu0 %v7575
        %7693 = vmatprep.subr.bf16.mxu0 %v7580
        %7694 = vmatpush1.bf16.msra.mxu0 %v7579
        %7695 = vmatprep.subr.bf16.mxu0 %v7584
        %7696 = vmatpush1.bf16.msra.mxu0 %v7583
        %7697 = vmatprep.subr.bf16.mxu0 %v7588
        %7698 = vmatpush1.bf16.msra.mxu0 %v7587
        %7699 = vmatprep.subr.bf16.mxu0 %v7592
        %7700 = vmatpush1.bf16.msra.mxu0 %v7591
        %7701 = vmatprep.subr.bf16.mxu0 %v7596
        %7702 = vmatpush1.bf16.msra.mxu0 %v7595
        %7703 = vmatprep.subr.bf16.mxu0 %v7600
        %7704 = vmatpush1.bf16.msra.mxu0 %v7599
        %7705 = vmatprep.subr.bf16.mxu0 %v7604
        %7706 = vmatpush1.bf16.msra.mxu0 %v7603
        %7707 = vmatprep.subr.bf16.mxu0 %v7608
        %7708 = vmatpush1.bf16.msra.mxu0 %v7607
        %7709 = vmatprep.subr.bf16.mxu0 %v7612
        %7710 = vmatpush1.bf16.msra.mxu0 %v7611
        %7711 = vmatprep.mubr.bf16.mxu0 %v7258
        %7712 = vmatmul.mubr.bf16.gmra.mrb[0].mxu0 %v7257
        %v7713 = vpop.f32.mrb[0].mxu0
        %v7714 = vadd.f32 %v7342, %v7713
        %v7715 = vpop.f32.mrb[0].mxu0
        %v7716 = vadd.f32 %v7346, %v7715
        %v7717 = vpop.f32.mrb[0].mxu0
        %v7718 = vadd.f32 %v7342, %v7717
        %v7719 = vpop.f32.mrb[0].mxu0
        %v7720 = vadd.f32 %v7346, %v7719
        %7721 = vmatprep.mubr.bf16.mxu0 %v7260
        %7722 = vmatmul.mubr.bf16.gmra.mrb[0].mxu0 %v7259
        %v7723 = vpop.f32.mrb[0].mxu0
        %v7724 = vadd.f32 %v7342, %v7723
        %v7725 = vpop.f32.mrb[0].mxu0
        %v7726 = vadd.f32 %v7346, %v7725
        %v7727 = vpop.f32.mrb[0].mxu0
        %v7728 = vadd.f32 %v7342, %v7727
        %v7729 = vpop.f32.mrb[0].mxu0
        %v7730 = vadd.f32 %v7346, %v7729
        %7731 = vmatprep.mubr.bf16.mxu0 %v7262
        %7732 = vmatmul.mubr.bf16.gmra.mrb[0].mxu0 %v7261
        %v7733 = vpop.f32.mrb[0].mxu0
        %v7734 = vadd.f32 %v7342, %v7733
        %v7735 = vpop.f32.mrb[0].mxu0
        %v7736 = vadd.f32 %v7346, %v7735
        %v7737 = vpop.f32.mrb[0].mxu0
        %v7738 = vadd.f32 %v7342, %v7737
        %v7739 = vpop.f32.mrb[0].mxu0
        %v7740 = vadd.f32 %v7346, %v7739
        %7741 = vmatprep.mubr.bf16.mxu0 %v7264
        %7742 = vmatmul.mubr.bf16.gmra.mrb[0].mxu0 %v7263
        %v7743 = vpop.f32.mrb[0].mxu0
        %v7744 = vadd.f32 %v7342, %v7743
        %v7745 = vpop.f32.mrb[0].mxu0
        %v7746 = vadd.f32 %v7346, %v7745
        %v7747 = vpop.f32.mrb[0].mxu0
        %v7748 = vadd.f32 %v7342, %v7747
        %v7749 = vpop.f32.mrb[0].mxu0
        %v7750 = vadd.f32 %v7346, %v7749
        %7751 = vmatprep.mubr.bf16.mxu0 %v7266
        %7752 = vmatmul.mubr.bf16.gmra.mrb[0].mxu0 %v7265
        %v7753 = vpop.f32.mrb[0].mxu0
        %v7754 = vadd.f32 %v7342, %v7753
        %v7755 = vpop.f32.mrb[0].mxu0
        %v7756 = vadd.f32 %v7346, %v7755
        %v7757 = vpop.f32.mrb[0].mxu0
        %v7758 = vadd.f32 %v7342, %v7757
        %v7759 = vpop.f32.mrb[0].mxu0
        %v7760 = vadd.f32 %v7346, %v7759
        %7761 = vmatprep.mubr.bf16.mxu0 %v7268
        %7762 = vmatmul.mubr.bf16.gmra.mrb[0].mxu0 %v7267
        %v7763 = vpop.f32.mrb[0].mxu0
        %v7764 = vadd.f32 %v7342, %v7763
        %v7765 = vpop.f32.mrb[0].mxu0
        %v7766 = vadd.f32 %v7346, %v7765
        %v7767 = vpop.f32.mrb[0].mxu0
        %v7768 = vadd.f32 %v7342, %v7767
        %v7769 = vpop.f32.mrb[0].mxu0
        %v7770 = vadd.f32 %v7346, %v7769
        %7771 = vmatprep.mubr.bf16.mxu0 %v7270
        %7772 = vmatmul.mubr.bf16.gmra.mrb[0].mxu0 %v7269
        %v7773 = vpop.f32.mrb[0].mxu0
        %v7774 = vadd.f32 %v7342, %v7773
        %v7775 = vpop.f32.mrb[0].mxu0
        %v7776 = vadd.f32 %v7346, %v7775
        %v7777 = vpop.f32.mrb[0].mxu0
        %v7778 = vadd.f32 %v7342, %v7777
        %v7779 = vpop.f32.mrb[0].mxu0
        %v7780 = vadd.f32 %v7346, %v7779
        %7781 = vmatprep.mubr.bf16.mxu0 %v7272
        %7782 = vmatmul.mubr.bf16.gmra.mrb[0].mxu0 %v7271
        %v7783 = vpop.f32.mrb[0].mxu0
        %v7784 = vadd.f32 %v7342, %v7783
        %v7785 = vpop.f32.mrb[0].mxu0
        %v7786 = vadd.f32 %v7346, %v7785
        %v7787 = vpop.f32.mrb[0].mxu0
        %v7788 = vadd.f32 %v7342, %v7787
        %v7789 = vpop.f32.mrb[0].mxu0
        %v7790 = vadd.f32 %v7346, %v7789
        %7791 = vdwg.mxu0
        %7792 = vmatprep.subr.bf16.mxu0 %v7554
        %7793 = vmatpush1.bf16.msra.mxu0 %v7553
        %7794 = vmatprep.subr.bf16.mxu0 %v7558
        %7795 = vmatpush1.bf16.msra.mxu0 %v7557
        %7796 = vmatprep.subr.bf16.mxu0 %v7562
        %7797 = vmatpush1.bf16.msra.mxu0 %v7561
        %7798 = vmatprep.subr.bf16.mxu0 %v7566
        %7799 = vmatpush1.bf16.msra.mxu0 %v7565
        %7800 = vmatprep.subr.bf16.mxu0 %v7570
        %7801 = vmatpush1.bf16.msra.mxu0 %v7569
        %7802 = vmatprep.subr.bf16.mxu0 %v7574
        %7803 = vmatpush1.bf16.msra.mxu0 %v7573
        %7804 = vmatprep.subr.bf16.mxu0 %v7578
        %7805 = vmatpush1.bf16.msra.mxu0 %v7577
        %7806 = vmatprep.subr.bf16.mxu0 %v7582
        %7807 = vmatpush1.bf16.msra.mxu0 %v7581
        %7808 = vmatprep.subr.bf16.mxu0 %v7586
        %7809 = vmatpush1.bf16.msra.mxu0 %v7585
        %7810 = vmatprep.subr.bf16.mxu0 %v7590
        %7811 = vmatpush1.bf16.msra.mxu0 %v7589
        %7812 = vmatprep.subr.bf16.mxu0 %v7594
        %7813 = vmatpush1.bf16.msra.mxu0 %v7593
        %7814 = vmatprep.subr.bf16.mxu0 %v7598
        %7815 = vmatpush1.bf16.msra.mxu0 %v7597
        %7816 = vmatprep.subr.bf16.mxu0 %v7602
        %7817 = vmatpush1.bf16.msra.mxu0 %v7601
        %7818 = vmatprep.subr.bf16.mxu0 %v7606
        %7819 = vmatpush1.bf16.msra.mxu0 %v7605
        %7820 = vmatprep.subr.bf16.mxu0 %v7610
        %7821 = vmatpush1.bf16.msra.mxu0 %v7609
        %7822 = vmatprep.subr.bf16.mxu0 %v7614
        %7823 = vmatpush1.bf16.msra.mxu0 %v7613
        %7824 = vmatprep.mubr.bf16.mxu0 %v7258
        %7825 = vmatmul.mubr.bf16.gmra.mrb[0].mxu0 %v7257
        %v7826 = vpop.f32.mrb[0].mxu0
        %v7827 = vadd.f32 %v7350, %v7826
        %v7828 = vpop.f32.mrb[0].mxu0
        %v7829 = vadd.f32 %v7354, %v7828
        %v7830 = vpop.f32.mrb[0].mxu0
        %v7831 = vadd.f32 %v7350, %v7830
        %v7832 = vpop.f32.mrb[0].mxu0
        %v7833 = vadd.f32 %v7354, %v7832
        %7834 = vmatprep.mubr.bf16.mxu0 %v7260
        %7835 = vmatmul.mubr.bf16.gmra.mrb[0].mxu0 %v7259
        %v7836 = vpop.f32.mrb[0].mxu0
        %v7837 = vadd.f32 %v7350, %v7836
        %v7838 = vpop.f32.mrb[0].mxu0
        %v7839 = vadd.f32 %v7354, %v7838
        %v7840 = vpop.f32.mrb[0].mxu0
        %v7841 = vadd.f32 %v7350, %v7840
        %v7842 = vpop.f32.mrb[0].mxu0
        %v7843 = vadd.f32 %v7354, %v7842
        %7844 = vmatprep.mubr.bf16.mxu0 %v7262
        %7845 = vmatmul.mubr.bf16.gmra.mrb[0].mxu0 %v7261
        %v7846 = vpop.f32.mrb[0].mxu0
        %v7847 = vadd.f32 %v7350, %v7846
        %v7848 = vpop.f32.mrb[0].mxu0
        %v7849 = vadd.f32 %v7354, %v7848
        %v7850 = vpop.f32.mrb[0].mxu0
        %v7851 = vadd.f32 %v7350, %v7850
        %v7852 = vpop.f32.mrb[0].mxu0
        %v7853 = vadd.f32 %v7354, %v7852
        %7854 = vmatprep.mubr.bf16.mxu0 %v7264
        %7855 = vmatmul.mubr.bf16.gmra.mrb[0].mxu0 %v7263
        %v7856 = vpop.f32.mrb[0].mxu0
        %v7857 = vadd.f32 %v7350, %v7856
        %v7858 = vpop.f32.mrb[0].mxu0
        %v7859 = vadd.f32 %v7354, %v7858
        %v7860 = vpop.f32.mrb[0].mxu0
        %v7861 = vadd.f32 %v7350, %v7860
        %v7862 = vpop.f32.mrb[0].mxu0
        %v7863 = vadd.f32 %v7354, %v7862
        %7864 = vmatprep.mubr.bf16.mxu0 %v7266
        %7865 = vmatmul.mubr.bf16.gmra.mrb[0].mxu0 %v7265
        %v7866 = vpop.f32.mrb[0].mxu0
        %v7867 = vadd.f32 %v7350, %v7866
        %v7868 = vpop.f32.mrb[0].mxu0
        %v7869 = vadd.f32 %v7354, %v7868
        %v7870 = vpop.f32.mrb[0].mxu0
        %v7871 = vadd.f32 %v7350, %v7870
        %v7872 = vpop.f32.mrb[0].mxu0
        %v7873 = vadd.f32 %v7354, %v7872
        %7874 = vmatprep.mubr.bf16.mxu0 %v7268
        %7875 = vmatmul.mubr.bf16.gmra.mrb[0].mxu0 %v7267
        %v7876 = vpop.f32.mrb[0].mxu0
        %v7877 = vadd.f32 %v7350, %v7876
        %v7878 = vpop.f32.mrb[0].mxu0
        %v7879 = vadd.f32 %v7354, %v7878
        %v7880 = vpop.f32.mrb[0].mxu0
        %v7881 = vadd.f32 %v7350, %v7880
        %v7882 = vpop.f32.mrb[0].mxu0
        %v7883 = vadd.f32 %v7354, %v7882
        %7884 = vmatprep.mubr.bf16.mxu0 %v7270
        %7885 = vmatmul.mubr.bf16.gmra.mrb[0].mxu0 %v7269
        %v7886 = vpop.f32.mrb[0].mxu0
        %v7887 = vadd.f32 %v7350, %v7886
        %v7888 = vpop.f32.mrb[0].mxu0
        %v7889 = vadd.f32 %v7354, %v7888
        %v7890 = vpop.f32.mrb[0].mxu0
        %v7891 = vadd.f32 %v7350, %v7890
        %v7892 = vpop.f32.mrb[0].mxu0
        %v7893 = vadd.f32 %v7354, %v7892
        %7894 = vmatprep.mubr.bf16.mxu0 %v7272
        %7895 = vmatmul.mubr.bf16.gmra.mrb[0].mxu0 %v7271
        %v7896 = vpop.f32.mrb[0].mxu0
        %v7897 = vadd.f32 %v7350, %v7896
        %v7898 = vpop.f32.mrb[0].mxu0
        %v7899 = vadd.f32 %v7354, %v7898
        %v7900 = vpop.f32.mrb[0].mxu0
        %v7901 = vadd.f32 %v7350, %v7900
        %v7902 = vpop.f32.mrb[0].mxu0
        %v7903 = vadd.f32 %v7354, %v7902
        %7904 = vdwg.mxu0
        %v7905 = vmax.f32 %v7714, 0.0
        %v7906 = vmax.f32 %v7716, 0.0
        %v7907 = vmax.f32 %v7827, 0.0
        %v7908 = vmax.f32 %v7829, 0.0
        %v7909 = vmax.f32 %v7718, 0.0
        %v7910 = vmax.f32 %v7720, 0.0
        %v7911 = vmax.f32 %v7831, 0.0
        %v7912 = vmax.f32 %v7833, 0.0
        %v7913 = vmax.f32 %v7724, 0.0
        %v7914 = vmax.f32 %v7726, 0.0
        %v7915 = vmax.f32 %v7837, 0.0
        %v7916 = vmax.f32 %v7839, 0.0
        %v7917 = vmax.f32 %v7728, 0.0
        %v7918 = vmax.f32 %v7730, 0.0
        %v7919 = vmax.f32 %v7841, 0.0
        %v7920 = vmax.f32 %v7843, 0.0
        %v7921 = vmax.f32 %v7734, 0.0
        %v7922 = vmax.f32 %v7736, 0.0
        %v7923 = vmax.f32 %v7847, 0.0
        %v7924 = vmax.f32 %v7849, 0.0
        %v7925 = vmax.f32 %v7738, 0.0
        %v7926 = vmax.f32 %v7740, 0.0
        %v7927 = vmax.f32 %v7851, 0.0
        %v7928 = vmax.f32 %v7853, 0.0
        %v7929 = vmax.f32 %v7744, 0.0
        %v7930 = vmax.f32 %v7746, 0.0
        %v7931 = vmax.f32 %v7857, 0.0
        %v7932 = vmax.f32 %v7859, 0.0
        %v7933 = vmax.f32 %v7748, 0.0
        %v7934 = vmax.f32 %v7750, 0.0
        %v7935 = vmax.f32 %v7861, 0.0
        %v7936 = vmax.f32 %v7863, 0.0
        %v7937 = vmax.f32 %v7754, 0.0
        %v7938 = vmax.f32 %v7756, 0.0
        %v7939 = vmax.f32 %v7867, 0.0
        %v7940 = vmax.f32 %v7869, 0.0
        %v7941 = vmax.f32 %v7758, 0.0
        %v7942 = vmax.f32 %v7760, 0.0
        %v7943 = vmax.f32 %v7871, 0.0
        %v7944 = vmax.f32 %v7873, 0.0
        %v7945 = vmax.f32 %v7764, 0.0
        %v7946 = vmax.f32 %v7766, 0.0
        %v7947 = vmax.f32 %v7877, 0.0
        %v7948 = vmax.f32 %v7879, 0.0
        %v7949 = vmax.f32 %v7768, 0.0
        %v7950 = vmax.f32 %v7770, 0.0
        %v7951 = vmax.f32 %v7881, 0.0
        %v7952 = vmax.f32 %v7883, 0.0
        %v7953 = vmax.f32 %v7774, 0.0
        %v7954 = vmax.f32 %v7776, 0.0
        %v7955 = vmax.f32 %v7887, 0.0
        %v7956 = vmax.f32 %v7889, 0.0
        %v7957 = vmax.f32 %v7778, 0.0
        %v7958 = vmax.f32 %v7780, 0.0
        %v7959 = vmax.f32 %v7891, 0.0
        %v7960 = vmax.f32 %v7893, 0.0
        %v7961 = vmax.f32 %v7784, 0.0
        %v7962 = vmax.f32 %v7786, 0.0
        %v7963 = vmax.f32 %v7897, 0.0
        %v7964 = vmax.f32 %v7899, 0.0
        %v7965 = vmax.f32 %v7788, 0.0
        %v7966 = vmax.f32 %v7790, 0.0
        %v7967 = vmax.f32 %v7901, 0.0
        %v7968 = vmax.f32 %v7903, 0.0
        %v7969 = vpack.c.bf16 %v7909, %v7905
        %v7970 = vpack.c.bf16 %v7910, %v7906
        %v7971 = vpack.c.bf16 %v7911, %v7907
        %v7972 = vpack.c.bf16 %v7912, %v7908
        %v7973 = vpack.c.bf16 %v7917, %v7913
        %v7974 = vpack.c.bf16 %v7918, %v7914
        %v7975 = vpack.c.bf16 %v7919, %v7915
        %v7976 = vpack.c.bf16 %v7920, %v7916
        %v7977 = vpack.c.bf16 %v7925, %v7921
        %v7978 = vpack.c.bf16 %v7926, %v7922
        %v7979 = vpack.c.bf16 %v7927, %v7923
        %v7980 = vpack.c.bf16 %v7928, %v7924
        %v7981 = vpack.c.bf16 %v7933, %v7929
        %v7982 = vpack.c.bf16 %v7934, %v7930
        %v7983 = vpack.c.bf16 %v7935, %v7931
        %v7984 = vpack.c.bf16 %v7936, %v7932
        %v7985 = vpack.c.bf16 %v7941, %v7937
        %v7986 = vpack.c.bf16 %v7942, %v7938
        %v7987 = vpack.c.bf16 %v7943, %v7939
        %v7988 = vpack.c.bf16 %v7944, %v7940
        %v7989 = vpack.c.bf16 %v7949, %v7945
        %v7990 = vpack.c.bf16 %v7950, %v7946
        %v7991 = vpack.c.bf16 %v7951, %v7947
        %v7992 = vpack.c.bf16 %v7952, %v7948
        %v7993 = vpack.c.bf16 %v7957, %v7953
        %v7994 = vpack.c.bf16 %v7958, %v7954
        %v7995 = vpack.c.bf16 %v7959, %v7955
        %v7996 = vpack.c.bf16 %v7960, %v7956
        %v7997 = vpack.c.bf16 %v7965, %v7961
        %v7998 = vpack.c.bf16 %v7966, %v7962
        %v7999 = vpack.c.bf16 %v7967, %v7963
        %v8000 = vpack.c.bf16 %v7968, %v7964
        %v8001 = vld [vmem:[%s13] sm:$0xff]
        %v8002 = vld [vmem:[%s13 + $0x8] sm:$0xff]
        %v8003 = vld [vmem:[%s13 + $0x10] sm:$0xff]
        %v8004 = vld [vmem:[%s13 + $0x18] sm:$0xff]
        %v8005 = vld [vmem:[%s13 + $0x20] sm:$0xff]
        %v8006 = vld [vmem:[%s13 + $0x28] sm:$0xff]
        %v8007 = vld [vmem:[%s13 + $0x30] sm:$0xff]
        %v8008 = vld [vmem:[%s13 + $0x38] sm:$0xff]
        %v8009 = vld [vmem:[%s13 + $0x40] sm:$0xff]
        %v8010 = vld [vmem:[%s13 + $0x48] sm:$0xff]
        %v8011 = vld [vmem:[%s13 + $0x50] sm:$0xff]
        %v8012 = vld [vmem:[%s13 + $0x58] sm:$0xff]
        %v8013 = vld [vmem:[%s13 + $0x60] sm:$0xff]
        %v8014 = vld [vmem:[%s13 + $0x68] sm:$0xff]
        %v8015 = vld [vmem:[%s13 + $0x70] sm:$0xff]
        %v8016 = vld [vmem:[%s13 + $0x78] sm:$0xff]
        %v8017 = vld [vmem:[%s13 + $0x80] sm:$0xff]
        %v8018 = vld [vmem:[%s13 + $0x88] sm:$0xff]
        %v8019 = vld [vmem:[%s13 + $0x90] sm:$0xff]
        %v8020 = vld [vmem:[%s13 + $0x98] sm:$0xff]
        %v8021 = vld [vmem:[%s13 + $0xa0] sm:$0xff]
        %v8022 = vld [vmem:[%s13 + $0xa8] sm:$0xff]
        %v8023 = vld [vmem:[%s13 + $0xb0] sm:$0xff]
        %v8024 = vld [vmem:[%s13 + $0xb8] sm:$0xff]
        %v8025 = vld [vmem:[%s13 + $0xc0] sm:$0xff]
        %v8026 = vld [vmem:[%s13 + $0xc8] sm:$0xff]
        %v8027 = vld [vmem:[%s13 + $0xd0] sm:$0xff]
        %v8028 = vld [vmem:[%s13 + $0xd8] sm:$0xff]
        %v8029 = vld [vmem:[%s13 + $0xe0] sm:$0xff]
        %v8030 = vld [vmem:[%s13 + $0xe8] sm:$0xff]
        %v8031 = vld [vmem:[%s13 + $0xf0] sm:$0xff]
        %v8032 = vld [vmem:[%s13 + $0xf8] sm:$0xff]
        %v8033 = vld [vmem:[%s13 + $0x100] sm:$0xff]
        %v8034 = vld [vmem:[%s13 + $0x108] sm:$0xff]
        %v8035 = vld [vmem:[%s13 + $0x110] sm:$0xff]
        %v8036 = vld [vmem:[%s13 + $0x118] sm:$0xff]
        %v8037 = vld [vmem:[%s13 + $0x120] sm:$0xff]
        %v8038 = vld [vmem:[%s13 + $0x128] sm:$0xff]
        %v8039 = vld [vmem:[%s13 + $0x130] sm:$0xff]
        %v8040 = vld [vmem:[%s13 + $0x138] sm:$0xff]
        %v8041 = vld [vmem:[%s13 + $0x140] sm:$0xff]
        %v8042 = vld [vmem:[%s13 + $0x148] sm:$0xff]
        %v8043 = vld [vmem:[%s13 + $0x150] sm:$0xff]
        %v8044 = vld [vmem:[%s13 + $0x158] sm:$0xff]
        %v8045 = vld [vmem:[%s13 + $0x160] sm:$0xff]
        %v8046 = vld [vmem:[%s13 + $0x168] sm:$0xff]
        %v8047 = vld [vmem:[%s13 + $0x170] sm:$0xff]
        %v8048 = vld [vmem:[%s13 + $0x178] sm:$0xff]
        %v8049 = vld [vmem:[%s13 + $0x180] sm:$0xff]
        %v8050 = vld [vmem:[%s13 + $0x188] sm:$0xff]
        %v8051 = vld [vmem:[%s13 + $0x190] sm:$0xff]
        %v8052 = vld [vmem:[%s13 + $0x198] sm:$0xff]
        %v8053 = vld [vmem:[%s13 + $0x1a0] sm:$0xff]
        %v8054 = vld [vmem:[%s13 + $0x1a8] sm:$0xff]
        %v8055 = vld [vmem:[%s13 + $0x1b0] sm:$0xff]
        %v8056 = vld [vmem:[%s13 + $0x1b8] sm:$0xff]
        %v8057 = vld [vmem:[%s13 + $0x1c0] sm:$0xff]
        %v8058 = vld [vmem:[%s13 + $0x1c8] sm:$0xff]
        %v8059 = vld [vmem:[%s13 + $0x1d0] sm:$0xff]
        %v8060 = vld [vmem:[%s13 + $0x1d8] sm:$0xff]
        %v8061 = vld [vmem:[%s13 + $0x1e0] sm:$0xff]
        %v8062 = vld [vmem:[%s13 + $0x1e8] sm:$0xff]
        %v8063 = vld [vmem:[%s13 + $0x1f0] sm:$0xff]
        %v8064 = vld [vmem:[%s13 + $0x1f8] sm:$0xff]
        %v8065 = vld [vmem:[#allocation13] sm:$0x3]
        %v8067 = vlaneseq
        %v8068 = vshrl.u32 %v8067, 7
        %v8069 = vsub.s32 0, %v8068
        %v8070 = vrot.slane %v8065, %v8069
        %v8071 = vlaneseq
        %v8072 = vshrl.u32 %v8071, 7
        %v8073 = vsub.s32 1, %v8072
        %v8074 = vrot.slane %v8065, %v8073
        %v8141 = vunpack.c.l.b16 %v8001
        %v8142 = vunpack.c.h.b16 %v8001
        %v8143 = vunpack.c.l.b16 %v8002
        %v8144 = vunpack.c.h.b16 %v8002
        %v8145 = vunpack.c.l.b16 %v8003
        %v8146 = vunpack.c.h.b16 %v8003
        %v8147 = vunpack.c.l.b16 %v8004
        %v8148 = vunpack.c.h.b16 %v8004
        %v8149 = vunpack.c.l.b16 %v8005
        %v8150 = vunpack.c.h.b16 %v8005
        %v8151 = vunpack.c.l.b16 %v8006
        %v8152 = vunpack.c.h.b16 %v8006
        %v8153 = vunpack.c.l.b16 %v8007
        %v8154 = vunpack.c.h.b16 %v8007
        %v8155 = vunpack.c.l.b16 %v8008
        %v8156 = vunpack.c.h.b16 %v8008
        %v8157 = vunpack.c.l.b16 %v8009
        %v8158 = vunpack.c.h.b16 %v8009
        %v8159 = vunpack.c.l.b16 %v8010
        %v8160 = vunpack.c.h.b16 %v8010
        %v8161 = vunpack.c.l.b16 %v8011
        %v8162 = vunpack.c.h.b16 %v8011
        %v8163 = vunpack.c.l.b16 %v8012
        %v8164 = vunpack.c.h.b16 %v8012
        %v8165 = vunpack.c.l.b16 %v8013
        %v8166 = vunpack.c.h.b16 %v8013
        %v8167 = vunpack.c.l.b16 %v8014
        %v8168 = vunpack.c.h.b16 %v8014
        %v8169 = vunpack.c.l.b16 %v8015
        %v8170 = vunpack.c.h.b16 %v8015
        %v8171 = vunpack.c.l.b16 %v8016
        %v8172 = vunpack.c.h.b16 %v8016
        %v8173 = vunpack.c.l.b16 %v8017
        %v8174 = vunpack.c.h.b16 %v8017
        %v8175 = vunpack.c.l.b16 %v8018
        %v8176 = vunpack.c.h.b16 %v8018
        %v8177 = vunpack.c.l.b16 %v8019
        %v8178 = vunpack.c.h.b16 %v8019
        %v8179 = vunpack.c.l.b16 %v8020
        %v8180 = vunpack.c.h.b16 %v8020
        %v8181 = vunpack.c.l.b16 %v8021
        %v8182 = vunpack.c.h.b16 %v8021
        %v8183 = vunpack.c.l.b16 %v8022
        %v8184 = vunpack.c.h.b16 %v8022
        %v8185 = vunpack.c.l.b16 %v8023
        %v8186 = vunpack.c.h.b16 %v8023
        %v8187 = vunpack.c.l.b16 %v8024
        %v8188 = vunpack.c.h.b16 %v8024
        %v8189 = vunpack.c.l.b16 %v8025
        %v8190 = vunpack.c.h.b16 %v8025
        %v8191 = vunpack.c.l.b16 %v8026
        %v8192 = vunpack.c.h.b16 %v8026
        %v8193 = vunpack.c.l.b16 %v8027
        %v8194 = vunpack.c.h.b16 %v8027
        %v8195 = vunpack.c.l.b16 %v8028
        %v8196 = vunpack.c.h.b16 %v8028
        %v8197 = vunpack.c.l.b16 %v8029
        %v8198 = vunpack.c.h.b16 %v8029
        %v8199 = vunpack.c.l.b16 %v8030
        %v8200 = vunpack.c.h.b16 %v8030
        %v8201 = vunpack.c.l.b16 %v8031
        %v8202 = vunpack.c.h.b16 %v8031
        %v8203 = vunpack.c.l.b16 %v8032
        %v8204 = vunpack.c.h.b16 %v8032
        %v8205 = vunpack.c.l.b16 %v8033
        %v8206 = vunpack.c.h.b16 %v8033
        %v8207 = vunpack.c.l.b16 %v8034
        %v8208 = vunpack.c.h.b16 %v8034
        %v8209 = vunpack.c.l.b16 %v8035
        %v8210 = vunpack.c.h.b16 %v8035
        %v8211 = vunpack.c.l.b16 %v8036
        %v8212 = vunpack.c.h.b16 %v8036
        %v8213 = vunpack.c.l.b16 %v8037
        %v8214 = vunpack.c.h.b16 %v8037
        %v8215 = vunpack.c.l.b16 %v8038
        %v8216 = vunpack.c.h.b16 %v8038
        %v8217 = vunpack.c.l.b16 %v8039
        %v8218 = vunpack.c.h.b16 %v8039
        %v8219 = vunpack.c.l.b16 %v8040
        %v8220 = vunpack.c.h.b16 %v8040
        %v8221 = vunpack.c.l.b16 %v8041
        %v8222 = vunpack.c.h.b16 %v8041
        %v8223 = vunpack.c.l.b16 %v8042
        %v8224 = vunpack.c.h.b16 %v8042
        %v8225 = vunpack.c.l.b16 %v8043
        %v8226 = vunpack.c.h.b16 %v8043
        %v8227 = vunpack.c.l.b16 %v8044
        %v8228 = vunpack.c.h.b16 %v8044
        %v8229 = vunpack.c.l.b16 %v8045
        %v8230 = vunpack.c.h.b16 %v8045
        %v8231 = vunpack.c.l.b16 %v8046
        %v8232 = vunpack.c.h.b16 %v8046
        %v8233 = vunpack.c.l.b16 %v8047
        %v8234 = vunpack.c.h.b16 %v8047
        %v8235 = vunpack.c.l.b16 %v8048
        %v8236 = vunpack.c.h.b16 %v8048
        %v8237 = vunpack.c.l.b16 %v8049
        %v8238 = vunpack.c.h.b16 %v8049
        %v8239 = vunpack.c.l.b16 %v8050
        %v8240 = vunpack.c.h.b16 %v8050
        %v8241 = vunpack.c.l.b16 %v8051
        %v8242 = vunpack.c.h.b16 %v8051
        %v8243 = vunpack.c.l.b16 %v8052
        %v8244 = vunpack.c.h.b16 %v8052
        %v8245 = vunpack.c.l.b16 %v8053
        %v8246 = vunpack.c.h.b16 %v8053
        %v8247 = vunpack.c.l.b16 %v8054
        %v8248 = vunpack.c.h.b16 %v8054
        %v8249 = vunpack.c.l.b16 %v8055
        %v8250 = vunpack.c.h.b16 %v8055
        %v8251 = vunpack.c.l.b16 %v8056
        %v8252 = vunpack.c.h.b16 %v8056
        %v8253 = vunpack.c.l.b16 %v8057
        %v8254 = vunpack.c.h.b16 %v8057
        %v8255 = vunpack.c.l.b16 %v8058
        %v8256 = vunpack.c.h.b16 %v8058
        %v8257 = vunpack.c.l.b16 %v8059
        %v8258 = vunpack.c.h.b16 %v8059
        %v8259 = vunpack.c.l.b16 %v8060
        %v8260 = vunpack.c.h.b16 %v8060
        %v8261 = vunpack.c.l.b16 %v8061
        %v8262 = vunpack.c.h.b16 %v8061
        %v8263 = vunpack.c.l.b16 %v8062
        %v8264 = vunpack.c.h.b16 %v8062
        %v8265 = vunpack.c.l.b16 %v8063
        %v8266 = vunpack.c.h.b16 %v8063
        %v8267 = vunpack.c.l.b16 %v8064
        %v8268 = vunpack.c.h.b16 %v8064
        %v8269 = vpack.c.b16 %v8143, %v8141
        %v8270 = vpack.c.b16 %v8144, %v8142
        %v8271 = vpack.c.b16 %v8147, %v8145
        %v8272 = vpack.c.b16 %v8148, %v8146
        %v8273 = vpack.c.b16 %v8151, %v8149
        %v8274 = vpack.c.b16 %v8152, %v8150
        %v8275 = vpack.c.b16 %v8155, %v8153
        %v8276 = vpack.c.b16 %v8156, %v8154
        %v8277 = vpack.c.b16 %v8159, %v8157
        %v8278 = vpack.c.b16 %v8160, %v8158
        %v8279 = vpack.c.b16 %v8163, %v8161
        %v8280 = vpack.c.b16 %v8164, %v8162
        %v8281 = vpack.c.b16 %v8167, %v8165
        %v8282 = vpack.c.b16 %v8168, %v8166
        %v8283 = vpack.c.b16 %v8171, %v8169
        %v8284 = vpack.c.b16 %v8172, %v8170
        %v8285 = vpack.c.b16 %v8175, %v8173
        %v8286 = vpack.c.b16 %v8176, %v8174
        %v8287 = vpack.c.b16 %v8179, %v8177
        %v8288 = vpack.c.b16 %v8180, %v8178
        %v8289 = vpack.c.b16 %v8183, %v8181
        %v8290 = vpack.c.b16 %v8184, %v8182
        %v8291 = vpack.c.b16 %v8187, %v8185
        %v8292 = vpack.c.b16 %v8188, %v8186
        %v8293 = vpack.c.b16 %v8191, %v8189
        %v8294 = vpack.c.b16 %v8192, %v8190
        %v8295 = vpack.c.b16 %v8195, %v8193
        %v8296 = vpack.c.b16 %v8196, %v8194
        %v8297 = vpack.c.b16 %v8199, %v8197
        %v8298 = vpack.c.b16 %v8200, %v8198
        %v8299 = vpack.c.b16 %v8203, %v8201
        %v8300 = vpack.c.b16 %v8204, %v8202
        %v8301 = vpack.c.b16 %v8207, %v8205
        %v8302 = vpack.c.b16 %v8208, %v8206
        %v8303 = vpack.c.b16 %v8211, %v8209
        %v8304 = vpack.c.b16 %v8212, %v8210
        %v8305 = vpack.c.b16 %v8215, %v8213
        %v8306 = vpack.c.b16 %v8216, %v8214
        %v8307 = vpack.c.b16 %v8219, %v8217
        %v8308 = vpack.c.b16 %v8220, %v8218
        %v8309 = vpack.c.b16 %v8223, %v8221
        %v8310 = vpack.c.b16 %v8224, %v8222
        %v8311 = vpack.c.b16 %v8227, %v8225
        %v8312 = vpack.c.b16 %v8228, %v8226
        %v8313 = vpack.c.b16 %v8231, %v8229
        %v8314 = vpack.c.b16 %v8232, %v8230
        %v8315 = vpack.c.b16 %v8235, %v8233
        %v8316 = vpack.c.b16 %v8236, %v8234
        %v8317 = vpack.c.b16 %v8239, %v8237
        %v8318 = vpack.c.b16 %v8240, %v8238
        %v8319 = vpack.c.b16 %v8243, %v8241
        %v8320 = vpack.c.b16 %v8244, %v8242
        %v8321 = vpack.c.b16 %v8247, %v8245
        %v8322 = vpack.c.b16 %v8248, %v8246
        %v8323 = vpack.c.b16 %v8251, %v8249
        %v8324 = vpack.c.b16 %v8252, %v8250
        %v8325 = vpack.c.b16 %v8255, %v8253
        %v8326 = vpack.c.b16 %v8256, %v8254
        %v8327 = vpack.c.b16 %v8259, %v8257
        %v8328 = vpack.c.b16 %v8260, %v8258
        %v8329 = vpack.c.b16 %v8263, %v8261
        %v8330 = vpack.c.b16 %v8264, %v8262
        %v8331 = vpack.c.b16 %v8267, %v8265
        %v8332 = vpack.c.b16 %v8268, %v8266
        %8397 = vmatprep.subr.bf16.mxu0 %v8270
        %8398 = vmatpush1.bf16.msra.mxu0 %v8269
        %8399 = vmatprep.subr.bf16.mxu0 %v8272
        %8400 = vmatpush1.bf16.msra.mxu0 %v8271
        %8401 = vmatprep.subr.bf16.mxu0 %v8274
        %8402 = vmatpush1.bf16.msra.mxu0 %v8273
        %8403 = vmatprep.subr.bf16.mxu0 %v8276
        %8404 = vmatpush1.bf16.msra.mxu0 %v8275
        %8405 = vmatprep.subr.bf16.mxu0 %v8278
        %8406 = vmatpush1.bf16.msra.mxu0 %v8277
        %8407 = vmatprep.subr.bf16.mxu0 %v8280
        %8408 = vmatpush1.bf16.msra.mxu0 %v8279
        %8409 = vmatprep.subr.bf16.mxu0 %v8282
        %8410 = vmatpush1.bf16.msra.mxu0 %v8281
        %8411 = vmatprep.subr.bf16.mxu0 %v8284
        %8412 = vmatpush1.bf16.msra.mxu0 %v8283
        %8413 = vmatprep.subr.bf16.mxu0 %v8286
        %8414 = vmatpush1.bf16.msra.mxu0 %v8285
        %8415 = vmatprep.subr.bf16.mxu0 %v8288
        %8416 = vmatpush1.bf16.msra.mxu0 %v8287
        %8417 = vmatprep.subr.bf16.mxu0 %v8290
        %8418 = vmatpush1.bf16.msra.mxu0 %v8289
        %8419 = vmatprep.subr.bf16.mxu0 %v8292
        %8420 = vmatpush1.bf16.msra.mxu0 %v8291
        %8421 = vmatprep.subr.bf16.mxu0 %v8294
        %8422 = vmatpush1.bf16.msra.mxu0 %v8293
        %8423 = vmatprep.subr.bf16.mxu0 %v8296
        %8424 = vmatpush1.bf16.msra.mxu0 %v8295
        %8425 = vmatprep.subr.bf16.mxu0 %v8298
        %8426 = vmatpush1.bf16.msra.mxu0 %v8297
        %8427 = vmatprep.subr.bf16.mxu0 %v8300
        %8428 = vmatpush1.bf16.msra.mxu0 %v8299
        %8429 = vmatprep.mubr.bf16.mxu0 %v7970
        %8430 = vmatmul.mubr.bf16.gmra.mrb[0].mxu0 %v7969
        %v8431 = vpop.f32.mrb[0].mxu0
        %v8432 = vadd.f32 %v8070, %v8431
        %v8433 = vpop.f32.mrb[0].mxu0
        %v8434 = vadd.f32 %v8074, %v8433
        %v8435 = vpop.f32.mrb[0].mxu0
        %v8436 = vadd.f32 %v8070, %v8435
        %v8437 = vpop.f32.mrb[0].mxu0
        %v8438 = vadd.f32 %v8074, %v8437
        %8439 = vmatprep.mubr.bf16.mxu0 %v7974
        %8440 = vmatmul.mubr.bf16.gmra.mrb[0].mxu0 %v7973
        %v8441 = vpop.f32.mrb[0].mxu0
        %v8442 = vadd.f32 %v8070, %v8441
        %v8443 = vpop.f32.mrb[0].mxu0
        %v8444 = vadd.f32 %v8074, %v8443
        %v8445 = vpop.f32.mrb[0].mxu0
        %v8446 = vadd.f32 %v8070, %v8445
        %v8447 = vpop.f32.mrb[0].mxu0
        %v8448 = vadd.f32 %v8074, %v8447
        %8449 = vmatprep.mubr.bf16.mxu0 %v7978
        %8450 = vmatmul.mubr.bf16.gmra.mrb[0].mxu0 %v7977
        %v8451 = vpop.f32.mrb[0].mxu0
        %v8452 = vadd.f32 %v8070, %v8451
        %v8453 = vpop.f32.mrb[0].mxu0
        %v8454 = vadd.f32 %v8074, %v8453
        %v8455 = vpop.f32.mrb[0].mxu0
        %v8456 = vadd.f32 %v8070, %v8455
        %v8457 = vpop.f32.mrb[0].mxu0
        %v8458 = vadd.f32 %v8074, %v8457
        %8459 = vmatprep.mubr.bf16.mxu0 %v7982
        %8460 = vmatmul.mubr.bf16.gmra.mrb[0].mxu0 %v7981
        %v8461 = vpop.f32.mrb[0].mxu0
        %v8462 = vadd.f32 %v8070, %v8461
        %v8463 = vpop.f32.mrb[0].mxu0
        %v8464 = vadd.f32 %v8074, %v8463
        %v8465 = vpop.f32.mrb[0].mxu0
        %v8466 = vadd.f32 %v8070, %v8465
        %v8467 = vpop.f32.mrb[0].mxu0
        %v8468 = vadd.f32 %v8074, %v8467
        %8469 = vmatprep.mubr.bf16.mxu0 %v7986
        %8470 = vmatmul.mubr.bf16.gmra.mrb[0].mxu0 %v7985
        %v8471 = vpop.f32.mrb[0].mxu0
        %v8472 = vadd.f32 %v8070, %v8471
        %v8473 = vpop.f32.mrb[0].mxu0
        %v8474 = vadd.f32 %v8074, %v8473
        %v8475 = vpop.f32.mrb[0].mxu0
        %v8476 = vadd.f32 %v8070, %v8475
        %v8477 = vpop.f32.mrb[0].mxu0
        %v8478 = vadd.f32 %v8074, %v8477
        %8479 = vmatprep.mubr.bf16.mxu0 %v7990
        %8480 = vmatmul.mubr.bf16.gmra.mrb[0].mxu0 %v7989
        %v8481 = vpop.f32.mrb[0].mxu0
        %v8482 = vadd.f32 %v8070, %v8481
        %v8483 = vpop.f32.mrb[0].mxu0
        %v8484 = vadd.f32 %v8074, %v8483
        %v8485 = vpop.f32.mrb[0].mxu0
        %v8486 = vadd.f32 %v8070, %v8485
        %v8487 = vpop.f32.mrb[0].mxu0
        %v8488 = vadd.f32 %v8074, %v8487
        %8489 = vmatprep.mubr.bf16.mxu0 %v7994
        %8490 = vmatmul.mubr.bf16.gmra.mrb[0].mxu0 %v7993
        %v8491 = vpop.f32.mrb[0].mxu0
        %v8492 = vadd.f32 %v8070, %v8491
        %v8493 = vpop.f32.mrb[0].mxu0
        %v8494 = vadd.f32 %v8074, %v8493
        %v8495 = vpop.f32.mrb[0].mxu0
        %v8496 = vadd.f32 %v8070, %v8495
        %v8497 = vpop.f32.mrb[0].mxu0
        %v8498 = vadd.f32 %v8074, %v8497
        %8499 = vmatprep.mubr.bf16.mxu0 %v7998
        %8500 = vmatmul.mubr.bf16.gmra.mrb[0].mxu0 %v7997
        %v8501 = vpop.f32.mrb[0].mxu0
        %v8502 = vadd.f32 %v8070, %v8501
        %v8503 = vpop.f32.mrb[0].mxu0
        %v8504 = vadd.f32 %v8074, %v8503
        %v8505 = vpop.f32.mrb[0].mxu0
        %v8506 = vadd.f32 %v8070, %v8505
        %v8507 = vpop.f32.mrb[0].mxu0
        %v8508 = vadd.f32 %v8074, %v8507
        %8509 = vdwg.mxu0
        %8510 = vmatprep.subr.bf16.mxu0 %v8302
        %8511 = vmatpush1.bf16.msra.mxu0 %v8301
        %8512 = vmatprep.subr.bf16.mxu0 %v8304
        %8513 = vmatpush1.bf16.msra.mxu0 %v8303
        %8514 = vmatprep.subr.bf16.mxu0 %v8306
        %8515 = vmatpush1.bf16.msra.mxu0 %v8305
        %8516 = vmatprep.subr.bf16.mxu0 %v8308
        %8517 = vmatpush1.bf16.msra.mxu0 %v8307
        %8518 = vmatprep.subr.bf16.mxu0 %v8310
        %8519 = vmatpush1.bf16.msra.mxu0 %v8309
        %8520 = vmatprep.subr.bf16.mxu0 %v8312
        %8521 = vmatpush1.bf16.msra.mxu0 %v8311
        %8522 = vmatprep.subr.bf16.mxu0 %v8314
        %8523 = vmatpush1.bf16.msra.mxu0 %v8313
        %8524 = vmatprep.subr.bf16.mxu0 %v8316
        %8525 = vmatpush1.bf16.msra.mxu0 %v8315
        %8526 = vmatprep.subr.bf16.mxu0 %v8318
        %8527 = vmatpush1.bf16.msra.mxu0 %v8317
        %8528 = vmatprep.subr.bf16.mxu0 %v8320
        %8529 = vmatpush1.bf16.msra.mxu0 %v8319
        %8530 = vmatprep.subr.bf16.mxu0 %v8322
        %8531 = vmatpush1.bf16.msra.mxu0 %v8321
        %8532 = vmatprep.subr.bf16.mxu0 %v8324
        %8533 = vmatpush1.bf16.msra.mxu0 %v8323
        %8534 = vmatprep.subr.bf16.mxu0 %v8326
        %8535 = vmatpush1.bf16.msra.mxu0 %v8325
        %8536 = vmatprep.subr.bf16.mxu0 %v8328
        %8537 = vmatpush1.bf16.msra.mxu0 %v8327
        %8538 = vmatprep.subr.bf16.mxu0 %v8330
        %8539 = vmatpush1.bf16.msra.mxu0 %v8329
        %8540 = vmatprep.subr.bf16.mxu0 %v8332
        %8541 = vmatpush1.bf16.msra.mxu0 %v8331
        %8542 = vmatprep.mubr.bf16.mxu0 %v7972
        %8543 = vmatmul.mubr.bf16.gmra.mrb[0].mxu0 %v7971
        %v8544 = vpop.f32.mrb[0].mxu0
        %v8545 = vadd.f32 %v8432, %v8544
        %v8546 = vpop.f32.mrb[0].mxu0
        %v8547 = vadd.f32 %v8434, %v8546
        %v8548 = vpop.f32.mrb[0].mxu0
        %v8549 = vadd.f32 %v8436, %v8548
        %v8550 = vpop.f32.mrb[0].mxu0
        %v8551 = vadd.f32 %v8438, %v8550
        %8552 = vmatprep.mubr.bf16.mxu0 %v7976
        %8553 = vmatmul.mubr.bf16.gmra.mrb[0].mxu0 %v7975
        %v8554 = vpop.f32.mrb[0].mxu0
        %v8555 = vadd.f32 %v8442, %v8554
        %v8556 = vpop.f32.mrb[0].mxu0
        %v8557 = vadd.f32 %v8444, %v8556
        %v8558 = vpop.f32.mrb[0].mxu0
        %v8559 = vadd.f32 %v8446, %v8558
        %v8560 = vpop.f32.mrb[0].mxu0
        %v8561 = vadd.f32 %v8448, %v8560
        %8562 = vmatprep.mubr.bf16.mxu0 %v7980
        %8563 = vmatmul.mubr.bf16.gmra.mrb[0].mxu0 %v7979
        %v8564 = vpop.f32.mrb[0].mxu0
        %v8565 = vadd.f32 %v8452, %v8564
        %v8566 = vpop.f32.mrb[0].mxu0
        %v8567 = vadd.f32 %v8454, %v8566
        %v8568 = vpop.f32.mrb[0].mxu0
        %v8569 = vadd.f32 %v8456, %v8568
        %v8570 = vpop.f32.mrb[0].mxu0
        %v8571 = vadd.f32 %v8458, %v8570
        %8572 = vmatprep.mubr.bf16.mxu0 %v7984
        %8573 = vmatmul.mubr.bf16.gmra.mrb[0].mxu0 %v7983
        %v8574 = vpop.f32.mrb[0].mxu0
        %v8575 = vadd.f32 %v8462, %v8574
        %v8576 = vpop.f32.mrb[0].mxu0
        %v8577 = vadd.f32 %v8464, %v8576
        %v8578 = vpop.f32.mrb[0].mxu0
        %v8579 = vadd.f32 %v8466, %v8578
        %v8580 = vpop.f32.mrb[0].mxu0
        %v8581 = vadd.f32 %v8468, %v8580
        %8582 = vmatprep.mubr.bf16.mxu0 %v7988
        %8583 = vmatmul.mubr.bf16.gmra.mrb[0].mxu0 %v7987
        %v8584 = vpop.f32.mrb[0].mxu0
        %v8585 = vadd.f32 %v8472, %v8584
        %v8586 = vpop.f32.mrb[0].mxu0
        %v8587 = vadd.f32 %v8474, %v8586
        %v8588 = vpop.f32.mrb[0].mxu0
        %v8589 = vadd.f32 %v8476, %v8588
        %v8590 = vpop.f32.mrb[0].mxu0
        %v8591 = vadd.f32 %v8478, %v8590
        %8592 = vmatprep.mubr.bf16.mxu0 %v7992
        %8593 = vmatmul.mubr.bf16.gmra.mrb[0].mxu0 %v7991
        %v8594 = vpop.f32.mrb[0].mxu0
        %v8595 = vadd.f32 %v8482, %v8594
        %v8596 = vpop.f32.mrb[0].mxu0
        %v8597 = vadd.f32 %v8484, %v8596
        %v8598 = vpop.f32.mrb[0].mxu0
        %v8599 = vadd.f32 %v8486, %v8598
        %v8600 = vpop.f32.mrb[0].mxu0
        %v8601 = vadd.f32 %v8488, %v8600
        %8602 = vmatprep.mubr.bf16.mxu0 %v7996
        %8603 = vmatmul.mubr.bf16.gmra.mrb[0].mxu0 %v7995
        %v8604 = vpop.f32.mrb[0].mxu0
        %v8605 = vadd.f32 %v8492, %v8604
        %v8606 = vpop.f32.mrb[0].mxu0
        %v8607 = vadd.f32 %v8494, %v8606
        %v8608 = vpop.f32.mrb[0].mxu0
        %v8609 = vadd.f32 %v8496, %v8608
        %v8610 = vpop.f32.mrb[0].mxu0
        %v8611 = vadd.f32 %v8498, %v8610
        %8612 = vmatprep.mubr.bf16.mxu0 %v8000
        %8613 = vmatmul.mubr.bf16.gmra.mrb[0].mxu0 %v7999
        %v8614 = vpop.f32.mrb[0].mxu0
        %v8615 = vadd.f32 %v8502, %v8614
        %v8616 = vpop.f32.mrb[0].mxu0
        %v8617 = vadd.f32 %v8504, %v8616
        %v8618 = vpop.f32.mrb[0].mxu0
        %v8619 = vadd.f32 %v8506, %v8618
        %v8620 = vpop.f32.mrb[0].mxu0
        %v8621 = vadd.f32 %v8508, %v8620
        %8622 = vdwg.mxu0
        %v8623 = vadd.f32 %v7225, %v8545
        %v8624 = vadd.f32 %v7226, %v8547
        %v8625 = vadd.f32 %v7227, %v8549
        %v8626 = vadd.f32 %v7228, %v8551
        %v8627 = vadd.f32 %v7229, %v8555
        %v8628 = vadd.f32 %v7230, %v8557
        %v8629 = vadd.f32 %v7231, %v8559
        %v8630 = vadd.f32 %v7232, %v8561
        %v8631 = vadd.f32 %v7233, %v8565
        %v8632 = vadd.f32 %v7234, %v8567
        %v8633 = vadd.f32 %v7235, %v8569
        %v8634 = vadd.f32 %v7236, %v8571
        %v8635 = vadd.f32 %v7237, %v8575
        %v8636 = vadd.f32 %v7238, %v8577
        %v8637 = vadd.f32 %v7239, %v8579
        %v8638 = vadd.f32 %v7240, %v8581
        %v8639 = vadd.f32 %v7241, %v8585
        %v8640 = vadd.f32 %v7242, %v8587
        %v8641 = vadd.f32 %v7243, %v8589
        %v8642 = vadd.f32 %v7244, %v8591
        %v8643 = vadd.f32 %v7245, %v8595
        %v8644 = vadd.f32 %v7246, %v8597
        %v8645 = vadd.f32 %v7247, %v8599
        %v8646 = vadd.f32 %v7248, %v8601
        %v8647 = vadd.f32 %v7249, %v8605
        %v8648 = vadd.f32 %v7250, %v8607
        %v8649 = vadd.f32 %v7251, %v8609
        %v8650 = vadd.f32 %v7252, %v8611
        %v8651 = vadd.f32 %v7253, %v8615
        %v8652 = vadd.f32 %v7254, %v8617
        %v8653 = vadd.f32 %v7255, %v8619
        %v8654 = vadd.f32 %v7256, %v8621
        %v8655 = vld [vmem:[%s15] sm:$0x3]
        %v8656 = vld [vmem:[%s16] sm:$0x3]
        %v8657 = vadd.f32 %v8623, %v8624
        %8658 = vadd.xlane.f32.xlu0 %v8657
        %v8659 = vpop.xlane.xlu0 %8658
        %v8660 = vadd.f32 %v8625, %v8626
        %8661 = vadd.xlane.f32.xlu0 %v8660
        %v8662 = vpop.xlane.xlu0 %8661
        %v8663 = vadd.f32 %v8627, %v8628
        %8664 = vadd.xlane.f32.xlu0 %v8663
        %v8665 = vpop.xlane.xlu0 %8664
        %v8666 = vadd.f32 %v8629, %v8630
        %8667 = vadd.xlane.f32.xlu0 %v8666
        %v8668 = vpop.xlane.xlu0 %8667
        %v8669 = vadd.f32 %v8631, %v8632
        %8670 = vadd.xlane.f32.xlu0 %v8669
        %v8671 = vpop.xlane.xlu0 %8670
        %v8672 = vadd.f32 %v8633, %v8634
        %8673 = vadd.xlane.f32.xlu0 %v8672
        %v8674 = vpop.xlane.xlu0 %8673
        %v8675 = vadd.f32 %v8635, %v8636
        %8676 = vadd.xlane.f32.xlu0 %v8675
        %v8677 = vpop.xlane.xlu0 %8676
        %v8678 = vadd.f32 %v8637, %v8638
        %8679 = vadd.xlane.f32.xlu0 %v8678
        %v8680 = vpop.xlane.xlu0 %8679
        %v8681 = vadd.f32 %v8639, %v8640
        %8682 = vadd.xlane.f32.xlu0 %v8681
        %v8683 = vpop.xlane.xlu0 %8682
        %v8684 = vadd.f32 %v8641, %v8642
        %8685 = vadd.xlane.f32.xlu0 %v8684
        %v8686 = vpop.xlane.xlu0 %8685
        %v8687 = vadd.f32 %v8643, %v8644
        %8688 = vadd.xlane.f32.xlu0 %v8687
        %v8689 = vpop.xlane.xlu0 %8688
        %v8690 = vadd.f32 %v8645, %v8646
        %8691 = vadd.xlane.f32.xlu0 %v8690
        %v8692 = vpop.xlane.xlu0 %8691
        %v8693 = vadd.f32 %v8647, %v8648
        %8694 = vadd.xlane.f32.xlu0 %v8693
        %v8695 = vpop.xlane.xlu0 %8694
        %v8696 = vadd.f32 %v8649, %v8650
        %8697 = vadd.xlane.f32.xlu0 %v8696
        %v8698 = vpop.xlane.xlu0 %8697
        %v8699 = vadd.f32 %v8651, %v8652
        %8700 = vadd.xlane.f32.xlu0 %v8699
        %v8701 = vpop.xlane.xlu0 %8700
        %v8702 = vadd.f32 %v8653, %v8654
        %8703 = vadd.xlane.f32.xlu0 %v8702
        %v8704 = vpop.xlane.xlu0 %8703
        %v8705 = vmul.f32 %v8659, %v6962
        %v8706 = vmul.f32 %v8662, %v6962
        %v8707 = vmul.f32 %v8665, %v6962
        %v8708 = vmul.f32 %v8668, %v6962
        %v8709 = vmul.f32 %v8671, %v6962
        %v8710 = vmul.f32 %v8674, %v6962
        %v8711 = vmul.f32 %v8677, %v6962
        %v8712 = vmul.f32 %v8680, %v6962
        %v8713 = vmul.f32 %v8683, %v6962
        %v8714 = vmul.f32 %v8686, %v6962
        %v8715 = vmul.f32 %v8689, %v6962
        %v8716 = vmul.f32 %v8692, %v6962
        %v8717 = vmul.f32 %v8695, %v6962
        %v8718 = vmul.f32 %v8698, %v6962
        %v8719 = vmul.f32 %v8701, %v6962
        %v8720 = vmul.f32 %v8704, %v6962
        %v8721 = vsub.f32 %v8623, %v8705
        %v8722 = vsub.f32 %v8624, %v8705
        %v8723 = vsub.f32 %v8625, %v8706
        %v8724 = vsub.f32 %v8626, %v8706
        %v8725 = vsub.f32 %v8627, %v8707
        %v8726 = vsub.f32 %v8628, %v8707
        %v8727 = vsub.f32 %v8629, %v8708
        %v8728 = vsub.f32 %v8630, %v8708
        %v8729 = vsub.f32 %v8631, %v8709
        %v8730 = vsub.f32 %v8632, %v8709
        %v8731 = vsub.f32 %v8633, %v8710
        %v8732 = vsub.f32 %v8634, %v8710
        %v8733 = vsub.f32 %v8635, %v8711
        %v8734 = vsub.f32 %v8636, %v8711
        %v8735 = vsub.f32 %v8637, %v8712
        %v8736 = vsub.f32 %v8638, %v8712
        %v8737 = vsub.f32 %v8639, %v8713
        %v8738 = vsub.f32 %v8640, %v8713
        %v8739 = vsub.f32 %v8641, %v8714
        %v8740 = vsub.f32 %v8642, %v8714
        %v8741 = vsub.f32 %v8643, %v8715
        %v8742 = vsub.f32 %v8644, %v8715
        %v8743 = vsub.f32 %v8645, %v8716
        %v8744 = vsub.f32 %v8646, %v8716
        %v8745 = vsub.f32 %v8647, %v8717
        %v8746 = vsub.f32 %v8648, %v8717
        %v8747 = vsub.f32 %v8649, %v8718
        %v8748 = vsub.f32 %v8650, %v8718
        %v8749 = vsub.f32 %v8651, %v8719
        %v8750 = vsub.f32 %v8652, %v8719
        %v8751 = vsub.f32 %v8653, %v8720
        %v8752 = vsub.f32 %v8654, %v8720
        %v8753 = vmul.f32 %v8721, %v8721
        %v8754 = vmul.f32 %v8722, %v8722
        %v8755 = vmul.f32 %v8723, %v8723
        %v8756 = vmul.f32 %v8724, %v8724
        %v8757 = vmul.f32 %v8725, %v8725
        %v8758 = vmul.f32 %v8726, %v8726
        %v8759 = vmul.f32 %v8727, %v8727
        %v8760 = vmul.f32 %v8728, %v8728
        %v8761 = vmul.f32 %v8729, %v8729
        %v8762 = vmul.f32 %v8730, %v8730
        %v8763 = vmul.f32 %v8731, %v8731
        %v8764 = vmul.f32 %v8732, %v8732
        %v8765 = vmul.f32 %v8733, %v8733
        %v8766 = vmul.f32 %v8734, %v8734
        %v8767 = vmul.f32 %v8735, %v8735
        %v8768 = vmul.f32 %v8736, %v8736
        %v8769 = vmul.f32 %v8737, %v8737
        %v8770 = vmul.f32 %v8738, %v8738
        %v8771 = vmul.f32 %v8739, %v8739
        %v8772 = vmul.f32 %v8740, %v8740
        %v8773 = vmul.f32 %v8741, %v8741
        %v8774 = vmul.f32 %v8742, %v8742
        %v8775 = vmul.f32 %v8743, %v8743
        %v8776 = vmul.f32 %v8744, %v8744
        %v8777 = vmul.f32 %v8745, %v8745
        %v8778 = vmul.f32 %v8746, %v8746
        %v8779 = vmul.f32 %v8747, %v8747
        %v8780 = vmul.f32 %v8748, %v8748
        %v8781 = vmul.f32 %v8749, %v8749
        %v8782 = vmul.f32 %v8750, %v8750
        %v8783 = vmul.f32 %v8751, %v8751
        %v8784 = vmul.f32 %v8752, %v8752
        %v8785 = vadd.f32 %v8753, %v8754
        %8786 = vadd.xlane.f32.xlu0 %v8785
        %v8787 = vpop.xlane.xlu0 %8786
        %v8788 = vadd.f32 %v8755, %v8756
        %8789 = vadd.xlane.f32.xlu0 %v8788
        %v8790 = vpop.xlane.xlu0 %8789
        %v8791 = vadd.f32 %v8757, %v8758
        %8792 = vadd.xlane.f32.xlu0 %v8791
        %v8793 = vpop.xlane.xlu0 %8792
        %v8794 = vadd.f32 %v8759, %v8760
        %8795 = vadd.xlane.f32.xlu0 %v8794
        %v8796 = vpop.xlane.xlu0 %8795
        %v8797 = vadd.f32 %v8761, %v8762
        %8798 = vadd.xlane.f32.xlu0 %v8797
        %v8799 = vpop.xlane.xlu0 %8798
        %v8800 = vadd.f32 %v8763, %v8764
        %8801 = vadd.xlane.f32.xlu0 %v8800
        %v8802 = vpop.xlane.xlu0 %8801
        %v8803 = vadd.f32 %v8765, %v8766
        %8804 = vadd.xlane.f32.xlu0 %v8803
        %v8805 = vpop.xlane.xlu0 %8804
        %v8806 = vadd.f32 %v8767, %v8768
        %8807 = vadd.xlane.f32.xlu0 %v8806
        %v8808 = vpop.xlane.xlu0 %8807
        %v8809 = vadd.f32 %v8769, %v8770
        %8810 = vadd.xlane.f32.xlu0 %v8809
        %v8811 = vpop.xlane.xlu0 %8810
        %v8812 = vadd.f32 %v8771, %v8772
        %8813 = vadd.xlane.f32.xlu0 %v8812
        %v8814 = vpop.xlane.xlu0 %8813
        %v8815 = vadd.f32 %v8773, %v8774
        %8816 = vadd.xlane.f32.xlu0 %v8815
        %v8817 = vpop.xlane.xlu0 %8816
        %v8818 = vadd.f32 %v8775, %v8776
        %8819 = vadd.xlane.f32.xlu0 %v8818
        %v8820 = vpop.xlane.xlu0 %8819
        %v8821 = vadd.f32 %v8777, %v8778
        %8822 = vadd.xlane.f32.xlu0 %v8821
        %v8823 = vpop.xlane.xlu0 %8822
        %v8824 = vadd.f32 %v8779, %v8780
        %8825 = vadd.xlane.f32.xlu0 %v8824
        %v8826 = vpop.xlane.xlu0 %8825
        %v8827 = vadd.f32 %v8781, %v8782
        %8828 = vadd.xlane.f32.xlu0 %v8827
        %v8829 = vpop.xlane.xlu0 %8828
        %v8830 = vadd.f32 %v8783, %v8784
        %8831 = vadd.xlane.f32.xlu0 %v8830
        %v8832 = vpop.xlane.xlu0 %8831
        %v8833 = vmul.f32 %v8787, %v6962
        %v8834 = vmul.f32 %v8790, %v6962
        %v8835 = vmul.f32 %v8793, %v6962
        %v8836 = vmul.f32 %v8796, %v6962
        %v8837 = vmul.f32 %v8799, %v6962
        %v8838 = vmul.f32 %v8802, %v6962
        %v8839 = vmul.f32 %v8805, %v6962
        %v8840 = vmul.f32 %v8808, %v6962
        %v8841 = vmul.f32 %v8811, %v6962
        %v8842 = vmul.f32 %v8814, %v6962
        %v8843 = vmul.f32 %v8817, %v6962
        %v8844 = vmul.f32 %v8820, %v6962
        %v8845 = vmul.f32 %v8823, %v6962
        %v8846 = vmul.f32 %v8826, %v6962
        %v8847 = vmul.f32 %v8829, %v6962
        %v8848 = vmul.f32 %v8832, %v6962
        %v8849 = vadd.f32 %v8833, 1e-05
        %v8850 = vadd.f32 %v8834, 1e-05
        %v8851 = vadd.f32 %v8835, 1e-05
        %v8852 = vadd.f32 %v8836, 1e-05
        %v8853 = vadd.f32 %v8837, 1e-05
        %v8854 = vadd.f32 %v8838, 1e-05
        %v8855 = vadd.f32 %v8839, 1e-05
        %v8856 = vadd.f32 %v8840, 1e-05
        %v8857 = vadd.f32 %v8841, 1e-05
        %v8858 = vadd.f32 %v8842, 1e-05
        %v8859 = vadd.f32 %v8843, 1e-05
        %v8860 = vadd.f32 %v8844, 1e-05
        %v8861 = vadd.f32 %v8845, 1e-05
        %v8862 = vadd.f32 %v8846, 1e-05
        %v8863 = vadd.f32 %v8847, 1e-05
        %v8864 = vadd.f32 %v8848, 1e-05
        %v8865 = vrsqrt.pop %v8849
        %v8866 = vrsqrt.pop %v8850
        %v8867 = vrsqrt.pop %v8851
        %v8868 = vrsqrt.pop %v8852
        %v8869 = vrsqrt.pop %v8853
        %v8870 = vrsqrt.pop %v8854
        %v8871 = vrsqrt.pop %v8855
        %v8872 = vrsqrt.pop %v8856
        %v8873 = vrsqrt.pop %v8857
        %v8874 = vrsqrt.pop %v8858
        %v8875 = vrsqrt.pop %v8859
        %v8876 = vrsqrt.pop %v8860
        %v8877 = vrsqrt.pop %v8861
        %v8878 = vrsqrt.pop %v8862
        %v8879 = vrsqrt.pop %v8863
        %v8880 = vrsqrt.pop %v8864
        %v8881 = vmul.f32 %v8721, %v8865
        %v8882 = vmul.f32 %v8722, %v8865
        %v8883 = vmul.f32 %v8723, %v8866
        %v8884 = vmul.f32 %v8724, %v8866
        %v8885 = vmul.f32 %v8725, %v8867
        %v8886 = vmul.f32 %v8726, %v8867
        %v8887 = vmul.f32 %v8727, %v8868
        %v8888 = vmul.f32 %v8728, %v8868
        %v8889 = vmul.f32 %v8729, %v8869
        %v8890 = vmul.f32 %v8730, %v8869
        %v8891 = vmul.f32 %v8731, %v8870
        %v8892 = vmul.f32 %v8732, %v8870
        %v8893 = vmul.f32 %v8733, %v8871
        %v8894 = vmul.f32 %v8734, %v8871
        %v8895 = vmul.f32 %v8735, %v8872
        %v8896 = vmul.f32 %v8736, %v8872
        %v8897 = vmul.f32 %v8737, %v8873
        %v8898 = vmul.f32 %v8738, %v8873
        %v8899 = vmul.f32 %v8739, %v8874
        %v8900 = vmul.f32 %v8740, %v8874
        %v8901 = vmul.f32 %v8741, %v8875
        %v8902 = vmul.f32 %v8742, %v8875
        %v8903 = vmul.f32 %v8743, %v8876
        %v8904 = vmul.f32 %v8744, %v8876
        %v8905 = vmul.f32 %v8745, %v8877
        %v8906 = vmul.f32 %v8746, %v8877
        %v8907 = vmul.f32 %v8747, %v8878
        %v8908 = vmul.f32 %v8748, %v8878
        %v8909 = vmul.f32 %v8749, %v8879
        %v8910 = vmul.f32 %v8750, %v8879
        %v8911 = vmul.f32 %v8751, %v8880
        %v8912 = vmul.f32 %v8752, %v8880
        %v8914 = vlaneseq
        %v8915 = vshrl.u32 %v8914, 7
        %v8916 = vsub.s32 0, %v8915
        %v8917 = vrot.slane %v8655, %v8916
        %v8918 = vlaneseq
        %v8919 = vshrl.u32 %v8918, 7
        %v8920 = vsub.s32 1, %v8919
        %v8921 = vrot.slane %v8655, %v8920
        %v8924 = vmul.f32 %v8881, %v8917
        %v8925 = vmul.f32 %v8882, %v8921
        %v8926 = vmul.f32 %v8883, %v8917
        %v8927 = vmul.f32 %v8884, %v8921
        %v8928 = vmul.f32 %v8885, %v8917
        %v8929 = vmul.f32 %v8886, %v8921
        %v8930 = vmul.f32 %v8887, %v8917
        %v8931 = vmul.f32 %v8888, %v8921
        %v8932 = vmul.f32 %v8889, %v8917
        %v8933 = vmul.f32 %v8890, %v8921
        %v8934 = vmul.f32 %v8891, %v8917
        %v8935 = vmul.f32 %v8892, %v8921
        %v8936 = vmul.f32 %v8893, %v8917
        %v8937 = vmul.f32 %v8894, %v8921
        %v8938 = vmul.f32 %v8895, %v8917
        %v8939 = vmul.f32 %v8896, %v8921
        %v8940 = vmul.f32 %v8897, %v8917
        %v8941 = vmul.f32 %v8898, %v8921
        %v8942 = vmul.f32 %v8899, %v8917
        %v8943 = vmul.f32 %v8900, %v8921
        %v8944 = vmul.f32 %v8901, %v8917
        %v8945 = vmul.f32 %v8902, %v8921
        %v8946 = vmul.f32 %v8903, %v8917
        %v8947 = vmul.f32 %v8904, %v8921
        %v8948 = vmul.f32 %v8905, %v8917
        %v8949 = vmul.f32 %v8906, %v8921
        %v8950 = vmul.f32 %v8907, %v8917
        %v8951 = vmul.f32 %v8908, %v8921
        %v8952 = vmul.f32 %v8909, %v8917
        %v8953 = vmul.f32 %v8910, %v8921
        %v8954 = vmul.f32 %v8911, %v8917
        %v8955 = vmul.f32 %v8912, %v8921
        %v8957 = vlaneseq
        %v8958 = vshrl.u32 %v8957, 7
        %v8959 = vsub.s32 0, %v8958
        %v8960 = vrot.slane %v8656, %v8959
        %v8961 = vlaneseq
        %v8962 = vshrl.u32 %v8961, 7
        %v8963 = vsub.s32 1, %v8962
        %v8964 = vrot.slane %v8656, %v8963
        %v8967 = vadd.f32 %v8924, %v8960
        %v8968 = vadd.f32 %v8925, %v8964
        %v8969 = vadd.f32 %v8926, %v8960
        %v8970 = vadd.f32 %v8927, %v8964
        %v8971 = vadd.f32 %v8928, %v8960
        %v8972 = vadd.f32 %v8929, %v8964
        %v8973 = vadd.f32 %v8930, %v8960
        %v8974 = vadd.f32 %v8931, %v8964
        %v8975 = vadd.f32 %v8932, %v8960
        %v8976 = vadd.f32 %v8933, %v8964
        %v8977 = vadd.f32 %v8934, %v8960
        %v8978 = vadd.f32 %v8935, %v8964
        %v8979 = vadd.f32 %v8936, %v8960
        %v8980 = vadd.f32 %v8937, %v8964
        %v8981 = vadd.f32 %v8938, %v8960
        %v8982 = vadd.f32 %v8939, %v8964
        %v8983 = vadd.f32 %v8940, %v8960
        %v8984 = vadd.f32 %v8941, %v8964
        %v8985 = vadd.f32 %v8942, %v8960
        %v8986 = vadd.f32 %v8943, %v8964
        %v8987 = vadd.f32 %v8944, %v8960
        %v8988 = vadd.f32 %v8945, %v8964
        %v8989 = vadd.f32 %v8946, %v8960
        %v8990 = vadd.f32 %v8947, %v8964
        %v8991 = vadd.f32 %v8948, %v8960
        %v8992 = vadd.f32 %v8949, %v8964
        %v8993 = vadd.f32 %v8950, %v8960
        %v8994 = vadd.f32 %v8951, %v8964
        %v8995 = vadd.f32 %v8952, %v8960
        %v8996 = vadd.f32 %v8953, %v8964
        %v8997 = vadd.f32 %v8954, %v8960
        %v8998 = vadd.f32 %v8955, %v8964
        %8999 = vst [vmem:[%s684] sm:$0xff] %v8967
        %9000 = vst [vmem:[%s684 + $0x8] sm:$0xff] %v8968
        %9001 = vst [vmem:[%s684 + $0x10] sm:$0xff] %v8969
        %9002 = vst [vmem:[%s684 + $0x18] sm:$0xff] %v8970
        %9003 = vst [vmem:[%s684 + $0x20] sm:$0xff] %v8971
        %9004 = vst [vmem:[%s684 + $0x28] sm:$0xff] %v8972
        %9005 = vst [vmem:[%s684 + $0x30] sm:$0xff] %v8973
        %9006 = vst [vmem:[%s684 + $0x38] sm:$0xff] %v8974
        %9007 = vst [vmem:[%s684 + $0x40] sm:$0xff] %v8975
        %9008 = vst [vmem:[%s684 + $0x48] sm:$0xff] %v8976
        %9009 = vst [vmem:[%s684 + $0x50] sm:$0xff] %v8977
        %9010 = vst [vmem:[%s684 + $0x58] sm:$0xff] %v8978
        %9011 = vst [vmem:[%s684 + $0x60] sm:$0xff] %v8979
        %9012 = vst [vmem:[%s684 + $0x68] sm:$0xff] %v8980
        %9013 = vst [vmem:[%s684 + $0x70] sm:$0xff] %v8981
        %9014 = vst [vmem:[%s684 + $0x78] sm:$0xff] %v8982
        %9015 = vst [vmem:[%s684 + $0x80] sm:$0xff] %v8983
        %9016 = vst [vmem:[%s684 + $0x88] sm:$0xff] %v8984
        %9017 = vst [vmem:[%s684 + $0x90] sm:$0xff] %v8985
        %9018 = vst [vmem:[%s684 + $0x98] sm:$0xff] %v8986
        %9019 = vst [vmem:[%s684 + $0xa0] sm:$0xff] %v8987
        %9020 = vst [vmem:[%s684 + $0xa8] sm:$0xff] %v8988
        %9021 = vst [vmem:[%s684 + $0xb0] sm:$0xff] %v8989
        %9022 = vst [vmem:[%s684 + $0xb8] sm:$0xff] %v8990
        %9023 = vst [vmem:[%s684 + $0xc0] sm:$0xff] %v8991
        %9024 = vst [vmem:[%s684 + $0xc8] sm:$0xff] %v8992
        %9025 = vst [vmem:[%s684 + $0xd0] sm:$0xff] %v8993
        %9026 = vst [vmem:[%s684 + $0xd8] sm:$0xff] %v8994
        %9027 = vst [vmem:[%s684 + $0xe0] sm:$0xff] %v8995
        %9028 = vst [vmem:[%s684 + $0xe8] sm:$0xff] %v8996
        %9029 = vst [vmem:[%s684 + $0xf0] sm:$0xff] %v8997
        %9030 = vst [vmem:[%s684 + $0xf8] sm:$0xff] %v8998
        %p9031 = scmp.lt.s32.totalorder %s33, 1
        %s9032 = scalar_select %p9031, %s33, 1
        %s9033 = smul.addr %s9032, 32
        %s9034 = smul.addr %s9033, 8
        %s9035 = scalar_lea.vmem %s17, %s9034
        %p9036 = scmp.lt.s32.totalorder %s33, 1
        %s9037 = scalar_select %p9036, %s33, 1
        %s9038 = smul.addr %s9037, 16
        %s9039 = smul.addr %s9038, 8
        %s9040 = scalar_lea.vmem %s18, %s9039
        // Predicated region
        $region109: #{encoder_layer_forward.1} parent=87 // pred_check
          %p9041 = pneg %p423
        $region110: #{encoder_layer_forward.1} parent=87 // pred_check_branch
          %9043 = sbr.rel (%p9041) target = $region112
        $region111: #{encoder_layer_forward.1} parent=87 // pred_region
          _
        $region112: #{encoder_layer_forward.1} parent=87 // pred_fallthru
          _
        // Predicated region
        $region113: #{encoder_layer_forward.1} parent=87 // pred_check
          %p9044 = pneg %p449
        $region114: #{encoder_layer_forward.1} parent=87 // pred_check_branch
          %9046 = sbr.rel (%p9044) target = $region116
        $region115: #{encoder_layer_forward.1} parent=87 // pred_region
          _
        $region116: #{encoder_layer_forward.1} parent=87 // pred_fallthru
          _
      $region88: #{encoder_layer_forward.1} parent=5 // pred_fallthru
        _
      %p9047 = scmp.le.s32.totalorder 2, %s28
      // Predicated region
      $region117: #{encoder_layer_forward.1} parent=5 // pred_check
        %p9048 = pneg %p9047
      $region118: #{encoder_layer_forward.1} parent=5 // pred_check_branch
        %9050 = sbr.rel (%p9048) target = $region120
      $region119: #{encoder_layer_forward.1} parent=5 // pred_region
        %s9051 = ssub.s32 %s28, 2
        // Predicated region
        $region121: #{encoder_layer_forward.1} parent=119 // pred_check
          %p9052 = pneg %p429
        $region122: #{encoder_layer_forward.1} parent=119 // pred_check_branch
          %9054 = sbr.rel (%p9052) target = $region124
        $region123: #{encoder_layer_forward.1} parent=119 // pred_region
          %p9055 = scmp.lt.s32.totalorder %s34, 1
          %s9056 = scalar_select %p9055, %s34, 1
          %s9057 = smul.addr %s9056, 32
          %s9058 = smul.addr %s9057, 8
          %s9059 = scalar_lea.vmem %s17, %s9058
        $region124: #{encoder_layer_forward.1} parent=119 // pred_fallthru
          _
        // Predicated region
        $region125: #{encoder_layer_forward.1} parent=119 // pred_check
          %p9060 = pneg %p455
        $region126: #{encoder_layer_forward.1} parent=119 // pred_check_branch
          %9062 = sbr.rel (%p9060) target = $region128
        $region127: #{encoder_layer_forward.1} parent=119 // pred_region
          %p9063 = scmp.lt.s32.totalorder %s34, 1
          %s9064 = scalar_select %p9063, %s34, 1
          %s9065 = smul.addr %s9064, 16
          %s9066 = smul.addr %s9065, 8
          %s9067 = scalar_lea.vmem %s18, %s9066
        $region128: #{encoder_layer_forward.1} parent=119 // pred_fallthru
          _
      $region120: #{encoder_layer_forward.1} parent=5 // pred_fallthru
        _
    $region6: #{encoder_layer_forward.1} parent=1 // loop_footer
      %s32 = sadd.s32 1, %s28
    $region7: #{encoder_layer_forward.1} parent=1 // loop_footer_branch
      %27 = sbr.rel target = $region3
    $region8: #{encoder_layer_forward.1} parent=1 // loop_exit
      _
    %9068 = vsyncpa [#allocation7], 1
    %s9069 = scalar_lea.sflag [#allocation7], 1
    %9070 = vsyncpa %s9069, 1
    %9071 = vsyncpa [#allocation9], 1
    %9072 = vsyncpa [#allocation12], 1

</llo_original>
